<compile_context>
chip_gen: v5e
topology: v5e:2x2
jax: 0.10.0
libtpu: 0.0.40
codegen_flags: <defaults>
</compile_context>

<pallas_src>
import functools

import jax
import jax.numpy as jnp
import numpy as np
from jax.experimental import pallas as pl
from jax.experimental.pallas import tpu as pltpu


# 3x3 tap offsets (dy, dx); ordering matches the im2col / PyTorch (ky, kx) order.
_TAPS = tuple((dy, dx) for dy in (-1, 0, 1) for dx in (-1, 0, 1))
_BN_EPS = 1e-5


# ------------------------------ fused kernel -------------------------------

def _fused_coupling_kernel(
    x_ref, cmask_ref, tapmask_ref,
    c1w_ref, c1b_ref,
    w1_ref, b1_ref, g1_ref, be1_ref,
    w2_ref, b2_ref, g2_ref, be2_ref,
    w3_ref, b3_ref,
    c2w_ref, c2b_ref,
    sc_ref,
    z_ref, ldj_ref,
    *, img_w, invert):
  """Entire AffineCoupling forward.  Activations are (channels, pixels)."""
  M = x_ref.shape[1]
  n_blocks = w1_ref.shape[0]

  x = x_ref[...]                      # (1, M) f32, lane-dense
  cmask = cmask_ref[...]              # (1, M) f32 coupling mask
  tap_masks = tapmask_ref[...]        # (9, M) f32 "same"-padding validity masks

  def shift_pixels(v, d):
    # shifted[:, p] = v[:, (p + d) % M]   (explicit concat => unambiguous dir).
    s = d % M
    if s == 0:
      return v
    return jnp.concatenate([v[:, s:], v[:, :s]], axis=1)

  def conv3x3(h, tap_w, bias):
    # h: (Cin, M) f32; tap_w(k) -> (Cout, Cin) bf16; bias: (Cout, 1) f32.
    # Edge masking commutes with the channel contraction, so it is applied to
    # the per-tap matmul output (keeps the MXU operand a plain shifted slab).
    acc = None
    for k, (dy, dx) in enumerate(_TAPS):
      d = dy * img_w + dx
      rolled = shift_pixels(h, d).astype(jnp.bfloat16)
      contrib = jnp.dot(tap_w(k), rolled, preferred_element_type=jnp.float32)
      contrib = contrib * tap_masks[k:k + 1, :]
      acc = contrib if acc is None else acc + contrib
    return acc + bias

  def bn_relu(y, g, be):
    # BatchNorm2d, training-mode batch statistics over all N*H*W pixels.
    mu = jnp.mean(y, axis=1, keepdims=True)
    var = jnp.mean((y - mu) ** 2, axis=1, keepdims=True)
    yn = (y - mu) * jax.lax.rsqrt(var + _BN_EPS)
    return jnp.maximum(yn * g + be, 0.0)

  # conv_1: 3x3, C_in = 1 -> F, done as 9 broadcast-multiplies on the VPU.
  xm = x * cmask
  h = None
  for k, (dy, dx) in enumerate(_TAPS):
    d = dy * img_w + dx
    rolled = shift_pixels(xm, d) * tap_masks[k:k + 1, :]       # (1, M)
    contrib = c1w_ref[k] * rolled                              # (F,1)*(1,M)
    h = contrib if h is None else h + contrib
  h = h + c1b_ref[...]

  # 8 ResBlocks; weights VMEM-resident, activations stay in vregs.
  for b in range(n_blocks):
    skip = h
    y = jnp.dot(w1_ref[b], h.astype(jnp.bfloat16),
                preferred_element_type=jnp.float32) + b1_ref[b]
    y = bn_relu(y, g1_ref[b], be1_ref[b])
    y = conv3x3(y, lambda k, b=b: w2_ref[b, k], b2_ref[b])
    y = bn_relu(y, g2_ref[b], be2_ref[b])
    h = jnp.dot(w3_ref[b], y.astype(jnp.bfloat16),
                preferred_element_type=jnp.float32) + b3_ref[b] + skip

  # trailing ReLU + conv_2 (out channels padded 2 -> 8 for a clean MXU shape).
  hr = jnp.maximum(h, 0.0)
  net = conv3x3(hr, lambda k: c2w_ref[k], c2b_ref[...])        # (8, M)

  # affine coupling — all lane-dense (1, M).
  scale = sc_ref[0]
  scale_shift = sc_ref[1]
  log_scale = scale * jnp.tanh(net[0:1, :]) + scale_shift
  one_minus_mask = 1.0 - cmask
  t = net[1:2, :] * one_minus_mask
  log_scale = log_scale * one_minus_mask
  if invert:
    # TODO(synk): ldj ignores the +1e-4 in the denominator, exactly matching
    # the PyTorch module's semantics.
    z_ref[...] = (x - t) / (jnp.exp(log_scale) + 1e-4)
    ldj_ref[...] = -log_scale
  else:
    z_ref[...] = x * jnp.exp(log_scale) + t
    ldj_ref[...] = log_scale


# ------------------------------ call wrapper --------------------------------

def _vspec(shape):
  zeros = (0,) * len(shape)
  return pl.BlockSpec(shape, lambda i, _z=zeros: _z)


def affine_coupling_forward(x, mask, kp, *, invert=False):
  N, C, H, W = x.shape
  assert C == 1  # TODO(synk): generalize the coupling broadcast to C > 1.
  M = N * H * W

  x_row = x.reshape(1, M).astype(jnp.float32)
  cmask_row = jnp.broadcast_to(mask, x.shape).reshape(1, M).astype(jnp.float32)

  # Per-tap validity masks for "same" padding (trace-time constants; pixel
  # order is (n, h, w), matching the flattened activation layout).
  hh = np.arange(H)[:, None]
  ww = np.arange(W)[None, :]
  tap_masks = np.stack([
      np.broadcast_to((hh + dy >= 0) & (hh + dy < H) &
                      (ww + dx >= 0) & (ww + dx < W), (N, H, W)).reshape(M)
      for (dy, dx) in _TAPS]).astype(np.float32)               # (9, M)
  tap_masks = jnp.asarray(tap_masks)

  vmem_args = (x_row, cmask_row, tap_masks,
               kp['c1w'], kp['c1b'],
               kp['w1'], kp['b1'], kp['g1'], kp['be1'],
               kp['w2'], kp['b2'], kp['g2'], kp['be2'],
               kp['w3'], kp['b3'],
               kp['c2w'], kp['c2b'])
  in_specs = [_vspec(a.shape) for a in vmem_args]
  in_specs.append(pl.BlockSpec(memory_space=pltpu.MemorySpace.SMEM))

  z_row, ldj_row = pl.pallas_call(
      functools.partial(_fused_coupling_kernel, img_w=W, invert=invert),
      grid=(1,),
      in_specs=in_specs,
      out_specs=(_vspec((1, M)), _vspec((1, M))),
      out_shape=(jax.ShapeDtypeStruct((1, M), jnp.float32),
                 jax.ShapeDtypeStruct((1, M), jnp.float32)),
      compiler_params=pltpu.CompilerParams(
          dimension_semantics=("arbitrary",)),
  )(*vmem_args, kp['sc'])
  return z_row.reshape(N, C, H, W), ldj_row.reshape(N, 1, H, W)


# ------------------------------- parameters --------------------------------

def init_params(key, in_channels, n_filters, n_blocks, n_out=2):
  keys = iter(jax.random.split(key, 4 + 10 * n_blocks + 4))

  def w_mat(fan_in, cout):
    return (jax.random.normal(next(keys), (fan_in, cout), jnp.float32)
            / np.sqrt(fan_in))

  def vec(cout, s=0.01):
    return s * jax.random.normal(next(keys), (1, cout), jnp.float32)

  p = {
      'conv1_w': w_mat(9 * in_channels, n_filters),
      'conv1_b': vec(n_filters),
      'blocks': [],
  }
  for _ in range(n_blocks):
    p['blocks'].append({
        'w1': w_mat(n_filters, n_filters), 'b1': vec(n_filters),
        'g1': 1.0 + vec(n_filters, 0.1), 'be1': vec(n_filters, 0.1),
        'w2': w_mat(9 * n_filters, n_filters), 'b2': vec(n_filters),
        'g2': 1.0 + vec(n_filters, 0.1), 'be2': vec(n_filters, 0.1),
        'w3': w_mat(n_filters, n_filters), 'b3': vec(n_filters),
    })
  p['conv2_w'] = w_mat(9 * n_filters, n_out)
  p['conv2_b'] = vec(n_out)
  # The module's __init__ sets scale = scale_shift = zeros(1); nonzero values
  # are used here so the tanh/exp coupling path is actually exercised.
  p['scale'] = jnp.full((1, 1), 0.7, jnp.float32)
  p['scale_shift'] = jnp.full((1, 1), 0.1, jnp.float32)
  return p


def pack_params(params):
  """Reference-layout params -> kernel layout (transposed, stacked, bf16)."""
  bf16, f32 = jnp.bfloat16, jnp.float32
  F = params['conv1_w'].shape[1]

  col = lambda v: v.T.astype(f32)                       # (1, C)      -> (C, 1)
  tmat = lambda w: w.T.astype(bf16)                     # (Cin, Cout) -> (Cout, Cin)

  def t3x3(w, cin):                                     # (9*Cin, Cout) -> (9, Cout, Cin)
    cout = w.shape[1]
    return jnp.transpose(w.reshape(9, cin, cout), (0, 2, 1))

  stack = lambda key, fn: jnp.stack([fn(b[key]) for b in params['blocks']])

  c2w = t3x3(params['conv2_w'], F).astype(bf16)         # (9, 2, F)
  c2w = jnp.pad(c2w, ((0, 0), (0, 6), (0, 0)))          # pad out-channels 2 -> 8
  c2b = jnp.pad(col(params['conv2_b']), ((0, 6), (0, 0)))

  return dict(
      c1w=t3x3(params['conv1_w'], 1).astype(f32),       # (9, F, 1), VPU path
      c1b=col(params['conv1_b']),
      w1=stack('w1', tmat), b1=stack('b1', col),
      g1=stack('g1', col), be1=stack('be1', col),
      w2=stack('w2', lambda w: t3x3(w, F).astype(bf16)),  # (nb, 9, F, F)
      b2=stack('b2', col), g2=stack('g2', col), be2=stack('be2', col),
      w3=stack('w3', tmat), b3=stack('b3', col),
      c2w=c2w, c2b=c2b,
      sc=jnp.concatenate([params['scale'].reshape(1),
                          params['scale_shift'].reshape(1)]).astype(f32),
  )


# ------------------------------ pure-JAX ref --------------------------------

def _im2col_3x3(x_nhwc):
  N, H, W, C = x_nhwc.shape
  xp = jnp.pad(x_nhwc, ((0, 0), (1, 1), (1, 1), (0, 0)))
  cols = [xp[:, dy:dy + H, dx:dx + W, :] for dy in range(3) for dx in range(3)]
  return jnp.concatenate(cols, axis=-1).reshape(N * H * W, 9 * C)


def _reference_forward(x, mask, params, *, invert=False):
  N, C, H, W = x.shape
  F = params['conv1_w'].shape[1]
  M = N * H * W

  def mm(a, w):   # bf16 matmul, f32 accumulation (matches the kernel)
    return jnp.dot(a.astype(jnp.bfloat16), w.astype(jnp.bfloat16),
                   preferred_element_type=jnp.float32)

  def bn_relu(y, g, be):
    mu = jnp.mean(y, axis=0, keepdims=True)
    var = jnp.mean((y - mu) ** 2, axis=0, keepdims=True)
    return jnp.maximum((y - mu) * jax.lax.rsqrt(var + _BN_EPS) * g + be, 0.0)

  h = _im2col_3x3(jnp.transpose(x * mask, (0, 2, 3, 1))) @ params['conv1_w'] \
      + params['conv1_b']
  for blk in params['blocks']:
    skip = h
    y = bn_relu(mm(h, blk['w1']) + blk['b1'], blk['g1'], blk['be1'])
    y = bn_relu(mm(_im2col_3x3(y.reshape(N, H, W, F)), blk['w2']) + blk['b2'],
                blk['g2'], blk['be2'])
    h = mm(y, blk['w3']) + blk['b3'] + skip
  net = mm(_im2col_3x3(jnp.maximum(h, 0.0).reshape(N, H, W, F)),
           params['conv2_w']) + params['conv2_b']
  log_scale = params['scale'] * jnp.tanh(net[:, 0:1]) + params['scale_shift']
  mask_flat = jnp.broadcast_to(mask, x.shape).reshape(M, 1)
  t = net[:, 1:2] * (1.0 - mask_flat)
  log_scale = log_scale * (1.0 - mask_flat)
  if invert:
    z = (x.reshape(M, 1) - t) / (jnp.exp(log_scale) + 1e-4)
    ldj = -log_scale
  else:
    z = x.reshape(M, 1) * jnp.exp(log_scale) + t
    ldj = log_scale
  return z.reshape(N, C, H, W), ldj.reshape(N, 1, H, W)


# ---------------------------------- main ------------------------------------

if __name__ == "__main__":
  root = jax.random.PRNGKey(0)
  k_param, k_x = jax.random.split(root)

  N, C, H, W = 2, 1, 8, 8            # in_shape = (1, 8, 8), batch = 2
  n_filters, n_blocks = 32, 8        # SimpleResnet hardcodes n_blocks = 8

  params = init_params(k_param, C, n_filters, n_blocks)
  kparams = pack_params(params)
  x = jax.random.normal(k_x, (N, C, H, W), jnp.float32)

  # checkerboard mask (the PyTorch code sets self.mask externally)
  ii = jnp.arange(H)[:, None]
  jj = jnp.arange(W)[None, :]
  mask = ((ii + jj) % 2).astype(jnp.float32).reshape(1, 1, H, W)

  fwd = jax.jit(functools.partial(affine_coupling_forward, invert=False))
  z, ldj = fwd(x, mask, kparams)
  z = jax.block_until_ready(z)
  ldj = jax.block_until_ready(ldj)

  z_ref, ldj_ref = _reference_forward(x, mask, params)
  np.testing.assert_allclose(np.asarray(z), np.asarray(z_ref),
                             rtol=5e-2, atol=5e-2)
  np.testing.assert_allclose(np.asarray(ldj), np.asarray(ldj_ref),
                             rtol=5e-2, atol=5e-2)
  assert z.shape == (N, C, H, W) and ldj.shape == (N, 1, H, W)
  print("KERNEL_OK")
</pallas_src>

<mosaic_0001>
module attributes {stable_mosaic.version = 11 : i64} {
  func.func @_fused_coupling_kernel(%arg0: i32, %arg1: memref<1x128xf32, #tpu.memory_space<vmem>>, %arg2: memref<1x128xf32, #tpu.memory_space<vmem>>, %arg3: memref<9x128xf32, #tpu.memory_space<vmem>>, %arg4: memref<9x32x1xf32, #tpu.memory_space<vmem>>, %arg5: memref<32x1xf32, #tpu.memory_space<vmem>>, %arg6: memref<8x32x32xbf16, #tpu.memory_space<vmem>>, %arg7: memref<8x32x1xf32, #tpu.memory_space<vmem>>, %arg8: memref<8x32x1xf32, #tpu.memory_space<vmem>>, %arg9: memref<8x32x1xf32, #tpu.memory_space<vmem>>, %arg10: memref<8x9x32x32xbf16, #tpu.memory_space<vmem>>, %arg11: memref<8x32x1xf32, #tpu.memory_space<vmem>>, %arg12: memref<8x32x1xf32, #tpu.memory_space<vmem>>, %arg13: memref<8x32x1xf32, #tpu.memory_space<vmem>>, %arg14: memref<8x32x32xbf16, #tpu.memory_space<vmem>>, %arg15: memref<8x32x1xf32, #tpu.memory_space<vmem>>, %arg16: memref<9x8x32xbf16, #tpu.memory_space<vmem>>, %arg17: memref<8x1xf32, #tpu.memory_space<vmem>>, %arg18: memref<2xf32, #tpu.memory_space<smem>>, %arg19: memref<1x128xf32, #tpu.memory_space<vmem>>, %arg20: memref<1x128xf32, #tpu.memory_space<vmem>>) attributes {dimension_semantics = [#tpu.dimension_semantics<arbitrary>], iteration_bounds = array<i64: 1>, scalar_prefetch = 0 : i64, scratch_operands = 0 : i64, tpu.core_type = #tpu.core_type<tc>, window_params = [{pipeline_mode = #tpu.pipeline_mode<synchronous>, transform_indices = @transform_0, window_bounds = array<i64: 1, 128>}, {pipeline_mode = #tpu.pipeline_mode<synchronous>, transform_indices = @transform_1, window_bounds = array<i64: 1, 128>}, {pipeline_mode = #tpu.pipeline_mode<synchronous>, transform_indices = @transform_2, window_bounds = array<i64: 9, 128>}, {pipeline_mode = #tpu.pipeline_mode<synchronous>, transform_indices = @transform_3, window_bounds = array<i64: 9, 32, 1>}, {pipeline_mode = #tpu.pipeline_mode<synchronous>, transform_indices = @transform_4, window_bounds = array<i64: 32, 1>}, {pipeline_mode = #tpu.pipeline_mode<synchronous>, transform_indices = @transform_5, window_bounds = array<i64: 8, 32, 32>}, {pipeline_mode = #tpu.pipeline_mode<synchronous>, transform_indices = @transform_6, window_bounds = array<i64: 8, 32, 1>}, {pipeline_mode = #tpu.pipeline_mode<synchronous>, transform_indices = @transform_7, window_bounds = array<i64: 8, 32, 1>}, {pipeline_mode = #tpu.pipeline_mode<synchronous>, transform_indices = @transform_8, window_bounds = array<i64: 8, 32, 1>}, {pipeline_mode = #tpu.pipeline_mode<synchronous>, transform_indices = @transform_9, window_bounds = array<i64: 8, 9, 32, 32>}, {pipeline_mode = #tpu.pipeline_mode<synchronous>, transform_indices = @transform_10, window_bounds = array<i64: 8, 32, 1>}, {pipeline_mode = #tpu.pipeline_mode<synchronous>, transform_indices = @transform_11, window_bounds = array<i64: 8, 32, 1>}, {pipeline_mode = #tpu.pipeline_mode<synchronous>, transform_indices = @transform_12, window_bounds = array<i64: 8, 32, 1>}, {pipeline_mode = #tpu.pipeline_mode<synchronous>, transform_indices = @transform_13, window_bounds = array<i64: 8, 32, 32>}, {pipeline_mode = #tpu.pipeline_mode<synchronous>, transform_indices = @transform_14, window_bounds = array<i64: 8, 32, 1>}, {pipeline_mode = #tpu.pipeline_mode<synchronous>, transform_indices = @transform_15, window_bounds = array<i64: 9, 8, 32>}, {pipeline_mode = #tpu.pipeline_mode<synchronous>, transform_indices = @transform_16, window_bounds = array<i64: 8, 1>}, {transform_indices = @transform_17, window_bounds = array<i64: 2>}, {pipeline_mode = #tpu.pipeline_mode<synchronous>, transform_indices = @transform_18, window_bounds = array<i64: 1, 128>}, {pipeline_mode = #tpu.pipeline_mode<synchronous>, transform_indices = @transform_19, window_bounds = array<i64: 1, 128>}]} {
    %c0 = arith.constant 0 : index
    %c0_0 = arith.constant 0 : index
    %0 = vector.load %arg1[%c0, %c0_0] : memref<1x128xf32, #tpu.memory_space<vmem>>, vector<1x128xf32>
    %c0_1 = arith.constant 0 : index
    %c0_2 = arith.constant 0 : index
    %1 = vector.load %arg2[%c0_1, %c0_2] : memref<1x128xf32, #tpu.memory_space<vmem>>, vector<1x128xf32>
    %c0_3 = arith.constant 0 : index
    %c0_4 = arith.constant 0 : index
    %2 = vector.load %arg3[%c0_3, %c0_4] : memref<9x128xf32, #tpu.memory_space<vmem>>, vector<9x128xf32>
    %3 = arith.mulf %0, %1 : vector<1x128xf32>
    %4 = vector.extract_strided_slice %3 {offsets = [0, 119], sizes = [1, 9], strides = [1, 1]} : vector<1x128xf32> to vector<1x9xf32>
    %5 = vector.extract_strided_slice %3 {offsets = [0, 0], sizes = [1, 119], strides = [1, 1]} : vector<1x128xf32> to vector<1x119xf32>
    %6 = tpu.concatenate %4, %5 in 1 : vector<1x9xf32>, vector<1x119xf32> -> vector<1x128xf32>
    %7 = vector.extract_strided_slice %2 {offsets = [0, 0], sizes = [1, 128], strides = [1, 1]} : vector<9x128xf32> to vector<1x128xf32>
    %8 = arith.mulf %6, %7 : vector<1x128xf32>
    %c0_5 = arith.constant 0 : index
    %c0_6 = arith.constant 0 : index
    %c0_7 = arith.constant 0 : index
    %9 = vector.load %arg4[%c0_5, %c0_6, %c0_7] : memref<9x32x1xf32, #tpu.memory_space<vmem>>, vector<1x32x1xf32>
    %10 = vector.shape_cast %9 : vector<1x32x1xf32> to vector<32x1xf32>
    %11 = vector.broadcast %10 : vector<32x1xf32> to vector<32x128xf32>
    %12 = vector.broadcast %8 : vector<1x128xf32> to vector<32x128xf32>
    %13 = arith.mulf %11, %12 : vector<32x128xf32>
    %14 = vector.extract_strided_slice %3 {offsets = [0, 120], sizes = [1, 8], strides = [1, 1]} : vector<1x128xf32> to vector<1x8xf32>
    %15 = vector.extract_strided_slice %3 {offsets = [0, 0], sizes = [1, 120], strides = [1, 1]} : vector<1x128xf32> to vector<1x120xf32>
    %16 = tpu.concatenate %14, %15 in 1 : vector<1x8xf32>, vector<1x120xf32> -> vector<1x128xf32>
    %17 = vector.extract_strided_slice %2 {offsets = [1, 0], sizes = [1, 128], strides = [1, 1]} : vector<9x128xf32> to vector<1x128xf32>
    %18 = arith.mulf %16, %17 : vector<1x128xf32>
    %c1 = arith.constant 1 : index
    %c0_8 = arith.constant 0 : index
    %c0_9 = arith.constant 0 : index
    %19 = vector.load %arg4[%c1, %c0_8, %c0_9] : memref<9x32x1xf32, #tpu.memory_space<vmem>>, vector<1x32x1xf32>
    %20 = vector.shape_cast %19 : vector<1x32x1xf32> to vector<32x1xf32>
    %21 = vector.broadcast %20 : vector<32x1xf32> to vector<32x128xf32>
    %22 = vector.broadcast %18 : vector<1x128xf32> to vector<32x128xf32>
    %23 = arith.mulf %21, %22 : vector<32x128xf32>
    %24 = arith.addf %13, %23 : vector<32x128xf32>
    %25 = vector.extract_strided_slice %3 {offsets = [0, 121], sizes = [1, 7], strides = [1, 1]} : vector<1x128xf32> to vector<1x7xf32>
    %26 = vector.extract_strided_slice %3 {offsets = [0, 0], sizes = [1, 121], strides = [1, 1]} : vector<1x128xf32> to vector<1x121xf32>
    %27 = tpu.concatenate %25, %26 in 1 : vector<1x7xf32>, vector<1x121xf32> -> vector<1x128xf32>
    %28 = vector.extract_strided_slice %2 {offsets = [2, 0], sizes = [1, 128], strides = [1, 1]} : vector<9x128xf32> to vector<1x128xf32>
    %29 = arith.mulf %27, %28 : vector<1x128xf32>
    %c2 = arith.constant 2 : index
    %c0_10 = arith.constant 0 : index
    %c0_11 = arith.constant 0 : index
    %30 = vector.load %arg4[%c2, %c0_10, %c0_11] : memref<9x32x1xf32, #tpu.memory_space<vmem>>, vector<1x32x1xf32>
    %31 = vector.shape_cast %30 : vector<1x32x1xf32> to vector<32x1xf32>
    %32 = vector.broadcast %31 : vector<32x1xf32> to vector<32x128xf32>
    %33 = vector.broadcast %29 : vector<1x128xf32> to vector<32x128xf32>
    %34 = arith.mulf %32, %33 : vector<32x128xf32>
    %35 = arith.addf %24, %34 : vector<32x128xf32>
    %36 = vector.extract_strided_slice %3 {offsets = [0, 127], sizes = [1, 1], strides = [1, 1]} : vector<1x128xf32> to vector<1x1xf32>
    %37 = vector.extract_strided_slice %3 {offsets = [0, 0], sizes = [1, 127], strides = [1, 1]} : vector<1x128xf32> to vector<1x127xf32>
    %38 = tpu.concatenate %36, %37 in 1 : vector<1x1xf32>, vector<1x127xf32> -> vector<1x128xf32>
    %39 = vector.extract_strided_slice %2 {offsets = [3, 0], sizes = [1, 128], strides = [1, 1]} : vector<9x128xf32> to vector<1x128xf32>
    %40 = arith.mulf %38, %39 : vector<1x128xf32>
    %c3 = arith.constant 3 : index
    %c0_12 = arith.constant 0 : index
    %c0_13 = arith.constant 0 : index
    %41 = vector.load %arg4[%c3, %c0_12, %c0_13] : memref<9x32x1xf32, #tpu.memory_space<vmem>>, vector<1x32x1xf32>
    %42 = vector.shape_cast %41 : vector<1x32x1xf32> to vector<32x1xf32>
    %43 = vector.broadcast %42 : vector<32x1xf32> to vector<32x128xf32>
    %44 = vector.broadcast %40 : vector<1x128xf32> to vector<32x128xf32>
    %45 = arith.mulf %43, %44 : vector<32x128xf32>
    %46 = arith.addf %35, %45 : vector<32x128xf32>
    %47 = vector.extract_strided_slice %2 {offsets = [4, 0], sizes = [1, 128], strides = [1, 1]} : vector<9x128xf32> to vector<1x128xf32>
    %48 = arith.mulf %3, %47 : vector<1x128xf32>
    %c4 = arith.constant 4 : index
    %c0_14 = arith.constant 0 : index
    %c0_15 = arith.constant 0 : index
    %49 = vector.load %arg4[%c4, %c0_14, %c0_15] : memref<9x32x1xf32, #tpu.memory_space<vmem>>, vector<1x32x1xf32>
    %50 = vector.shape_cast %49 : vector<1x32x1xf32> to vector<32x1xf32>
    %51 = vector.broadcast %50 : vector<32x1xf32> to vector<32x128xf32>
    %52 = vector.broadcast %48 : vector<1x128xf32> to vector<32x128xf32>
    %53 = arith.mulf %51, %52 : vector<32x128xf32>
    %54 = arith.addf %46, %53 : vector<32x128xf32>
    %55 = vector.extract_strided_slice %3 {offsets = [0, 1], sizes = [1, 127], strides = [1, 1]} : vector<1x128xf32> to vector<1x127xf32>
    %56 = vector.extract_strided_slice %3 {offsets = [0, 0], sizes = [1, 1], strides = [1, 1]} : vector<1x128xf32> to vector<1x1xf32>
    %57 = tpu.concatenate %55, %56 in 1 : vector<1x127xf32>, vector<1x1xf32> -> vector<1x128xf32>
    %58 = vector.extract_strided_slice %2 {offsets = [5, 0], sizes = [1, 128], strides = [1, 1]} : vector<9x128xf32> to vector<1x128xf32>
    %59 = arith.mulf %57, %58 : vector<1x128xf32>
    %c5 = arith.constant 5 : index
    %c0_16 = arith.constant 0 : index
    %c0_17 = arith.constant 0 : index
    %60 = vector.load %arg4[%c5, %c0_16, %c0_17] : memref<9x32x1xf32, #tpu.memory_space<vmem>>, vector<1x32x1xf32>
    %61 = vector.shape_cast %60 : vector<1x32x1xf32> to vector<32x1xf32>
    %62 = vector.broadcast %61 : vector<32x1xf32> to vector<32x128xf32>
    %63 = vector.broadcast %59 : vector<1x128xf32> to vector<32x128xf32>
    %64 = arith.mulf %62, %63 : vector<32x128xf32>
    %65 = arith.addf %54, %64 : vector<32x128xf32>
    %66 = vector.extract_strided_slice %3 {offsets = [0, 7], sizes = [1, 121], strides = [1, 1]} : vector<1x128xf32> to vector<1x121xf32>
    %67 = vector.extract_strided_slice %3 {offsets = [0, 0], sizes = [1, 7], strides = [1, 1]} : vector<1x128xf32> to vector<1x7xf32>
    %68 = tpu.concatenate %66, %67 in 1 : vector<1x121xf32>, vector<1x7xf32> -> vector<1x128xf32>
    %69 = vector.extract_strided_slice %2 {offsets = [6, 0], sizes = [1, 128], strides = [1, 1]} : vector<9x128xf32> to vector<1x128xf32>
    %70 = arith.mulf %68, %69 : vector<1x128xf32>
    %c6 = arith.constant 6 : index
    %c0_18 = arith.constant 0 : index
    %c0_19 = arith.constant 0 : index
    %71 = vector.load %arg4[%c6, %c0_18, %c0_19] : memref<9x32x1xf32, #tpu.memory_space<vmem>>, vector<1x32x1xf32>
    %72 = vector.shape_cast %71 : vector<1x32x1xf32> to vector<32x1xf32>
    %73 = vector.broadcast %72 : vector<32x1xf32> to vector<32x128xf32>
    %74 = vector.broadcast %70 : vector<1x128xf32> to vector<32x128xf32>
    %75 = arith.mulf %73, %74 : vector<32x128xf32>
    %76 = arith.addf %65, %75 : vector<32x128xf32>
    %77 = vector.extract_strided_slice %3 {offsets = [0, 8], sizes = [1, 120], strides = [1, 1]} : vector<1x128xf32> to vector<1x120xf32>
    %78 = vector.extract_strided_slice %3 {offsets = [0, 0], sizes = [1, 8], strides = [1, 1]} : vector<1x128xf32> to vector<1x8xf32>
    %79 = tpu.concatenate %77, %78 in 1 : vector<1x120xf32>, vector<1x8xf32> -> vector<1x128xf32>
    %80 = vector.extract_strided_slice %2 {offsets = [7, 0], sizes = [1, 128], strides = [1, 1]} : vector<9x128xf32> to vector<1x128xf32>
    %81 = arith.mulf %79, %80 : vector<1x128xf32>
    %c7 = arith.constant 7 : index
    %c0_20 = arith.constant 0 : index
    %c0_21 = arith.constant 0 : index
    %82 = vector.load %arg4[%c7, %c0_20, %c0_21] : memref<9x32x1xf32, #tpu.memory_space<vmem>>, vector<1x32x1xf32>
    %83 = vector.shape_cast %82 : vector<1x32x1xf32> to vector<32x1xf32>
    %84 = vector.broadcast %83 : vector<32x1xf32> to vector<32x128xf32>
    %85 = vector.broadcast %81 : vector<1x128xf32> to vector<32x128xf32>
    %86 = arith.mulf %84, %85 : vector<32x128xf32>
    %87 = arith.addf %76, %86 : vector<32x128xf32>
    %88 = vector.extract_strided_slice %3 {offsets = [0, 9], sizes = [1, 119], strides = [1, 1]} : vector<1x128xf32> to vector<1x119xf32>
    %89 = vector.extract_strided_slice %3 {offsets = [0, 0], sizes = [1, 9], strides = [1, 1]} : vector<1x128xf32> to vector<1x9xf32>
    %90 = tpu.concatenate %88, %89 in 1 : vector<1x119xf32>, vector<1x9xf32> -> vector<1x128xf32>
    %91 = vector.extract_strided_slice %2 {offsets = [8, 0], sizes = [1, 128], strides = [1, 1]} : vector<9x128xf32> to vector<1x128xf32>
    %92 = arith.mulf %90, %91 : vector<1x128xf32>
    %c8 = arith.constant 8 : index
    %c0_22 = arith.constant 0 : index
    %c0_23 = arith.constant 0 : index
    %93 = vector.load %arg4[%c8, %c0_22, %c0_23] : memref<9x32x1xf32, #tpu.memory_space<vmem>>, vector<1x32x1xf32>
    %94 = vector.shape_cast %93 : vector<1x32x1xf32> to vector<32x1xf32>
    %95 = vector.broadcast %94 : vector<32x1xf32> to vector<32x128xf32>
    %96 = vector.broadcast %92 : vector<1x128xf32> to vector<32x128xf32>
    %97 = arith.mulf %95, %96 : vector<32x128xf32>
    %98 = arith.addf %87, %97 : vector<32x128xf32>
    %c0_24 = arith.constant 0 : index
    %c0_25 = arith.constant 0 : index
    %99 = vector.load %arg5[%c0_24, %c0_25] : memref<32x1xf32, #tpu.memory_space<vmem>>, vector<32x1xf32>
    %100 = vector.broadcast %99 : vector<32x1xf32> to vector<32x128xf32>
    %101 = arith.addf %98, %100 : vector<32x128xf32>
    %c0_26 = arith.constant 0 : index
    %c0_27 = arith.constant 0 : index
    %c0_28 = arith.constant 0 : index
    %102 = vector.load %arg6[%c0_26, %c0_27, %c0_28] : memref<8x32x32xbf16, #tpu.memory_space<vmem>>, vector<1x32x32xbf16>
    %103 = vector.shape_cast %102 : vector<1x32x32xbf16> to vector<32x32xbf16>
    %104 = arith.truncf %101 : vector<32x128xf32> to vector<32x128xbf16>
    %cst = arith.constant dense<0.000000e+00> : vector<32x128xf32>
    %105 = tpu.matmul %103, %104, %cst {dimension_numbers = #tpu.dot_dimension_numbers<[1], [0], [0], [1], [0, 0, 1, 1], [], []>} : vector<32x32xbf16>, vector<32x128xbf16>, vector<32x128xf32> -> vector<32x128xf32>
    %c0_29 = arith.constant 0 : index
    %c0_30 = arith.constant 0 : index
    %c0_31 = arith.constant 0 : index
    %106 = vector.load %arg7[%c0_29, %c0_30, %c0_31] : memref<8x32x1xf32, #tpu.memory_space<vmem>>, vector<1x32x1xf32>
    %107 = vector.shape_cast %106 : vector<1x32x1xf32> to vector<32x1xf32>
    %108 = vector.broadcast %107 : vector<32x1xf32> to vector<32x128xf32>
    %109 = arith.addf %105, %108 : vector<32x128xf32>
    %c0_32 = arith.constant 0 : index
    %c0_33 = arith.constant 0 : index
    %c0_34 = arith.constant 0 : index
    %110 = vector.load %arg8[%c0_32, %c0_33, %c0_34] : memref<8x32x1xf32, #tpu.memory_space<vmem>>, vector<1x32x1xf32>
    %111 = vector.shape_cast %110 : vector<1x32x1xf32> to vector<32x1xf32>
    %c0_35 = arith.constant 0 : index
    %c0_36 = arith.constant 0 : index
    %c0_37 = arith.constant 0 : index
    %112 = vector.load %arg9[%c0_35, %c0_36, %c0_37] : memref<8x32x1xf32, #tpu.memory_space<vmem>>, vector<1x32x1xf32>
    %113 = vector.shape_cast %112 : vector<1x32x1xf32> to vector<32x1xf32>
    %cst_38 = arith.constant dense<0.000000e+00> : vector<32xf32>
    %114 = vector.multi_reduction <add>, %109, %cst_38 [1] : vector<32x128xf32> to vector<32xf32>
    %115 = vector.shape_cast %114 : vector<32xf32> to vector<32x1xf32>
    %cst_39 = arith.constant 1.280000e+02 : f32
    %116 = vector.broadcast %cst_39 : f32 to vector<32x1xf32>
    %117 = arith.divf %115, %116 : vector<32x1xf32>
    %118 = vector.broadcast %117 : vector<32x1xf32> to vector<32x128xf32>
    %119 = arith.subf %109, %118 : vector<32x128xf32>
    %120 = arith.mulf %119, %119 : vector<32x128xf32>
    %cst_40 = arith.constant dense<0.000000e+00> : vector<32xf32>
    %121 = vector.multi_reduction <add>, %120, %cst_40 [1] : vector<32x128xf32> to vector<32xf32>
    %122 = vector.shape_cast %121 : vector<32xf32> to vector<32x1xf32>
    %cst_41 = arith.constant 1.280000e+02 : f32
    %123 = vector.broadcast %cst_41 : f32 to vector<32x1xf32>
    %124 = arith.divf %122, %123 : vector<32x1xf32>
    %125 = vector.broadcast %117 : vector<32x1xf32> to vector<32x128xf32>
    %126 = arith.subf %109, %125 : vector<32x128xf32>
    %cst_42 = arith.constant 9.99999974E-6 : f32
    %127 = vector.broadcast %cst_42 : f32 to vector<32x1xf32>
    %128 = arith.addf %124, %127 : vector<32x1xf32>
    %129 = math.rsqrt %128 : vector<32x1xf32>
    %130 = vector.broadcast %129 : vector<32x1xf32> to vector<32x128xf32>
    %131 = arith.mulf %126, %130 : vector<32x128xf32>
    %132 = vector.broadcast %111 : vector<32x1xf32> to vector<32x128xf32>
    %133 = arith.mulf %131, %132 : vector<32x128xf32>
    %134 = vector.broadcast %113 : vector<32x1xf32> to vector<32x128xf32>
    %135 = arith.addf %133, %134 : vector<32x128xf32>
    %cst_43 = arith.constant 0.000000e+00 : f32
    %136 = vector.broadcast %cst_43 : f32 to vector<32x128xf32>
    %137 = arith.maximumf %135, %136 : vector<32x128xf32>
    %c0_44 = arith.constant 0 : index
    %c0_45 = arith.constant 0 : index
    %c0_46 = arith.constant 0 : index
    %138 = vector.load %arg11[%c0_44, %c0_45, %c0_46] : memref<8x32x1xf32, #tpu.memory_space<vmem>>, vector<1x32x1xf32>
    %139 = vector.shape_cast %138 : vector<1x32x1xf32> to vector<32x1xf32>
    %140 = vector.extract_strided_slice %137 {offsets = [0, 119], sizes = [32, 9], strides = [1, 1]} : vector<32x128xf32> to vector<32x9xf32>
    %141 = vector.extract_strided_slice %137 {offsets = [0, 0], sizes = [32, 119], strides = [1, 1]} : vector<32x128xf32> to vector<32x119xf32>
    %142 = tpu.concatenate %140, %141 in 1 : vector<32x9xf32>, vector<32x119xf32> -> vector<32x128xf32>
    %143 = arith.truncf %142 : vector<32x128xf32> to vector<32x128xbf16>
    %c0_47 = arith.constant 0 : index
    %c0_48 = arith.constant 0 : index
    %c0_49 = arith.constant 0 : index
    %c0_50 = arith.constant 0 : index
    %144 = vector.load %arg10[%c0_47, %c0_48, %c0_49, %c0_50] : memref<8x9x32x32xbf16, #tpu.memory_space<vmem>>, vector<1x1x32x32xbf16>
    %145 = vector.shape_cast %144 : vector<1x1x32x32xbf16> to vector<32x32xbf16>
    %cst_51 = arith.constant dense<0.000000e+00> : vector<32x128xf32>
    %146 = tpu.matmul %145, %143, %cst_51 {dimension_numbers = #tpu.dot_dimension_numbers<[1], [0], [0], [1], [0, 0, 1, 1], [], []>} : vector<32x32xbf16>, vector<32x128xbf16>, vector<32x128xf32> -> vector<32x128xf32>
    %147 = vector.extract_strided_slice %2 {offsets = [0, 0], sizes = [1, 128], strides = [1, 1]} : vector<9x128xf32> to vector<1x128xf32>
    %148 = vector.broadcast %147 : vector<1x128xf32> to vector<32x128xf32>
    %149 = arith.mulf %146, %148 : vector<32x128xf32>
    %150 = vector.extract_strided_slice %137 {offsets = [0, 120], sizes = [32, 8], strides = [1, 1]} : vector<32x128xf32> to vector<32x8xf32>
    %151 = vector.extract_strided_slice %137 {offsets = [0, 0], sizes = [32, 120], strides = [1, 1]} : vector<32x128xf32> to vector<32x120xf32>
    %152 = tpu.concatenate %150, %151 in 1 : vector<32x8xf32>, vector<32x120xf32> -> vector<32x128xf32>
    %153 = arith.truncf %152 : vector<32x128xf32> to vector<32x128xbf16>
    %c0_52 = arith.constant 0 : index
    %c1_53 = arith.constant 1 : index
    %c0_54 = arith.constant 0 : index
    %c0_55 = arith.constant 0 : index
    %154 = vector.load %arg10[%c0_52, %c1_53, %c0_54, %c0_55] : memref<8x9x32x32xbf16, #tpu.memory_space<vmem>>, vector<1x1x32x32xbf16>
    %155 = vector.shape_cast %154 : vector<1x1x32x32xbf16> to vector<32x32xbf16>
    %cst_56 = arith.constant dense<0.000000e+00> : vector<32x128xf32>
    %156 = tpu.matmul %155, %153, %cst_56 {dimension_numbers = #tpu.dot_dimension_numbers<[1], [0], [0], [1], [0, 0, 1, 1], [], []>} : vector<32x32xbf16>, vector<32x128xbf16>, vector<32x128xf32> -> vector<32x128xf32>
    %157 = vector.extract_strided_slice %2 {offsets = [1, 0], sizes = [1, 128], strides = [1, 1]} : vector<9x128xf32> to vector<1x128xf32>
    %158 = vector.broadcast %157 : vector<1x128xf32> to vector<32x128xf32>
    %159 = arith.mulf %156, %158 : vector<32x128xf32>
    %160 = arith.addf %149, %159 : vector<32x128xf32>
    %161 = vector.extract_strided_slice %137 {offsets = [0, 121], sizes = [32, 7], strides = [1, 1]} : vector<32x128xf32> to vector<32x7xf32>
    %162 = vector.extract_strided_slice %137 {offsets = [0, 0], sizes = [32, 121], strides = [1, 1]} : vector<32x128xf32> to vector<32x121xf32>
    %163 = tpu.concatenate %161, %162 in 1 : vector<32x7xf32>, vector<32x121xf32> -> vector<32x128xf32>
    %164 = arith.truncf %163 : vector<32x128xf32> to vector<32x128xbf16>
    %c0_57 = arith.constant 0 : index
    %c2_58 = arith.constant 2 : index
    %c0_59 = arith.constant 0 : index
    %c0_60 = arith.constant 0 : index
    %165 = vector.load %arg10[%c0_57, %c2_58, %c0_59, %c0_60] : memref<8x9x32x32xbf16, #tpu.memory_space<vmem>>, vector<1x1x32x32xbf16>
    %166 = vector.shape_cast %165 : vector<1x1x32x32xbf16> to vector<32x32xbf16>
    %cst_61 = arith.constant dense<0.000000e+00> : vector<32x128xf32>
    %167 = tpu.matmul %166, %164, %cst_61 {dimension_numbers = #tpu.dot_dimension_numbers<[1], [0], [0], [1], [0, 0, 1, 1], [], []>} : vector<32x32xbf16>, vector<32x128xbf16>, vector<32x128xf32> -> vector<32x128xf32>
    %168 = vector.extract_strided_slice %2 {offsets = [2, 0], sizes = [1, 128], strides = [1, 1]} : vector<9x128xf32> to vector<1x128xf32>
    %169 = vector.broadcast %168 : vector<1x128xf32> to vector<32x128xf32>
    %170 = arith.mulf %167, %169 : vector<32x128xf32>
    %171 = arith.addf %160, %170 : vector<32x128xf32>
    %172 = vector.extract_strided_slice %137 {offsets = [0, 127], sizes = [32, 1], strides = [1, 1]} : vector<32x128xf32> to vector<32x1xf32>
    %173 = vector.extract_strided_slice %137 {offsets = [0, 0], sizes = [32, 127], strides = [1, 1]} : vector<32x128xf32> to vector<32x127xf32>
    %174 = tpu.concatenate %172, %173 in 1 : vector<32x1xf32>, vector<32x127xf32> -> vector<32x128xf32>
    %175 = arith.truncf %174 : vector<32x128xf32> to vector<32x128xbf16>
    %c0_62 = arith.constant 0 : index
    %c3_63 = arith.constant 3 : index
    %c0_64 = arith.constant 0 : index
    %c0_65 = arith.constant 0 : index
    %176 = vector.load %arg10[%c0_62, %c3_63, %c0_64, %c0_65] : memref<8x9x32x32xbf16, #tpu.memory_space<vmem>>, vector<1x1x32x32xbf16>
    %177 = vector.shape_cast %176 : vector<1x1x32x32xbf16> to vector<32x32xbf16>
    %cst_66 = arith.constant dense<0.000000e+00> : vector<32x128xf32>
    %178 = tpu.matmul %177, %175, %cst_66 {dimension_numbers = #tpu.dot_dimension_numbers<[1], [0], [0], [1], [0, 0, 1, 1], [], []>} : vector<32x32xbf16>, vector<32x128xbf16>, vector<32x128xf32> -> vector<32x128xf32>
    %179 = vector.extract_strided_slice %2 {offsets = [3, 0], sizes = [1, 128], strides = [1, 1]} : vector<9x128xf32> to vector<1x128xf32>
    %180 = vector.broadcast %179 : vector<1x128xf32> to vector<32x128xf32>
    %181 = arith.mulf %178, %180 : vector<32x128xf32>
    %182 = arith.addf %171, %181 : vector<32x128xf32>
    %183 = arith.truncf %137 : vector<32x128xf32> to vector<32x128xbf16>
    %c0_67 = arith.constant 0 : index
    %c4_68 = arith.constant 4 : index
    %c0_69 = arith.constant 0 : index
    %c0_70 = arith.constant 0 : index
    %184 = vector.load %arg10[%c0_67, %c4_68, %c0_69, %c0_70] : memref<8x9x32x32xbf16, #tpu.memory_space<vmem>>, vector<1x1x32x32xbf16>
    %185 = vector.shape_cast %184 : vector<1x1x32x32xbf16> to vector<32x32xbf16>
    %cst_71 = arith.constant dense<0.000000e+00> : vector<32x128xf32>
    %186 = tpu.matmul %185, %183, %cst_71 {dimension_numbers = #tpu.dot_dimension_numbers<[1], [0], [0], [1], [0, 0, 1, 1], [], []>} : vector<32x32xbf16>, vector<32x128xbf16>, vector<32x128xf32> -> vector<32x128xf32>
    %187 = vector.extract_strided_slice %2 {offsets = [4, 0], sizes = [1, 128], strides = [1, 1]} : vector<9x128xf32> to vector<1x128xf32>
    %188 = vector.broadcast %187 : vector<1x128xf32> to vector<32x128xf32>
    %189 = arith.mulf %186, %188 : vector<32x128xf32>
    %190 = arith.addf %182, %189 : vector<32x128xf32>
    %191 = vector.extract_strided_slice %137 {offsets = [0, 1], sizes = [32, 127], strides = [1, 1]} : vector<32x128xf32> to vector<32x127xf32>
    %192 = vector.extract_strided_slice %137 {offsets = [0, 0], sizes = [32, 1], strides = [1, 1]} : vector<32x128xf32> to vector<32x1xf32>
    %193 = tpu.concatenate %191, %192 in 1 : vector<32x127xf32>, vector<32x1xf32> -> vector<32x128xf32>
    %194 = arith.truncf %193 : vector<32x128xf32> to vector<32x128xbf16>
    %c0_72 = arith.constant 0 : index
    %c5_73 = arith.constant 5 : index
    %c0_74 = arith.constant 0 : index
    %c0_75 = arith.constant 0 : index
    %195 = vector.load %arg10[%c0_72, %c5_73, %c0_74, %c0_75] : memref<8x9x32x32xbf16, #tpu.memory_space<vmem>>, vector<1x1x32x32xbf16>
    %196 = vector.shape_cast %195 : vector<1x1x32x32xbf16> to vector<32x32xbf16>
    %cst_76 = arith.constant dense<0.000000e+00> : vector<32x128xf32>
    %197 = tpu.matmul %196, %194, %cst_76 {dimension_numbers = #tpu.dot_dimension_numbers<[1], [0], [0], [1], [0, 0, 1, 1], [], []>} : vector<32x32xbf16>, vector<32x128xbf16>, vector<32x128xf32> -> vector<32x128xf32>
    %198 = vector.extract_strided_slice %2 {offsets = [5, 0], sizes = [1, 128], strides = [1, 1]} : vector<9x128xf32> to vector<1x128xf32>
    %199 = vector.broadcast %198 : vector<1x128xf32> to vector<32x128xf32>
    %200 = arith.mulf %197, %199 : vector<32x128xf32>
    %201 = arith.addf %190, %200 : vector<32x128xf32>
    %202 = vector.extract_strided_slice %137 {offsets = [0, 7], sizes = [32, 121], strides = [1, 1]} : vector<32x128xf32> to vector<32x121xf32>
    %203 = vector.extract_strided_slice %137 {offsets = [0, 0], sizes = [32, 7], strides = [1, 1]} : vector<32x128xf32> to vector<32x7xf32>
    %204 = tpu.concatenate %202, %203 in 1 : vector<32x121xf32>, vector<32x7xf32> -> vector<32x128xf32>
    %205 = arith.truncf %204 : vector<32x128xf32> to vector<32x128xbf16>
    %c0_77 = arith.constant 0 : index
    %c6_78 = arith.constant 6 : index
    %c0_79 = arith.constant 0 : index
    %c0_80 = arith.constant 0 : index
    %206 = vector.load %arg10[%c0_77, %c6_78, %c0_79, %c0_80] : memref<8x9x32x32xbf16, #tpu.memory_space<vmem>>, vector<1x1x32x32xbf16>
    %207 = vector.shape_cast %206 : vector<1x1x32x32xbf16> to vector<32x32xbf16>
    %cst_81 = arith.constant dense<0.000000e+00> : vector<32x128xf32>
    %208 = tpu.matmul %207, %205, %cst_81 {dimension_numbers = #tpu.dot_dimension_numbers<[1], [0], [0], [1], [0, 0, 1, 1], [], []>} : vector<32x32xbf16>, vector<32x128xbf16>, vector<32x128xf32> -> vector<32x128xf32>
    %209 = vector.extract_strided_slice %2 {offsets = [6, 0], sizes = [1, 128], strides = [1, 1]} : vector<9x128xf32> to vector<1x128xf32>
    %210 = vector.broadcast %209 : vector<1x128xf32> to vector<32x128xf32>
    %211 = arith.mulf %208, %210 : vector<32x128xf32>
    %212 = arith.addf %201, %211 : vector<32x128xf32>
    %213 = vector.extract_strided_slice %137 {offsets = [0, 8], sizes = [32, 120], strides = [1, 1]} : vector<32x128xf32> to vector<32x120xf32>
    %214 = vector.extract_strided_slice %137 {offsets = [0, 0], sizes = [32, 8], strides = [1, 1]} : vector<32x128xf32> to vector<32x8xf32>
    %215 = tpu.concatenate %213, %214 in 1 : vector<32x120xf32>, vector<32x8xf32> -> vector<32x128xf32>
    %216 = arith.truncf %215 : vector<32x128xf32> to vector<32x128xbf16>
    %c0_82 = arith.constant 0 : index
    %c7_83 = arith.constant 7 : index
    %c0_84 = arith.constant 0 : index
    %c0_85 = arith.constant 0 : index
    %217 = vector.load %arg10[%c0_82, %c7_83, %c0_84, %c0_85] : memref<8x9x32x32xbf16, #tpu.memory_space<vmem>>, vector<1x1x32x32xbf16>
    %218 = vector.shape_cast %217 : vector<1x1x32x32xbf16> to vector<32x32xbf16>
    %cst_86 = arith.constant dense<0.000000e+00> : vector<32x128xf32>
    %219 = tpu.matmul %218, %216, %cst_86 {dimension_numbers = #tpu.dot_dimension_numbers<[1], [0], [0], [1], [0, 0, 1, 1], [], []>} : vector<32x32xbf16>, vector<32x128xbf16>, vector<32x128xf32> -> vector<32x128xf32>
    %220 = vector.extract_strided_slice %2 {offsets = [7, 0], sizes = [1, 128], strides = [1, 1]} : vector<9x128xf32> to vector<1x128xf32>
    %221 = vector.broadcast %220 : vector<1x128xf32> to vector<32x128xf32>
    %222 = arith.mulf %219, %221 : vector<32x128xf32>
    %223 = arith.addf %212, %222 : vector<32x128xf32>
    %224 = vector.extract_strided_slice %137 {offsets = [0, 9], sizes = [32, 119], strides = [1, 1]} : vector<32x128xf32> to vector<32x119xf32>
    %225 = vector.extract_strided_slice %137 {offsets = [0, 0], sizes = [32, 9], strides = [1, 1]} : vector<32x128xf32> to vector<32x9xf32>
    %226 = tpu.concatenate %224, %225 in 1 : vector<32x119xf32>, vector<32x9xf32> -> vector<32x128xf32>
    %227 = arith.truncf %226 : vector<32x128xf32> to vector<32x128xbf16>
    %c0_87 = arith.constant 0 : index
    %c8_88 = arith.constant 8 : index
    %c0_89 = arith.constant 0 : index
    %c0_90 = arith.constant 0 : index
    %228 = vector.load %arg10[%c0_87, %c8_88, %c0_89, %c0_90] : memref<8x9x32x32xbf16, #tpu.memory_space<vmem>>, vector<1x1x32x32xbf16>
    %229 = vector.shape_cast %228 : vector<1x1x32x32xbf16> to vector<32x32xbf16>
    %cst_91 = arith.constant dense<0.000000e+00> : vector<32x128xf32>
    %230 = tpu.matmul %229, %227, %cst_91 {dimension_numbers = #tpu.dot_dimension_numbers<[1], [0], [0], [1], [0, 0, 1, 1], [], []>} : vector<32x32xbf16>, vector<32x128xbf16>, vector<32x128xf32> -> vector<32x128xf32>
    %231 = vector.extract_strided_slice %2 {offsets = [8, 0], sizes = [1, 128], strides = [1, 1]} : vector<9x128xf32> to vector<1x128xf32>
    %232 = vector.broadcast %231 : vector<1x128xf32> to vector<32x128xf32>
    %233 = arith.mulf %230, %232 : vector<32x128xf32>
    %234 = arith.addf %223, %233 : vector<32x128xf32>
    %235 = vector.broadcast %139 : vector<32x1xf32> to vector<32x128xf32>
    %236 = arith.addf %234, %235 : vector<32x128xf32>
    %c0_92 = arith.constant 0 : index
    %c0_93 = arith.constant 0 : index
    %c0_94 = arith.constant 0 : index
    %237 = vector.load %arg12[%c0_92, %c0_93, %c0_94] : memref<8x32x1xf32, #tpu.memory_space<vmem>>, vector<1x32x1xf32>
    %238 = vector.shape_cast %237 : vector<1x32x1xf32> to vector<32x1xf32>
    %c0_95 = arith.constant 0 : index
    %c0_96 = arith.constant 0 : index
    %c0_97 = arith.constant 0 : index
    %239 = vector.load %arg13[%c0_95, %c0_96, %c0_97] : memref<8x32x1xf32, #tpu.memory_space<vmem>>, vector<1x32x1xf32>
    %240 = vector.shape_cast %239 : vector<1x32x1xf32> to vector<32x1xf32>
    %cst_98 = arith.constant dense<0.000000e+00> : vector<32xf32>
    %241 = vector.multi_reduction <add>, %236, %cst_98 [1] : vector<32x128xf32> to vector<32xf32>
    %242 = vector.shape_cast %241 : vector<32xf32> to vector<32x1xf32>
    %cst_99 = arith.constant 1.280000e+02 : f32
    %243 = vector.broadcast %cst_99 : f32 to vector<32x1xf32>
    %244 = arith.divf %242, %243 : vector<32x1xf32>
    %245 = vector.broadcast %244 : vector<32x1xf32> to vector<32x128xf32>
    %246 = arith.subf %236, %245 : vector<32x128xf32>
    %247 = arith.mulf %246, %246 : vector<32x128xf32>
    %cst_100 = arith.constant dense<0.000000e+00> : vector<32xf32>
    %248 = vector.multi_reduction <add>, %247, %cst_100 [1] : vector<32x128xf32> to vector<32xf32>
    %249 = vector.shape_cast %248 : vector<32xf32> to vector<32x1xf32>
    %cst_101 = arith.constant 1.280000e+02 : f32
    %250 = vector.broadcast %cst_101 : f32 to vector<32x1xf32>
    %251 = arith.divf %249, %250 : vector<32x1xf32>
    %252 = vector.broadcast %244 : vector<32x1xf32> to vector<32x128xf32>
    %253 = arith.subf %236, %252 : vector<32x128xf32>
    %cst_102 = arith.constant 9.99999974E-6 : f32
    %254 = vector.broadcast %cst_102 : f32 to vector<32x1xf32>
    %255 = arith.addf %251, %254 : vector<32x1xf32>
    %256 = math.rsqrt %255 : vector<32x1xf32>
    %257 = vector.broadcast %256 : vector<32x1xf32> to vector<32x128xf32>
    %258 = arith.mulf %253, %257 : vector<32x128xf32>
    %259 = vector.broadcast %238 : vector<32x1xf32> to vector<32x128xf32>
    %260 = arith.mulf %258, %259 : vector<32x128xf32>
    %261 = vector.broadcast %240 : vector<32x1xf32> to vector<32x128xf32>
    %262 = arith.addf %260, %261 : vector<32x128xf32>
    %cst_103 = arith.constant 0.000000e+00 : f32
    %263 = vector.broadcast %cst_103 : f32 to vector<32x128xf32>
    %264 = arith.maximumf %262, %263 : vector<32x128xf32>
    %c0_104 = arith.constant 0 : index
    %c0_105 = arith.constant 0 : index
    %c0_106 = arith.constant 0 : index
    %265 = vector.load %arg14[%c0_104, %c0_105, %c0_106] : memref<8x32x32xbf16, #tpu.memory_space<vmem>>, vector<1x32x32xbf16>
    %266 = vector.shape_cast %265 : vector<1x32x32xbf16> to vector<32x32xbf16>
    %267 = arith.truncf %264 : vector<32x128xf32> to vector<32x128xbf16>
    %cst_107 = arith.constant dense<0.000000e+00> : vector<32x128xf32>
    %268 = tpu.matmul %266, %267, %cst_107 {dimension_numbers = #tpu.dot_dimension_numbers<[1], [0], [0], [1], [0, 0, 1, 1], [], []>} : vector<32x32xbf16>, vector<32x128xbf16>, vector<32x128xf32> -> vector<32x128xf32>
    %c0_108 = arith.constant 0 : index
    %c0_109 = arith.constant 0 : index
    %c0_110 = arith.constant 0 : index
    %269 = vector.load %arg15[%c0_108, %c0_109, %c0_110] : memref<8x32x1xf32, #tpu.memory_space<vmem>>, vector<1x32x1xf32>
    %270 = vector.shape_cast %269 : vector<1x32x1xf32> to vector<32x1xf32>
    %271 = vector.broadcast %270 : vector<32x1xf32> to vector<32x128xf32>
    %272 = arith.addf %268, %271 : vector<32x128xf32>
    %273 = arith.addf %272, %101 : vector<32x128xf32>
    %c1_111 = arith.constant 1 : index
    %c0_112 = arith.constant 0 : index
    %c0_113 = arith.constant 0 : index
    %274 = vector.load %arg6[%c1_111, %c0_112, %c0_113] : memref<8x32x32xbf16, #tpu.memory_space<vmem>>, vector<1x32x32xbf16>
    %275 = vector.shape_cast %274 : vector<1x32x32xbf16> to vector<32x32xbf16>
    %276 = arith.truncf %273 : vector<32x128xf32> to vector<32x128xbf16>
    %cst_114 = arith.constant dense<0.000000e+00> : vector<32x128xf32>
    %277 = tpu.matmul %275, %276, %cst_114 {dimension_numbers = #tpu.dot_dimension_numbers<[1], [0], [0], [1], [0, 0, 1, 1], [], []>} : vector<32x32xbf16>, vector<32x128xbf16>, vector<32x128xf32> -> vector<32x128xf32>
    %c1_115 = arith.constant 1 : index
    %c0_116 = arith.constant 0 : index
    %c0_117 = arith.constant 0 : index
    %278 = vector.load %arg7[%c1_115, %c0_116, %c0_117] : memref<8x32x1xf32, #tpu.memory_space<vmem>>, vector<1x32x1xf32>
    %279 = vector.shape_cast %278 : vector<1x32x1xf32> to vector<32x1xf32>
    %280 = vector.broadcast %279 : vector<32x1xf32> to vector<32x128xf32>
    %281 = arith.addf %277, %280 : vector<32x128xf32>
    %c1_118 = arith.constant 1 : index
    %c0_119 = arith.constant 0 : index
    %c0_120 = arith.constant 0 : index
    %282 = vector.load %arg8[%c1_118, %c0_119, %c0_120] : memref<8x32x1xf32, #tpu.memory_space<vmem>>, vector<1x32x1xf32>
    %283 = vector.shape_cast %282 : vector<1x32x1xf32> to vector<32x1xf32>
    %c1_121 = arith.constant 1 : index
    %c0_122 = arith.constant 0 : index
    %c0_123 = arith.constant 0 : index
    %284 = vector.load %arg9[%c1_121, %c0_122, %c0_123] : memref<8x32x1xf32, #tpu.memory_space<vmem>>, vector<1x32x1xf32>
    %285 = vector.shape_cast %284 : vector<1x32x1xf32> to vector<32x1xf32>
    %cst_124 = arith.constant dense<0.000000e+00> : vector<32xf32>
    %286 = vector.multi_reduction <add>, %281, %cst_124 [1] : vector<32x128xf32> to vector<32xf32>
    %287 = vector.shape_cast %286 : vector<32xf32> to vector<32x1xf32>
    %cst_125 = arith.constant 1.280000e+02 : f32
    %288 = vector.broadcast %cst_125 : f32 to vector<32x1xf32>
    %289 = arith.divf %287, %288 : vector<32x1xf32>
    %290 = vector.broadcast %289 : vector<32x1xf32> to vector<32x128xf32>
    %291 = arith.subf %281, %290 : vector<32x128xf32>
    %292 = arith.mulf %291, %291 : vector<32x128xf32>
    %cst_126 = arith.constant dense<0.000000e+00> : vector<32xf32>
    %293 = vector.multi_reduction <add>, %292, %cst_126 [1] : vector<32x128xf32> to vector<32xf32>
    %294 = vector.shape_cast %293 : vector<32xf32> to vector<32x1xf32>
    %cst_127 = arith.constant 1.280000e+02 : f32
    %295 = vector.broadcast %cst_127 : f32 to vector<32x1xf32>
    %296 = arith.divf %294, %295 : vector<32x1xf32>
    %297 = vector.broadcast %289 : vector<32x1xf32> to vector<32x128xf32>
    %298 = arith.subf %281, %297 : vector<32x128xf32>
    %cst_128 = arith.constant 9.99999974E-6 : f32
    %299 = vector.broadcast %cst_128 : f32 to vector<32x1xf32>
    %300 = arith.addf %296, %299 : vector<32x1xf32>
    %301 = math.rsqrt %300 : vector<32x1xf32>
    %302 = vector.broadcast %301 : vector<32x1xf32> to vector<32x128xf32>
    %303 = arith.mulf %298, %302 : vector<32x128xf32>
    %304 = vector.broadcast %283 : vector<32x1xf32> to vector<32x128xf32>
    %305 = arith.mulf %303, %304 : vector<32x128xf32>
    %306 = vector.broadcast %285 : vector<32x1xf32> to vector<32x128xf32>
    %307 = arith.addf %305, %306 : vector<32x128xf32>
    %cst_129 = arith.constant 0.000000e+00 : f32
    %308 = vector.broadcast %cst_129 : f32 to vector<32x128xf32>
    %309 = arith.maximumf %307, %308 : vector<32x128xf32>
    %c1_130 = arith.constant 1 : index
    %c0_131 = arith.constant 0 : index
    %c0_132 = arith.constant 0 : index
    %310 = vector.load %arg11[%c1_130, %c0_131, %c0_132] : memref<8x32x1xf32, #tpu.memory_space<vmem>>, vector<1x32x1xf32>
    %311 = vector.shape_cast %310 : vector<1x32x1xf32> to vector<32x1xf32>
    %312 = vector.extract_strided_slice %309 {offsets = [0, 119], sizes = [32, 9], strides = [1, 1]} : vector<32x128xf32> to vector<32x9xf32>
    %313 = vector.extract_strided_slice %309 {offsets = [0, 0], sizes = [32, 119], strides = [1, 1]} : vector<32x128xf32> to vector<32x119xf32>
    %314 = tpu.concatenate %312, %313 in 1 : vector<32x9xf32>, vector<32x119xf32> -> vector<32x128xf32>
    %315 = arith.truncf %314 : vector<32x128xf32> to vector<32x128xbf16>
    %c1_133 = arith.constant 1 : index
    %c0_134 = arith.constant 0 : index
    %c0_135 = arith.constant 0 : index
    %c0_136 = arith.constant 0 : index
    %316 = vector.load %arg10[%c1_133, %c0_134, %c0_135, %c0_136] : memref<8x9x32x32xbf16, #tpu.memory_space<vmem>>, vector<1x1x32x32xbf16>
    %317 = vector.shape_cast %316 : vector<1x1x32x32xbf16> to vector<32x32xbf16>
    %cst_137 = arith.constant dense<0.000000e+00> : vector<32x128xf32>
    %318 = tpu.matmul %317, %315, %cst_137 {dimension_numbers = #tpu.dot_dimension_numbers<[1], [0], [0], [1], [0, 0, 1, 1], [], []>} : vector<32x32xbf16>, vector<32x128xbf16>, vector<32x128xf32> -> vector<32x128xf32>
    %319 = vector.extract_strided_slice %2 {offsets = [0, 0], sizes = [1, 128], strides = [1, 1]} : vector<9x128xf32> to vector<1x128xf32>
    %320 = vector.broadcast %319 : vector<1x128xf32> to vector<32x128xf32>
    %321 = arith.mulf %318, %320 : vector<32x128xf32>
    %322 = vector.extract_strided_slice %309 {offsets = [0, 120], sizes = [32, 8], strides = [1, 1]} : vector<32x128xf32> to vector<32x8xf32>
    %323 = vector.extract_strided_slice %309 {offsets = [0, 0], sizes = [32, 120], strides = [1, 1]} : vector<32x128xf32> to vector<32x120xf32>
    %324 = tpu.concatenate %322, %323 in 1 : vector<32x8xf32>, vector<32x120xf32> -> vector<32x128xf32>
    %325 = arith.truncf %324 : vector<32x128xf32> to vector<32x128xbf16>
    %c1_138 = arith.constant 1 : index
    %c1_139 = arith.constant 1 : index
    %c0_140 = arith.constant 0 : index
    %c0_141 = arith.constant 0 : index
    %326 = vector.load %arg10[%c1_138, %c1_139, %c0_140, %c0_141] : memref<8x9x32x32xbf16, #tpu.memory_space<vmem>>, vector<1x1x32x32xbf16>
    %327 = vector.shape_cast %326 : vector<1x1x32x32xbf16> to vector<32x32xbf16>
    %cst_142 = arith.constant dense<0.000000e+00> : vector<32x128xf32>
    %328 = tpu.matmul %327, %325, %cst_142 {dimension_numbers = #tpu.dot_dimension_numbers<[1], [0], [0], [1], [0, 0, 1, 1], [], []>} : vector<32x32xbf16>, vector<32x128xbf16>, vector<32x128xf32> -> vector<32x128xf32>
    %329 = vector.extract_strided_slice %2 {offsets = [1, 0], sizes = [1, 128], strides = [1, 1]} : vector<9x128xf32> to vector<1x128xf32>
    %330 = vector.broadcast %329 : vector<1x128xf32> to vector<32x128xf32>
    %331 = arith.mulf %328, %330 : vector<32x128xf32>
    %332 = arith.addf %321, %331 : vector<32x128xf32>
    %333 = vector.extract_strided_slice %309 {offsets = [0, 121], sizes = [32, 7], strides = [1, 1]} : vector<32x128xf32> to vector<32x7xf32>
    %334 = vector.extract_strided_slice %309 {offsets = [0, 0], sizes = [32, 121], strides = [1, 1]} : vector<32x128xf32> to vector<32x121xf32>
    %335 = tpu.concatenate %333, %334 in 1 : vector<32x7xf32>, vector<32x121xf32> -> vector<32x128xf32>
    %336 = arith.truncf %335 : vector<32x128xf32> to vector<32x128xbf16>
    %c1_143 = arith.constant 1 : index
    %c2_144 = arith.constant 2 : index
    %c0_145 = arith.constant 0 : index
    %c0_146 = arith.constant 0 : index
    %337 = vector.load %arg10[%c1_143, %c2_144, %c0_145, %c0_146] : memref<8x9x32x32xbf16, #tpu.memory_space<vmem>>, vector<1x1x32x32xbf16>
    %338 = vector.shape_cast %337 : vector<1x1x32x32xbf16> to vector<32x32xbf16>
    %cst_147 = arith.constant dense<0.000000e+00> : vector<32x128xf32>
    %339 = tpu.matmul %338, %336, %cst_147 {dimension_numbers = #tpu.dot_dimension_numbers<[1], [0], [0], [1], [0, 0, 1, 1], [], []>} : vector<32x32xbf16>, vector<32x128xbf16>, vector<32x128xf32> -> vector<32x128xf32>
    %340 = vector.extract_strided_slice %2 {offsets = [2, 0], sizes = [1, 128], strides = [1, 1]} : vector<9x128xf32> to vector<1x128xf32>
    %341 = vector.broadcast %340 : vector<1x128xf32> to vector<32x128xf32>
    %342 = arith.mulf %339, %341 : vector<32x128xf32>
    %343 = arith.addf %332, %342 : vector<32x128xf32>
    %344 = vector.extract_strided_slice %309 {offsets = [0, 127], sizes = [32, 1], strides = [1, 1]} : vector<32x128xf32> to vector<32x1xf32>
    %345 = vector.extract_strided_slice %309 {offsets = [0, 0], sizes = [32, 127], strides = [1, 1]} : vector<32x128xf32> to vector<32x127xf32>
    %346 = tpu.concatenate %344, %345 in 1 : vector<32x1xf32>, vector<32x127xf32> -> vector<32x128xf32>
    %347 = arith.truncf %346 : vector<32x128xf32> to vector<32x128xbf16>
    %c1_148 = arith.constant 1 : index
    %c3_149 = arith.constant 3 : index
    %c0_150 = arith.constant 0 : index
    %c0_151 = arith.constant 0 : index
    %348 = vector.load %arg10[%c1_148, %c3_149, %c0_150, %c0_151] : memref<8x9x32x32xbf16, #tpu.memory_space<vmem>>, vector<1x1x32x32xbf16>
    %349 = vector.shape_cast %348 : vector<1x1x32x32xbf16> to vector<32x32xbf16>
    %cst_152 = arith.constant dense<0.000000e+00> : vector<32x128xf32>
    %350 = tpu.matmul %349, %347, %cst_152 {dimension_numbers = #tpu.dot_dimension_numbers<[1], [0], [0], [1], [0, 0, 1, 1], [], []>} : vector<32x32xbf16>, vector<32x128xbf16>, vector<32x128xf32> -> vector<32x128xf32>
    %351 = vector.extract_strided_slice %2 {offsets = [3, 0], sizes = [1, 128], strides = [1, 1]} : vector<9x128xf32> to vector<1x128xf32>
    %352 = vector.broadcast %351 : vector<1x128xf32> to vector<32x128xf32>
    %353 = arith.mulf %350, %352 : vector<32x128xf32>
    %354 = arith.addf %343, %353 : vector<32x128xf32>
    %355 = arith.truncf %309 : vector<32x128xf32> to vector<32x128xbf16>
    %c1_153 = arith.constant 1 : index
    %c4_154 = arith.constant 4 : index
    %c0_155 = arith.constant 0 : index
    %c0_156 = arith.constant 0 : index
    %356 = vector.load %arg10[%c1_153, %c4_154, %c0_155, %c0_156] : memref<8x9x32x32xbf16, #tpu.memory_space<vmem>>, vector<1x1x32x32xbf16>
    %357 = vector.shape_cast %356 : vector<1x1x32x32xbf16> to vector<32x32xbf16>
    %cst_157 = arith.constant dense<0.000000e+00> : vector<32x128xf32>
    %358 = tpu.matmul %357, %355, %cst_157 {dimension_numbers = #tpu.dot_dimension_numbers<[1], [0], [0], [1], [0, 0, 1, 1], [], []>} : vector<32x32xbf16>, vector<32x128xbf16>, vector<32x128xf32> -> vector<32x128xf32>
    %359 = vector.extract_strided_slice %2 {offsets = [4, 0], sizes = [1, 128], strides = [1, 1]} : vector<9x128xf32> to vector<1x128xf32>
    %360 = vector.broadcast %359 : vector<1x128xf32> to vector<32x128xf32>
    %361 = arith.mulf %358, %360 : vector<32x128xf32>
    %362 = arith.addf %354, %361 : vector<32x128xf32>
    %363 = vector.extract_strided_slice %309 {offsets = [0, 1], sizes = [32, 127], strides = [1, 1]} : vector<32x128xf32> to vector<32x127xf32>
    %364 = vector.extract_strided_slice %309 {offsets = [0, 0], sizes = [32, 1], strides = [1, 1]} : vector<32x128xf32> to vector<32x1xf32>
    %365 = tpu.concatenate %363, %364 in 1 : vector<32x127xf32>, vector<32x1xf32> -> vector<32x128xf32>
    %366 = arith.truncf %365 : vector<32x128xf32> to vector<32x128xbf16>
    %c1_158 = arith.constant 1 : index
    %c5_159 = arith.constant 5 : index
    %c0_160 = arith.constant 0 : index
    %c0_161 = arith.constant 0 : index
    %367 = vector.load %arg10[%c1_158, %c5_159, %c0_160, %c0_161] : memref<8x9x32x32xbf16, #tpu.memory_space<vmem>>, vector<1x1x32x32xbf16>
    %368 = vector.shape_cast %367 : vector<1x1x32x32xbf16> to vector<32x32xbf16>
    %cst_162 = arith.constant dense<0.000000e+00> : vector<32x128xf32>
    %369 = tpu.matmul %368, %366, %cst_162 {dimension_numbers = #tpu.dot_dimension_numbers<[1], [0], [0], [1], [0, 0, 1, 1], [], []>} : vector<32x32xbf16>, vector<32x128xbf16>, vector<32x128xf32> -> vector<32x128xf32>
    %370 = vector.extract_strided_slice %2 {offsets = [5, 0], sizes = [1, 128], strides = [1, 1]} : vector<9x128xf32> to vector<1x128xf32>
    %371 = vector.broadcast %370 : vector<1x128xf32> to vector<32x128xf32>
    %372 = arith.mulf %369, %371 : vector<32x128xf32>
    %373 = arith.addf %362, %372 : vector<32x128xf32>
    %374 = vector.extract_strided_slice %309 {offsets = [0, 7], sizes = [32, 121], strides = [1, 1]} : vector<32x128xf32> to vector<32x121xf32>
    %375 = vector.extract_strided_slice %309 {offsets = [0, 0], sizes = [32, 7], strides = [1, 1]} : vector<32x128xf32> to vector<32x7xf32>
    %376 = tpu.concatenate %374, %375 in 1 : vector<32x121xf32>, vector<32x7xf32> -> vector<32x128xf32>
    %377 = arith.truncf %376 : vector<32x128xf32> to vector<32x128xbf16>
    %c1_163 = arith.constant 1 : index
    %c6_164 = arith.constant 6 : index
    %c0_165 = arith.constant 0 : index
    %c0_166 = arith.constant 0 : index
    %378 = vector.load %arg10[%c1_163, %c6_164, %c0_165, %c0_166] : memref<8x9x32x32xbf16, #tpu.memory_space<vmem>>, vector<1x1x32x32xbf16>
    %379 = vector.shape_cast %378 : vector<1x1x32x32xbf16> to vector<32x32xbf16>
    %cst_167 = arith.constant dense<0.000000e+00> : vector<32x128xf32>
    %380 = tpu.matmul %379, %377, %cst_167 {dimension_numbers = #tpu.dot_dimension_numbers<[1], [0], [0], [1], [0, 0, 1, 1], [], []>} : vector<32x32xbf16>, vector<32x128xbf16>, vector<32x128xf32> -> vector<32x128xf32>
    %381 = vector.extract_strided_slice %2 {offsets = [6, 0], sizes = [1, 128], strides = [1, 1]} : vector<9x128xf32> to vector<1x128xf32>
    %382 = vector.broadcast %381 : vector<1x128xf32> to vector<32x128xf32>
    %383 = arith.mulf %380, %382 : vector<32x128xf32>
    %384 = arith.addf %373, %383 : vector<32x128xf32>
    %385 = vector.extract_strided_slice %309 {offsets = [0, 8], sizes = [32, 120], strides = [1, 1]} : vector<32x128xf32> to vector<32x120xf32>
    %386 = vector.extract_strided_slice %309 {offsets = [0, 0], sizes = [32, 8], strides = [1, 1]} : vector<32x128xf32> to vector<32x8xf32>
    %387 = tpu.concatenate %385, %386 in 1 : vector<32x120xf32>, vector<32x8xf32> -> vector<32x128xf32>
    %388 = arith.truncf %387 : vector<32x128xf32> to vector<32x128xbf16>
    %c1_168 = arith.constant 1 : index
    %c7_169 = arith.constant 7 : index
    %c0_170 = arith.constant 0 : index
    %c0_171 = arith.constant 0 : index
    %389 = vector.load %arg10[%c1_168, %c7_169, %c0_170, %c0_171] : memref<8x9x32x32xbf16, #tpu.memory_space<vmem>>, vector<1x1x32x32xbf16>
    %390 = vector.shape_cast %389 : vector<1x1x32x32xbf16> to vector<32x32xbf16>
    %cst_172 = arith.constant dense<0.000000e+00> : vector<32x128xf32>
    %391 = tpu.matmul %390, %388, %cst_172 {dimension_numbers = #tpu.dot_dimension_numbers<[1], [0], [0], [1], [0, 0, 1, 1], [], []>} : vector<32x32xbf16>, vector<32x128xbf16>, vector<32x128xf32> -> vector<32x128xf32>
    %392 = vector.extract_strided_slice %2 {offsets = [7, 0], sizes = [1, 128], strides = [1, 1]} : vector<9x128xf32> to vector<1x128xf32>
    %393 = vector.broadcast %392 : vector<1x128xf32> to vector<32x128xf32>
    %394 = arith.mulf %391, %393 : vector<32x128xf32>
    %395 = arith.addf %384, %394 : vector<32x128xf32>
    %396 = vector.extract_strided_slice %309 {offsets = [0, 9], sizes = [32, 119], strides = [1, 1]} : vector<32x128xf32> to vector<32x119xf32>
    %397 = vector.extract_strided_slice %309 {offsets = [0, 0], sizes = [32, 9], strides = [1, 1]} : vector<32x128xf32> to vector<32x9xf32>
    %398 = tpu.concatenate %396, %397 in 1 : vector<32x119xf32>, vector<32x9xf32> -> vector<32x128xf32>
    %399 = arith.truncf %398 : vector<32x128xf32> to vector<32x128xbf16>
    %c1_173 = arith.constant 1 : index
    %c8_174 = arith.constant 8 : index
    %c0_175 = arith.constant 0 : index
    %c0_176 = arith.constant 0 : index
    %400 = vector.load %arg10[%c1_173, %c8_174, %c0_175, %c0_176] : memref<8x9x32x32xbf16, #tpu.memory_space<vmem>>, vector<1x1x32x32xbf16>
    %401 = vector.shape_cast %400 : vector<1x1x32x32xbf16> to vector<32x32xbf16>
    %cst_177 = arith.constant dense<0.000000e+00> : vector<32x128xf32>
    %402 = tpu.matmul %401, %399, %cst_177 {dimension_numbers = #tpu.dot_dimension_numbers<[1], [0], [0], [1], [0, 0, 1, 1], [], []>} : vector<32x32xbf16>, vector<32x128xbf16>, vector<32x128xf32> -> vector<32x128xf32>
    %403 = vector.extract_strided_slice %2 {offsets = [8, 0], sizes = [1, 128], strides = [1, 1]} : vector<9x128xf32> to vector<1x128xf32>
    %404 = vector.broadcast %403 : vector<1x128xf32> to vector<32x128xf32>
    %405 = arith.mulf %402, %404 : vector<32x128xf32>
    %406 = arith.addf %395, %405 : vector<32x128xf32>
    %407 = vector.broadcast %311 : vector<32x1xf32> to vector<32x128xf32>
    %408 = arith.addf %406, %407 : vector<32x128xf32>
    %c1_178 = arith.constant 1 : index
    %c0_179 = arith.constant 0 : index
    %c0_180 = arith.constant 0 : index
    %409 = vector.load %arg12[%c1_178, %c0_179, %c0_180] : memref<8x32x1xf32, #tpu.memory_space<vmem>>, vector<1x32x1xf32>
    %410 = vector.shape_cast %409 : vector<1x32x1xf32> to vector<32x1xf32>
    %c1_181 = arith.constant 1 : index
    %c0_182 = arith.constant 0 : index
    %c0_183 = arith.constant 0 : index
    %411 = vector.load %arg13[%c1_181, %c0_182, %c0_183] : memref<8x32x1xf32, #tpu.memory_space<vmem>>, vector<1x32x1xf32>
    %412 = vector.shape_cast %411 : vector<1x32x1xf32> to vector<32x1xf32>
    %cst_184 = arith.constant dense<0.000000e+00> : vector<32xf32>
    %413 = vector.multi_reduction <add>, %408, %cst_184 [1] : vector<32x128xf32> to vector<32xf32>
    %414 = vector.shape_cast %413 : vector<32xf32> to vector<32x1xf32>
    %cst_185 = arith.constant 1.280000e+02 : f32
    %415 = vector.broadcast %cst_185 : f32 to vector<32x1xf32>
    %416 = arith.divf %414, %415 : vector<32x1xf32>
    %417 = vector.broadcast %416 : vector<32x1xf32> to vector<32x128xf32>
    %418 = arith.subf %408, %417 : vector<32x128xf32>
    %419 = arith.mulf %418, %418 : vector<32x128xf32>
    %cst_186 = arith.constant dense<0.000000e+00> : vector<32xf32>
    %420 = vector.multi_reduction <add>, %419, %cst_186 [1] : vector<32x128xf32> to vector<32xf32>
    %421 = vector.shape_cast %420 : vector<32xf32> to vector<32x1xf32>
    %cst_187 = arith.constant 1.280000e+02 : f32
    %422 = vector.broadcast %cst_187 : f32 to vector<32x1xf32>
    %423 = arith.divf %421, %422 : vector<32x1xf32>
    %424 = vector.broadcast %416 : vector<32x1xf32> to vector<32x128xf32>
    %425 = arith.subf %408, %424 : vector<32x128xf32>
    %cst_188 = arith.constant 9.99999974E-6 : f32
    %426 = vector.broadcast %cst_188 : f32 to vector<32x1xf32>
    %427 = arith.addf %423, %426 : vector<32x1xf32>
    %428 = math.rsqrt %427 : vector<32x1xf32>
    %429 = vector.broadcast %428 : vector<32x1xf32> to vector<32x128xf32>
    %430 = arith.mulf %425, %429 : vector<32x128xf32>
    %431 = vector.broadcast %410 : vector<32x1xf32> to vector<32x128xf32>
    %432 = arith.mulf %430, %431 : vector<32x128xf32>
    %433 = vector.broadcast %412 : vector<32x1xf32> to vector<32x128xf32>
    %434 = arith.addf %432, %433 : vector<32x128xf32>
    %cst_189 = arith.constant 0.000000e+00 : f32
    %435 = vector.broadcast %cst_189 : f32 to vector<32x128xf32>
    %436 = arith.maximumf %434, %435 : vector<32x128xf32>
    %c1_190 = arith.constant 1 : index
    %c0_191 = arith.constant 0 : index
    %c0_192 = arith.constant 0 : index
    %437 = vector.load %arg14[%c1_190, %c0_191, %c0_192] : memref<8x32x32xbf16, #tpu.memory_space<vmem>>, vector<1x32x32xbf16>
    %438 = vector.shape_cast %437 : vector<1x32x32xbf16> to vector<32x32xbf16>
    %439 = arith.truncf %436 : vector<32x128xf32> to vector<32x128xbf16>
    %cst_193 = arith.constant dense<0.000000e+00> : vector<32x128xf32>
    %440 = tpu.matmul %438, %439, %cst_193 {dimension_numbers = #tpu.dot_dimension_numbers<[1], [0], [0], [1], [0, 0, 1, 1], [], []>} : vector<32x32xbf16>, vector<32x128xbf16>, vector<32x128xf32> -> vector<32x128xf32>
    %c1_194 = arith.constant 1 : index
    %c0_195 = arith.constant 0 : index
    %c0_196 = arith.constant 0 : index
    %441 = vector.load %arg15[%c1_194, %c0_195, %c0_196] : memref<8x32x1xf32, #tpu.memory_space<vmem>>, vector<1x32x1xf32>
    %442 = vector.shape_cast %441 : vector<1x32x1xf32> to vector<32x1xf32>
    %443 = vector.broadcast %442 : vector<32x1xf32> to vector<32x128xf32>
    %444 = arith.addf %440, %443 : vector<32x128xf32>
    %445 = arith.addf %444, %273 : vector<32x128xf32>
    %c2_197 = arith.constant 2 : index
    %c0_198 = arith.constant 0 : index
    %c0_199 = arith.constant 0 : index
    %446 = vector.load %arg6[%c2_197, %c0_198, %c0_199] : memref<8x32x32xbf16, #tpu.memory_space<vmem>>, vector<1x32x32xbf16>
    %447 = vector.shape_cast %446 : vector<1x32x32xbf16> to vector<32x32xbf16>
    %448 = arith.truncf %445 : vector<32x128xf32> to vector<32x128xbf16>
    %cst_200 = arith.constant dense<0.000000e+00> : vector<32x128xf32>
    %449 = tpu.matmul %447, %448, %cst_200 {dimension_numbers = #tpu.dot_dimension_numbers<[1], [0], [0], [1], [0, 0, 1, 1], [], []>} : vector<32x32xbf16>, vector<32x128xbf16>, vector<32x128xf32> -> vector<32x128xf32>
    %c2_201 = arith.constant 2 : index
    %c0_202 = arith.constant 0 : index
    %c0_203 = arith.constant 0 : index
    %450 = vector.load %arg7[%c2_201, %c0_202, %c0_203] : memref<8x32x1xf32, #tpu.memory_space<vmem>>, vector<1x32x1xf32>
    %451 = vector.shape_cast %450 : vector<1x32x1xf32> to vector<32x1xf32>
    %452 = vector.broadcast %451 : vector<32x1xf32> to vector<32x128xf32>
    %453 = arith.addf %449, %452 : vector<32x128xf32>
    %c2_204 = arith.constant 2 : index
    %c0_205 = arith.constant 0 : index
    %c0_206 = arith.constant 0 : index
    %454 = vector.load %arg8[%c2_204, %c0_205, %c0_206] : memref<8x32x1xf32, #tpu.memory_space<vmem>>, vector<1x32x1xf32>
    %455 = vector.shape_cast %454 : vector<1x32x1xf32> to vector<32x1xf32>
    %c2_207 = arith.constant 2 : index
    %c0_208 = arith.constant 0 : index
    %c0_209 = arith.constant 0 : index
    %456 = vector.load %arg9[%c2_207, %c0_208, %c0_209] : memref<8x32x1xf32, #tpu.memory_space<vmem>>, vector<1x32x1xf32>
    %457 = vector.shape_cast %456 : vector<1x32x1xf32> to vector<32x1xf32>
    %cst_210 = arith.constant dense<0.000000e+00> : vector<32xf32>
    %458 = vector.multi_reduction <add>, %453, %cst_210 [1] : vector<32x128xf32> to vector<32xf32>
    %459 = vector.shape_cast %458 : vector<32xf32> to vector<32x1xf32>
    %cst_211 = arith.constant 1.280000e+02 : f32
    %460 = vector.broadcast %cst_211 : f32 to vector<32x1xf32>
    %461 = arith.divf %459, %460 : vector<32x1xf32>
    %462 = vector.broadcast %461 : vector<32x1xf32> to vector<32x128xf32>
    %463 = arith.subf %453, %462 : vector<32x128xf32>
    %464 = arith.mulf %463, %463 : vector<32x128xf32>
    %cst_212 = arith.constant dense<0.000000e+00> : vector<32xf32>
    %465 = vector.multi_reduction <add>, %464, %cst_212 [1] : vector<32x128xf32> to vector<32xf32>
    %466 = vector.shape_cast %465 : vector<32xf32> to vector<32x1xf32>
    %cst_213 = arith.constant 1.280000e+02 : f32
    %467 = vector.broadcast %cst_213 : f32 to vector<32x1xf32>
    %468 = arith.divf %466, %467 : vector<32x1xf32>
    %469 = vector.broadcast %461 : vector<32x1xf32> to vector<32x128xf32>
    %470 = arith.subf %453, %469 : vector<32x128xf32>
    %cst_214 = arith.constant 9.99999974E-6 : f32
    %471 = vector.broadcast %cst_214 : f32 to vector<32x1xf32>
    %472 = arith.addf %468, %471 : vector<32x1xf32>
    %473 = math.rsqrt %472 : vector<32x1xf32>
    %474 = vector.broadcast %473 : vector<32x1xf32> to vector<32x128xf32>
    %475 = arith.mulf %470, %474 : vector<32x128xf32>
    %476 = vector.broadcast %455 : vector<32x1xf32> to vector<32x128xf32>
    %477 = arith.mulf %475, %476 : vector<32x128xf32>
    %478 = vector.broadcast %457 : vector<32x1xf32> to vector<32x128xf32>
    %479 = arith.addf %477, %478 : vector<32x128xf32>
    %cst_215 = arith.constant 0.000000e+00 : f32
    %480 = vector.broadcast %cst_215 : f32 to vector<32x128xf32>
    %481 = arith.maximumf %479, %480 : vector<32x128xf32>
    %c2_216 = arith.constant 2 : index
    %c0_217 = arith.constant 0 : index
    %c0_218 = arith.constant 0 : index
    %482 = vector.load %arg11[%c2_216, %c0_217, %c0_218] : memref<8x32x1xf32, #tpu.memory_space<vmem>>, vector<1x32x1xf32>
    %483 = vector.shape_cast %482 : vector<1x32x1xf32> to vector<32x1xf32>
    %484 = vector.extract_strided_slice %481 {offsets = [0, 119], sizes = [32, 9], strides = [1, 1]} : vector<32x128xf32> to vector<32x9xf32>
    %485 = vector.extract_strided_slice %481 {offsets = [0, 0], sizes = [32, 119], strides = [1, 1]} : vector<32x128xf32> to vector<32x119xf32>
    %486 = tpu.concatenate %484, %485 in 1 : vector<32x9xf32>, vector<32x119xf32> -> vector<32x128xf32>
    %487 = arith.truncf %486 : vector<32x128xf32> to vector<32x128xbf16>
    %c2_219 = arith.constant 2 : index
    %c0_220 = arith.constant 0 : index
    %c0_221 = arith.constant 0 : index
    %c0_222 = arith.constant 0 : index
    %488 = vector.load %arg10[%c2_219, %c0_220, %c0_221, %c0_222] : memref<8x9x32x32xbf16, #tpu.memory_space<vmem>>, vector<1x1x32x32xbf16>
    %489 = vector.shape_cast %488 : vector<1x1x32x32xbf16> to vector<32x32xbf16>
    %cst_223 = arith.constant dense<0.000000e+00> : vector<32x128xf32>
    %490 = tpu.matmul %489, %487, %cst_223 {dimension_numbers = #tpu.dot_dimension_numbers<[1], [0], [0], [1], [0, 0, 1, 1], [], []>} : vector<32x32xbf16>, vector<32x128xbf16>, vector<32x128xf32> -> vector<32x128xf32>
    %491 = vector.extract_strided_slice %2 {offsets = [0, 0], sizes = [1, 128], strides = [1, 1]} : vector<9x128xf32> to vector<1x128xf32>
    %492 = vector.broadcast %491 : vector<1x128xf32> to vector<32x128xf32>
    %493 = arith.mulf %490, %492 : vector<32x128xf32>
    %494 = vector.extract_strided_slice %481 {offsets = [0, 120], sizes = [32, 8], strides = [1, 1]} : vector<32x128xf32> to vector<32x8xf32>
    %495 = vector.extract_strided_slice %481 {offsets = [0, 0], sizes = [32, 120], strides = [1, 1]} : vector<32x128xf32> to vector<32x120xf32>
    %496 = tpu.concatenate %494, %495 in 1 : vector<32x8xf32>, vector<32x120xf32> -> vector<32x128xf32>
    %497 = arith.truncf %496 : vector<32x128xf32> to vector<32x128xbf16>
    %c2_224 = arith.constant 2 : index
    %c1_225 = arith.constant 1 : index
    %c0_226 = arith.constant 0 : index
    %c0_227 = arith.constant 0 : index
    %498 = vector.load %arg10[%c2_224, %c1_225, %c0_226, %c0_227] : memref<8x9x32x32xbf16, #tpu.memory_space<vmem>>, vector<1x1x32x32xbf16>
    %499 = vector.shape_cast %498 : vector<1x1x32x32xbf16> to vector<32x32xbf16>
    %cst_228 = arith.constant dense<0.000000e+00> : vector<32x128xf32>
    %500 = tpu.matmul %499, %497, %cst_228 {dimension_numbers = #tpu.dot_dimension_numbers<[1], [0], [0], [1], [0, 0, 1, 1], [], []>} : vector<32x32xbf16>, vector<32x128xbf16>, vector<32x128xf32> -> vector<32x128xf32>
    %501 = vector.extract_strided_slice %2 {offsets = [1, 0], sizes = [1, 128], strides = [1, 1]} : vector<9x128xf32> to vector<1x128xf32>
    %502 = vector.broadcast %501 : vector<1x128xf32> to vector<32x128xf32>
    %503 = arith.mulf %500, %502 : vector<32x128xf32>
    %504 = arith.addf %493, %503 : vector<32x128xf32>
    %505 = vector.extract_strided_slice %481 {offsets = [0, 121], sizes = [32, 7], strides = [1, 1]} : vector<32x128xf32> to vector<32x7xf32>
    %506 = vector.extract_strided_slice %481 {offsets = [0, 0], sizes = [32, 121], strides = [1, 1]} : vector<32x128xf32> to vector<32x121xf32>
    %507 = tpu.concatenate %505, %506 in 1 : vector<32x7xf32>, vector<32x121xf32> -> vector<32x128xf32>
    %508 = arith.truncf %507 : vector<32x128xf32> to vector<32x128xbf16>
    %c2_229 = arith.constant 2 : index
    %c2_230 = arith.constant 2 : index
    %c0_231 = arith.constant 0 : index
    %c0_232 = arith.constant 0 : index
    %509 = vector.load %arg10[%c2_229, %c2_230, %c0_231, %c0_232] : memref<8x9x32x32xbf16, #tpu.memory_space<vmem>>, vector<1x1x32x32xbf16>
    %510 = vector.shape_cast %509 : vector<1x1x32x32xbf16> to vector<32x32xbf16>
    %cst_233 = arith.constant dense<0.000000e+00> : vector<32x128xf32>
    %511 = tpu.matmul %510, %508, %cst_233 {dimension_numbers = #tpu.dot_dimension_numbers<[1], [0], [0], [1], [0, 0, 1, 1], [], []>} : vector<32x32xbf16>, vector<32x128xbf16>, vector<32x128xf32> -> vector<32x128xf32>
    %512 = vector.extract_strided_slice %2 {offsets = [2, 0], sizes = [1, 128], strides = [1, 1]} : vector<9x128xf32> to vector<1x128xf32>
    %513 = vector.broadcast %512 : vector<1x128xf32> to vector<32x128xf32>
    %514 = arith.mulf %511, %513 : vector<32x128xf32>
    %515 = arith.addf %504, %514 : vector<32x128xf32>
    %516 = vector.extract_strided_slice %481 {offsets = [0, 127], sizes = [32, 1], strides = [1, 1]} : vector<32x128xf32> to vector<32x1xf32>
    %517 = vector.extract_strided_slice %481 {offsets = [0, 0], sizes = [32, 127], strides = [1, 1]} : vector<32x128xf32> to vector<32x127xf32>
    %518 = tpu.concatenate %516, %517 in 1 : vector<32x1xf32>, vector<32x127xf32> -> vector<32x128xf32>
    %519 = arith.truncf %518 : vector<32x128xf32> to vector<32x128xbf16>
    %c2_234 = arith.constant 2 : index
    %c3_235 = arith.constant 3 : index
    %c0_236 = arith.constant 0 : index
    %c0_237 = arith.constant 0 : index
    %520 = vector.load %arg10[%c2_234, %c3_235, %c0_236, %c0_237] : memref<8x9x32x32xbf16, #tpu.memory_space<vmem>>, vector<1x1x32x32xbf16>
    %521 = vector.shape_cast %520 : vector<1x1x32x32xbf16> to vector<32x32xbf16>
    %cst_238 = arith.constant dense<0.000000e+00> : vector<32x128xf32>
    %522 = tpu.matmul %521, %519, %cst_238 {dimension_numbers = #tpu.dot_dimension_numbers<[1], [0], [0], [1], [0, 0, 1, 1], [], []>} : vector<32x32xbf16>, vector<32x128xbf16>, vector<32x128xf32> -> vector<32x128xf32>
    %523 = vector.extract_strided_slice %2 {offsets = [3, 0], sizes = [1, 128], strides = [1, 1]} : vector<9x128xf32> to vector<1x128xf32>
    %524 = vector.broadcast %523 : vector<1x128xf32> to vector<32x128xf32>
    %525 = arith.mulf %522, %524 : vector<32x128xf32>
    %526 = arith.addf %515, %525 : vector<32x128xf32>
    %527 = arith.truncf %481 : vector<32x128xf32> to vector<32x128xbf16>
    %c2_239 = arith.constant 2 : index
    %c4_240 = arith.constant 4 : index
    %c0_241 = arith.constant 0 : index
    %c0_242 = arith.constant 0 : index
    %528 = vector.load %arg10[%c2_239, %c4_240, %c0_241, %c0_242] : memref<8x9x32x32xbf16, #tpu.memory_space<vmem>>, vector<1x1x32x32xbf16>
    %529 = vector.shape_cast %528 : vector<1x1x32x32xbf16> to vector<32x32xbf16>
    %cst_243 = arith.constant dense<0.000000e+00> : vector<32x128xf32>
    %530 = tpu.matmul %529, %527, %cst_243 {dimension_numbers = #tpu.dot_dimension_numbers<[1], [0], [0], [1], [0, 0, 1, 1], [], []>} : vector<32x32xbf16>, vector<32x128xbf16>, vector<32x128xf32> -> vector<32x128xf32>
    %531 = vector.extract_strided_slice %2 {offsets = [4, 0], sizes = [1, 128], strides = [1, 1]} : vector<9x128xf32> to vector<1x128xf32>
    %532 = vector.broadcast %531 : vector<1x128xf32> to vector<32x128xf32>
    %533 = arith.mulf %530, %532 : vector<32x128xf32>
    %534 = arith.addf %526, %533 : vector<32x128xf32>
    %535 = vector.extract_strided_slice %481 {offsets = [0, 1], sizes = [32, 127], strides = [1, 1]} : vector<32x128xf32> to vector<32x127xf32>
    %536 = vector.extract_strided_slice %481 {offsets = [0, 0], sizes = [32, 1], strides = [1, 1]} : vector<32x128xf32> to vector<32x1xf32>
    %537 = tpu.concatenate %535, %536 in 1 : vector<32x127xf32>, vector<32x1xf32> -> vector<32x128xf32>
    %538 = arith.truncf %537 : vector<32x128xf32> to vector<32x128xbf16>
    %c2_244 = arith.constant 2 : index
    %c5_245 = arith.constant 5 : index
    %c0_246 = arith.constant 0 : index
    %c0_247 = arith.constant 0 : index
    %539 = vector.load %arg10[%c2_244, %c5_245, %c0_246, %c0_247] : memref<8x9x32x32xbf16, #tpu.memory_space<vmem>>, vector<1x1x32x32xbf16>
    %540 = vector.shape_cast %539 : vector<1x1x32x32xbf16> to vector<32x32xbf16>
    %cst_248 = arith.constant dense<0.000000e+00> : vector<32x128xf32>
    %541 = tpu.matmul %540, %538, %cst_248 {dimension_numbers = #tpu.dot_dimension_numbers<[1], [0], [0], [1], [0, 0, 1, 1], [], []>} : vector<32x32xbf16>, vector<32x128xbf16>, vector<32x128xf32> -> vector<32x128xf32>
    %542 = vector.extract_strided_slice %2 {offsets = [5, 0], sizes = [1, 128], strides = [1, 1]} : vector<9x128xf32> to vector<1x128xf32>
    %543 = vector.broadcast %542 : vector<1x128xf32> to vector<32x128xf32>
    %544 = arith.mulf %541, %543 : vector<32x128xf32>
    %545 = arith.addf %534, %544 : vector<32x128xf32>
    %546 = vector.extract_strided_slice %481 {offsets = [0, 7], sizes = [32, 121], strides = [1, 1]} : vector<32x128xf32> to vector<32x121xf32>
    %547 = vector.extract_strided_slice %481 {offsets = [0, 0], sizes = [32, 7], strides = [1, 1]} : vector<32x128xf32> to vector<32x7xf32>
    %548 = tpu.concatenate %546, %547 in 1 : vector<32x121xf32>, vector<32x7xf32> -> vector<32x128xf32>
    %549 = arith.truncf %548 : vector<32x128xf32> to vector<32x128xbf16>
    %c2_249 = arith.constant 2 : index
    %c6_250 = arith.constant 6 : index
    %c0_251 = arith.constant 0 : index
    %c0_252 = arith.constant 0 : index
    %550 = vector.load %arg10[%c2_249, %c6_250, %c0_251, %c0_252] : memref<8x9x32x32xbf16, #tpu.memory_space<vmem>>, vector<1x1x32x32xbf16>
    %551 = vector.shape_cast %550 : vector<1x1x32x32xbf16> to vector<32x32xbf16>
    %cst_253 = arith.constant dense<0.000000e+00> : vector<32x128xf32>
    %552 = tpu.matmul %551, %549, %cst_253 {dimension_numbers = #tpu.dot_dimension_numbers<[1], [0], [0], [1], [0, 0, 1, 1], [], []>} : vector<32x32xbf16>, vector<32x128xbf16>, vector<32x128xf32> -> vector<32x128xf32>
    %553 = vector.extract_strided_slice %2 {offsets = [6, 0], sizes = [1, 128], strides = [1, 1]} : vector<9x128xf32> to vector<1x128xf32>
    %554 = vector.broadcast %553 : vector<1x128xf32> to vector<32x128xf32>
    %555 = arith.mulf %552, %554 : vector<32x128xf32>
    %556 = arith.addf %545, %555 : vector<32x128xf32>
    %557 = vector.extract_strided_slice %481 {offsets = [0, 8], sizes = [32, 120], strides = [1, 1]} : vector<32x128xf32> to vector<32x120xf32>
    %558 = vector.extract_strided_slice %481 {offsets = [0, 0], sizes = [32, 8], strides = [1, 1]} : vector<32x128xf32> to vector<32x8xf32>
    %559 = tpu.concatenate %557, %558 in 1 : vector<32x120xf32>, vector<32x8xf32> -> vector<32x128xf32>
    %560 = arith.truncf %559 : vector<32x128xf32> to vector<32x128xbf16>
    %c2_254 = arith.constant 2 : index
    %c7_255 = arith.constant 7 : index
    %c0_256 = arith.constant 0 : index
    %c0_257 = arith.constant 0 : index
    %561 = vector.load %arg10[%c2_254, %c7_255, %c0_256, %c0_257] : memref<8x9x32x32xbf16, #tpu.memory_space<vmem>>, vector<1x1x32x32xbf16>
    %562 = vector.shape_cast %561 : vector<1x1x32x32xbf16> to vector<32x32xbf16>
    %cst_258 = arith.constant dense<0.000000e+00> : vector<32x128xf32>
    %563 = tpu.matmul %562, %560, %cst_258 {dimension_numbers = #tpu.dot_dimension_numbers<[1], [0], [0], [1], [0, 0, 1, 1], [], []>} : vector<32x32xbf16>, vector<32x128xbf16>, vector<32x128xf32> -> vector<32x128xf32>
    %564 = vector.extract_strided_slice %2 {offsets = [7, 0], sizes = [1, 128], strides = [1, 1]} : vector<9x128xf32> to vector<1x128xf32>
    %565 = vector.broadcast %564 : vector<1x128xf32> to vector<32x128xf32>
    %566 = arith.mulf %563, %565 : vector<32x128xf32>
    %567 = arith.addf %556, %566 : vector<32x128xf32>
    %568 = vector.extract_strided_slice %481 {offsets = [0, 9], sizes = [32, 119], strides = [1, 1]} : vector<32x128xf32> to vector<32x119xf32>
    %569 = vector.extract_strided_slice %481 {offsets = [0, 0], sizes = [32, 9], strides = [1, 1]} : vector<32x128xf32> to vector<32x9xf32>
    %570 = tpu.concatenate %568, %569 in 1 : vector<32x119xf32>, vector<32x9xf32> -> vector<32x128xf32>
    %571 = arith.truncf %570 : vector<32x128xf32> to vector<32x128xbf16>
    %c2_259 = arith.constant 2 : index
    %c8_260 = arith.constant 8 : index
    %c0_261 = arith.constant 0 : index
    %c0_262 = arith.constant 0 : index
    %572 = vector.load %arg10[%c2_259, %c8_260, %c0_261, %c0_262] : memref<8x9x32x32xbf16, #tpu.memory_space<vmem>>, vector<1x1x32x32xbf16>
    %573 = vector.shape_cast %572 : vector<1x1x32x32xbf16> to vector<32x32xbf16>
    %cst_263 = arith.constant dense<0.000000e+00> : vector<32x128xf32>
    %574 = tpu.matmul %573, %571, %cst_263 {dimension_numbers = #tpu.dot_dimension_numbers<[1], [0], [0], [1], [0, 0, 1, 1], [], []>} : vector<32x32xbf16>, vector<32x128xbf16>, vector<32x128xf32> -> vector<32x128xf32>
    %575 = vector.extract_strided_slice %2 {offsets = [8, 0], sizes = [1, 128], strides = [1, 1]} : vector<9x128xf32> to vector<1x128xf32>
    %576 = vector.broadcast %575 : vector<1x128xf32> to vector<32x128xf32>
    %577 = arith.mulf %574, %576 : vector<32x128xf32>
    %578 = arith.addf %567, %577 : vector<32x128xf32>
    %579 = vector.broadcast %483 : vector<32x1xf32> to vector<32x128xf32>
    %580 = arith.addf %578, %579 : vector<32x128xf32>
    %c2_264 = arith.constant 2 : index
    %c0_265 = arith.constant 0 : index
    %c0_266 = arith.constant 0 : index
    %581 = vector.load %arg12[%c2_264, %c0_265, %c0_266] : memref<8x32x1xf32, #tpu.memory_space<vmem>>, vector<1x32x1xf32>
    %582 = vector.shape_cast %581 : vector<1x32x1xf32> to vector<32x1xf32>
    %c2_267 = arith.constant 2 : index
    %c0_268 = arith.constant 0 : index
    %c0_269 = arith.constant 0 : index
    %583 = vector.load %arg13[%c2_267, %c0_268, %c0_269] : memref<8x32x1xf32, #tpu.memory_space<vmem>>, vector<1x32x1xf32>
    %584 = vector.shape_cast %583 : vector<1x32x1xf32> to vector<32x1xf32>
    %cst_270 = arith.constant dense<0.000000e+00> : vector<32xf32>
    %585 = vector.multi_reduction <add>, %580, %cst_270 [1] : vector<32x128xf32> to vector<32xf32>
    %586 = vector.shape_cast %585 : vector<32xf32> to vector<32x1xf32>
    %cst_271 = arith.constant 1.280000e+02 : f32
    %587 = vector.broadcast %cst_271 : f32 to vector<32x1xf32>
    %588 = arith.divf %586, %587 : vector<32x1xf32>
    %589 = vector.broadcast %588 : vector<32x1xf32> to vector<32x128xf32>
    %590 = arith.subf %580, %589 : vector<32x128xf32>
    %591 = arith.mulf %590, %590 : vector<32x128xf32>
    %cst_272 = arith.constant dense<0.000000e+00> : vector<32xf32>
    %592 = vector.multi_reduction <add>, %591, %cst_272 [1] : vector<32x128xf32> to vector<32xf32>
    %593 = vector.shape_cast %592 : vector<32xf32> to vector<32x1xf32>
    %cst_273 = arith.constant 1.280000e+02 : f32
    %594 = vector.broadcast %cst_273 : f32 to vector<32x1xf32>
    %595 = arith.divf %593, %594 : vector<32x1xf32>
    %596 = vector.broadcast %588 : vector<32x1xf32> to vector<32x128xf32>
    %597 = arith.subf %580, %596 : vector<32x128xf32>
    %cst_274 = arith.constant 9.99999974E-6 : f32
    %598 = vector.broadcast %cst_274 : f32 to vector<32x1xf32>
    %599 = arith.addf %595, %598 : vector<32x1xf32>
    %600 = math.rsqrt %599 : vector<32x1xf32>
    %601 = vector.broadcast %600 : vector<32x1xf32> to vector<32x128xf32>
    %602 = arith.mulf %597, %601 : vector<32x128xf32>
    %603 = vector.broadcast %582 : vector<32x1xf32> to vector<32x128xf32>
    %604 = arith.mulf %602, %603 : vector<32x128xf32>
    %605 = vector.broadcast %584 : vector<32x1xf32> to vector<32x128xf32>
    %606 = arith.addf %604, %605 : vector<32x128xf32>
    %cst_275 = arith.constant 0.000000e+00 : f32
    %607 = vector.broadcast %cst_275 : f32 to vector<32x128xf32>
    %608 = arith.maximumf %606, %607 : vector<32x128xf32>
    %c2_276 = arith.constant 2 : index
    %c0_277 = arith.constant 0 : index
    %c0_278 = arith.constant 0 : index
    %609 = vector.load %arg14[%c2_276, %c0_277, %c0_278] : memref<8x32x32xbf16, #tpu.memory_space<vmem>>, vector<1x32x32xbf16>
    %610 = vector.shape_cast %609 : vector<1x32x32xbf16> to vector<32x32xbf16>
    %611 = arith.truncf %608 : vector<32x128xf32> to vector<32x128xbf16>
    %cst_279 = arith.constant dense<0.000000e+00> : vector<32x128xf32>
    %612 = tpu.matmul %610, %611, %cst_279 {dimension_numbers = #tpu.dot_dimension_numbers<[1], [0], [0], [1], [0, 0, 1, 1], [], []>} : vector<32x32xbf16>, vector<32x128xbf16>, vector<32x128xf32> -> vector<32x128xf32>
    %c2_280 = arith.constant 2 : index
    %c0_281 = arith.constant 0 : index
    %c0_282 = arith.constant 0 : index
    %613 = vector.load %arg15[%c2_280, %c0_281, %c0_282] : memref<8x32x1xf32, #tpu.memory_space<vmem>>, vector<1x32x1xf32>
    %614 = vector.shape_cast %613 : vector<1x32x1xf32> to vector<32x1xf32>
    %615 = vector.broadcast %614 : vector<32x1xf32> to vector<32x128xf32>
    %616 = arith.addf %612, %615 : vector<32x128xf32>
    %617 = arith.addf %616, %445 : vector<32x128xf32>
    %c3_283 = arith.constant 3 : index
    %c0_284 = arith.constant 0 : index
    %c0_285 = arith.constant 0 : index
    %618 = vector.load %arg6[%c3_283, %c0_284, %c0_285] : memref<8x32x32xbf16, #tpu.memory_space<vmem>>, vector<1x32x32xbf16>
    %619 = vector.shape_cast %618 : vector<1x32x32xbf16> to vector<32x32xbf16>
    %620 = arith.truncf %617 : vector<32x128xf32> to vector<32x128xbf16>
    %cst_286 = arith.constant dense<0.000000e+00> : vector<32x128xf32>
    %621 = tpu.matmul %619, %620, %cst_286 {dimension_numbers = #tpu.dot_dimension_numbers<[1], [0], [0], [1], [0, 0, 1, 1], [], []>} : vector<32x32xbf16>, vector<32x128xbf16>, vector<32x128xf32> -> vector<32x128xf32>
    %c3_287 = arith.constant 3 : index
    %c0_288 = arith.constant 0 : index
    %c0_289 = arith.constant 0 : index
    %622 = vector.load %arg7[%c3_287, %c0_288, %c0_289] : memref<8x32x1xf32, #tpu.memory_space<vmem>>, vector<1x32x1xf32>
    %623 = vector.shape_cast %622 : vector<1x32x1xf32> to vector<32x1xf32>
    %624 = vector.broadcast %623 : vector<32x1xf32> to vector<32x128xf32>
    %625 = arith.addf %621, %624 : vector<32x128xf32>
    %c3_290 = arith.constant 3 : index
    %c0_291 = arith.constant 0 : index
    %c0_292 = arith.constant 0 : index
    %626 = vector.load %arg8[%c3_290, %c0_291, %c0_292] : memref<8x32x1xf32, #tpu.memory_space<vmem>>, vector<1x32x1xf32>
    %627 = vector.shape_cast %626 : vector<1x32x1xf32> to vector<32x1xf32>
    %c3_293 = arith.constant 3 : index
    %c0_294 = arith.constant 0 : index
    %c0_295 = arith.constant 0 : index
    %628 = vector.load %arg9[%c3_293, %c0_294, %c0_295] : memref<8x32x1xf32, #tpu.memory_space<vmem>>, vector<1x32x1xf32>
    %629 = vector.shape_cast %628 : vector<1x32x1xf32> to vector<32x1xf32>
    %cst_296 = arith.constant dense<0.000000e+00> : vector<32xf32>
    %630 = vector.multi_reduction <add>, %625, %cst_296 [1] : vector<32x128xf32> to vector<32xf32>
    %631 = vector.shape_cast %630 : vector<32xf32> to vector<32x1xf32>
    %cst_297 = arith.constant 1.280000e+02 : f32
    %632 = vector.broadcast %cst_297 : f32 to vector<32x1xf32>
    %633 = arith.divf %631, %632 : vector<32x1xf32>
    %634 = vector.broadcast %633 : vector<32x1xf32> to vector<32x128xf32>
    %635 = arith.subf %625, %634 : vector<32x128xf32>
    %636 = arith.mulf %635, %635 : vector<32x128xf32>
    %cst_298 = arith.constant dense<0.000000e+00> : vector<32xf32>
    %637 = vector.multi_reduction <add>, %636, %cst_298 [1] : vector<32x128xf32> to vector<32xf32>
    %638 = vector.shape_cast %637 : vector<32xf32> to vector<32x1xf32>
    %cst_299 = arith.constant 1.280000e+02 : f32
    %639 = vector.broadcast %cst_299 : f32 to vector<32x1xf32>
    %640 = arith.divf %638, %639 : vector<32x1xf32>
    %641 = vector.broadcast %633 : vector<32x1xf32> to vector<32x128xf32>
    %642 = arith.subf %625, %641 : vector<32x128xf32>
    %cst_300 = arith.constant 9.99999974E-6 : f32
    %643 = vector.broadcast %cst_300 : f32 to vector<32x1xf32>
    %644 = arith.addf %640, %643 : vector<32x1xf32>
    %645 = math.rsqrt %644 : vector<32x1xf32>
    %646 = vector.broadcast %645 : vector<32x1xf32> to vector<32x128xf32>
    %647 = arith.mulf %642, %646 : vector<32x128xf32>
    %648 = vector.broadcast %627 : vector<32x1xf32> to vector<32x128xf32>
    %649 = arith.mulf %647, %648 : vector<32x128xf32>
    %650 = vector.broadcast %629 : vector<32x1xf32> to vector<32x128xf32>
    %651 = arith.addf %649, %650 : vector<32x128xf32>
    %cst_301 = arith.constant 0.000000e+00 : f32
    %652 = vector.broadcast %cst_301 : f32 to vector<32x128xf32>
    %653 = arith.maximumf %651, %652 : vector<32x128xf32>
    %c3_302 = arith.constant 3 : index
    %c0_303 = arith.constant 0 : index
    %c0_304 = arith.constant 0 : index
    %654 = vector.load %arg11[%c3_302, %c0_303, %c0_304] : memref<8x32x1xf32, #tpu.memory_space<vmem>>, vector<1x32x1xf32>
    %655 = vector.shape_cast %654 : vector<1x32x1xf32> to vector<32x1xf32>
    %656 = vector.extract_strided_slice %653 {offsets = [0, 119], sizes = [32, 9], strides = [1, 1]} : vector<32x128xf32> to vector<32x9xf32>
    %657 = vector.extract_strided_slice %653 {offsets = [0, 0], sizes = [32, 119], strides = [1, 1]} : vector<32x128xf32> to vector<32x119xf32>
    %658 = tpu.concatenate %656, %657 in 1 : vector<32x9xf32>, vector<32x119xf32> -> vector<32x128xf32>
    %659 = arith.truncf %658 : vector<32x128xf32> to vector<32x128xbf16>
    %c3_305 = arith.constant 3 : index
    %c0_306 = arith.constant 0 : index
    %c0_307 = arith.constant 0 : index
    %c0_308 = arith.constant 0 : index
    %660 = vector.load %arg10[%c3_305, %c0_306, %c0_307, %c0_308] : memref<8x9x32x32xbf16, #tpu.memory_space<vmem>>, vector<1x1x32x32xbf16>
    %661 = vector.shape_cast %660 : vector<1x1x32x32xbf16> to vector<32x32xbf16>
    %cst_309 = arith.constant dense<0.000000e+00> : vector<32x128xf32>
    %662 = tpu.matmul %661, %659, %cst_309 {dimension_numbers = #tpu.dot_dimension_numbers<[1], [0], [0], [1], [0, 0, 1, 1], [], []>} : vector<32x32xbf16>, vector<32x128xbf16>, vector<32x128xf32> -> vector<32x128xf32>
    %663 = vector.extract_strided_slice %2 {offsets = [0, 0], sizes = [1, 128], strides = [1, 1]} : vector<9x128xf32> to vector<1x128xf32>
    %664 = vector.broadcast %663 : vector<1x128xf32> to vector<32x128xf32>
    %665 = arith.mulf %662, %664 : vector<32x128xf32>
    %666 = vector.extract_strided_slice %653 {offsets = [0, 120], sizes = [32, 8], strides = [1, 1]} : vector<32x128xf32> to vector<32x8xf32>
    %667 = vector.extract_strided_slice %653 {offsets = [0, 0], sizes = [32, 120], strides = [1, 1]} : vector<32x128xf32> to vector<32x120xf32>
    %668 = tpu.concatenate %666, %667 in 1 : vector<32x8xf32>, vector<32x120xf32> -> vector<32x128xf32>
    %669 = arith.truncf %668 : vector<32x128xf32> to vector<32x128xbf16>
    %c3_310 = arith.constant 3 : index
    %c1_311 = arith.constant 1 : index
    %c0_312 = arith.constant 0 : index
    %c0_313 = arith.constant 0 : index
    %670 = vector.load %arg10[%c3_310, %c1_311, %c0_312, %c0_313] : memref<8x9x32x32xbf16, #tpu.memory_space<vmem>>, vector<1x1x32x32xbf16>
    %671 = vector.shape_cast %670 : vector<1x1x32x32xbf16> to vector<32x32xbf16>
    %cst_314 = arith.constant dense<0.000000e+00> : vector<32x128xf32>
    %672 = tpu.matmul %671, %669, %cst_314 {dimension_numbers = #tpu.dot_dimension_numbers<[1], [0], [0], [1], [0, 0, 1, 1], [], []>} : vector<32x32xbf16>, vector<32x128xbf16>, vector<32x128xf32> -> vector<32x128xf32>
    %673 = vector.extract_strided_slice %2 {offsets = [1, 0], sizes = [1, 128], strides = [1, 1]} : vector<9x128xf32> to vector<1x128xf32>
    %674 = vector.broadcast %673 : vector<1x128xf32> to vector<32x128xf32>
    %675 = arith.mulf %672, %674 : vector<32x128xf32>
    %676 = arith.addf %665, %675 : vector<32x128xf32>
    %677 = vector.extract_strided_slice %653 {offsets = [0, 121], sizes = [32, 7], strides = [1, 1]} : vector<32x128xf32> to vector<32x7xf32>
    %678 = vector.extract_strided_slice %653 {offsets = [0, 0], sizes = [32, 121], strides = [1, 1]} : vector<32x128xf32> to vector<32x121xf32>
    %679 = tpu.concatenate %677, %678 in 1 : vector<32x7xf32>, vector<32x121xf32> -> vector<32x128xf32>
    %680 = arith.truncf %679 : vector<32x128xf32> to vector<32x128xbf16>
    %c3_315 = arith.constant 3 : index
    %c2_316 = arith.constant 2 : index
    %c0_317 = arith.constant 0 : index
    %c0_318 = arith.constant 0 : index
    %681 = vector.load %arg10[%c3_315, %c2_316, %c0_317, %c0_318] : memref<8x9x32x32xbf16, #tpu.memory_space<vmem>>, vector<1x1x32x32xbf16>
    %682 = vector.shape_cast %681 : vector<1x1x32x32xbf16> to vector<32x32xbf16>
    %cst_319 = arith.constant dense<0.000000e+00> : vector<32x128xf32>
    %683 = tpu.matmul %682, %680, %cst_319 {dimension_numbers = #tpu.dot_dimension_numbers<[1], [0], [0], [1], [0, 0, 1, 1], [], []>} : vector<32x32xbf16>, vector<32x128xbf16>, vector<32x128xf32> -> vector<32x128xf32>
    %684 = vector.extract_strided_slice %2 {offsets = [2, 0], sizes = [1, 128], strides = [1, 1]} : vector<9x128xf32> to vector<1x128xf32>
    %685 = vector.broadcast %684 : vector<1x128xf32> to vector<32x128xf32>
    %686 = arith.mulf %683, %685 : vector<32x128xf32>
    %687 = arith.addf %676, %686 : vector<32x128xf32>
    %688 = vector.extract_strided_slice %653 {offsets = [0, 127], sizes = [32, 1], strides = [1, 1]} : vector<32x128xf32> to vector<32x1xf32>
    %689 = vector.extract_strided_slice %653 {offsets = [0, 0], sizes = [32, 127], strides = [1, 1]} : vector<32x128xf32> to vector<32x127xf32>
    %690 = tpu.concatenate %688, %689 in 1 : vector<32x1xf32>, vector<32x127xf32> -> vector<32x128xf32>
    %691 = arith.truncf %690 : vector<32x128xf32> to vector<32x128xbf16>
    %c3_320 = arith.constant 3 : index
    %c3_321 = arith.constant 3 : index
    %c0_322 = arith.constant 0 : index
    %c0_323 = arith.constant 0 : index
    %692 = vector.load %arg10[%c3_320, %c3_321, %c0_322, %c0_323] : memref<8x9x32x32xbf16, #tpu.memory_space<vmem>>, vector<1x1x32x32xbf16>
    %693 = vector.shape_cast %692 : vector<1x1x32x32xbf16> to vector<32x32xbf16>
    %cst_324 = arith.constant dense<0.000000e+00> : vector<32x128xf32>
    %694 = tpu.matmul %693, %691, %cst_324 {dimension_numbers = #tpu.dot_dimension_numbers<[1], [0], [0], [1], [0, 0, 1, 1], [], []>} : vector<32x32xbf16>, vector<32x128xbf16>, vector<32x128xf32> -> vector<32x128xf32>
    %695 = vector.extract_strided_slice %2 {offsets = [3, 0], sizes = [1, 128], strides = [1, 1]} : vector<9x128xf32> to vector<1x128xf32>
    %696 = vector.broadcast %695 : vector<1x128xf32> to vector<32x128xf32>
    %697 = arith.mulf %694, %696 : vector<32x128xf32>
    %698 = arith.addf %687, %697 : vector<32x128xf32>
    %699 = arith.truncf %653 : vector<32x128xf32> to vector<32x128xbf16>
    %c3_325 = arith.constant 3 : index
    %c4_326 = arith.constant 4 : index
    %c0_327 = arith.constant 0 : index
    %c0_328 = arith.constant 0 : index
    %700 = vector.load %arg10[%c3_325, %c4_326, %c0_327, %c0_328] : memref<8x9x32x32xbf16, #tpu.memory_space<vmem>>, vector<1x1x32x32xbf16>
    %701 = vector.shape_cast %700 : vector<1x1x32x32xbf16> to vector<32x32xbf16>
    %cst_329 = arith.constant dense<0.000000e+00> : vector<32x128xf32>
    %702 = tpu.matmul %701, %699, %cst_329 {dimension_numbers = #tpu.dot_dimension_numbers<[1], [0], [0], [1], [0, 0, 1, 1], [], []>} : vector<32x32xbf16>, vector<32x128xbf16>, vector<32x128xf32> -> vector<32x128xf32>
    %703 = vector.extract_strided_slice %2 {offsets = [4, 0], sizes = [1, 128], strides = [1, 1]} : vector<9x128xf32> to vector<1x128xf32>
    %704 = vector.broadcast %703 : vector<1x128xf32> to vector<32x128xf32>
    %705 = arith.mulf %702, %704 : vector<32x128xf32>
    %706 = arith.addf %698, %705 : vector<32x128xf32>
    %707 = vector.extract_strided_slice %653 {offsets = [0, 1], sizes = [32, 127], strides = [1, 1]} : vector<32x128xf32> to vector<32x127xf32>
    %708 = vector.extract_strided_slice %653 {offsets = [0, 0], sizes = [32, 1], strides = [1, 1]} : vector<32x128xf32> to vector<32x1xf32>
    %709 = tpu.concatenate %707, %708 in 1 : vector<32x127xf32>, vector<32x1xf32> -> vector<32x128xf32>
    %710 = arith.truncf %709 : vector<32x128xf32> to vector<32x128xbf16>
    %c3_330 = arith.constant 3 : index
    %c5_331 = arith.constant 5 : index
    %c0_332 = arith.constant 0 : index
    %c0_333 = arith.constant 0 : index
    %711 = vector.load %arg10[%c3_330, %c5_331, %c0_332, %c0_333] : memref<8x9x32x32xbf16, #tpu.memory_space<vmem>>, vector<1x1x32x32xbf16>
    %712 = vector.shape_cast %711 : vector<1x1x32x32xbf16> to vector<32x32xbf16>
    %cst_334 = arith.constant dense<0.000000e+00> : vector<32x128xf32>
    %713 = tpu.matmul %712, %710, %cst_334 {dimension_numbers = #tpu.dot_dimension_numbers<[1], [0], [0], [1], [0, 0, 1, 1], [], []>} : vector<32x32xbf16>, vector<32x128xbf16>, vector<32x128xf32> -> vector<32x128xf32>
    %714 = vector.extract_strided_slice %2 {offsets = [5, 0], sizes = [1, 128], strides = [1, 1]} : vector<9x128xf32> to vector<1x128xf32>
    %715 = vector.broadcast %714 : vector<1x128xf32> to vector<32x128xf32>
    %716 = arith.mulf %713, %715 : vector<32x128xf32>
    %717 = arith.addf %706, %716 : vector<32x128xf32>
    %718 = vector.extract_strided_slice %653 {offsets = [0, 7], sizes = [32, 121], strides = [1, 1]} : vector<32x128xf32> to vector<32x121xf32>
    %719 = vector.extract_strided_slice %653 {offsets = [0, 0], sizes = [32, 7], strides = [1, 1]} : vector<32x128xf32> to vector<32x7xf32>
    %720 = tpu.concatenate %718, %719 in 1 : vector<32x121xf32>, vector<32x7xf32> -> vector<32x128xf32>
    %721 = arith.truncf %720 : vector<32x128xf32> to vector<32x128xbf16>
    %c3_335 = arith.constant 3 : index
    %c6_336 = arith.constant 6 : index
    %c0_337 = arith.constant 0 : index
    %c0_338 = arith.constant 0 : index
    %722 = vector.load %arg10[%c3_335, %c6_336, %c0_337, %c0_338] : memref<8x9x32x32xbf16, #tpu.memory_space<vmem>>, vector<1x1x32x32xbf16>
    %723 = vector.shape_cast %722 : vector<1x1x32x32xbf16> to vector<32x32xbf16>
    %cst_339 = arith.constant dense<0.000000e+00> : vector<32x128xf32>
    %724 = tpu.matmul %723, %721, %cst_339 {dimension_numbers = #tpu.dot_dimension_numbers<[1], [0], [0], [1], [0, 0, 1, 1], [], []>} : vector<32x32xbf16>, vector<32x128xbf16>, vector<32x128xf32> -> vector<32x128xf32>
    %725 = vector.extract_strided_slice %2 {offsets = [6, 0], sizes = [1, 128], strides = [1, 1]} : vector<9x128xf32> to vector<1x128xf32>
    %726 = vector.broadcast %725 : vector<1x128xf32> to vector<32x128xf32>
    %727 = arith.mulf %724, %726 : vector<32x128xf32>
    %728 = arith.addf %717, %727 : vector<32x128xf32>
    %729 = vector.extract_strided_slice %653 {offsets = [0, 8], sizes = [32, 120], strides = [1, 1]} : vector<32x128xf32> to vector<32x120xf32>
    %730 = vector.extract_strided_slice %653 {offsets = [0, 0], sizes = [32, 8], strides = [1, 1]} : vector<32x128xf32> to vector<32x8xf32>
    %731 = tpu.concatenate %729, %730 in 1 : vector<32x120xf32>, vector<32x8xf32> -> vector<32x128xf32>
    %732 = arith.truncf %731 : vector<32x128xf32> to vector<32x128xbf16>
    %c3_340 = arith.constant 3 : index
    %c7_341 = arith.constant 7 : index
    %c0_342 = arith.constant 0 : index
    %c0_343 = arith.constant 0 : index
    %733 = vector.load %arg10[%c3_340, %c7_341, %c0_342, %c0_343] : memref<8x9x32x32xbf16, #tpu.memory_space<vmem>>, vector<1x1x32x32xbf16>
    %734 = vector.shape_cast %733 : vector<1x1x32x32xbf16> to vector<32x32xbf16>
    %cst_344 = arith.constant dense<0.000000e+00> : vector<32x128xf32>
    %735 = tpu.matmul %734, %732, %cst_344 {dimension_numbers = #tpu.dot_dimension_numbers<[1], [0], [0], [1], [0, 0, 1, 1], [], []>} : vector<32x32xbf16>, vector<32x128xbf16>, vector<32x128xf32> -> vector<32x128xf32>
    %736 = vector.extract_strided_slice %2 {offsets = [7, 0], sizes = [1, 128], strides = [1, 1]} : vector<9x128xf32> to vector<1x128xf32>
    %737 = vector.broadcast %736 : vector<1x128xf32> to vector<32x128xf32>
    %738 = arith.mulf %735, %737 : vector<32x128xf32>
    %739 = arith.addf %728, %738 : vector<32x128xf32>
    %740 = vector.extract_strided_slice %653 {offsets = [0, 9], sizes = [32, 119], strides = [1, 1]} : vector<32x128xf32> to vector<32x119xf32>
    %741 = vector.extract_strided_slice %653 {offsets = [0, 0], sizes = [32, 9], strides = [1, 1]} : vector<32x128xf32> to vector<32x9xf32>
    %742 = tpu.concatenate %740, %741 in 1 : vector<32x119xf32>, vector<32x9xf32> -> vector<32x128xf32>
    %743 = arith.truncf %742 : vector<32x128xf32> to vector<32x128xbf16>
    %c3_345 = arith.constant 3 : index
    %c8_346 = arith.constant 8 : index
    %c0_347 = arith.constant 0 : index
    %c0_348 = arith.constant 0 : index
    %744 = vector.load %arg10[%c3_345, %c8_346, %c0_347, %c0_348] : memref<8x9x32x32xbf16, #tpu.memory_space<vmem>>, vector<1x1x32x32xbf16>
    %745 = vector.shape_cast %744 : vector<1x1x32x32xbf16> to vector<32x32xbf16>
    %cst_349 = arith.constant dense<0.000000e+00> : vector<32x128xf32>
    %746 = tpu.matmul %745, %743, %cst_349 {dimension_numbers = #tpu.dot_dimension_numbers<[1], [0], [0], [1], [0, 0, 1, 1], [], []>} : vector<32x32xbf16>, vector<32x128xbf16>, vector<32x128xf32> -> vector<32x128xf32>
    %747 = vector.extract_strided_slice %2 {offsets = [8, 0], sizes = [1, 128], strides = [1, 1]} : vector<9x128xf32> to vector<1x128xf32>
    %748 = vector.broadcast %747 : vector<1x128xf32> to vector<32x128xf32>
    %749 = arith.mulf %746, %748 : vector<32x128xf32>
    %750 = arith.addf %739, %749 : vector<32x128xf32>
    %751 = vector.broadcast %655 : vector<32x1xf32> to vector<32x128xf32>
    %752 = arith.addf %750, %751 : vector<32x128xf32>
    %c3_350 = arith.constant 3 : index
    %c0_351 = arith.constant 0 : index
    %c0_352 = arith.constant 0 : index
    %753 = vector.load %arg12[%c3_350, %c0_351, %c0_352] : memref<8x32x1xf32, #tpu.memory_space<vmem>>, vector<1x32x1xf32>
    %754 = vector.shape_cast %753 : vector<1x32x1xf32> to vector<32x1xf32>
    %c3_353 = arith.constant 3 : index
    %c0_354 = arith.constant 0 : index
    %c0_355 = arith.constant 0 : index
    %755 = vector.load %arg13[%c3_353, %c0_354, %c0_355] : memref<8x32x1xf32, #tpu.memory_space<vmem>>, vector<1x32x1xf32>
    %756 = vector.shape_cast %755 : vector<1x32x1xf32> to vector<32x1xf32>
    %cst_356 = arith.constant dense<0.000000e+00> : vector<32xf32>
    %757 = vector.multi_reduction <add>, %752, %cst_356 [1] : vector<32x128xf32> to vector<32xf32>
    %758 = vector.shape_cast %757 : vector<32xf32> to vector<32x1xf32>
    %cst_357 = arith.constant 1.280000e+02 : f32
    %759 = vector.broadcast %cst_357 : f32 to vector<32x1xf32>
    %760 = arith.divf %758, %759 : vector<32x1xf32>
    %761 = vector.broadcast %760 : vector<32x1xf32> to vector<32x128xf32>
    %762 = arith.subf %752, %761 : vector<32x128xf32>
    %763 = arith.mulf %762, %762 : vector<32x128xf32>
    %cst_358 = arith.constant dense<0.000000e+00> : vector<32xf32>
    %764 = vector.multi_reduction <add>, %763, %cst_358 [1] : vector<32x128xf32> to vector<32xf32>
    %765 = vector.shape_cast %764 : vector<32xf32> to vector<32x1xf32>
    %cst_359 = arith.constant 1.280000e+02 : f32
    %766 = vector.broadcast %cst_359 : f32 to vector<32x1xf32>
    %767 = arith.divf %765, %766 : vector<32x1xf32>
    %768 = vector.broadcast %760 : vector<32x1xf32> to vector<32x128xf32>
    %769 = arith.subf %752, %768 : vector<32x128xf32>
    %cst_360 = arith.constant 9.99999974E-6 : f32
    %770 = vector.broadcast %cst_360 : f32 to vector<32x1xf32>
    %771 = arith.addf %767, %770 : vector<32x1xf32>
    %772 = math.rsqrt %771 : vector<32x1xf32>
    %773 = vector.broadcast %772 : vector<32x1xf32> to vector<32x128xf32>
    %774 = arith.mulf %769, %773 : vector<32x128xf32>
    %775 = vector.broadcast %754 : vector<32x1xf32> to vector<32x128xf32>
    %776 = arith.mulf %774, %775 : vector<32x128xf32>
    %777 = vector.broadcast %756 : vector<32x1xf32> to vector<32x128xf32>
    %778 = arith.addf %776, %777 : vector<32x128xf32>
    %cst_361 = arith.constant 0.000000e+00 : f32
    %779 = vector.broadcast %cst_361 : f32 to vector<32x128xf32>
    %780 = arith.maximumf %778, %779 : vector<32x128xf32>
    %c3_362 = arith.constant 3 : index
    %c0_363 = arith.constant 0 : index
    %c0_364 = arith.constant 0 : index
    %781 = vector.load %arg14[%c3_362, %c0_363, %c0_364] : memref<8x32x32xbf16, #tpu.memory_space<vmem>>, vector<1x32x32xbf16>
    %782 = vector.shape_cast %781 : vector<1x32x32xbf16> to vector<32x32xbf16>
    %783 = arith.truncf %780 : vector<32x128xf32> to vector<32x128xbf16>
    %cst_365 = arith.constant dense<0.000000e+00> : vector<32x128xf32>
    %784 = tpu.matmul %782, %783, %cst_365 {dimension_numbers = #tpu.dot_dimension_numbers<[1], [0], [0], [1], [0, 0, 1, 1], [], []>} : vector<32x32xbf16>, vector<32x128xbf16>, vector<32x128xf32> -> vector<32x128xf32>
    %c3_366 = arith.constant 3 : index
    %c0_367 = arith.constant 0 : index
    %c0_368 = arith.constant 0 : index
    %785 = vector.load %arg15[%c3_366, %c0_367, %c0_368] : memref<8x32x1xf32, #tpu.memory_space<vmem>>, vector<1x32x1xf32>
    %786 = vector.shape_cast %785 : vector<1x32x1xf32> to vector<32x1xf32>
    %787 = vector.broadcast %786 : vector<32x1xf32> to vector<32x128xf32>
    %788 = arith.addf %784, %787 : vector<32x128xf32>
    %789 = arith.addf %788, %617 : vector<32x128xf32>
    %c4_369 = arith.constant 4 : index
    %c0_370 = arith.constant 0 : index
    %c0_371 = arith.constant 0 : index
    %790 = vector.load %arg6[%c4_369, %c0_370, %c0_371] : memref<8x32x32xbf16, #tpu.memory_space<vmem>>, vector<1x32x32xbf16>
    %791 = vector.shape_cast %790 : vector<1x32x32xbf16> to vector<32x32xbf16>
    %792 = arith.truncf %789 : vector<32x128xf32> to vector<32x128xbf16>
    %cst_372 = arith.constant dense<0.000000e+00> : vector<32x128xf32>
    %793 = tpu.matmul %791, %792, %cst_372 {dimension_numbers = #tpu.dot_dimension_numbers<[1], [0], [0], [1], [0, 0, 1, 1], [], []>} : vector<32x32xbf16>, vector<32x128xbf16>, vector<32x128xf32> -> vector<32x128xf32>
    %c4_373 = arith.constant 4 : index
    %c0_374 = arith.constant 0 : index
    %c0_375 = arith.constant 0 : index
    %794 = vector.load %arg7[%c4_373, %c0_374, %c0_375] : memref<8x32x1xf32, #tpu.memory_space<vmem>>, vector<1x32x1xf32>
    %795 = vector.shape_cast %794 : vector<1x32x1xf32> to vector<32x1xf32>
    %796 = vector.broadcast %795 : vector<32x1xf32> to vector<32x128xf32>
    %797 = arith.addf %793, %796 : vector<32x128xf32>
    %c4_376 = arith.constant 4 : index
    %c0_377 = arith.constant 0 : index
    %c0_378 = arith.constant 0 : index
    %798 = vector.load %arg8[%c4_376, %c0_377, %c0_378] : memref<8x32x1xf32, #tpu.memory_space<vmem>>, vector<1x32x1xf32>
    %799 = vector.shape_cast %798 : vector<1x32x1xf32> to vector<32x1xf32>
    %c4_379 = arith.constant 4 : index
    %c0_380 = arith.constant 0 : index
    %c0_381 = arith.constant 0 : index
    %800 = vector.load %arg9[%c4_379, %c0_380, %c0_381] : memref<8x32x1xf32, #tpu.memory_space<vmem>>, vector<1x32x1xf32>
    %801 = vector.shape_cast %800 : vector<1x32x1xf32> to vector<32x1xf32>
    %cst_382 = arith.constant dense<0.000000e+00> : vector<32xf32>
    %802 = vector.multi_reduction <add>, %797, %cst_382 [1] : vector<32x128xf32> to vector<32xf32>
    %803 = vector.shape_cast %802 : vector<32xf32> to vector<32x1xf32>
    %cst_383 = arith.constant 1.280000e+02 : f32
    %804 = vector.broadcast %cst_383 : f32 to vector<32x1xf32>
    %805 = arith.divf %803, %804 : vector<32x1xf32>
    %806 = vector.broadcast %805 : vector<32x1xf32> to vector<32x128xf32>
    %807 = arith.subf %797, %806 : vector<32x128xf32>
    %808 = arith.mulf %807, %807 : vector<32x128xf32>
    %cst_384 = arith.constant dense<0.000000e+00> : vector<32xf32>
    %809 = vector.multi_reduction <add>, %808, %cst_384 [1] : vector<32x128xf32> to vector<32xf32>
    %810 = vector.shape_cast %809 : vector<32xf32> to vector<32x1xf32>
    %cst_385 = arith.constant 1.280000e+02 : f32
    %811 = vector.broadcast %cst_385 : f32 to vector<32x1xf32>
    %812 = arith.divf %810, %811 : vector<32x1xf32>
    %813 = vector.broadcast %805 : vector<32x1xf32> to vector<32x128xf32>
    %814 = arith.subf %797, %813 : vector<32x128xf32>
    %cst_386 = arith.constant 9.99999974E-6 : f32
    %815 = vector.broadcast %cst_386 : f32 to vector<32x1xf32>
    %816 = arith.addf %812, %815 : vector<32x1xf32>
    %817 = math.rsqrt %816 : vector<32x1xf32>
    %818 = vector.broadcast %817 : vector<32x1xf32> to vector<32x128xf32>
    %819 = arith.mulf %814, %818 : vector<32x128xf32>
    %820 = vector.broadcast %799 : vector<32x1xf32> to vector<32x128xf32>
    %821 = arith.mulf %819, %820 : vector<32x128xf32>
    %822 = vector.broadcast %801 : vector<32x1xf32> to vector<32x128xf32>
    %823 = arith.addf %821, %822 : vector<32x128xf32>
    %cst_387 = arith.constant 0.000000e+00 : f32
    %824 = vector.broadcast %cst_387 : f32 to vector<32x128xf32>
    %825 = arith.maximumf %823, %824 : vector<32x128xf32>
    %c4_388 = arith.constant 4 : index
    %c0_389 = arith.constant 0 : index
    %c0_390 = arith.constant 0 : index
    %826 = vector.load %arg11[%c4_388, %c0_389, %c0_390] : memref<8x32x1xf32, #tpu.memory_space<vmem>>, vector<1x32x1xf32>
    %827 = vector.shape_cast %826 : vector<1x32x1xf32> to vector<32x1xf32>
    %828 = vector.extract_strided_slice %825 {offsets = [0, 119], sizes = [32, 9], strides = [1, 1]} : vector<32x128xf32> to vector<32x9xf32>
    %829 = vector.extract_strided_slice %825 {offsets = [0, 0], sizes = [32, 119], strides = [1, 1]} : vector<32x128xf32> to vector<32x119xf32>
    %830 = tpu.concatenate %828, %829 in 1 : vector<32x9xf32>, vector<32x119xf32> -> vector<32x128xf32>
    %831 = arith.truncf %830 : vector<32x128xf32> to vector<32x128xbf16>
    %c4_391 = arith.constant 4 : index
    %c0_392 = arith.constant 0 : index
    %c0_393 = arith.constant 0 : index
    %c0_394 = arith.constant 0 : index
    %832 = vector.load %arg10[%c4_391, %c0_392, %c0_393, %c0_394] : memref<8x9x32x32xbf16, #tpu.memory_space<vmem>>, vector<1x1x32x32xbf16>
    %833 = vector.shape_cast %832 : vector<1x1x32x32xbf16> to vector<32x32xbf16>
    %cst_395 = arith.constant dense<0.000000e+00> : vector<32x128xf32>
    %834 = tpu.matmul %833, %831, %cst_395 {dimension_numbers = #tpu.dot_dimension_numbers<[1], [0], [0], [1], [0, 0, 1, 1], [], []>} : vector<32x32xbf16>, vector<32x128xbf16>, vector<32x128xf32> -> vector<32x128xf32>
    %835 = vector.extract_strided_slice %2 {offsets = [0, 0], sizes = [1, 128], strides = [1, 1]} : vector<9x128xf32> to vector<1x128xf32>
    %836 = vector.broadcast %835 : vector<1x128xf32> to vector<32x128xf32>
    %837 = arith.mulf %834, %836 : vector<32x128xf32>
    %838 = vector.extract_strided_slice %825 {offsets = [0, 120], sizes = [32, 8], strides = [1, 1]} : vector<32x128xf32> to vector<32x8xf32>
    %839 = vector.extract_strided_slice %825 {offsets = [0, 0], sizes = [32, 120], strides = [1, 1]} : vector<32x128xf32> to vector<32x120xf32>
    %840 = tpu.concatenate %838, %839 in 1 : vector<32x8xf32>, vector<32x120xf32> -> vector<32x128xf32>
    %841 = arith.truncf %840 : vector<32x128xf32> to vector<32x128xbf16>
    %c4_396 = arith.constant 4 : index
    %c1_397 = arith.constant 1 : index
    %c0_398 = arith.constant 0 : index
    %c0_399 = arith.constant 0 : index
    %842 = vector.load %arg10[%c4_396, %c1_397, %c0_398, %c0_399] : memref<8x9x32x32xbf16, #tpu.memory_space<vmem>>, vector<1x1x32x32xbf16>
    %843 = vector.shape_cast %842 : vector<1x1x32x32xbf16> to vector<32x32xbf16>
    %cst_400 = arith.constant dense<0.000000e+00> : vector<32x128xf32>
    %844 = tpu.matmul %843, %841, %cst_400 {dimension_numbers = #tpu.dot_dimension_numbers<[1], [0], [0], [1], [0, 0, 1, 1], [], []>} : vector<32x32xbf16>, vector<32x128xbf16>, vector<32x128xf32> -> vector<32x128xf32>
    %845 = vector.extract_strided_slice %2 {offsets = [1, 0], sizes = [1, 128], strides = [1, 1]} : vector<9x128xf32> to vector<1x128xf32>
    %846 = vector.broadcast %845 : vector<1x128xf32> to vector<32x128xf32>
    %847 = arith.mulf %844, %846 : vector<32x128xf32>
    %848 = arith.addf %837, %847 : vector<32x128xf32>
    %849 = vector.extract_strided_slice %825 {offsets = [0, 121], sizes = [32, 7], strides = [1, 1]} : vector<32x128xf32> to vector<32x7xf32>
    %850 = vector.extract_strided_slice %825 {offsets = [0, 0], sizes = [32, 121], strides = [1, 1]} : vector<32x128xf32> to vector<32x121xf32>
    %851 = tpu.concatenate %849, %850 in 1 : vector<32x7xf32>, vector<32x121xf32> -> vector<32x128xf32>
    %852 = arith.truncf %851 : vector<32x128xf32> to vector<32x128xbf16>
    %c4_401 = arith.constant 4 : index
    %c2_402 = arith.constant 2 : index
    %c0_403 = arith.constant 0 : index
    %c0_404 = arith.constant 0 : index
    %853 = vector.load %arg10[%c4_401, %c2_402, %c0_403, %c0_404] : memref<8x9x32x32xbf16, #tpu.memory_space<vmem>>, vector<1x1x32x32xbf16>
    %854 = vector.shape_cast %853 : vector<1x1x32x32xbf16> to vector<32x32xbf16>
    %cst_405 = arith.constant dense<0.000000e+00> : vector<32x128xf32>
    %855 = tpu.matmul %854, %852, %cst_405 {dimension_numbers = #tpu.dot_dimension_numbers<[1], [0], [0], [1], [0, 0, 1, 1], [], []>} : vector<32x32xbf16>, vector<32x128xbf16>, vector<32x128xf32> -> vector<32x128xf32>
    %856 = vector.extract_strided_slice %2 {offsets = [2, 0], sizes = [1, 128], strides = [1, 1]} : vector<9x128xf32> to vector<1x128xf32>
    %857 = vector.broadcast %856 : vector<1x128xf32> to vector<32x128xf32>
    %858 = arith.mulf %855, %857 : vector<32x128xf32>
    %859 = arith.addf %848, %858 : vector<32x128xf32>
    %860 = vector.extract_strided_slice %825 {offsets = [0, 127], sizes = [32, 1], strides = [1, 1]} : vector<32x128xf32> to vector<32x1xf32>
    %861 = vector.extract_strided_slice %825 {offsets = [0, 0], sizes = [32, 127], strides = [1, 1]} : vector<32x128xf32> to vector<32x127xf32>
    %862 = tpu.concatenate %860, %861 in 1 : vector<32x1xf32>, vector<32x127xf32> -> vector<32x128xf32>
    %863 = arith.truncf %862 : vector<32x128xf32> to vector<32x128xbf16>
    %c4_406 = arith.constant 4 : index
    %c3_407 = arith.constant 3 : index
    %c0_408 = arith.constant 0 : index
    %c0_409 = arith.constant 0 : index
    %864 = vector.load %arg10[%c4_406, %c3_407, %c0_408, %c0_409] : memref<8x9x32x32xbf16, #tpu.memory_space<vmem>>, vector<1x1x32x32xbf16>
    %865 = vector.shape_cast %864 : vector<1x1x32x32xbf16> to vector<32x32xbf16>
    %cst_410 = arith.constant dense<0.000000e+00> : vector<32x128xf32>
    %866 = tpu.matmul %865, %863, %cst_410 {dimension_numbers = #tpu.dot_dimension_numbers<[1], [0], [0], [1], [0, 0, 1, 1], [], []>} : vector<32x32xbf16>, vector<32x128xbf16>, vector<32x128xf32> -> vector<32x128xf32>
    %867 = vector.extract_strided_slice %2 {offsets = [3, 0], sizes = [1, 128], strides = [1, 1]} : vector<9x128xf32> to vector<1x128xf32>
    %868 = vector.broadcast %867 : vector<1x128xf32> to vector<32x128xf32>
    %869 = arith.mulf %866, %868 : vector<32x128xf32>
    %870 = arith.addf %859, %869 : vector<32x128xf32>
    %871 = arith.truncf %825 : vector<32x128xf32> to vector<32x128xbf16>
    %c4_411 = arith.constant 4 : index
    %c4_412 = arith.constant 4 : index
    %c0_413 = arith.constant 0 : index
    %c0_414 = arith.constant 0 : index
    %872 = vector.load %arg10[%c4_411, %c4_412, %c0_413, %c0_414] : memref<8x9x32x32xbf16, #tpu.memory_space<vmem>>, vector<1x1x32x32xbf16>
    %873 = vector.shape_cast %872 : vector<1x1x32x32xbf16> to vector<32x32xbf16>
    %cst_415 = arith.constant dense<0.000000e+00> : vector<32x128xf32>
    %874 = tpu.matmul %873, %871, %cst_415 {dimension_numbers = #tpu.dot_dimension_numbers<[1], [0], [0], [1], [0, 0, 1, 1], [], []>} : vector<32x32xbf16>, vector<32x128xbf16>, vector<32x128xf32> -> vector<32x128xf32>
    %875 = vector.extract_strided_slice %2 {offsets = [4, 0], sizes = [1, 128], strides = [1, 1]} : vector<9x128xf32> to vector<1x128xf32>
    %876 = vector.broadcast %875 : vector<1x128xf32> to vector<32x128xf32>
    %877 = arith.mulf %874, %876 : vector<32x128xf32>
    %878 = arith.addf %870, %877 : vector<32x128xf32>
    %879 = vector.extract_strided_slice %825 {offsets = [0, 1], sizes = [32, 127], strides = [1, 1]} : vector<32x128xf32> to vector<32x127xf32>
    %880 = vector.extract_strided_slice %825 {offsets = [0, 0], sizes = [32, 1], strides = [1, 1]} : vector<32x128xf32> to vector<32x1xf32>
    %881 = tpu.concatenate %879, %880 in 1 : vector<32x127xf32>, vector<32x1xf32> -> vector<32x128xf32>
    %882 = arith.truncf %881 : vector<32x128xf32> to vector<32x128xbf16>
    %c4_416 = arith.constant 4 : index
    %c5_417 = arith.constant 5 : index
    %c0_418 = arith.constant 0 : index
    %c0_419 = arith.constant 0 : index
    %883 = vector.load %arg10[%c4_416, %c5_417, %c0_418, %c0_419] : memref<8x9x32x32xbf16, #tpu.memory_space<vmem>>, vector<1x1x32x32xbf16>
    %884 = vector.shape_cast %883 : vector<1x1x32x32xbf16> to vector<32x32xbf16>
    %cst_420 = arith.constant dense<0.000000e+00> : vector<32x128xf32>
    %885 = tpu.matmul %884, %882, %cst_420 {dimension_numbers = #tpu.dot_dimension_numbers<[1], [0], [0], [1], [0, 0, 1, 1], [], []>} : vector<32x32xbf16>, vector<32x128xbf16>, vector<32x128xf32> -> vector<32x128xf32>
    %886 = vector.extract_strided_slice %2 {offsets = [5, 0], sizes = [1, 128], strides = [1, 1]} : vector<9x128xf32> to vector<1x128xf32>
    %887 = vector.broadcast %886 : vector<1x128xf32> to vector<32x128xf32>
    %888 = arith.mulf %885, %887 : vector<32x128xf32>
    %889 = arith.addf %878, %888 : vector<32x128xf32>
    %890 = vector.extract_strided_slice %825 {offsets = [0, 7], sizes = [32, 121], strides = [1, 1]} : vector<32x128xf32> to vector<32x121xf32>
    %891 = vector.extract_strided_slice %825 {offsets = [0, 0], sizes = [32, 7], strides = [1, 1]} : vector<32x128xf32> to vector<32x7xf32>
    %892 = tpu.concatenate %890, %891 in 1 : vector<32x121xf32>, vector<32x7xf32> -> vector<32x128xf32>
    %893 = arith.truncf %892 : vector<32x128xf32> to vector<32x128xbf16>
    %c4_421 = arith.constant 4 : index
    %c6_422 = arith.constant 6 : index
    %c0_423 = arith.constant 0 : index
    %c0_424 = arith.constant 0 : index
    %894 = vector.load %arg10[%c4_421, %c6_422, %c0_423, %c0_424] : memref<8x9x32x32xbf16, #tpu.memory_space<vmem>>, vector<1x1x32x32xbf16>
    %895 = vector.shape_cast %894 : vector<1x1x32x32xbf16> to vector<32x32xbf16>
    %cst_425 = arith.constant dense<0.000000e+00> : vector<32x128xf32>
    %896 = tpu.matmul %895, %893, %cst_425 {dimension_numbers = #tpu.dot_dimension_numbers<[1], [0], [0], [1], [0, 0, 1, 1], [], []>} : vector<32x32xbf16>, vector<32x128xbf16>, vector<32x128xf32> -> vector<32x128xf32>
    %897 = vector.extract_strided_slice %2 {offsets = [6, 0], sizes = [1, 128], strides = [1, 1]} : vector<9x128xf32> to vector<1x128xf32>
    %898 = vector.broadcast %897 : vector<1x128xf32> to vector<32x128xf32>
    %899 = arith.mulf %896, %898 : vector<32x128xf32>
    %900 = arith.addf %889, %899 : vector<32x128xf32>
    %901 = vector.extract_strided_slice %825 {offsets = [0, 8], sizes = [32, 120], strides = [1, 1]} : vector<32x128xf32> to vector<32x120xf32>
    %902 = vector.extract_strided_slice %825 {offsets = [0, 0], sizes = [32, 8], strides = [1, 1]} : vector<32x128xf32> to vector<32x8xf32>
    %903 = tpu.concatenate %901, %902 in 1 : vector<32x120xf32>, vector<32x8xf32> -> vector<32x128xf32>
    %904 = arith.truncf %903 : vector<32x128xf32> to vector<32x128xbf16>
    %c4_426 = arith.constant 4 : index
    %c7_427 = arith.constant 7 : index
    %c0_428 = arith.constant 0 : index
    %c0_429 = arith.constant 0 : index
    %905 = vector.load %arg10[%c4_426, %c7_427, %c0_428, %c0_429] : memref<8x9x32x32xbf16, #tpu.memory_space<vmem>>, vector<1x1x32x32xbf16>
    %906 = vector.shape_cast %905 : vector<1x1x32x32xbf16> to vector<32x32xbf16>
    %cst_430 = arith.constant dense<0.000000e+00> : vector<32x128xf32>
    %907 = tpu.matmul %906, %904, %cst_430 {dimension_numbers = #tpu.dot_dimension_numbers<[1], [0], [0], [1], [0, 0, 1, 1], [], []>} : vector<32x32xbf16>, vector<32x128xbf16>, vector<32x128xf32> -> vector<32x128xf32>
    %908 = vector.extract_strided_slice %2 {offsets = [7, 0], sizes = [1, 128], strides = [1, 1]} : vector<9x128xf32> to vector<1x128xf32>
    %909 = vector.broadcast %908 : vector<1x128xf32> to vector<32x128xf32>
    %910 = arith.mulf %907, %909 : vector<32x128xf32>
    %911 = arith.addf %900, %910 : vector<32x128xf32>
    %912 = vector.extract_strided_slice %825 {offsets = [0, 9], sizes = [32, 119], strides = [1, 1]} : vector<32x128xf32> to vector<32x119xf32>
    %913 = vector.extract_strided_slice %825 {offsets = [0, 0], sizes = [32, 9], strides = [1, 1]} : vector<32x128xf32> to vector<32x9xf32>
    %914 = tpu.concatenate %912, %913 in 1 : vector<32x119xf32>, vector<32x9xf32> -> vector<32x128xf32>
    %915 = arith.truncf %914 : vector<32x128xf32> to vector<32x128xbf16>
    %c4_431 = arith.constant 4 : index
    %c8_432 = arith.constant 8 : index
    %c0_433 = arith.constant 0 : index
    %c0_434 = arith.constant 0 : index
    %916 = vector.load %arg10[%c4_431, %c8_432, %c0_433, %c0_434] : memref<8x9x32x32xbf16, #tpu.memory_space<vmem>>, vector<1x1x32x32xbf16>
    %917 = vector.shape_cast %916 : vector<1x1x32x32xbf16> to vector<32x32xbf16>
    %cst_435 = arith.constant dense<0.000000e+00> : vector<32x128xf32>
    %918 = tpu.matmul %917, %915, %cst_435 {dimension_numbers = #tpu.dot_dimension_numbers<[1], [0], [0], [1], [0, 0, 1, 1], [], []>} : vector<32x32xbf16>, vector<32x128xbf16>, vector<32x128xf32> -> vector<32x128xf32>
    %919 = vector.extract_strided_slice %2 {offsets = [8, 0], sizes = [1, 128], strides = [1, 1]} : vector<9x128xf32> to vector<1x128xf32>
    %920 = vector.broadcast %919 : vector<1x128xf32> to vector<32x128xf32>
    %921 = arith.mulf %918, %920 : vector<32x128xf32>
    %922 = arith.addf %911, %921 : vector<32x128xf32>
    %923 = vector.broadcast %827 : vector<32x1xf32> to vector<32x128xf32>
    %924 = arith.addf %922, %923 : vector<32x128xf32>
    %c4_436 = arith.constant 4 : index
    %c0_437 = arith.constant 0 : index
    %c0_438 = arith.constant 0 : index
    %925 = vector.load %arg12[%c4_436, %c0_437, %c0_438] : memref<8x32x1xf32, #tpu.memory_space<vmem>>, vector<1x32x1xf32>
    %926 = vector.shape_cast %925 : vector<1x32x1xf32> to vector<32x1xf32>
    %c4_439 = arith.constant 4 : index
    %c0_440 = arith.constant 0 : index
    %c0_441 = arith.constant 0 : index
    %927 = vector.load %arg13[%c4_439, %c0_440, %c0_441] : memref<8x32x1xf32, #tpu.memory_space<vmem>>, vector<1x32x1xf32>
    %928 = vector.shape_cast %927 : vector<1x32x1xf32> to vector<32x1xf32>
    %cst_442 = arith.constant dense<0.000000e+00> : vector<32xf32>
    %929 = vector.multi_reduction <add>, %924, %cst_442 [1] : vector<32x128xf32> to vector<32xf32>
    %930 = vector.shape_cast %929 : vector<32xf32> to vector<32x1xf32>
    %cst_443 = arith.constant 1.280000e+02 : f32
    %931 = vector.broadcast %cst_443 : f32 to vector<32x1xf32>
    %932 = arith.divf %930, %931 : vector<32x1xf32>
    %933 = vector.broadcast %932 : vector<32x1xf32> to vector<32x128xf32>
    %934 = arith.subf %924, %933 : vector<32x128xf32>
    %935 = arith.mulf %934, %934 : vector<32x128xf32>
    %cst_444 = arith.constant dense<0.000000e+00> : vector<32xf32>
    %936 = vector.multi_reduction <add>, %935, %cst_444 [1] : vector<32x128xf32> to vector<32xf32>
    %937 = vector.shape_cast %936 : vector<32xf32> to vector<32x1xf32>
    %cst_445 = arith.constant 1.280000e+02 : f32
    %938 = vector.broadcast %cst_445 : f32 to vector<32x1xf32>
    %939 = arith.divf %937, %938 : vector<32x1xf32>
    %940 = vector.broadcast %932 : vector<32x1xf32> to vector<32x128xf32>
    %941 = arith.subf %924, %940 : vector<32x128xf32>
    %cst_446 = arith.constant 9.99999974E-6 : f32
    %942 = vector.broadcast %cst_446 : f32 to vector<32x1xf32>
    %943 = arith.addf %939, %942 : vector<32x1xf32>
    %944 = math.rsqrt %943 : vector<32x1xf32>
    %945 = vector.broadcast %944 : vector<32x1xf32> to vector<32x128xf32>
    %946 = arith.mulf %941, %945 : vector<32x128xf32>
    %947 = vector.broadcast %926 : vector<32x1xf32> to vector<32x128xf32>
    %948 = arith.mulf %946, %947 : vector<32x128xf32>
    %949 = vector.broadcast %928 : vector<32x1xf32> to vector<32x128xf32>
    %950 = arith.addf %948, %949 : vector<32x128xf32>
    %cst_447 = arith.constant 0.000000e+00 : f32
    %951 = vector.broadcast %cst_447 : f32 to vector<32x128xf32>
    %952 = arith.maximumf %950, %951 : vector<32x128xf32>
    %c4_448 = arith.constant 4 : index
    %c0_449 = arith.constant 0 : index
    %c0_450 = arith.constant 0 : index
    %953 = vector.load %arg14[%c4_448, %c0_449, %c0_450] : memref<8x32x32xbf16, #tpu.memory_space<vmem>>, vector<1x32x32xbf16>
    %954 = vector.shape_cast %953 : vector<1x32x32xbf16> to vector<32x32xbf16>
    %955 = arith.truncf %952 : vector<32x128xf32> to vector<32x128xbf16>
    %cst_451 = arith.constant dense<0.000000e+00> : vector<32x128xf32>
    %956 = tpu.matmul %954, %955, %cst_451 {dimension_numbers = #tpu.dot_dimension_numbers<[1], [0], [0], [1], [0, 0, 1, 1], [], []>} : vector<32x32xbf16>, vector<32x128xbf16>, vector<32x128xf32> -> vector<32x128xf32>
    %c4_452 = arith.constant 4 : index
    %c0_453 = arith.constant 0 : index
    %c0_454 = arith.constant 0 : index
    %957 = vector.load %arg15[%c4_452, %c0_453, %c0_454] : memref<8x32x1xf32, #tpu.memory_space<vmem>>, vector<1x32x1xf32>
    %958 = vector.shape_cast %957 : vector<1x32x1xf32> to vector<32x1xf32>
    %959 = vector.broadcast %958 : vector<32x1xf32> to vector<32x128xf32>
    %960 = arith.addf %956, %959 : vector<32x128xf32>
    %961 = arith.addf %960, %789 : vector<32x128xf32>
    %c5_455 = arith.constant 5 : index
    %c0_456 = arith.constant 0 : index
    %c0_457 = arith.constant 0 : index
    %962 = vector.load %arg6[%c5_455, %c0_456, %c0_457] : memref<8x32x32xbf16, #tpu.memory_space<vmem>>, vector<1x32x32xbf16>
    %963 = vector.shape_cast %962 : vector<1x32x32xbf16> to vector<32x32xbf16>
    %964 = arith.truncf %961 : vector<32x128xf32> to vector<32x128xbf16>
    %cst_458 = arith.constant dense<0.000000e+00> : vector<32x128xf32>
    %965 = tpu.matmul %963, %964, %cst_458 {dimension_numbers = #tpu.dot_dimension_numbers<[1], [0], [0], [1], [0, 0, 1, 1], [], []>} : vector<32x32xbf16>, vector<32x128xbf16>, vector<32x128xf32> -> vector<32x128xf32>
    %c5_459 = arith.constant 5 : index
    %c0_460 = arith.constant 0 : index
    %c0_461 = arith.constant 0 : index
    %966 = vector.load %arg7[%c5_459, %c0_460, %c0_461] : memref<8x32x1xf32, #tpu.memory_space<vmem>>, vector<1x32x1xf32>
    %967 = vector.shape_cast %966 : vector<1x32x1xf32> to vector<32x1xf32>
    %968 = vector.broadcast %967 : vector<32x1xf32> to vector<32x128xf32>
    %969 = arith.addf %965, %968 : vector<32x128xf32>
    %c5_462 = arith.constant 5 : index
    %c0_463 = arith.constant 0 : index
    %c0_464 = arith.constant 0 : index
    %970 = vector.load %arg8[%c5_462, %c0_463, %c0_464] : memref<8x32x1xf32, #tpu.memory_space<vmem>>, vector<1x32x1xf32>
    %971 = vector.shape_cast %970 : vector<1x32x1xf32> to vector<32x1xf32>
    %c5_465 = arith.constant 5 : index
    %c0_466 = arith.constant 0 : index
    %c0_467 = arith.constant 0 : index
    %972 = vector.load %arg9[%c5_465, %c0_466, %c0_467] : memref<8x32x1xf32, #tpu.memory_space<vmem>>, vector<1x32x1xf32>
    %973 = vector.shape_cast %972 : vector<1x32x1xf32> to vector<32x1xf32>
    %cst_468 = arith.constant dense<0.000000e+00> : vector<32xf32>
    %974 = vector.multi_reduction <add>, %969, %cst_468 [1] : vector<32x128xf32> to vector<32xf32>
    %975 = vector.shape_cast %974 : vector<32xf32> to vector<32x1xf32>
    %cst_469 = arith.constant 1.280000e+02 : f32
    %976 = vector.broadcast %cst_469 : f32 to vector<32x1xf32>
    %977 = arith.divf %975, %976 : vector<32x1xf32>
    %978 = vector.broadcast %977 : vector<32x1xf32> to vector<32x128xf32>
    %979 = arith.subf %969, %978 : vector<32x128xf32>
    %980 = arith.mulf %979, %979 : vector<32x128xf32>
    %cst_470 = arith.constant dense<0.000000e+00> : vector<32xf32>
    %981 = vector.multi_reduction <add>, %980, %cst_470 [1] : vector<32x128xf32> to vector<32xf32>
    %982 = vector.shape_cast %981 : vector<32xf32> to vector<32x1xf32>
    %cst_471 = arith.constant 1.280000e+02 : f32
    %983 = vector.broadcast %cst_471 : f32 to vector<32x1xf32>
    %984 = arith.divf %982, %983 : vector<32x1xf32>
    %985 = vector.broadcast %977 : vector<32x1xf32> to vector<32x128xf32>
    %986 = arith.subf %969, %985 : vector<32x128xf32>
    %cst_472 = arith.constant 9.99999974E-6 : f32
    %987 = vector.broadcast %cst_472 : f32 to vector<32x1xf32>
    %988 = arith.addf %984, %987 : vector<32x1xf32>
    %989 = math.rsqrt %988 : vector<32x1xf32>
    %990 = vector.broadcast %989 : vector<32x1xf32> to vector<32x128xf32>
    %991 = arith.mulf %986, %990 : vector<32x128xf32>
    %992 = vector.broadcast %971 : vector<32x1xf32> to vector<32x128xf32>
    %993 = arith.mulf %991, %992 : vector<32x128xf32>
    %994 = vector.broadcast %973 : vector<32x1xf32> to vector<32x128xf32>
    %995 = arith.addf %993, %994 : vector<32x128xf32>
    %cst_473 = arith.constant 0.000000e+00 : f32
    %996 = vector.broadcast %cst_473 : f32 to vector<32x128xf32>
    %997 = arith.maximumf %995, %996 : vector<32x128xf32>
    %c5_474 = arith.constant 5 : index
    %c0_475 = arith.constant 0 : index
    %c0_476 = arith.constant 0 : index
    %998 = vector.load %arg11[%c5_474, %c0_475, %c0_476] : memref<8x32x1xf32, #tpu.memory_space<vmem>>, vector<1x32x1xf32>
    %999 = vector.shape_cast %998 : vector<1x32x1xf32> to vector<32x1xf32>
    %1000 = vector.extract_strided_slice %997 {offsets = [0, 119], sizes = [32, 9], strides = [1, 1]} : vector<32x128xf32> to vector<32x9xf32>
    %1001 = vector.extract_strided_slice %997 {offsets = [0, 0], sizes = [32, 119], strides = [1, 1]} : vector<32x128xf32> to vector<32x119xf32>
    %1002 = tpu.concatenate %1000, %1001 in 1 : vector<32x9xf32>, vector<32x119xf32> -> vector<32x128xf32>
    %1003 = arith.truncf %1002 : vector<32x128xf32> to vector<32x128xbf16>
    %c5_477 = arith.constant 5 : index
    %c0_478 = arith.constant 0 : index
    %c0_479 = arith.constant 0 : index
    %c0_480 = arith.constant 0 : index
    %1004 = vector.load %arg10[%c5_477, %c0_478, %c0_479, %c0_480] : memref<8x9x32x32xbf16, #tpu.memory_space<vmem>>, vector<1x1x32x32xbf16>
    %1005 = vector.shape_cast %1004 : vector<1x1x32x32xbf16> to vector<32x32xbf16>
    %cst_481 = arith.constant dense<0.000000e+00> : vector<32x128xf32>
    %1006 = tpu.matmul %1005, %1003, %cst_481 {dimension_numbers = #tpu.dot_dimension_numbers<[1], [0], [0], [1], [0, 0, 1, 1], [], []>} : vector<32x32xbf16>, vector<32x128xbf16>, vector<32x128xf32> -> vector<32x128xf32>
    %1007 = vector.extract_strided_slice %2 {offsets = [0, 0], sizes = [1, 128], strides = [1, 1]} : vector<9x128xf32> to vector<1x128xf32>
    %1008 = vector.broadcast %1007 : vector<1x128xf32> to vector<32x128xf32>
    %1009 = arith.mulf %1006, %1008 : vector<32x128xf32>
    %1010 = vector.extract_strided_slice %997 {offsets = [0, 120], sizes = [32, 8], strides = [1, 1]} : vector<32x128xf32> to vector<32x8xf32>
    %1011 = vector.extract_strided_slice %997 {offsets = [0, 0], sizes = [32, 120], strides = [1, 1]} : vector<32x128xf32> to vector<32x120xf32>
    %1012 = tpu.concatenate %1010, %1011 in 1 : vector<32x8xf32>, vector<32x120xf32> -> vector<32x128xf32>
    %1013 = arith.truncf %1012 : vector<32x128xf32> to vector<32x128xbf16>
    %c5_482 = arith.constant 5 : index
    %c1_483 = arith.constant 1 : index
    %c0_484 = arith.constant 0 : index
    %c0_485 = arith.constant 0 : index
    %1014 = vector.load %arg10[%c5_482, %c1_483, %c0_484, %c0_485] : memref<8x9x32x32xbf16, #tpu.memory_space<vmem>>, vector<1x1x32x32xbf16>
    %1015 = vector.shape_cast %1014 : vector<1x1x32x32xbf16> to vector<32x32xbf16>
    %cst_486 = arith.constant dense<0.000000e+00> : vector<32x128xf32>
    %1016 = tpu.matmul %1015, %1013, %cst_486 {dimension_numbers = #tpu.dot_dimension_numbers<[1], [0], [0], [1], [0, 0, 1, 1], [], []>} : vector<32x32xbf16>, vector<32x128xbf16>, vector<32x128xf32> -> vector<32x128xf32>
    %1017 = vector.extract_strided_slice %2 {offsets = [1, 0], sizes = [1, 128], strides = [1, 1]} : vector<9x128xf32> to vector<1x128xf32>
    %1018 = vector.broadcast %1017 : vector<1x128xf32> to vector<32x128xf32>
    %1019 = arith.mulf %1016, %1018 : vector<32x128xf32>
    %1020 = arith.addf %1009, %1019 : vector<32x128xf32>
    %1021 = vector.extract_strided_slice %997 {offsets = [0, 121], sizes = [32, 7], strides = [1, 1]} : vector<32x128xf32> to vector<32x7xf32>
    %1022 = vector.extract_strided_slice %997 {offsets = [0, 0], sizes = [32, 121], strides = [1, 1]} : vector<32x128xf32> to vector<32x121xf32>
    %1023 = tpu.concatenate %1021, %1022 in 1 : vector<32x7xf32>, vector<32x121xf32> -> vector<32x128xf32>
    %1024 = arith.truncf %1023 : vector<32x128xf32> to vector<32x128xbf16>
    %c5_487 = arith.constant 5 : index
    %c2_488 = arith.constant 2 : index
    %c0_489 = arith.constant 0 : index
    %c0_490 = arith.constant 0 : index
    %1025 = vector.load %arg10[%c5_487, %c2_488, %c0_489, %c0_490] : memref<8x9x32x32xbf16, #tpu.memory_space<vmem>>, vector<1x1x32x32xbf16>
    %1026 = vector.shape_cast %1025 : vector<1x1x32x32xbf16> to vector<32x32xbf16>
    %cst_491 = arith.constant dense<0.000000e+00> : vector<32x128xf32>
    %1027 = tpu.matmul %1026, %1024, %cst_491 {dimension_numbers = #tpu.dot_dimension_numbers<[1], [0], [0], [1], [0, 0, 1, 1], [], []>} : vector<32x32xbf16>, vector<32x128xbf16>, vector<32x128xf32> -> vector<32x128xf32>
    %1028 = vector.extract_strided_slice %2 {offsets = [2, 0], sizes = [1, 128], strides = [1, 1]} : vector<9x128xf32> to vector<1x128xf32>
    %1029 = vector.broadcast %1028 : vector<1x128xf32> to vector<32x128xf32>
    %1030 = arith.mulf %1027, %1029 : vector<32x128xf32>
    %1031 = arith.addf %1020, %1030 : vector<32x128xf32>
    %1032 = vector.extract_strided_slice %997 {offsets = [0, 127], sizes = [32, 1], strides = [1, 1]} : vector<32x128xf32> to vector<32x1xf32>
    %1033 = vector.extract_strided_slice %997 {offsets = [0, 0], sizes = [32, 127], strides = [1, 1]} : vector<32x128xf32> to vector<32x127xf32>
    %1034 = tpu.concatenate %1032, %1033 in 1 : vector<32x1xf32>, vector<32x127xf32> -> vector<32x128xf32>
    %1035 = arith.truncf %1034 : vector<32x128xf32> to vector<32x128xbf16>
    %c5_492 = arith.constant 5 : index
    %c3_493 = arith.constant 3 : index
    %c0_494 = arith.constant 0 : index
    %c0_495 = arith.constant 0 : index
    %1036 = vector.load %arg10[%c5_492, %c3_493, %c0_494, %c0_495] : memref<8x9x32x32xbf16, #tpu.memory_space<vmem>>, vector<1x1x32x32xbf16>
    %1037 = vector.shape_cast %1036 : vector<1x1x32x32xbf16> to vector<32x32xbf16>
    %cst_496 = arith.constant dense<0.000000e+00> : vector<32x128xf32>
    %1038 = tpu.matmul %1037, %1035, %cst_496 {dimension_numbers = #tpu.dot_dimension_numbers<[1], [0], [0], [1], [0, 0, 1, 1], [], []>} : vector<32x32xbf16>, vector<32x128xbf16>, vector<32x128xf32> -> vector<32x128xf32>
    %1039 = vector.extract_strided_slice %2 {offsets = [3, 0], sizes = [1, 128], strides = [1, 1]} : vector<9x128xf32> to vector<1x128xf32>
    %1040 = vector.broadcast %1039 : vector<1x128xf32> to vector<32x128xf32>
    %1041 = arith.mulf %1038, %1040 : vector<32x128xf32>
    %1042 = arith.addf %1031, %1041 : vector<32x128xf32>
    %1043 = arith.truncf %997 : vector<32x128xf32> to vector<32x128xbf16>
    %c5_497 = arith.constant 5 : index
    %c4_498 = arith.constant 4 : index
    %c0_499 = arith.constant 0 : index
    %c0_500 = arith.constant 0 : index
    %1044 = vector.load %arg10[%c5_497, %c4_498, %c0_499, %c0_500] : memref<8x9x32x32xbf16, #tpu.memory_space<vmem>>, vector<1x1x32x32xbf16>
    %1045 = vector.shape_cast %1044 : vector<1x1x32x32xbf16> to vector<32x32xbf16>
    %cst_501 = arith.constant dense<0.000000e+00> : vector<32x128xf32>
    %1046 = tpu.matmul %1045, %1043, %cst_501 {dimension_numbers = #tpu.dot_dimension_numbers<[1], [0], [0], [1], [0, 0, 1, 1], [], []>} : vector<32x32xbf16>, vector<32x128xbf16>, vector<32x128xf32> -> vector<32x128xf32>
    %1047 = vector.extract_strided_slice %2 {offsets = [4, 0], sizes = [1, 128], strides = [1, 1]} : vector<9x128xf32> to vector<1x128xf32>
    %1048 = vector.broadcast %1047 : vector<1x128xf32> to vector<32x128xf32>
    %1049 = arith.mulf %1046, %1048 : vector<32x128xf32>
    %1050 = arith.addf %1042, %1049 : vector<32x128xf32>
    %1051 = vector.extract_strided_slice %997 {offsets = [0, 1], sizes = [32, 127], strides = [1, 1]} : vector<32x128xf32> to vector<32x127xf32>
    %1052 = vector.extract_strided_slice %997 {offsets = [0, 0], sizes = [32, 1], strides = [1, 1]} : vector<32x128xf32> to vector<32x1xf32>
    %1053 = tpu.concatenate %1051, %1052 in 1 : vector<32x127xf32>, vector<32x1xf32> -> vector<32x128xf32>
    %1054 = arith.truncf %1053 : vector<32x128xf32> to vector<32x128xbf16>
    %c5_502 = arith.constant 5 : index
    %c5_503 = arith.constant 5 : index
    %c0_504 = arith.constant 0 : index
    %c0_505 = arith.constant 0 : index
    %1055 = vector.load %arg10[%c5_502, %c5_503, %c0_504, %c0_505] : memref<8x9x32x32xbf16, #tpu.memory_space<vmem>>, vector<1x1x32x32xbf16>
    %1056 = vector.shape_cast %1055 : vector<1x1x32x32xbf16> to vector<32x32xbf16>
    %cst_506 = arith.constant dense<0.000000e+00> : vector<32x128xf32>
    %1057 = tpu.matmul %1056, %1054, %cst_506 {dimension_numbers = #tpu.dot_dimension_numbers<[1], [0], [0], [1], [0, 0, 1, 1], [], []>} : vector<32x32xbf16>, vector<32x128xbf16>, vector<32x128xf32> -> vector<32x128xf32>
    %1058 = vector.extract_strided_slice %2 {offsets = [5, 0], sizes = [1, 128], strides = [1, 1]} : vector<9x128xf32> to vector<1x128xf32>
    %1059 = vector.broadcast %1058 : vector<1x128xf32> to vector<32x128xf32>
    %1060 = arith.mulf %1057, %1059 : vector<32x128xf32>
    %1061 = arith.addf %1050, %1060 : vector<32x128xf32>
    %1062 = vector.extract_strided_slice %997 {offsets = [0, 7], sizes = [32, 121], strides = [1, 1]} : vector<32x128xf32> to vector<32x121xf32>
    %1063 = vector.extract_strided_slice %997 {offsets = [0, 0], sizes = [32, 7], strides = [1, 1]} : vector<32x128xf32> to vector<32x7xf32>
    %1064 = tpu.concatenate %1062, %1063 in 1 : vector<32x121xf32>, vector<32x7xf32> -> vector<32x128xf32>
    %1065 = arith.truncf %1064 : vector<32x128xf32> to vector<32x128xbf16>
    %c5_507 = arith.constant 5 : index
    %c6_508 = arith.constant 6 : index
    %c0_509 = arith.constant 0 : index
    %c0_510 = arith.constant 0 : index
    %1066 = vector.load %arg10[%c5_507, %c6_508, %c0_509, %c0_510] : memref<8x9x32x32xbf16, #tpu.memory_space<vmem>>, vector<1x1x32x32xbf16>
    %1067 = vector.shape_cast %1066 : vector<1x1x32x32xbf16> to vector<32x32xbf16>
    %cst_511 = arith.constant dense<0.000000e+00> : vector<32x128xf32>
    %1068 = tpu.matmul %1067, %1065, %cst_511 {dimension_numbers = #tpu.dot_dimension_numbers<[1], [0], [0], [1], [0, 0, 1, 1], [], []>} : vector<32x32xbf16>, vector<32x128xbf16>, vector<32x128xf32> -> vector<32x128xf32>
    %1069 = vector.extract_strided_slice %2 {offsets = [6, 0], sizes = [1, 128], strides = [1, 1]} : vector<9x128xf32> to vector<1x128xf32>
    %1070 = vector.broadcast %1069 : vector<1x128xf32> to vector<32x128xf32>
    %1071 = arith.mulf %1068, %1070 : vector<32x128xf32>
    %1072 = arith.addf %1061, %1071 : vector<32x128xf32>
    %1073 = vector.extract_strided_slice %997 {offsets = [0, 8], sizes = [32, 120], strides = [1, 1]} : vector<32x128xf32> to vector<32x120xf32>
    %1074 = vector.extract_strided_slice %997 {offsets = [0, 0], sizes = [32, 8], strides = [1, 1]} : vector<32x128xf32> to vector<32x8xf32>
    %1075 = tpu.concatenate %1073, %1074 in 1 : vector<32x120xf32>, vector<32x8xf32> -> vector<32x128xf32>
    %1076 = arith.truncf %1075 : vector<32x128xf32> to vector<32x128xbf16>
    %c5_512 = arith.constant 5 : index
    %c7_513 = arith.constant 7 : index
    %c0_514 = arith.constant 0 : index
    %c0_515 = arith.constant 0 : index
    %1077 = vector.load %arg10[%c5_512, %c7_513, %c0_514, %c0_515] : memref<8x9x32x32xbf16, #tpu.memory_space<vmem>>, vector<1x1x32x32xbf16>
    %1078 = vector.shape_cast %1077 : vector<1x1x32x32xbf16> to vector<32x32xbf16>
    %cst_516 = arith.constant dense<0.000000e+00> : vector<32x128xf32>
    %1079 = tpu.matmul %1078, %1076, %cst_516 {dimension_numbers = #tpu.dot_dimension_numbers<[1], [0], [0], [1], [0, 0, 1, 1], [], []>} : vector<32x32xbf16>, vector<32x128xbf16>, vector<32x128xf32> -> vector<32x128xf32>
    %1080 = vector.extract_strided_slice %2 {offsets = [7, 0], sizes = [1, 128], strides = [1, 1]} : vector<9x128xf32> to vector<1x128xf32>
    %1081 = vector.broadcast %1080 : vector<1x128xf32> to vector<32x128xf32>
    %1082 = arith.mulf %1079, %1081 : vector<32x128xf32>
    %1083 = arith.addf %1072, %1082 : vector<32x128xf32>
    %1084 = vector.extract_strided_slice %997 {offsets = [0, 9], sizes = [32, 119], strides = [1, 1]} : vector<32x128xf32> to vector<32x119xf32>
    %1085 = vector.extract_strided_slice %997 {offsets = [0, 0], sizes = [32, 9], strides = [1, 1]} : vector<32x128xf32> to vector<32x9xf32>
    %1086 = tpu.concatenate %1084, %1085 in 1 : vector<32x119xf32>, vector<32x9xf32> -> vector<32x128xf32>
    %1087 = arith.truncf %1086 : vector<32x128xf32> to vector<32x128xbf16>
    %c5_517 = arith.constant 5 : index
    %c8_518 = arith.constant 8 : index
    %c0_519 = arith.constant 0 : index
    %c0_520 = arith.constant 0 : index
    %1088 = vector.load %arg10[%c5_517, %c8_518, %c0_519, %c0_520] : memref<8x9x32x32xbf16, #tpu.memory_space<vmem>>, vector<1x1x32x32xbf16>
    %1089 = vector.shape_cast %1088 : vector<1x1x32x32xbf16> to vector<32x32xbf16>
    %cst_521 = arith.constant dense<0.000000e+00> : vector<32x128xf32>
    %1090 = tpu.matmul %1089, %1087, %cst_521 {dimension_numbers = #tpu.dot_dimension_numbers<[1], [0], [0], [1], [0, 0, 1, 1], [], []>} : vector<32x32xbf16>, vector<32x128xbf16>, vector<32x128xf32> -> vector<32x128xf32>
    %1091 = vector.extract_strided_slice %2 {offsets = [8, 0], sizes = [1, 128], strides = [1, 1]} : vector<9x128xf32> to vector<1x128xf32>
    %1092 = vector.broadcast %1091 : vector<1x128xf32> to vector<32x128xf32>
    %1093 = arith.mulf %1090, %1092 : vector<32x128xf32>
    %1094 = arith.addf %1083, %1093 : vector<32x128xf32>
    %1095 = vector.broadcast %999 : vector<32x1xf32> to vector<32x128xf32>
    %1096 = arith.addf %1094, %1095 : vector<32x128xf32>
    %c5_522 = arith.constant 5 : index
    %c0_523 = arith.constant 0 : index
    %c0_524 = arith.constant 0 : index
    %1097 = vector.load %arg12[%c5_522, %c0_523, %c0_524] : memref<8x32x1xf32, #tpu.memory_space<vmem>>, vector<1x32x1xf32>
    %1098 = vector.shape_cast %1097 : vector<1x32x1xf32> to vector<32x1xf32>
    %c5_525 = arith.constant 5 : index
    %c0_526 = arith.constant 0 : index
    %c0_527 = arith.constant 0 : index
    %1099 = vector.load %arg13[%c5_525, %c0_526, %c0_527] : memref<8x32x1xf32, #tpu.memory_space<vmem>>, vector<1x32x1xf32>
    %1100 = vector.shape_cast %1099 : vector<1x32x1xf32> to vector<32x1xf32>
    %cst_528 = arith.constant dense<0.000000e+00> : vector<32xf32>
    %1101 = vector.multi_reduction <add>, %1096, %cst_528 [1] : vector<32x128xf32> to vector<32xf32>
    %1102 = vector.shape_cast %1101 : vector<32xf32> to vector<32x1xf32>
    %cst_529 = arith.constant 1.280000e+02 : f32
    %1103 = vector.broadcast %cst_529 : f32 to vector<32x1xf32>
    %1104 = arith.divf %1102, %1103 : vector<32x1xf32>
    %1105 = vector.broadcast %1104 : vector<32x1xf32> to vector<32x128xf32>
    %1106 = arith.subf %1096, %1105 : vector<32x128xf32>
    %1107 = arith.mulf %1106, %1106 : vector<32x128xf32>
    %cst_530 = arith.constant dense<0.000000e+00> : vector<32xf32>
    %1108 = vector.multi_reduction <add>, %1107, %cst_530 [1] : vector<32x128xf32> to vector<32xf32>
    %1109 = vector.shape_cast %1108 : vector<32xf32> to vector<32x1xf32>
    %cst_531 = arith.constant 1.280000e+02 : f32
    %1110 = vector.broadcast %cst_531 : f32 to vector<32x1xf32>
    %1111 = arith.divf %1109, %1110 : vector<32x1xf32>
    %1112 = vector.broadcast %1104 : vector<32x1xf32> to vector<32x128xf32>
    %1113 = arith.subf %1096, %1112 : vector<32x128xf32>
    %cst_532 = arith.constant 9.99999974E-6 : f32
    %1114 = vector.broadcast %cst_532 : f32 to vector<32x1xf32>
    %1115 = arith.addf %1111, %1114 : vector<32x1xf32>
    %1116 = math.rsqrt %1115 : vector<32x1xf32>
    %1117 = vector.broadcast %1116 : vector<32x1xf32> to vector<32x128xf32>
    %1118 = arith.mulf %1113, %1117 : vector<32x128xf32>
    %1119 = vector.broadcast %1098 : vector<32x1xf32> to vector<32x128xf32>
    %1120 = arith.mulf %1118, %1119 : vector<32x128xf32>
    %1121 = vector.broadcast %1100 : vector<32x1xf32> to vector<32x128xf32>
    %1122 = arith.addf %1120, %1121 : vector<32x128xf32>
    %cst_533 = arith.constant 0.000000e+00 : f32
    %1123 = vector.broadcast %cst_533 : f32 to vector<32x128xf32>
    %1124 = arith.maximumf %1122, %1123 : vector<32x128xf32>
    %c5_534 = arith.constant 5 : index
    %c0_535 = arith.constant 0 : index
    %c0_536 = arith.constant 0 : index
    %1125 = vector.load %arg14[%c5_534, %c0_535, %c0_536] : memref<8x32x32xbf16, #tpu.memory_space<vmem>>, vector<1x32x32xbf16>
    %1126 = vector.shape_cast %1125 : vector<1x32x32xbf16> to vector<32x32xbf16>
    %1127 = arith.truncf %1124 : vector<32x128xf32> to vector<32x128xbf16>
    %cst_537 = arith.constant dense<0.000000e+00> : vector<32x128xf32>
    %1128 = tpu.matmul %1126, %1127, %cst_537 {dimension_numbers = #tpu.dot_dimension_numbers<[1], [0], [0], [1], [0, 0, 1, 1], [], []>} : vector<32x32xbf16>, vector<32x128xbf16>, vector<32x128xf32> -> vector<32x128xf32>
    %c5_538 = arith.constant 5 : index
    %c0_539 = arith.constant 0 : index
    %c0_540 = arith.constant 0 : index
    %1129 = vector.load %arg15[%c5_538, %c0_539, %c0_540] : memref<8x32x1xf32, #tpu.memory_space<vmem>>, vector<1x32x1xf32>
    %1130 = vector.shape_cast %1129 : vector<1x32x1xf32> to vector<32x1xf32>
    %1131 = vector.broadcast %1130 : vector<32x1xf32> to vector<32x128xf32>
    %1132 = arith.addf %1128, %1131 : vector<32x128xf32>
    %1133 = arith.addf %1132, %961 : vector<32x128xf32>
    %c6_541 = arith.constant 6 : index
    %c0_542 = arith.constant 0 : index
    %c0_543 = arith.constant 0 : index
    %1134 = vector.load %arg6[%c6_541, %c0_542, %c0_543] : memref<8x32x32xbf16, #tpu.memory_space<vmem>>, vector<1x32x32xbf16>
    %1135 = vector.shape_cast %1134 : vector<1x32x32xbf16> to vector<32x32xbf16>
    %1136 = arith.truncf %1133 : vector<32x128xf32> to vector<32x128xbf16>
    %cst_544 = arith.constant dense<0.000000e+00> : vector<32x128xf32>
    %1137 = tpu.matmul %1135, %1136, %cst_544 {dimension_numbers = #tpu.dot_dimension_numbers<[1], [0], [0], [1], [0, 0, 1, 1], [], []>} : vector<32x32xbf16>, vector<32x128xbf16>, vector<32x128xf32> -> vector<32x128xf32>
    %c6_545 = arith.constant 6 : index
    %c0_546 = arith.constant 0 : index
    %c0_547 = arith.constant 0 : index
    %1138 = vector.load %arg7[%c6_545, %c0_546, %c0_547] : memref<8x32x1xf32, #tpu.memory_space<vmem>>, vector<1x32x1xf32>
    %1139 = vector.shape_cast %1138 : vector<1x32x1xf32> to vector<32x1xf32>
    %1140 = vector.broadcast %1139 : vector<32x1xf32> to vector<32x128xf32>
    %1141 = arith.addf %1137, %1140 : vector<32x128xf32>
    %c6_548 = arith.constant 6 : index
    %c0_549 = arith.constant 0 : index
    %c0_550 = arith.constant 0 : index
    %1142 = vector.load %arg8[%c6_548, %c0_549, %c0_550] : memref<8x32x1xf32, #tpu.memory_space<vmem>>, vector<1x32x1xf32>
    %1143 = vector.shape_cast %1142 : vector<1x32x1xf32> to vector<32x1xf32>
    %c6_551 = arith.constant 6 : index
    %c0_552 = arith.constant 0 : index
    %c0_553 = arith.constant 0 : index
    %1144 = vector.load %arg9[%c6_551, %c0_552, %c0_553] : memref<8x32x1xf32, #tpu.memory_space<vmem>>, vector<1x32x1xf32>
    %1145 = vector.shape_cast %1144 : vector<1x32x1xf32> to vector<32x1xf32>
    %cst_554 = arith.constant dense<0.000000e+00> : vector<32xf32>
    %1146 = vector.multi_reduction <add>, %1141, %cst_554 [1] : vector<32x128xf32> to vector<32xf32>
    %1147 = vector.shape_cast %1146 : vector<32xf32> to vector<32x1xf32>
    %cst_555 = arith.constant 1.280000e+02 : f32
    %1148 = vector.broadcast %cst_555 : f32 to vector<32x1xf32>
    %1149 = arith.divf %1147, %1148 : vector<32x1xf32>
    %1150 = vector.broadcast %1149 : vector<32x1xf32> to vector<32x128xf32>
    %1151 = arith.subf %1141, %1150 : vector<32x128xf32>
    %1152 = arith.mulf %1151, %1151 : vector<32x128xf32>
    %cst_556 = arith.constant dense<0.000000e+00> : vector<32xf32>
    %1153 = vector.multi_reduction <add>, %1152, %cst_556 [1] : vector<32x128xf32> to vector<32xf32>
    %1154 = vector.shape_cast %1153 : vector<32xf32> to vector<32x1xf32>
    %cst_557 = arith.constant 1.280000e+02 : f32
    %1155 = vector.broadcast %cst_557 : f32 to vector<32x1xf32>
    %1156 = arith.divf %1154, %1155 : vector<32x1xf32>
    %1157 = vector.broadcast %1149 : vector<32x1xf32> to vector<32x128xf32>
    %1158 = arith.subf %1141, %1157 : vector<32x128xf32>
    %cst_558 = arith.constant 9.99999974E-6 : f32
    %1159 = vector.broadcast %cst_558 : f32 to vector<32x1xf32>
    %1160 = arith.addf %1156, %1159 : vector<32x1xf32>
    %1161 = math.rsqrt %1160 : vector<32x1xf32>
    %1162 = vector.broadcast %1161 : vector<32x1xf32> to vector<32x128xf32>
    %1163 = arith.mulf %1158, %1162 : vector<32x128xf32>
    %1164 = vector.broadcast %1143 : vector<32x1xf32> to vector<32x128xf32>
    %1165 = arith.mulf %1163, %1164 : vector<32x128xf32>
    %1166 = vector.broadcast %1145 : vector<32x1xf32> to vector<32x128xf32>
    %1167 = arith.addf %1165, %1166 : vector<32x128xf32>
    %cst_559 = arith.constant 0.000000e+00 : f32
    %1168 = vector.broadcast %cst_559 : f32 to vector<32x128xf32>
    %1169 = arith.maximumf %1167, %1168 : vector<32x128xf32>
    %c6_560 = arith.constant 6 : index
    %c0_561 = arith.constant 0 : index
    %c0_562 = arith.constant 0 : index
    %1170 = vector.load %arg11[%c6_560, %c0_561, %c0_562] : memref<8x32x1xf32, #tpu.memory_space<vmem>>, vector<1x32x1xf32>
    %1171 = vector.shape_cast %1170 : vector<1x32x1xf32> to vector<32x1xf32>
    %1172 = vector.extract_strided_slice %1169 {offsets = [0, 119], sizes = [32, 9], strides = [1, 1]} : vector<32x128xf32> to vector<32x9xf32>
    %1173 = vector.extract_strided_slice %1169 {offsets = [0, 0], sizes = [32, 119], strides = [1, 1]} : vector<32x128xf32> to vector<32x119xf32>
    %1174 = tpu.concatenate %1172, %1173 in 1 : vector<32x9xf32>, vector<32x119xf32> -> vector<32x128xf32>
    %1175 = arith.truncf %1174 : vector<32x128xf32> to vector<32x128xbf16>
    %c6_563 = arith.constant 6 : index
    %c0_564 = arith.constant 0 : index
    %c0_565 = arith.constant 0 : index
    %c0_566 = arith.constant 0 : index
    %1176 = vector.load %arg10[%c6_563, %c0_564, %c0_565, %c0_566] : memref<8x9x32x32xbf16, #tpu.memory_space<vmem>>, vector<1x1x32x32xbf16>
    %1177 = vector.shape_cast %1176 : vector<1x1x32x32xbf16> to vector<32x32xbf16>
    %cst_567 = arith.constant dense<0.000000e+00> : vector<32x128xf32>
    %1178 = tpu.matmul %1177, %1175, %cst_567 {dimension_numbers = #tpu.dot_dimension_numbers<[1], [0], [0], [1], [0, 0, 1, 1], [], []>} : vector<32x32xbf16>, vector<32x128xbf16>, vector<32x128xf32> -> vector<32x128xf32>
    %1179 = vector.extract_strided_slice %2 {offsets = [0, 0], sizes = [1, 128], strides = [1, 1]} : vector<9x128xf32> to vector<1x128xf32>
    %1180 = vector.broadcast %1179 : vector<1x128xf32> to vector<32x128xf32>
    %1181 = arith.mulf %1178, %1180 : vector<32x128xf32>
    %1182 = vector.extract_strided_slice %1169 {offsets = [0, 120], sizes = [32, 8], strides = [1, 1]} : vector<32x128xf32> to vector<32x8xf32>
    %1183 = vector.extract_strided_slice %1169 {offsets = [0, 0], sizes = [32, 120], strides = [1, 1]} : vector<32x128xf32> to vector<32x120xf32>
    %1184 = tpu.concatenate %1182, %1183 in 1 : vector<32x8xf32>, vector<32x120xf32> -> vector<32x128xf32>
    %1185 = arith.truncf %1184 : vector<32x128xf32> to vector<32x128xbf16>
    %c6_568 = arith.constant 6 : index
    %c1_569 = arith.constant 1 : index
    %c0_570 = arith.constant 0 : index
    %c0_571 = arith.constant 0 : index
    %1186 = vector.load %arg10[%c6_568, %c1_569, %c0_570, %c0_571] : memref<8x9x32x32xbf16, #tpu.memory_space<vmem>>, vector<1x1x32x32xbf16>
    %1187 = vector.shape_cast %1186 : vector<1x1x32x32xbf16> to vector<32x32xbf16>
    %cst_572 = arith.constant dense<0.000000e+00> : vector<32x128xf32>
    %1188 = tpu.matmul %1187, %1185, %cst_572 {dimension_numbers = #tpu.dot_dimension_numbers<[1], [0], [0], [1], [0, 0, 1, 1], [], []>} : vector<32x32xbf16>, vector<32x128xbf16>, vector<32x128xf32> -> vector<32x128xf32>
    %1189 = vector.extract_strided_slice %2 {offsets = [1, 0], sizes = [1, 128], strides = [1, 1]} : vector<9x128xf32> to vector<1x128xf32>
    %1190 = vector.broadcast %1189 : vector<1x128xf32> to vector<32x128xf32>
    %1191 = arith.mulf %1188, %1190 : vector<32x128xf32>
    %1192 = arith.addf %1181, %1191 : vector<32x128xf32>
    %1193 = vector.extract_strided_slice %1169 {offsets = [0, 121], sizes = [32, 7], strides = [1, 1]} : vector<32x128xf32> to vector<32x7xf32>
    %1194 = vector.extract_strided_slice %1169 {offsets = [0, 0], sizes = [32, 121], strides = [1, 1]} : vector<32x128xf32> to vector<32x121xf32>
    %1195 = tpu.concatenate %1193, %1194 in 1 : vector<32x7xf32>, vector<32x121xf32> -> vector<32x128xf32>
    %1196 = arith.truncf %1195 : vector<32x128xf32> to vector<32x128xbf16>
    %c6_573 = arith.constant 6 : index
    %c2_574 = arith.constant 2 : index
    %c0_575 = arith.constant 0 : index
    %c0_576 = arith.constant 0 : index
    %1197 = vector.load %arg10[%c6_573, %c2_574, %c0_575, %c0_576] : memref<8x9x32x32xbf16, #tpu.memory_space<vmem>>, vector<1x1x32x32xbf16>
    %1198 = vector.shape_cast %1197 : vector<1x1x32x32xbf16> to vector<32x32xbf16>
    %cst_577 = arith.constant dense<0.000000e+00> : vector<32x128xf32>
    %1199 = tpu.matmul %1198, %1196, %cst_577 {dimension_numbers = #tpu.dot_dimension_numbers<[1], [0], [0], [1], [0, 0, 1, 1], [], []>} : vector<32x32xbf16>, vector<32x128xbf16>, vector<32x128xf32> -> vector<32x128xf32>
    %1200 = vector.extract_strided_slice %2 {offsets = [2, 0], sizes = [1, 128], strides = [1, 1]} : vector<9x128xf32> to vector<1x128xf32>
    %1201 = vector.broadcast %1200 : vector<1x128xf32> to vector<32x128xf32>
    %1202 = arith.mulf %1199, %1201 : vector<32x128xf32>
    %1203 = arith.addf %1192, %1202 : vector<32x128xf32>
    %1204 = vector.extract_strided_slice %1169 {offsets = [0, 127], sizes = [32, 1], strides = [1, 1]} : vector<32x128xf32> to vector<32x1xf32>
    %1205 = vector.extract_strided_slice %1169 {offsets = [0, 0], sizes = [32, 127], strides = [1, 1]} : vector<32x128xf32> to vector<32x127xf32>
    %1206 = tpu.concatenate %1204, %1205 in 1 : vector<32x1xf32>, vector<32x127xf32> -> vector<32x128xf32>
    %1207 = arith.truncf %1206 : vector<32x128xf32> to vector<32x128xbf16>
    %c6_578 = arith.constant 6 : index
    %c3_579 = arith.constant 3 : index
    %c0_580 = arith.constant 0 : index
    %c0_581 = arith.constant 0 : index
    %1208 = vector.load %arg10[%c6_578, %c3_579, %c0_580, %c0_581] : memref<8x9x32x32xbf16, #tpu.memory_space<vmem>>, vector<1x1x32x32xbf16>
    %1209 = vector.shape_cast %1208 : vector<1x1x32x32xbf16> to vector<32x32xbf16>
    %cst_582 = arith.constant dense<0.000000e+00> : vector<32x128xf32>
    %1210 = tpu.matmul %1209, %1207, %cst_582 {dimension_numbers = #tpu.dot_dimension_numbers<[1], [0], [0], [1], [0, 0, 1, 1], [], []>} : vector<32x32xbf16>, vector<32x128xbf16>, vector<32x128xf32> -> vector<32x128xf32>
    %1211 = vector.extract_strided_slice %2 {offsets = [3, 0], sizes = [1, 128], strides = [1, 1]} : vector<9x128xf32> to vector<1x128xf32>
    %1212 = vector.broadcast %1211 : vector<1x128xf32> to vector<32x128xf32>
    %1213 = arith.mulf %1210, %1212 : vector<32x128xf32>
    %1214 = arith.addf %1203, %1213 : vector<32x128xf32>
    %1215 = arith.truncf %1169 : vector<32x128xf32> to vector<32x128xbf16>
    %c6_583 = arith.constant 6 : index
    %c4_584 = arith.constant 4 : index
    %c0_585 = arith.constant 0 : index
    %c0_586 = arith.constant 0 : index
    %1216 = vector.load %arg10[%c6_583, %c4_584, %c0_585, %c0_586] : memref<8x9x32x32xbf16, #tpu.memory_space<vmem>>, vector<1x1x32x32xbf16>
    %1217 = vector.shape_cast %1216 : vector<1x1x32x32xbf16> to vector<32x32xbf16>
    %cst_587 = arith.constant dense<0.000000e+00> : vector<32x128xf32>
    %1218 = tpu.matmul %1217, %1215, %cst_587 {dimension_numbers = #tpu.dot_dimension_numbers<[1], [0], [0], [1], [0, 0, 1, 1], [], []>} : vector<32x32xbf16>, vector<32x128xbf16>, vector<32x128xf32> -> vector<32x128xf32>
    %1219 = vector.extract_strided_slice %2 {offsets = [4, 0], sizes = [1, 128], strides = [1, 1]} : vector<9x128xf32> to vector<1x128xf32>
    %1220 = vector.broadcast %1219 : vector<1x128xf32> to vector<32x128xf32>
    %1221 = arith.mulf %1218, %1220 : vector<32x128xf32>
    %1222 = arith.addf %1214, %1221 : vector<32x128xf32>
    %1223 = vector.extract_strided_slice %1169 {offsets = [0, 1], sizes = [32, 127], strides = [1, 1]} : vector<32x128xf32> to vector<32x127xf32>
    %1224 = vector.extract_strided_slice %1169 {offsets = [0, 0], sizes = [32, 1], strides = [1, 1]} : vector<32x128xf32> to vector<32x1xf32>
    %1225 = tpu.concatenate %1223, %1224 in 1 : vector<32x127xf32>, vector<32x1xf32> -> vector<32x128xf32>
    %1226 = arith.truncf %1225 : vector<32x128xf32> to vector<32x128xbf16>
    %c6_588 = arith.constant 6 : index
    %c5_589 = arith.constant 5 : index
    %c0_590 = arith.constant 0 : index
    %c0_591 = arith.constant 0 : index
    %1227 = vector.load %arg10[%c6_588, %c5_589, %c0_590, %c0_591] : memref<8x9x32x32xbf16, #tpu.memory_space<vmem>>, vector<1x1x32x32xbf16>
    %1228 = vector.shape_cast %1227 : vector<1x1x32x32xbf16> to vector<32x32xbf16>
    %cst_592 = arith.constant dense<0.000000e+00> : vector<32x128xf32>
    %1229 = tpu.matmul %1228, %1226, %cst_592 {dimension_numbers = #tpu.dot_dimension_numbers<[1], [0], [0], [1], [0, 0, 1, 1], [], []>} : vector<32x32xbf16>, vector<32x128xbf16>, vector<32x128xf32> -> vector<32x128xf32>
    %1230 = vector.extract_strided_slice %2 {offsets = [5, 0], sizes = [1, 128], strides = [1, 1]} : vector<9x128xf32> to vector<1x128xf32>
    %1231 = vector.broadcast %1230 : vector<1x128xf32> to vector<32x128xf32>
    %1232 = arith.mulf %1229, %1231 : vector<32x128xf32>
    %1233 = arith.addf %1222, %1232 : vector<32x128xf32>
    %1234 = vector.extract_strided_slice %1169 {offsets = [0, 7], sizes = [32, 121], strides = [1, 1]} : vector<32x128xf32> to vector<32x121xf32>
    %1235 = vector.extract_strided_slice %1169 {offsets = [0, 0], sizes = [32, 7], strides = [1, 1]} : vector<32x128xf32> to vector<32x7xf32>
    %1236 = tpu.concatenate %1234, %1235 in 1 : vector<32x121xf32>, vector<32x7xf32> -> vector<32x128xf32>
    %1237 = arith.truncf %1236 : vector<32x128xf32> to vector<32x128xbf16>
    %c6_593 = arith.constant 6 : index
    %c6_594 = arith.constant 6 : index
    %c0_595 = arith.constant 0 : index
    %c0_596 = arith.constant 0 : index
    %1238 = vector.load %arg10[%c6_593, %c6_594, %c0_595, %c0_596] : memref<8x9x32x32xbf16, #tpu.memory_space<vmem>>, vector<1x1x32x32xbf16>
    %1239 = vector.shape_cast %1238 : vector<1x1x32x32xbf16> to vector<32x32xbf16>
    %cst_597 = arith.constant dense<0.000000e+00> : vector<32x128xf32>
    %1240 = tpu.matmul %1239, %1237, %cst_597 {dimension_numbers = #tpu.dot_dimension_numbers<[1], [0], [0], [1], [0, 0, 1, 1], [], []>} : vector<32x32xbf16>, vector<32x128xbf16>, vector<32x128xf32> -> vector<32x128xf32>
    %1241 = vector.extract_strided_slice %2 {offsets = [6, 0], sizes = [1, 128], strides = [1, 1]} : vector<9x128xf32> to vector<1x128xf32>
    %1242 = vector.broadcast %1241 : vector<1x128xf32> to vector<32x128xf32>
    %1243 = arith.mulf %1240, %1242 : vector<32x128xf32>
    %1244 = arith.addf %1233, %1243 : vector<32x128xf32>
    %1245 = vector.extract_strided_slice %1169 {offsets = [0, 8], sizes = [32, 120], strides = [1, 1]} : vector<32x128xf32> to vector<32x120xf32>
    %1246 = vector.extract_strided_slice %1169 {offsets = [0, 0], sizes = [32, 8], strides = [1, 1]} : vector<32x128xf32> to vector<32x8xf32>
    %1247 = tpu.concatenate %1245, %1246 in 1 : vector<32x120xf32>, vector<32x8xf32> -> vector<32x128xf32>
    %1248 = arith.truncf %1247 : vector<32x128xf32> to vector<32x128xbf16>
    %c6_598 = arith.constant 6 : index
    %c7_599 = arith.constant 7 : index
    %c0_600 = arith.constant 0 : index
    %c0_601 = arith.constant 0 : index
    %1249 = vector.load %arg10[%c6_598, %c7_599, %c0_600, %c0_601] : memref<8x9x32x32xbf16, #tpu.memory_space<vmem>>, vector<1x1x32x32xbf16>
    %1250 = vector.shape_cast %1249 : vector<1x1x32x32xbf16> to vector<32x32xbf16>
    %cst_602 = arith.constant dense<0.000000e+00> : vector<32x128xf32>
    %1251 = tpu.matmul %1250, %1248, %cst_602 {dimension_numbers = #tpu.dot_dimension_numbers<[1], [0], [0], [1], [0, 0, 1, 1], [], []>} : vector<32x32xbf16>, vector<32x128xbf16>, vector<32x128xf32> -> vector<32x128xf32>
    %1252 = vector.extract_strided_slice %2 {offsets = [7, 0], sizes = [1, 128], strides = [1, 1]} : vector<9x128xf32> to vector<1x128xf32>
    %1253 = vector.broadcast %1252 : vector<1x128xf32> to vector<32x128xf32>
    %1254 = arith.mulf %1251, %1253 : vector<32x128xf32>
    %1255 = arith.addf %1244, %1254 : vector<32x128xf32>
    %1256 = vector.extract_strided_slice %1169 {offsets = [0, 9], sizes = [32, 119], strides = [1, 1]} : vector<32x128xf32> to vector<32x119xf32>
    %1257 = vector.extract_strided_slice %1169 {offsets = [0, 0], sizes = [32, 9], strides = [1, 1]} : vector<32x128xf32> to vector<32x9xf32>
    %1258 = tpu.concatenate %1256, %1257 in 1 : vector<32x119xf32>, vector<32x9xf32> -> vector<32x128xf32>
    %1259 = arith.truncf %1258 : vector<32x128xf32> to vector<32x128xbf16>
    %c6_603 = arith.constant 6 : index
    %c8_604 = arith.constant 8 : index
    %c0_605 = arith.constant 0 : index
    %c0_606 = arith.constant 0 : index
    %1260 = vector.load %arg10[%c6_603, %c8_604, %c0_605, %c0_606] : memref<8x9x32x32xbf16, #tpu.memory_space<vmem>>, vector<1x1x32x32xbf16>
    %1261 = vector.shape_cast %1260 : vector<1x1x32x32xbf16> to vector<32x32xbf16>
    %cst_607 = arith.constant dense<0.000000e+00> : vector<32x128xf32>
    %1262 = tpu.matmul %1261, %1259, %cst_607 {dimension_numbers = #tpu.dot_dimension_numbers<[1], [0], [0], [1], [0, 0, 1, 1], [], []>} : vector<32x32xbf16>, vector<32x128xbf16>, vector<32x128xf32> -> vector<32x128xf32>
    %1263 = vector.extract_strided_slice %2 {offsets = [8, 0], sizes = [1, 128], strides = [1, 1]} : vector<9x128xf32> to vector<1x128xf32>
    %1264 = vector.broadcast %1263 : vector<1x128xf32> to vector<32x128xf32>
    %1265 = arith.mulf %1262, %1264 : vector<32x128xf32>
    %1266 = arith.addf %1255, %1265 : vector<32x128xf32>
    %1267 = vector.broadcast %1171 : vector<32x1xf32> to vector<32x128xf32>
    %1268 = arith.addf %1266, %1267 : vector<32x128xf32>
    %c6_608 = arith.constant 6 : index
    %c0_609 = arith.constant 0 : index
    %c0_610 = arith.constant 0 : index
    %1269 = vector.load %arg12[%c6_608, %c0_609, %c0_610] : memref<8x32x1xf32, #tpu.memory_space<vmem>>, vector<1x32x1xf32>
    %1270 = vector.shape_cast %1269 : vector<1x32x1xf32> to vector<32x1xf32>
    %c6_611 = arith.constant 6 : index
    %c0_612 = arith.constant 0 : index
    %c0_613 = arith.constant 0 : index
    %1271 = vector.load %arg13[%c6_611, %c0_612, %c0_613] : memref<8x32x1xf32, #tpu.memory_space<vmem>>, vector<1x32x1xf32>
    %1272 = vector.shape_cast %1271 : vector<1x32x1xf32> to vector<32x1xf32>
    %cst_614 = arith.constant dense<0.000000e+00> : vector<32xf32>
    %1273 = vector.multi_reduction <add>, %1268, %cst_614 [1] : vector<32x128xf32> to vector<32xf32>
    %1274 = vector.shape_cast %1273 : vector<32xf32> to vector<32x1xf32>
    %cst_615 = arith.constant 1.280000e+02 : f32
    %1275 = vector.broadcast %cst_615 : f32 to vector<32x1xf32>
    %1276 = arith.divf %1274, %1275 : vector<32x1xf32>
    %1277 = vector.broadcast %1276 : vector<32x1xf32> to vector<32x128xf32>
    %1278 = arith.subf %1268, %1277 : vector<32x128xf32>
    %1279 = arith.mulf %1278, %1278 : vector<32x128xf32>
    %cst_616 = arith.constant dense<0.000000e+00> : vector<32xf32>
    %1280 = vector.multi_reduction <add>, %1279, %cst_616 [1] : vector<32x128xf32> to vector<32xf32>
    %1281 = vector.shape_cast %1280 : vector<32xf32> to vector<32x1xf32>
    %cst_617 = arith.constant 1.280000e+02 : f32
    %1282 = vector.broadcast %cst_617 : f32 to vector<32x1xf32>
    %1283 = arith.divf %1281, %1282 : vector<32x1xf32>
    %1284 = vector.broadcast %1276 : vector<32x1xf32> to vector<32x128xf32>
    %1285 = arith.subf %1268, %1284 : vector<32x128xf32>
    %cst_618 = arith.constant 9.99999974E-6 : f32
    %1286 = vector.broadcast %cst_618 : f32 to vector<32x1xf32>
    %1287 = arith.addf %1283, %1286 : vector<32x1xf32>
    %1288 = math.rsqrt %1287 : vector<32x1xf32>
    %1289 = vector.broadcast %1288 : vector<32x1xf32> to vector<32x128xf32>
    %1290 = arith.mulf %1285, %1289 : vector<32x128xf32>
    %1291 = vector.broadcast %1270 : vector<32x1xf32> to vector<32x128xf32>
    %1292 = arith.mulf %1290, %1291 : vector<32x128xf32>
    %1293 = vector.broadcast %1272 : vector<32x1xf32> to vector<32x128xf32>
    %1294 = arith.addf %1292, %1293 : vector<32x128xf32>
    %cst_619 = arith.constant 0.000000e+00 : f32
    %1295 = vector.broadcast %cst_619 : f32 to vector<32x128xf32>
    %1296 = arith.maximumf %1294, %1295 : vector<32x128xf32>
    %c6_620 = arith.constant 6 : index
    %c0_621 = arith.constant 0 : index
    %c0_622 = arith.constant 0 : index
    %1297 = vector.load %arg14[%c6_620, %c0_621, %c0_622] : memref<8x32x32xbf16, #tpu.memory_space<vmem>>, vector<1x32x32xbf16>
    %1298 = vector.shape_cast %1297 : vector<1x32x32xbf16> to vector<32x32xbf16>
    %1299 = arith.truncf %1296 : vector<32x128xf32> to vector<32x128xbf16>
    %cst_623 = arith.constant dense<0.000000e+00> : vector<32x128xf32>
    %1300 = tpu.matmul %1298, %1299, %cst_623 {dimension_numbers = #tpu.dot_dimension_numbers<[1], [0], [0], [1], [0, 0, 1, 1], [], []>} : vector<32x32xbf16>, vector<32x128xbf16>, vector<32x128xf32> -> vector<32x128xf32>
    %c6_624 = arith.constant 6 : index
    %c0_625 = arith.constant 0 : index
    %c0_626 = arith.constant 0 : index
    %1301 = vector.load %arg15[%c6_624, %c0_625, %c0_626] : memref<8x32x1xf32, #tpu.memory_space<vmem>>, vector<1x32x1xf32>
    %1302 = vector.shape_cast %1301 : vector<1x32x1xf32> to vector<32x1xf32>
    %1303 = vector.broadcast %1302 : vector<32x1xf32> to vector<32x128xf32>
    %1304 = arith.addf %1300, %1303 : vector<32x128xf32>
    %1305 = arith.addf %1304, %1133 : vector<32x128xf32>
    %c7_627 = arith.constant 7 : index
    %c0_628 = arith.constant 0 : index
    %c0_629 = arith.constant 0 : index
    %1306 = vector.load %arg6[%c7_627, %c0_628, %c0_629] : memref<8x32x32xbf16, #tpu.memory_space<vmem>>, vector<1x32x32xbf16>
    %1307 = vector.shape_cast %1306 : vector<1x32x32xbf16> to vector<32x32xbf16>
    %1308 = arith.truncf %1305 : vector<32x128xf32> to vector<32x128xbf16>
    %cst_630 = arith.constant dense<0.000000e+00> : vector<32x128xf32>
    %1309 = tpu.matmul %1307, %1308, %cst_630 {dimension_numbers = #tpu.dot_dimension_numbers<[1], [0], [0], [1], [0, 0, 1, 1], [], []>} : vector<32x32xbf16>, vector<32x128xbf16>, vector<32x128xf32> -> vector<32x128xf32>
    %c7_631 = arith.constant 7 : index
    %c0_632 = arith.constant 0 : index
    %c0_633 = arith.constant 0 : index
    %1310 = vector.load %arg7[%c7_631, %c0_632, %c0_633] : memref<8x32x1xf32, #tpu.memory_space<vmem>>, vector<1x32x1xf32>
    %1311 = vector.shape_cast %1310 : vector<1x32x1xf32> to vector<32x1xf32>
    %1312 = vector.broadcast %1311 : vector<32x1xf32> to vector<32x128xf32>
    %1313 = arith.addf %1309, %1312 : vector<32x128xf32>
    %c7_634 = arith.constant 7 : index
    %c0_635 = arith.constant 0 : index
    %c0_636 = arith.constant 0 : index
    %1314 = vector.load %arg8[%c7_634, %c0_635, %c0_636] : memref<8x32x1xf32, #tpu.memory_space<vmem>>, vector<1x32x1xf32>
    %1315 = vector.shape_cast %1314 : vector<1x32x1xf32> to vector<32x1xf32>
    %c7_637 = arith.constant 7 : index
    %c0_638 = arith.constant 0 : index
    %c0_639 = arith.constant 0 : index
    %1316 = vector.load %arg9[%c7_637, %c0_638, %c0_639] : memref<8x32x1xf32, #tpu.memory_space<vmem>>, vector<1x32x1xf32>
    %1317 = vector.shape_cast %1316 : vector<1x32x1xf32> to vector<32x1xf32>
    %cst_640 = arith.constant dense<0.000000e+00> : vector<32xf32>
    %1318 = vector.multi_reduction <add>, %1313, %cst_640 [1] : vector<32x128xf32> to vector<32xf32>
    %1319 = vector.shape_cast %1318 : vector<32xf32> to vector<32x1xf32>
    %cst_641 = arith.constant 1.280000e+02 : f32
    %1320 = vector.broadcast %cst_641 : f32 to vector<32x1xf32>
    %1321 = arith.divf %1319, %1320 : vector<32x1xf32>
    %1322 = vector.broadcast %1321 : vector<32x1xf32> to vector<32x128xf32>
    %1323 = arith.subf %1313, %1322 : vector<32x128xf32>
    %1324 = arith.mulf %1323, %1323 : vector<32x128xf32>
    %cst_642 = arith.constant dense<0.000000e+00> : vector<32xf32>
    %1325 = vector.multi_reduction <add>, %1324, %cst_642 [1] : vector<32x128xf32> to vector<32xf32>
    %1326 = vector.shape_cast %1325 : vector<32xf32> to vector<32x1xf32>
    %cst_643 = arith.constant 1.280000e+02 : f32
    %1327 = vector.broadcast %cst_643 : f32 to vector<32x1xf32>
    %1328 = arith.divf %1326, %1327 : vector<32x1xf32>
    %1329 = vector.broadcast %1321 : vector<32x1xf32> to vector<32x128xf32>
    %1330 = arith.subf %1313, %1329 : vector<32x128xf32>
    %cst_644 = arith.constant 9.99999974E-6 : f32
    %1331 = vector.broadcast %cst_644 : f32 to vector<32x1xf32>
    %1332 = arith.addf %1328, %1331 : vector<32x1xf32>
    %1333 = math.rsqrt %1332 : vector<32x1xf32>
    %1334 = vector.broadcast %1333 : vector<32x1xf32> to vector<32x128xf32>
    %1335 = arith.mulf %1330, %1334 : vector<32x128xf32>
    %1336 = vector.broadcast %1315 : vector<32x1xf32> to vector<32x128xf32>
    %1337 = arith.mulf %1335, %1336 : vector<32x128xf32>
    %1338 = vector.broadcast %1317 : vector<32x1xf32> to vector<32x128xf32>
    %1339 = arith.addf %1337, %1338 : vector<32x128xf32>
    %cst_645 = arith.constant 0.000000e+00 : f32
    %1340 = vector.broadcast %cst_645 : f32 to vector<32x128xf32>
    %1341 = arith.maximumf %1339, %1340 : vector<32x128xf32>
    %c7_646 = arith.constant 7 : index
    %c0_647 = arith.constant 0 : index
    %c0_648 = arith.constant 0 : index
    %1342 = vector.load %arg11[%c7_646, %c0_647, %c0_648] : memref<8x32x1xf32, #tpu.memory_space<vmem>>, vector<1x32x1xf32>
    %1343 = vector.shape_cast %1342 : vector<1x32x1xf32> to vector<32x1xf32>
    %1344 = vector.extract_strided_slice %1341 {offsets = [0, 119], sizes = [32, 9], strides = [1, 1]} : vector<32x128xf32> to vector<32x9xf32>
    %1345 = vector.extract_strided_slice %1341 {offsets = [0, 0], sizes = [32, 119], strides = [1, 1]} : vector<32x128xf32> to vector<32x119xf32>
    %1346 = tpu.concatenate %1344, %1345 in 1 : vector<32x9xf32>, vector<32x119xf32> -> vector<32x128xf32>
    %1347 = arith.truncf %1346 : vector<32x128xf32> to vector<32x128xbf16>
    %c7_649 = arith.constant 7 : index
    %c0_650 = arith.constant 0 : index
    %c0_651 = arith.constant 0 : index
    %c0_652 = arith.constant 0 : index
    %1348 = vector.load %arg10[%c7_649, %c0_650, %c0_651, %c0_652] : memref<8x9x32x32xbf16, #tpu.memory_space<vmem>>, vector<1x1x32x32xbf16>
    %1349 = vector.shape_cast %1348 : vector<1x1x32x32xbf16> to vector<32x32xbf16>
    %cst_653 = arith.constant dense<0.000000e+00> : vector<32x128xf32>
    %1350 = tpu.matmul %1349, %1347, %cst_653 {dimension_numbers = #tpu.dot_dimension_numbers<[1], [0], [0], [1], [0, 0, 1, 1], [], []>} : vector<32x32xbf16>, vector<32x128xbf16>, vector<32x128xf32> -> vector<32x128xf32>
    %1351 = vector.extract_strided_slice %2 {offsets = [0, 0], sizes = [1, 128], strides = [1, 1]} : vector<9x128xf32> to vector<1x128xf32>
    %1352 = vector.broadcast %1351 : vector<1x128xf32> to vector<32x128xf32>
    %1353 = arith.mulf %1350, %1352 : vector<32x128xf32>
    %1354 = vector.extract_strided_slice %1341 {offsets = [0, 120], sizes = [32, 8], strides = [1, 1]} : vector<32x128xf32> to vector<32x8xf32>
    %1355 = vector.extract_strided_slice %1341 {offsets = [0, 0], sizes = [32, 120], strides = [1, 1]} : vector<32x128xf32> to vector<32x120xf32>
    %1356 = tpu.concatenate %1354, %1355 in 1 : vector<32x8xf32>, vector<32x120xf32> -> vector<32x128xf32>
    %1357 = arith.truncf %1356 : vector<32x128xf32> to vector<32x128xbf16>
    %c7_654 = arith.constant 7 : index
    %c1_655 = arith.constant 1 : index
    %c0_656 = arith.constant 0 : index
    %c0_657 = arith.constant 0 : index
    %1358 = vector.load %arg10[%c7_654, %c1_655, %c0_656, %c0_657] : memref<8x9x32x32xbf16, #tpu.memory_space<vmem>>, vector<1x1x32x32xbf16>
    %1359 = vector.shape_cast %1358 : vector<1x1x32x32xbf16> to vector<32x32xbf16>
    %cst_658 = arith.constant dense<0.000000e+00> : vector<32x128xf32>
    %1360 = tpu.matmul %1359, %1357, %cst_658 {dimension_numbers = #tpu.dot_dimension_numbers<[1], [0], [0], [1], [0, 0, 1, 1], [], []>} : vector<32x32xbf16>, vector<32x128xbf16>, vector<32x128xf32> -> vector<32x128xf32>
    %1361 = vector.extract_strided_slice %2 {offsets = [1, 0], sizes = [1, 128], strides = [1, 1]} : vector<9x128xf32> to vector<1x128xf32>
    %1362 = vector.broadcast %1361 : vector<1x128xf32> to vector<32x128xf32>
    %1363 = arith.mulf %1360, %1362 : vector<32x128xf32>
    %1364 = arith.addf %1353, %1363 : vector<32x128xf32>
    %1365 = vector.extract_strided_slice %1341 {offsets = [0, 121], sizes = [32, 7], strides = [1, 1]} : vector<32x128xf32> to vector<32x7xf32>
    %1366 = vector.extract_strided_slice %1341 {offsets = [0, 0], sizes = [32, 121], strides = [1, 1]} : vector<32x128xf32> to vector<32x121xf32>
    %1367 = tpu.concatenate %1365, %1366 in 1 : vector<32x7xf32>, vector<32x121xf32> -> vector<32x128xf32>
    %1368 = arith.truncf %1367 : vector<32x128xf32> to vector<32x128xbf16>
    %c7_659 = arith.constant 7 : index
    %c2_660 = arith.constant 2 : index
    %c0_661 = arith.constant 0 : index
    %c0_662 = arith.constant 0 : index
    %1369 = vector.load %arg10[%c7_659, %c2_660, %c0_661, %c0_662] : memref<8x9x32x32xbf16, #tpu.memory_space<vmem>>, vector<1x1x32x32xbf16>
    %1370 = vector.shape_cast %1369 : vector<1x1x32x32xbf16> to vector<32x32xbf16>
    %cst_663 = arith.constant dense<0.000000e+00> : vector<32x128xf32>
    %1371 = tpu.matmul %1370, %1368, %cst_663 {dimension_numbers = #tpu.dot_dimension_numbers<[1], [0], [0], [1], [0, 0, 1, 1], [], []>} : vector<32x32xbf16>, vector<32x128xbf16>, vector<32x128xf32> -> vector<32x128xf32>
    %1372 = vector.extract_strided_slice %2 {offsets = [2, 0], sizes = [1, 128], strides = [1, 1]} : vector<9x128xf32> to vector<1x128xf32>
    %1373 = vector.broadcast %1372 : vector<1x128xf32> to vector<32x128xf32>
    %1374 = arith.mulf %1371, %1373 : vector<32x128xf32>
    %1375 = arith.addf %1364, %1374 : vector<32x128xf32>
    %1376 = vector.extract_strided_slice %1341 {offsets = [0, 127], sizes = [32, 1], strides = [1, 1]} : vector<32x128xf32> to vector<32x1xf32>
    %1377 = vector.extract_strided_slice %1341 {offsets = [0, 0], sizes = [32, 127], strides = [1, 1]} : vector<32x128xf32> to vector<32x127xf32>
    %1378 = tpu.concatenate %1376, %1377 in 1 : vector<32x1xf32>, vector<32x127xf32> -> vector<32x128xf32>
    %1379 = arith.truncf %1378 : vector<32x128xf32> to vector<32x128xbf16>
    %c7_664 = arith.constant 7 : index
    %c3_665 = arith.constant 3 : index
    %c0_666 = arith.constant 0 : index
    %c0_667 = arith.constant 0 : index
    %1380 = vector.load %arg10[%c7_664, %c3_665, %c0_666, %c0_667] : memref<8x9x32x32xbf16, #tpu.memory_space<vmem>>, vector<1x1x32x32xbf16>
    %1381 = vector.shape_cast %1380 : vector<1x1x32x32xbf16> to vector<32x32xbf16>
    %cst_668 = arith.constant dense<0.000000e+00> : vector<32x128xf32>
    %1382 = tpu.matmul %1381, %1379, %cst_668 {dimension_numbers = #tpu.dot_dimension_numbers<[1], [0], [0], [1], [0, 0, 1, 1], [], []>} : vector<32x32xbf16>, vector<32x128xbf16>, vector<32x128xf32> -> vector<32x128xf32>
    %1383 = vector.extract_strided_slice %2 {offsets = [3, 0], sizes = [1, 128], strides = [1, 1]} : vector<9x128xf32> to vector<1x128xf32>
    %1384 = vector.broadcast %1383 : vector<1x128xf32> to vector<32x128xf32>
    %1385 = arith.mulf %1382, %1384 : vector<32x128xf32>
    %1386 = arith.addf %1375, %1385 : vector<32x128xf32>
    %1387 = arith.truncf %1341 : vector<32x128xf32> to vector<32x128xbf16>
    %c7_669 = arith.constant 7 : index
    %c4_670 = arith.constant 4 : index
    %c0_671 = arith.constant 0 : index
    %c0_672 = arith.constant 0 : index
    %1388 = vector.load %arg10[%c7_669, %c4_670, %c0_671, %c0_672] : memref<8x9x32x32xbf16, #tpu.memory_space<vmem>>, vector<1x1x32x32xbf16>
    %1389 = vector.shape_cast %1388 : vector<1x1x32x32xbf16> to vector<32x32xbf16>
    %cst_673 = arith.constant dense<0.000000e+00> : vector<32x128xf32>
    %1390 = tpu.matmul %1389, %1387, %cst_673 {dimension_numbers = #tpu.dot_dimension_numbers<[1], [0], [0], [1], [0, 0, 1, 1], [], []>} : vector<32x32xbf16>, vector<32x128xbf16>, vector<32x128xf32> -> vector<32x128xf32>
    %1391 = vector.extract_strided_slice %2 {offsets = [4, 0], sizes = [1, 128], strides = [1, 1]} : vector<9x128xf32> to vector<1x128xf32>
    %1392 = vector.broadcast %1391 : vector<1x128xf32> to vector<32x128xf32>
    %1393 = arith.mulf %1390, %1392 : vector<32x128xf32>
    %1394 = arith.addf %1386, %1393 : vector<32x128xf32>
    %1395 = vector.extract_strided_slice %1341 {offsets = [0, 1], sizes = [32, 127], strides = [1, 1]} : vector<32x128xf32> to vector<32x127xf32>
    %1396 = vector.extract_strided_slice %1341 {offsets = [0, 0], sizes = [32, 1], strides = [1, 1]} : vector<32x128xf32> to vector<32x1xf32>
    %1397 = tpu.concatenate %1395, %1396 in 1 : vector<32x127xf32>, vector<32x1xf32> -> vector<32x128xf32>
    %1398 = arith.truncf %1397 : vector<32x128xf32> to vector<32x128xbf16>
    %c7_674 = arith.constant 7 : index
    %c5_675 = arith.constant 5 : index
    %c0_676 = arith.constant 0 : index
    %c0_677 = arith.constant 0 : index
    %1399 = vector.load %arg10[%c7_674, %c5_675, %c0_676, %c0_677] : memref<8x9x32x32xbf16, #tpu.memory_space<vmem>>, vector<1x1x32x32xbf16>
    %1400 = vector.shape_cast %1399 : vector<1x1x32x32xbf16> to vector<32x32xbf16>
    %cst_678 = arith.constant dense<0.000000e+00> : vector<32x128xf32>
    %1401 = tpu.matmul %1400, %1398, %cst_678 {dimension_numbers = #tpu.dot_dimension_numbers<[1], [0], [0], [1], [0, 0, 1, 1], [], []>} : vector<32x32xbf16>, vector<32x128xbf16>, vector<32x128xf32> -> vector<32x128xf32>
    %1402 = vector.extract_strided_slice %2 {offsets = [5, 0], sizes = [1, 128], strides = [1, 1]} : vector<9x128xf32> to vector<1x128xf32>
    %1403 = vector.broadcast %1402 : vector<1x128xf32> to vector<32x128xf32>
    %1404 = arith.mulf %1401, %1403 : vector<32x128xf32>
    %1405 = arith.addf %1394, %1404 : vector<32x128xf32>
    %1406 = vector.extract_strided_slice %1341 {offsets = [0, 7], sizes = [32, 121], strides = [1, 1]} : vector<32x128xf32> to vector<32x121xf32>
    %1407 = vector.extract_strided_slice %1341 {offsets = [0, 0], sizes = [32, 7], strides = [1, 1]} : vector<32x128xf32> to vector<32x7xf32>
    %1408 = tpu.concatenate %1406, %1407 in 1 : vector<32x121xf32>, vector<32x7xf32> -> vector<32x128xf32>
    %1409 = arith.truncf %1408 : vector<32x128xf32> to vector<32x128xbf16>
    %c7_679 = arith.constant 7 : index
    %c6_680 = arith.constant 6 : index
    %c0_681 = arith.constant 0 : index
    %c0_682 = arith.constant 0 : index
    %1410 = vector.load %arg10[%c7_679, %c6_680, %c0_681, %c0_682] : memref<8x9x32x32xbf16, #tpu.memory_space<vmem>>, vector<1x1x32x32xbf16>
    %1411 = vector.shape_cast %1410 : vector<1x1x32x32xbf16> to vector<32x32xbf16>
    %cst_683 = arith.constant dense<0.000000e+00> : vector<32x128xf32>
    %1412 = tpu.matmul %1411, %1409, %cst_683 {dimension_numbers = #tpu.dot_dimension_numbers<[1], [0], [0], [1], [0, 0, 1, 1], [], []>} : vector<32x32xbf16>, vector<32x128xbf16>, vector<32x128xf32> -> vector<32x128xf32>
    %1413 = vector.extract_strided_slice %2 {offsets = [6, 0], sizes = [1, 128], strides = [1, 1]} : vector<9x128xf32> to vector<1x128xf32>
    %1414 = vector.broadcast %1413 : vector<1x128xf32> to vector<32x128xf32>
    %1415 = arith.mulf %1412, %1414 : vector<32x128xf32>
    %1416 = arith.addf %1405, %1415 : vector<32x128xf32>
    %1417 = vector.extract_strided_slice %1341 {offsets = [0, 8], sizes = [32, 120], strides = [1, 1]} : vector<32x128xf32> to vector<32x120xf32>
    %1418 = vector.extract_strided_slice %1341 {offsets = [0, 0], sizes = [32, 8], strides = [1, 1]} : vector<32x128xf32> to vector<32x8xf32>
    %1419 = tpu.concatenate %1417, %1418 in 1 : vector<32x120xf32>, vector<32x8xf32> -> vector<32x128xf32>
    %1420 = arith.truncf %1419 : vector<32x128xf32> to vector<32x128xbf16>
    %c7_684 = arith.constant 7 : index
    %c7_685 = arith.constant 7 : index
    %c0_686 = arith.constant 0 : index
    %c0_687 = arith.constant 0 : index
    %1421 = vector.load %arg10[%c7_684, %c7_685, %c0_686, %c0_687] : memref<8x9x32x32xbf16, #tpu.memory_space<vmem>>, vector<1x1x32x32xbf16>
    %1422 = vector.shape_cast %1421 : vector<1x1x32x32xbf16> to vector<32x32xbf16>
    %cst_688 = arith.constant dense<0.000000e+00> : vector<32x128xf32>
    %1423 = tpu.matmul %1422, %1420, %cst_688 {dimension_numbers = #tpu.dot_dimension_numbers<[1], [0], [0], [1], [0, 0, 1, 1], [], []>} : vector<32x32xbf16>, vector<32x128xbf16>, vector<32x128xf32> -> vector<32x128xf32>
    %1424 = vector.extract_strided_slice %2 {offsets = [7, 0], sizes = [1, 128], strides = [1, 1]} : vector<9x128xf32> to vector<1x128xf32>
    %1425 = vector.broadcast %1424 : vector<1x128xf32> to vector<32x128xf32>
    %1426 = arith.mulf %1423, %1425 : vector<32x128xf32>
    %1427 = arith.addf %1416, %1426 : vector<32x128xf32>
    %1428 = vector.extract_strided_slice %1341 {offsets = [0, 9], sizes = [32, 119], strides = [1, 1]} : vector<32x128xf32> to vector<32x119xf32>
    %1429 = vector.extract_strided_slice %1341 {offsets = [0, 0], sizes = [32, 9], strides = [1, 1]} : vector<32x128xf32> to vector<32x9xf32>
    %1430 = tpu.concatenate %1428, %1429 in 1 : vector<32x119xf32>, vector<32x9xf32> -> vector<32x128xf32>
    %1431 = arith.truncf %1430 : vector<32x128xf32> to vector<32x128xbf16>
    %c7_689 = arith.constant 7 : index
    %c8_690 = arith.constant 8 : index
    %c0_691 = arith.constant 0 : index
    %c0_692 = arith.constant 0 : index
    %1432 = vector.load %arg10[%c7_689, %c8_690, %c0_691, %c0_692] : memref<8x9x32x32xbf16, #tpu.memory_space<vmem>>, vector<1x1x32x32xbf16>
    %1433 = vector.shape_cast %1432 : vector<1x1x32x32xbf16> to vector<32x32xbf16>
    %cst_693 = arith.constant dense<0.000000e+00> : vector<32x128xf32>
    %1434 = tpu.matmul %1433, %1431, %cst_693 {dimension_numbers = #tpu.dot_dimension_numbers<[1], [0], [0], [1], [0, 0, 1, 1], [], []>} : vector<32x32xbf16>, vector<32x128xbf16>, vector<32x128xf32> -> vector<32x128xf32>
    %1435 = vector.extract_strided_slice %2 {offsets = [8, 0], sizes = [1, 128], strides = [1, 1]} : vector<9x128xf32> to vector<1x128xf32>
    %1436 = vector.broadcast %1435 : vector<1x128xf32> to vector<32x128xf32>
    %1437 = arith.mulf %1434, %1436 : vector<32x128xf32>
    %1438 = arith.addf %1427, %1437 : vector<32x128xf32>
    %1439 = vector.broadcast %1343 : vector<32x1xf32> to vector<32x128xf32>
    %1440 = arith.addf %1438, %1439 : vector<32x128xf32>
    %c7_694 = arith.constant 7 : index
    %c0_695 = arith.constant 0 : index
    %c0_696 = arith.constant 0 : index
    %1441 = vector.load %arg12[%c7_694, %c0_695, %c0_696] : memref<8x32x1xf32, #tpu.memory_space<vmem>>, vector<1x32x1xf32>
    %1442 = vector.shape_cast %1441 : vector<1x32x1xf32> to vector<32x1xf32>
    %c7_697 = arith.constant 7 : index
    %c0_698 = arith.constant 0 : index
    %c0_699 = arith.constant 0 : index
    %1443 = vector.load %arg13[%c7_697, %c0_698, %c0_699] : memref<8x32x1xf32, #tpu.memory_space<vmem>>, vector<1x32x1xf32>
    %1444 = vector.shape_cast %1443 : vector<1x32x1xf32> to vector<32x1xf32>
    %cst_700 = arith.constant dense<0.000000e+00> : vector<32xf32>
    %1445 = vector.multi_reduction <add>, %1440, %cst_700 [1] : vector<32x128xf32> to vector<32xf32>
    %1446 = vector.shape_cast %1445 : vector<32xf32> to vector<32x1xf32>
    %cst_701 = arith.constant 1.280000e+02 : f32
    %1447 = vector.broadcast %cst_701 : f32 to vector<32x1xf32>
    %1448 = arith.divf %1446, %1447 : vector<32x1xf32>
    %1449 = vector.broadcast %1448 : vector<32x1xf32> to vector<32x128xf32>
    %1450 = arith.subf %1440, %1449 : vector<32x128xf32>
    %1451 = arith.mulf %1450, %1450 : vector<32x128xf32>
    %cst_702 = arith.constant dense<0.000000e+00> : vector<32xf32>
    %1452 = vector.multi_reduction <add>, %1451, %cst_702 [1] : vector<32x128xf32> to vector<32xf32>
    %1453 = vector.shape_cast %1452 : vector<32xf32> to vector<32x1xf32>
    %cst_703 = arith.constant 1.280000e+02 : f32
    %1454 = vector.broadcast %cst_703 : f32 to vector<32x1xf32>
    %1455 = arith.divf %1453, %1454 : vector<32x1xf32>
    %1456 = vector.broadcast %1448 : vector<32x1xf32> to vector<32x128xf32>
    %1457 = arith.subf %1440, %1456 : vector<32x128xf32>
    %cst_704 = arith.constant 9.99999974E-6 : f32
    %1458 = vector.broadcast %cst_704 : f32 to vector<32x1xf32>
    %1459 = arith.addf %1455, %1458 : vector<32x1xf32>
    %1460 = math.rsqrt %1459 : vector<32x1xf32>
    %1461 = vector.broadcast %1460 : vector<32x1xf32> to vector<32x128xf32>
    %1462 = arith.mulf %1457, %1461 : vector<32x128xf32>
    %1463 = vector.broadcast %1442 : vector<32x1xf32> to vector<32x128xf32>
    %1464 = arith.mulf %1462, %1463 : vector<32x128xf32>
    %1465 = vector.broadcast %1444 : vector<32x1xf32> to vector<32x128xf32>
    %1466 = arith.addf %1464, %1465 : vector<32x128xf32>
    %cst_705 = arith.constant 0.000000e+00 : f32
    %1467 = vector.broadcast %cst_705 : f32 to vector<32x128xf32>
    %1468 = arith.maximumf %1466, %1467 : vector<32x128xf32>
    %c7_706 = arith.constant 7 : index
    %c0_707 = arith.constant 0 : index
    %c0_708 = arith.constant 0 : index
    %1469 = vector.load %arg14[%c7_706, %c0_707, %c0_708] : memref<8x32x32xbf16, #tpu.memory_space<vmem>>, vector<1x32x32xbf16>
    %1470 = vector.shape_cast %1469 : vector<1x32x32xbf16> to vector<32x32xbf16>
    %1471 = arith.truncf %1468 : vector<32x128xf32> to vector<32x128xbf16>
    %cst_709 = arith.constant dense<0.000000e+00> : vector<32x128xf32>
    %1472 = tpu.matmul %1470, %1471, %cst_709 {dimension_numbers = #tpu.dot_dimension_numbers<[1], [0], [0], [1], [0, 0, 1, 1], [], []>} : vector<32x32xbf16>, vector<32x128xbf16>, vector<32x128xf32> -> vector<32x128xf32>
    %c7_710 = arith.constant 7 : index
    %c0_711 = arith.constant 0 : index
    %c0_712 = arith.constant 0 : index
    %1473 = vector.load %arg15[%c7_710, %c0_711, %c0_712] : memref<8x32x1xf32, #tpu.memory_space<vmem>>, vector<1x32x1xf32>
    %1474 = vector.shape_cast %1473 : vector<1x32x1xf32> to vector<32x1xf32>
    %1475 = vector.broadcast %1474 : vector<32x1xf32> to vector<32x128xf32>
    %1476 = arith.addf %1472, %1475 : vector<32x128xf32>
    %1477 = arith.addf %1476, %1305 : vector<32x128xf32>
    %cst_713 = arith.constant 0.000000e+00 : f32
    %1478 = vector.broadcast %cst_713 : f32 to vector<32x128xf32>
    %1479 = arith.maximumf %1477, %1478 : vector<32x128xf32>
    %c0_714 = arith.constant 0 : index
    %c0_715 = arith.constant 0 : index
    %1480 = vector.load %arg17[%c0_714, %c0_715] : memref<8x1xf32, #tpu.memory_space<vmem>>, vector<8x1xf32>
    %1481 = vector.extract_strided_slice %1479 {offsets = [0, 119], sizes = [32, 9], strides = [1, 1]} : vector<32x128xf32> to vector<32x9xf32>
    %1482 = vector.extract_strided_slice %1479 {offsets = [0, 0], sizes = [32, 119], strides = [1, 1]} : vector<32x128xf32> to vector<32x119xf32>
    %1483 = tpu.concatenate %1481, %1482 in 1 : vector<32x9xf32>, vector<32x119xf32> -> vector<32x128xf32>
    %1484 = arith.truncf %1483 : vector<32x128xf32> to vector<32x128xbf16>
    %c0_716 = arith.constant 0 : index
    %c0_717 = arith.constant 0 : index
    %c0_718 = arith.constant 0 : index
    %1485 = vector.load %arg16[%c0_716, %c0_717, %c0_718] : memref<9x8x32xbf16, #tpu.memory_space<vmem>>, vector<1x8x32xbf16>
    %1486 = vector.shape_cast %1485 : vector<1x8x32xbf16> to vector<8x32xbf16>
    %cst_719 = arith.constant dense<0.000000e+00> : vector<8x128xf32>
    %1487 = tpu.matmul %1486, %1484, %cst_719 {dimension_numbers = #tpu.dot_dimension_numbers<[1], [0], [0], [1], [0, 0, 1, 1], [], []>} : vector<8x32xbf16>, vector<32x128xbf16>, vector<8x128xf32> -> vector<8x128xf32>
    %1488 = vector.extract_strided_slice %2 {offsets = [0, 0], sizes = [1, 128], strides = [1, 1]} : vector<9x128xf32> to vector<1x128xf32>
    %1489 = vector.broadcast %1488 : vector<1x128xf32> to vector<8x128xf32>
    %1490 = arith.mulf %1487, %1489 : vector<8x128xf32>
    %1491 = vector.extract_strided_slice %1479 {offsets = [0, 120], sizes = [32, 8], strides = [1, 1]} : vector<32x128xf32> to vector<32x8xf32>
    %1492 = vector.extract_strided_slice %1479 {offsets = [0, 0], sizes = [32, 120], strides = [1, 1]} : vector<32x128xf32> to vector<32x120xf32>
    %1493 = tpu.concatenate %1491, %1492 in 1 : vector<32x8xf32>, vector<32x120xf32> -> vector<32x128xf32>
    %1494 = arith.truncf %1493 : vector<32x128xf32> to vector<32x128xbf16>
    %c1_720 = arith.constant 1 : index
    %c0_721 = arith.constant 0 : index
    %c0_722 = arith.constant 0 : index
    %1495 = vector.load %arg16[%c1_720, %c0_721, %c0_722] : memref<9x8x32xbf16, #tpu.memory_space<vmem>>, vector<1x8x32xbf16>
    %1496 = vector.shape_cast %1495 : vector<1x8x32xbf16> to vector<8x32xbf16>
    %cst_723 = arith.constant dense<0.000000e+00> : vector<8x128xf32>
    %1497 = tpu.matmul %1496, %1494, %cst_723 {dimension_numbers = #tpu.dot_dimension_numbers<[1], [0], [0], [1], [0, 0, 1, 1], [], []>} : vector<8x32xbf16>, vector<32x128xbf16>, vector<8x128xf32> -> vector<8x128xf32>
    %1498 = vector.extract_strided_slice %2 {offsets = [1, 0], sizes = [1, 128], strides = [1, 1]} : vector<9x128xf32> to vector<1x128xf32>
    %1499 = vector.broadcast %1498 : vector<1x128xf32> to vector<8x128xf32>
    %1500 = arith.mulf %1497, %1499 : vector<8x128xf32>
    %1501 = arith.addf %1490, %1500 : vector<8x128xf32>
    %1502 = vector.extract_strided_slice %1479 {offsets = [0, 121], sizes = [32, 7], strides = [1, 1]} : vector<32x128xf32> to vector<32x7xf32>
    %1503 = vector.extract_strided_slice %1479 {offsets = [0, 0], sizes = [32, 121], strides = [1, 1]} : vector<32x128xf32> to vector<32x121xf32>
    %1504 = tpu.concatenate %1502, %1503 in 1 : vector<32x7xf32>, vector<32x121xf32> -> vector<32x128xf32>
    %1505 = arith.truncf %1504 : vector<32x128xf32> to vector<32x128xbf16>
    %c2_724 = arith.constant 2 : index
    %c0_725 = arith.constant 0 : index
    %c0_726 = arith.constant 0 : index
    %1506 = vector.load %arg16[%c2_724, %c0_725, %c0_726] : memref<9x8x32xbf16, #tpu.memory_space<vmem>>, vector<1x8x32xbf16>
    %1507 = vector.shape_cast %1506 : vector<1x8x32xbf16> to vector<8x32xbf16>
    %cst_727 = arith.constant dense<0.000000e+00> : vector<8x128xf32>
    %1508 = tpu.matmul %1507, %1505, %cst_727 {dimension_numbers = #tpu.dot_dimension_numbers<[1], [0], [0], [1], [0, 0, 1, 1], [], []>} : vector<8x32xbf16>, vector<32x128xbf16>, vector<8x128xf32> -> vector<8x128xf32>
    %1509 = vector.extract_strided_slice %2 {offsets = [2, 0], sizes = [1, 128], strides = [1, 1]} : vector<9x128xf32> to vector<1x128xf32>
    %1510 = vector.broadcast %1509 : vector<1x128xf32> to vector<8x128xf32>
    %1511 = arith.mulf %1508, %1510 : vector<8x128xf32>
    %1512 = arith.addf %1501, %1511 : vector<8x128xf32>
    %1513 = vector.extract_strided_slice %1479 {offsets = [0, 127], sizes = [32, 1], strides = [1, 1]} : vector<32x128xf32> to vector<32x1xf32>
    %1514 = vector.extract_strided_slice %1479 {offsets = [0, 0], sizes = [32, 127], strides = [1, 1]} : vector<32x128xf32> to vector<32x127xf32>
    %1515 = tpu.concatenate %1513, %1514 in 1 : vector<32x1xf32>, vector<32x127xf32> -> vector<32x128xf32>
    %1516 = arith.truncf %1515 : vector<32x128xf32> to vector<32x128xbf16>
    %c3_728 = arith.constant 3 : index
    %c0_729 = arith.constant 0 : index
    %c0_730 = arith.constant 0 : index
    %1517 = vector.load %arg16[%c3_728, %c0_729, %c0_730] : memref<9x8x32xbf16, #tpu.memory_space<vmem>>, vector<1x8x32xbf16>
    %1518 = vector.shape_cast %1517 : vector<1x8x32xbf16> to vector<8x32xbf16>
    %cst_731 = arith.constant dense<0.000000e+00> : vector<8x128xf32>
    %1519 = tpu.matmul %1518, %1516, %cst_731 {dimension_numbers = #tpu.dot_dimension_numbers<[1], [0], [0], [1], [0, 0, 1, 1], [], []>} : vector<8x32xbf16>, vector<32x128xbf16>, vector<8x128xf32> -> vector<8x128xf32>
    %1520 = vector.extract_strided_slice %2 {offsets = [3, 0], sizes = [1, 128], strides = [1, 1]} : vector<9x128xf32> to vector<1x128xf32>
    %1521 = vector.broadcast %1520 : vector<1x128xf32> to vector<8x128xf32>
    %1522 = arith.mulf %1519, %1521 : vector<8x128xf32>
    %1523 = arith.addf %1512, %1522 : vector<8x128xf32>
    %1524 = arith.truncf %1479 : vector<32x128xf32> to vector<32x128xbf16>
    %c4_732 = arith.constant 4 : index
    %c0_733 = arith.constant 0 : index
    %c0_734 = arith.constant 0 : index
    %1525 = vector.load %arg16[%c4_732, %c0_733, %c0_734] : memref<9x8x32xbf16, #tpu.memory_space<vmem>>, vector<1x8x32xbf16>
    %1526 = vector.shape_cast %1525 : vector<1x8x32xbf16> to vector<8x32xbf16>
    %cst_735 = arith.constant dense<0.000000e+00> : vector<8x128xf32>
    %1527 = tpu.matmul %1526, %1524, %cst_735 {dimension_numbers = #tpu.dot_dimension_numbers<[1], [0], [0], [1], [0, 0, 1, 1], [], []>} : vector<8x32xbf16>, vector<32x128xbf16>, vector<8x128xf32> -> vector<8x128xf32>
    %1528 = vector.extract_strided_slice %2 {offsets = [4, 0], sizes = [1, 128], strides = [1, 1]} : vector<9x128xf32> to vector<1x128xf32>
    %1529 = vector.broadcast %1528 : vector<1x128xf32> to vector<8x128xf32>
    %1530 = arith.mulf %1527, %1529 : vector<8x128xf32>
    %1531 = arith.addf %1523, %1530 : vector<8x128xf32>
    %1532 = vector.extract_strided_slice %1479 {offsets = [0, 1], sizes = [32, 127], strides = [1, 1]} : vector<32x128xf32> to vector<32x127xf32>
    %1533 = vector.extract_strided_slice %1479 {offsets = [0, 0], sizes = [32, 1], strides = [1, 1]} : vector<32x128xf32> to vector<32x1xf32>
    %1534 = tpu.concatenate %1532, %1533 in 1 : vector<32x127xf32>, vector<32x1xf32> -> vector<32x128xf32>
    %1535 = arith.truncf %1534 : vector<32x128xf32> to vector<32x128xbf16>
    %c5_736 = arith.constant 5 : index
    %c0_737 = arith.constant 0 : index
    %c0_738 = arith.constant 0 : index
    %1536 = vector.load %arg16[%c5_736, %c0_737, %c0_738] : memref<9x8x32xbf16, #tpu.memory_space<vmem>>, vector<1x8x32xbf16>
    %1537 = vector.shape_cast %1536 : vector<1x8x32xbf16> to vector<8x32xbf16>
    %cst_739 = arith.constant dense<0.000000e+00> : vector<8x128xf32>
    %1538 = tpu.matmul %1537, %1535, %cst_739 {dimension_numbers = #tpu.dot_dimension_numbers<[1], [0], [0], [1], [0, 0, 1, 1], [], []>} : vector<8x32xbf16>, vector<32x128xbf16>, vector<8x128xf32> -> vector<8x128xf32>
    %1539 = vector.extract_strided_slice %2 {offsets = [5, 0], sizes = [1, 128], strides = [1, 1]} : vector<9x128xf32> to vector<1x128xf32>
    %1540 = vector.broadcast %1539 : vector<1x128xf32> to vector<8x128xf32>
    %1541 = arith.mulf %1538, %1540 : vector<8x128xf32>
    %1542 = arith.addf %1531, %1541 : vector<8x128xf32>
    %1543 = vector.extract_strided_slice %1479 {offsets = [0, 7], sizes = [32, 121], strides = [1, 1]} : vector<32x128xf32> to vector<32x121xf32>
    %1544 = vector.extract_strided_slice %1479 {offsets = [0, 0], sizes = [32, 7], strides = [1, 1]} : vector<32x128xf32> to vector<32x7xf32>
    %1545 = tpu.concatenate %1543, %1544 in 1 : vector<32x121xf32>, vector<32x7xf32> -> vector<32x128xf32>
    %1546 = arith.truncf %1545 : vector<32x128xf32> to vector<32x128xbf16>
    %c6_740 = arith.constant 6 : index
    %c0_741 = arith.constant 0 : index
    %c0_742 = arith.constant 0 : index
    %1547 = vector.load %arg16[%c6_740, %c0_741, %c0_742] : memref<9x8x32xbf16, #tpu.memory_space<vmem>>, vector<1x8x32xbf16>
    %1548 = vector.shape_cast %1547 : vector<1x8x32xbf16> to vector<8x32xbf16>
    %cst_743 = arith.constant dense<0.000000e+00> : vector<8x128xf32>
    %1549 = tpu.matmul %1548, %1546, %cst_743 {dimension_numbers = #tpu.dot_dimension_numbers<[1], [0], [0], [1], [0, 0, 1, 1], [], []>} : vector<8x32xbf16>, vector<32x128xbf16>, vector<8x128xf32> -> vector<8x128xf32>
    %1550 = vector.extract_strided_slice %2 {offsets = [6, 0], sizes = [1, 128], strides = [1, 1]} : vector<9x128xf32> to vector<1x128xf32>
    %1551 = vector.broadcast %1550 : vector<1x128xf32> to vector<8x128xf32>
    %1552 = arith.mulf %1549, %1551 : vector<8x128xf32>
    %1553 = arith.addf %1542, %1552 : vector<8x128xf32>
    %1554 = vector.extract_strided_slice %1479 {offsets = [0, 8], sizes = [32, 120], strides = [1, 1]} : vector<32x128xf32> to vector<32x120xf32>
    %1555 = vector.extract_strided_slice %1479 {offsets = [0, 0], sizes = [32, 8], strides = [1, 1]} : vector<32x128xf32> to vector<32x8xf32>
    %1556 = tpu.concatenate %1554, %1555 in 1 : vector<32x120xf32>, vector<32x8xf32> -> vector<32x128xf32>
    %1557 = arith.truncf %1556 : vector<32x128xf32> to vector<32x128xbf16>
    %c7_744 = arith.constant 7 : index
    %c0_745 = arith.constant 0 : index
    %c0_746 = arith.constant 0 : index
    %1558 = vector.load %arg16[%c7_744, %c0_745, %c0_746] : memref<9x8x32xbf16, #tpu.memory_space<vmem>>, vector<1x8x32xbf16>
    %1559 = vector.shape_cast %1558 : vector<1x8x32xbf16> to vector<8x32xbf16>
    %cst_747 = arith.constant dense<0.000000e+00> : vector<8x128xf32>
    %1560 = tpu.matmul %1559, %1557, %cst_747 {dimension_numbers = #tpu.dot_dimension_numbers<[1], [0], [0], [1], [0, 0, 1, 1], [], []>} : vector<8x32xbf16>, vector<32x128xbf16>, vector<8x128xf32> -> vector<8x128xf32>
    %1561 = vector.extract_strided_slice %2 {offsets = [7, 0], sizes = [1, 128], strides = [1, 1]} : vector<9x128xf32> to vector<1x128xf32>
    %1562 = vector.broadcast %1561 : vector<1x128xf32> to vector<8x128xf32>
    %1563 = arith.mulf %1560, %1562 : vector<8x128xf32>
    %1564 = arith.addf %1553, %1563 : vector<8x128xf32>
    %1565 = vector.extract_strided_slice %1479 {offsets = [0, 9], sizes = [32, 119], strides = [1, 1]} : vector<32x128xf32> to vector<32x119xf32>
    %1566 = vector.extract_strided_slice %1479 {offsets = [0, 0], sizes = [32, 9], strides = [1, 1]} : vector<32x128xf32> to vector<32x9xf32>
    %1567 = tpu.concatenate %1565, %1566 in 1 : vector<32x119xf32>, vector<32x9xf32> -> vector<32x128xf32>
    %1568 = arith.truncf %1567 : vector<32x128xf32> to vector<32x128xbf16>
    %c8_748 = arith.constant 8 : index
    %c0_749 = arith.constant 0 : index
    %c0_750 = arith.constant 0 : index
    %1569 = vector.load %arg16[%c8_748, %c0_749, %c0_750] : memref<9x8x32xbf16, #tpu.memory_space<vmem>>, vector<1x8x32xbf16>
    %1570 = vector.shape_cast %1569 : vector<1x8x32xbf16> to vector<8x32xbf16>
    %cst_751 = arith.constant dense<0.000000e+00> : vector<8x128xf32>
    %1571 = tpu.matmul %1570, %1568, %cst_751 {dimension_numbers = #tpu.dot_dimension_numbers<[1], [0], [0], [1], [0, 0, 1, 1], [], []>} : vector<8x32xbf16>, vector<32x128xbf16>, vector<8x128xf32> -> vector<8x128xf32>
    %1572 = vector.extract_strided_slice %2 {offsets = [8, 0], sizes = [1, 128], strides = [1, 1]} : vector<9x128xf32> to vector<1x128xf32>
    %1573 = vector.broadcast %1572 : vector<1x128xf32> to vector<8x128xf32>
    %1574 = arith.mulf %1571, %1573 : vector<8x128xf32>
    %1575 = arith.addf %1564, %1574 : vector<8x128xf32>
    %1576 = vector.broadcast %1480 : vector<8x1xf32> to vector<8x128xf32>
    %1577 = arith.addf %1575, %1576 : vector<8x128xf32>
    %c0_752 = arith.constant 0 : index
    %1578 = memref.load %arg18[%c0_752] : memref<2xf32, #tpu.memory_space<smem>>
    %c1_753 = arith.constant 1 : index
    %1579 = memref.load %arg18[%c1_753] : memref<2xf32, #tpu.memory_space<smem>>
    %1580 = vector.extract_strided_slice %1577 {offsets = [0, 0], sizes = [1, 128], strides = [1, 1]} : vector<8x128xf32> to vector<1x128xf32>
    %1581 = math.tanh %1580 : vector<1x128xf32>
    %1582 = vector.broadcast %1578 : f32 to vector<1x128xf32>
    %1583 = arith.mulf %1582, %1581 : vector<1x128xf32>
    %1584 = vector.broadcast %1579 : f32 to vector<1x128xf32>
    %1585 = arith.addf %1583, %1584 : vector<1x128xf32>
    %cst_754 = arith.constant 1.000000e+00 : f32
    %1586 = vector.broadcast %cst_754 : f32 to vector<1x128xf32>
    %1587 = arith.subf %1586, %1 : vector<1x128xf32>
    %1588 = vector.extract_strided_slice %1577 {offsets = [1, 0], sizes = [1, 128], strides = [1, 1]} : vector<8x128xf32> to vector<1x128xf32>
    %1589 = arith.mulf %1588, %1587 : vector<1x128xf32>
    %1590 = arith.mulf %1585, %1587 : vector<1x128xf32>
    %1591 = math.exp %1590 : vector<1x128xf32>
    %1592 = arith.mulf %0, %1591 : vector<1x128xf32>
    %1593 = arith.addf %1592, %1589 : vector<1x128xf32>
    %c0_755 = arith.constant 0 : index
    %c0_756 = arith.constant 0 : index
    %1594 = vector.load %arg19[%c0_755, %c0_756] : memref<1x128xf32, #tpu.memory_space<vmem>>, vector<1x128xf32>
    tpu.vector_store %arg19[%c0_755, %c0_756], %1593 {strides = array<i32>} : memref<1x128xf32, #tpu.memory_space<vmem>>, vector<1x128xf32>,
    %c0_757 = arith.constant 0 : index
    %c0_758 = arith.constant 0 : index
    %1595 = vector.load %arg20[%c0_757, %c0_758] : memref<1x128xf32, #tpu.memory_space<vmem>>, vector<1x128xf32>
    tpu.vector_store %arg20[%c0_757, %c0_758], %1590 {strides = array<i32>} : memref<1x128xf32, #tpu.memory_space<vmem>>, vector<1x128xf32>,
    return
  }
  func.func @transform_0(%arg0: i32) -> (i32, i32) {
    %c0_i32 = arith.constant 0 : i32
    %c0_i32_0 = arith.constant 0 : i32
    %c0_i32_1 = arith.constant 0 : i32
    return %c0_i32, %c0_i32_0 : i32, i32
  }
  func.func @transform_1(%arg0: i32) -> (i32, i32) {
    %c0_i32 = arith.constant 0 : i32
    %c0_i32_0 = arith.constant 0 : i32
    %c0_i32_1 = arith.constant 0 : i32
    return %c0_i32, %c0_i32_0 : i32, i32
  }
  func.func @transform_2(%arg0: i32) -> (i32, i32) {
    %c0_i32 = arith.constant 0 : i32
    %c0_i32_0 = arith.constant 0 : i32
    %c0_i32_1 = arith.constant 0 : i32
    return %c0_i32, %c0_i32_0 : i32, i32
  }
  func.func @transform_3(%arg0: i32) -> (i32, i32, i32) {
    %c0_i32 = arith.constant 0 : i32
    %c0_i32_0 = arith.constant 0 : i32
    %c0_i32_1 = arith.constant 0 : i32
    %c0_i32_2 = arith.constant 0 : i32
    return %c0_i32, %c0_i32_0, %c0_i32_1 : i32, i32, i32
  }
  func.func @transform_4(%arg0: i32) -> (i32, i32) {
    %c0_i32 = arith.constant 0 : i32
    %c0_i32_0 = arith.constant 0 : i32
    %c0_i32_1 = arith.constant 0 : i32
    return %c0_i32, %c0_i32_0 : i32, i32
  }
  func.func @transform_5(%arg0: i32) -> (i32, i32, i32) {
    %c0_i32 = arith.constant 0 : i32
    %c0_i32_0 = arith.constant 0 : i32
    %c0_i32_1 = arith.constant 0 : i32
    %c0_i32_2 = arith.constant 0 : i32
    return %c0_i32, %c0_i32_0, %c0_i32_1 : i32, i32, i32
  }
  func.func @transform_6(%arg0: i32) -> (i32, i32, i32) {
    %c0_i32 = arith.constant 0 : i32
    %c0_i32_0 = arith.constant 0 : i32
    %c0_i32_1 = arith.constant 0 : i32
    %c0_i32_2 = arith.constant 0 : i32
    return %c0_i32, %c0_i32_0, %c0_i32_1 : i32, i32, i32
  }
  func.func @transform_7(%arg0: i32) -> (i32, i32, i32) {
    %c0_i32 = arith.constant 0 : i32
    %c0_i32_0 = arith.constant 0 : i32
    %c0_i32_1 = arith.constant 0 : i32
    %c0_i32_2 = arith.constant 0 : i32
    return %c0_i32, %c0_i32_0, %c0_i32_1 : i32, i32, i32
  }
  func.func @transform_8(%arg0: i32) -> (i32, i32, i32) {
    %c0_i32 = arith.constant 0 : i32
    %c0_i32_0 = arith.constant 0 : i32
    %c0_i32_1 = arith.constant 0 : i32
    %c0_i32_2 = arith.constant 0 : i32
    return %c0_i32, %c0_i32_0, %c0_i32_1 : i32, i32, i32
  }
  func.func @transform_9(%arg0: i32) -> (i32, i32, i32, i32) {
    %c0_i32 = arith.constant 0 : i32
    %c0_i32_0 = arith.constant 0 : i32
    %c0_i32_1 = arith.constant 0 : i32
    %c0_i32_2 = arith.constant 0 : i32
    %c0_i32_3 = arith.constant 0 : i32
    return %c0_i32, %c0_i32_0, %c0_i32_1, %c0_i32_2 : i32, i32, i32, i32
  }
  func.func @transform_10(%arg0: i32) -> (i32, i32, i32) {
    %c0_i32 = arith.constant 0 : i32
    %c0_i32_0 = arith.constant 0 : i32
    %c0_i32_1 = arith.constant 0 : i32
    %c0_i32_2 = arith.constant 0 : i32
    return %c0_i32, %c0_i32_0, %c0_i32_1 : i32, i32, i32
  }
  func.func @transform_11(%arg0: i32) -> (i32, i32, i32) {
    %c0_i32 = arith.constant 0 : i32
    %c0_i32_0 = arith.constant 0 : i32
    %c0_i32_1 = arith.constant 0 : i32
    %c0_i32_2 = arith.constant 0 : i32
    return %c0_i32, %c0_i32_0, %c0_i32_1 : i32, i32, i32
  }
  func.func @transform_12(%arg0: i32) -> (i32, i32, i32) {
    %c0_i32 = arith.constant 0 : i32
    %c0_i32_0 = arith.constant 0 : i32
    %c0_i32_1 = arith.constant 0 : i32
    %c0_i32_2 = arith.constant 0 : i32
    return %c0_i32, %c0_i32_0, %c0_i32_1 : i32, i32, i32
  }
  func.func @transform_13(%arg0: i32) -> (i32, i32, i32) {
    %c0_i32 = arith.constant 0 : i32
    %c0_i32_0 = arith.constant 0 : i32
    %c0_i32_1 = arith.constant 0 : i32
    %c0_i32_2 = arith.constant 0 : i32
    return %c0_i32, %c0_i32_0, %c0_i32_1 : i32, i32, i32
  }
  func.func @transform_14(%arg0: i32) -> (i32, i32, i32) {
    %c0_i32 = arith.constant 0 : i32
    %c0_i32_0 = arith.constant 0 : i32
    %c0_i32_1 = arith.constant 0 : i32
    %c0_i32_2 = arith.constant 0 : i32
    return %c0_i32, %c0_i32_0, %c0_i32_1 : i32, i32, i32
  }
  func.func @transform_15(%arg0: i32) -> (i32, i32, i32) {
    %c0_i32 = arith.constant 0 : i32
    %c0_i32_0 = arith.constant 0 : i32
    %c0_i32_1 = arith.constant 0 : i32
    %c0_i32_2 = arith.constant 0 : i32
    return %c0_i32, %c0_i32_0, %c0_i32_1 : i32, i32, i32
  }
  func.func @transform_16(%arg0: i32) -> (i32, i32) {
    %c0_i32 = arith.constant 0 : i32
    %c0_i32_0 = arith.constant 0 : i32
    %c0_i32_1 = arith.constant 0 : i32
    return %c0_i32, %c0_i32_0 : i32, i32
  }
  func.func @transform_17(%arg0: i32) -> i32 {
    %c0_i32 = arith.constant 0 : i32
    %c0_i32_0 = arith.constant 0 : i32
    return %c0_i32 : i32
  }
  func.func @transform_18(%arg0: i32) -> (i32, i32) {
    %c0_i32 = arith.constant 0 : i32
    %c0_i32_0 = arith.constant 0 : i32
    %c0_i32_1 = arith.constant 0 : i32
    return %c0_i32, %c0_i32_0 : i32, i32
  }
  func.func @transform_19(%arg0: i32) -> (i32, i32) {
    %c0_i32 = arith.constant 0 : i32
    %c0_i32_0 = arith.constant 0 : i32
    %c0_i32_1 = arith.constant 0 : i32
    return %c0_i32, %c0_i32_0 : i32, i32
  }
}

</mosaic_0001>

<llo_original>
// kernel: affine_coupling_forward.1
$region0: #{affine_coupling_forward.1}
  #allocation0 [shape = 'u32[]', space=smem, size = 0x4, offset = 0x4, fixed_abs, tag = 'smem constant byte address 0x4 - core index']
  #allocation1 [shape = 'u32[72,128]{1,0:T(1,128)}', space=vmem, size = 0x9000, scoped, tag = 'internal scratch']
  %s0 = inlined_call_operand.vmem [shape: f32[1,128], index: 0, kind: input, shape index: {}]
  %s1 = inlined_call_operand.vmem [shape: f32[1,128], index: 1, kind: input, shape index: {}]
  %s2 = inlined_call_operand.vmem [shape: f32[9,128], index: 2, kind: input, shape index: {}]
  %s3 = inlined_call_operand.vmem [shape: f32[9,32,1], index: 3, kind: input, shape index: {}]
  %s4 = inlined_call_operand.vmem [shape: f32[32,1], index: 4, kind: input, shape index: {}]
  %s5 = inlined_call_operand.vmem [shape: bf16[8,32,32], index: 5, kind: input, shape index: {}]
  %s6 = inlined_call_operand.vmem [shape: f32[8,32,1], index: 6, kind: input, shape index: {}]
  %s7 = inlined_call_operand.vmem [shape: f32[8,32,1], index: 7, kind: input, shape index: {}]
  %s8 = inlined_call_operand.vmem [shape: f32[8,32,1], index: 8, kind: input, shape index: {}]
  %s9 = inlined_call_operand.hbm [shape: bf16[8,9,32,32], index: 9, kind: input, shape index: {}]
  %s10 = inlined_call_operand.vmem [shape: f32[8,32,1], index: 10, kind: input, shape index: {}]
  %s11 = inlined_call_operand.vmem [shape: f32[8,32,1], index: 11, kind: input, shape index: {}]
  %s12 = inlined_call_operand.vmem [shape: f32[8,32,1], index: 12, kind: input, shape index: {}]
  %s13 = inlined_call_operand.vmem [shape: bf16[8,32,32], index: 13, kind: input, shape index: {}]
  %s14 = inlined_call_operand.vmem [shape: f32[8,32,1], index: 14, kind: input, shape index: {}]
  %s15 = inlined_call_operand.vmem [shape: bf16[9,8,32], index: 15, kind: input, shape index: {}]
  %s16 = inlined_call_operand.vmem [shape: f32[8,1], index: 16, kind: input, shape index: {}]
  %s17 = inlined_call_operand.vmem [shape: f32[2], index: 17, kind: input, shape index: {}]
  %s18 = inlined_call_operand.vmem [shape: f32[1,128], index: 18, kind: output, shape index: {0}]
  %s19 = inlined_call_operand.vmem [shape: f32[1,128], index: 19, kind: output, shape index: {1}]
  %20 = xla_tuple %s18, %s19
  %s21 = sld [smem:[#allocation0]]
  $region98: #{affine_coupling_forward.1} parent=0
    _
  %s23 = ssub.s32 1, %s21
  %s24 = scalar_select 0, %s23, %s21
  $region1: #{affine_coupling_forward.1} parent=0
    #allocation2 [shape = 'u8[589824]{0}', space=vmem, size = 0x90000, scoped, tag = 'input window, operand 9, single buffered']
    #allocation3 [shape = 's32[1]{0}', space=sflag, size = 0x4, scoped, tag = 'scoped memory for affine_coupling_forward.1']
    #allocation4 [shape = 's32[1]{0}', space=sflag, size = 0x4, scoped, tag = 'scoped memory for affine_coupling_forward.1']
    #allocation5 [shape = 'u8[512]{0}', space=smem, size = 0x200, scoped, tag = 'input window, operand 17, single buffered']
    %25 = vsyncpa [#allocation3], 0
    %26 = vsyncpa [#allocation4], 0
    // Predicated region
    $region2: #{affine_coupling_forward.1} parent=1 // pred_check
      _
    $region3: #{affine_coupling_forward.1} parent=1 // pred_check_branch
      %28 = sbr.rel (0) target = $region5
    $region4: #{affine_coupling_forward.1} parent=1 // pred_region
      _
    $region5: #{affine_coupling_forward.1} parent=1 // pred_fallthru
      _
    // Predicated region
    $region6: #{affine_coupling_forward.1} parent=1 // pred_check
      _
    $region7: #{affine_coupling_forward.1} parent=1 // pred_check_branch
      %30 = sbr.rel (0) target = $region9
    $region8: #{affine_coupling_forward.1} parent=1 // pred_region
      _
    $region9: #{affine_coupling_forward.1} parent=1 // pred_fallthru
      _
    // Predicated region
    $region10: #{affine_coupling_forward.1} parent=1 // pred_check
      _
    $region11: #{affine_coupling_forward.1} parent=1 // pred_check_branch
      %32 = sbr.rel (0) target = $region13
    $region12: #{affine_coupling_forward.1} parent=1 // pred_region
      _
    $region13: #{affine_coupling_forward.1} parent=1 // pred_fallthru
      _
    // Predicated region
    $region14: #{affine_coupling_forward.1} parent=1 // pred_check
      _
    $region15: #{affine_coupling_forward.1} parent=1 // pred_check_branch
      %34 = sbr.rel (0) target = $region17
    $region16: #{affine_coupling_forward.1} parent=1 // pred_region
      _
    $region17: #{affine_coupling_forward.1} parent=1 // pred_fallthru
      _
    // Predicated region
    $region18: #{affine_coupling_forward.1} parent=1 // pred_check
      _
    $region19: #{affine_coupling_forward.1} parent=1 // pred_check_branch
      %36 = sbr.rel (0) target = $region21
    $region20: #{affine_coupling_forward.1} parent=1 // pred_region
      _
    $region21: #{affine_coupling_forward.1} parent=1 // pred_fallthru
      _
    // Predicated region
    $region22: #{affine_coupling_forward.1} parent=1 // pred_check
      _
    $region23: #{affine_coupling_forward.1} parent=1 // pred_check_branch
      %38 = sbr.rel (0) target = $region25
    $region24: #{affine_coupling_forward.1} parent=1 // pred_region
      _
    $region25: #{affine_coupling_forward.1} parent=1 // pred_fallthru
      _
    // Predicated region
    $region26: #{affine_coupling_forward.1} parent=1 // pred_check
      _
    $region27: #{affine_coupling_forward.1} parent=1 // pred_check_branch
      %40 = sbr.rel (0) target = $region29
    $region28: #{affine_coupling_forward.1} parent=1 // pred_region
      _
    $region29: #{affine_coupling_forward.1} parent=1 // pred_fallthru
      _
    // Predicated region
    $region30: #{affine_coupling_forward.1} parent=1 // pred_check
      _
    $region31: #{affine_coupling_forward.1} parent=1 // pred_check_branch
      %42 = sbr.rel (0) target = $region33
    $region32: #{affine_coupling_forward.1} parent=1 // pred_region
      _
    $region33: #{affine_coupling_forward.1} parent=1 // pred_fallthru
      _
    // Predicated region
    $region34: #{affine_coupling_forward.1} parent=1 // pred_check
      _
    $region35: #{affine_coupling_forward.1} parent=1 // pred_check_branch
      %44 = sbr.rel (0) target = $region37
    $region36: #{affine_coupling_forward.1} parent=1 // pred_region
      _
    $region37: #{affine_coupling_forward.1} parent=1 // pred_fallthru
      _
    // Predicated region
    $region38: #{affine_coupling_forward.1} parent=1 // pred_check
      _
    $region39: #{affine_coupling_forward.1} parent=1 // pred_check_branch
      %46 = sbr.rel (0) target = $region41
    $region40: #{affine_coupling_forward.1} parent=1 // pred_region
      %48 = vsyncadd [#allocation3], 0
      %s49 = sshll.u32 %s9, 4
      %s50 = int_to_ptr.hbm [resolvable:$true] %s49
      %s51 = sshll.u32 [#allocation2], 4
      %s52 = int_to_ptr.vmem [resolvable:$true] %s51
      %57 = dma.hbm_to_vmem [thread:$0]  %s50, 18432, %s52, [#allocation3], 64, 64, 4
    $region41: #{affine_coupling_forward.1} parent=1 // pred_fallthru
      _
    // Predicated region
    $region42: #{affine_coupling_forward.1} parent=1 // pred_check
      _
    $region43: #{affine_coupling_forward.1} parent=1 // pred_check_branch
      %59 = sbr.rel (0) target = $region45
    $region44: #{affine_coupling_forward.1} parent=1 // pred_region
      _
    $region45: #{affine_coupling_forward.1} parent=1 // pred_fallthru
      _
    // Predicated region
    $region46: #{affine_coupling_forward.1} parent=1 // pred_check
      _
    $region47: #{affine_coupling_forward.1} parent=1 // pred_check_branch
      %61 = sbr.rel (0) target = $region49
    $region48: #{affine_coupling_forward.1} parent=1 // pred_region
      _
    $region49: #{affine_coupling_forward.1} parent=1 // pred_fallthru
      _
    // Predicated region
    $region50: #{affine_coupling_forward.1} parent=1 // pred_check
      _
    $region51: #{affine_coupling_forward.1} parent=1 // pred_check_branch
      %63 = sbr.rel (0) target = $region53
    $region52: #{affine_coupling_forward.1} parent=1 // pred_region
      _
    $region53: #{affine_coupling_forward.1} parent=1 // pred_fallthru
      _
    // Predicated region
    $region54: #{affine_coupling_forward.1} parent=1 // pred_check
      _
    $region55: #{affine_coupling_forward.1} parent=1 // pred_check_branch
      %65 = sbr.rel (0) target = $region57
    $region56: #{affine_coupling_forward.1} parent=1 // pred_region
      _
    $region57: #{affine_coupling_forward.1} parent=1 // pred_fallthru
      _
    // Predicated region
    $region58: #{affine_coupling_forward.1} parent=1 // pred_check
      _
    $region59: #{affine_coupling_forward.1} parent=1 // pred_check_branch
      %67 = sbr.rel (0) target = $region61
    $region60: #{affine_coupling_forward.1} parent=1 // pred_region
      _
    $region61: #{affine_coupling_forward.1} parent=1 // pred_fallthru
      _
    // Predicated region
    $region62: #{affine_coupling_forward.1} parent=1 // pred_check
      _
    $region63: #{affine_coupling_forward.1} parent=1 // pred_check_branch
      %69 = sbr.rel (0) target = $region65
    $region64: #{affine_coupling_forward.1} parent=1 // pred_region
      _
    $region65: #{affine_coupling_forward.1} parent=1 // pred_fallthru
      _
    // Predicated region
    $region66: #{affine_coupling_forward.1} parent=1 // pred_check
      _
    $region67: #{affine_coupling_forward.1} parent=1 // pred_check_branch
      %71 = sbr.rel (0) target = $region69
    $region68: #{affine_coupling_forward.1} parent=1 // pred_region
      _
    $region69: #{affine_coupling_forward.1} parent=1 // pred_fallthru
      _
    // Predicated region
    $region70: #{affine_coupling_forward.1} parent=1 // pred_check
      _
    $region71: #{affine_coupling_forward.1} parent=1 // pred_check_branch
      %73 = sbr.rel (0) target = $region73
    $region72: #{affine_coupling_forward.1} parent=1 // pred_region
      %75 = vsyncadd [#allocation4], 0
      %s77 = sshll.u32 %s17, 4
      %s78 = int_to_ptr.vmem [resolvable:$true] %s77
      %80 = dma.vmem_to_smem %s78, 16, [#allocation5], [#allocation4]
    $region73: #{affine_coupling_forward.1} parent=1 // pred_fallthru
      _
    // Predicated region
    $region74: #{affine_coupling_forward.1} parent=1 // pred_check
      _
    $region75: #{affine_coupling_forward.1} parent=1 // pred_check_branch
      %82 = sbr.rel (0) target = $region77
    $region76: #{affine_coupling_forward.1} parent=1 // pred_region
      %84 = dma.done [#allocation3], 18432
    $region77: #{affine_coupling_forward.1} parent=1 // pred_fallthru
      _
    // Predicated region
    $region78: #{affine_coupling_forward.1} parent=1 // pred_check
      _
    $region79: #{affine_coupling_forward.1} parent=1 // pred_check_branch
      %86 = sbr.rel (0) target = $region81
    $region80: #{affine_coupling_forward.1} parent=1 // pred_region
      %88 = dma.done [#allocation4], 16
    $region81: #{affine_coupling_forward.1} parent=1 // pred_fallthru
      _
    %89 = sfence
    %v91 = vld [vmem:[%s0] sm:$0x1]
    %v92 = vld [vmem:[%s1] sm:$0x1]
    %v93 = vld [vmem:[%s2] sm:$0xff]
    %v94 = vld [vmem:[%s2 + $0x8] sm:$0x1]
    %v95 = vmul.f32 %v91, %v92
    %v97 = vperm.slane %v95, 0
    %98 = vrot.lane.b32.xlu0 %v97, 9
    %v99 = vpop.permute.xlu0 %98
    %v101 = vmul.f32 %v99, %v93
    %v102 = vld [vmem:[%s3] sm:$0xff]
    %v103 = vld [vmem:[%s3 + $0x8] sm:$0xff]
    %v104 = vld [vmem:[%s3 + $0x10] sm:$0xff]
    %v105 = vld [vmem:[%s3 + $0x18] sm:$0xff]
    %107 = vset.pattern.permute.xlu0 0
    %108 = vperm.xlu0 %107, %v102
    %v109 = vpop.permute.xlu0 %108
    %112 = vset.pattern.permute.xlu0 0
    %113 = vperm.xlu0 %112, %v103
    %v114 = vpop.permute.xlu0 %113
    %117 = vset.pattern.permute.xlu0 0
    %118 = vperm.xlu0 %117, %v104
    %v119 = vpop.permute.xlu0 %118
    %122 = vset.pattern.permute.xlu0 0
    %123 = vperm.xlu0 %122, %v105
    %v124 = vpop.permute.xlu0 %123
    %v126 = vperm.slane %v101, 0
    %v127 = vmul.f32 %v109, %v126
    %v128 = vmul.f32 %v114, %v126
    %v129 = vmul.f32 %v119, %v126
    %v130 = vmul.f32 %v124, %v126
    %131 = vrot.lane.b32.xlu0 %v97, 8
    %v132 = vpop.permute.xlu0 %131
    %v135 = vrot.slane %v93, 1
    %v137 = vmul.f32 %v132, %v135
    %s138 = scalar_lea.vmem %s3, 32
    %v139 = vld [vmem:[%s138] sm:$0xff]
    %v140 = vld [vmem:[%s138 + $0x8] sm:$0xff]
    %v141 = vld [vmem:[%s138 + $0x10] sm:$0xff]
    %v142 = vld [vmem:[%s138 + $0x18] sm:$0xff]
    %144 = vset.pattern.permute.xlu0 0
    %145 = vperm.xlu0 %144, %v139
    %v146 = vpop.permute.xlu0 %145
    %149 = vset.pattern.permute.xlu0 0
    %150 = vperm.xlu0 %149, %v140
    %v151 = vpop.permute.xlu0 %150
    %154 = vset.pattern.permute.xlu0 0
    %155 = vperm.xlu0 %154, %v141
    %v156 = vpop.permute.xlu0 %155
    %159 = vset.pattern.permute.xlu0 0
    %160 = vperm.xlu0 %159, %v142
    %v161 = vpop.permute.xlu0 %160
    %v163 = vperm.slane %v137, 0
    %v164 = vmul.f32 %v146, %v163
    %v165 = vmul.f32 %v151, %v163
    %v166 = vmul.f32 %v156, %v163
    %v167 = vmul.f32 %v161, %v163
    %v168 = vadd.f32 %v127, %v164
    %v169 = vadd.f32 %v128, %v165
    %v170 = vadd.f32 %v129, %v166
    %v171 = vadd.f32 %v130, %v167
    %172 = vrot.lane.b32.xlu0 %v97, 7
    %v173 = vpop.permute.xlu0 %172
    %v175 = vrot.slane %v93, 2
    %v177 = vmul.f32 %v173, %v175
    %s178 = scalar_lea.vmem %s3, 64
    %v179 = vld [vmem:[%s178] sm:$0xff]
    %v180 = vld [vmem:[%s178 + $0x8] sm:$0xff]
    %v181 = vld [vmem:[%s178 + $0x10] sm:$0xff]
    %v182 = vld [vmem:[%s178 + $0x18] sm:$0xff]
    %184 = vset.pattern.permute.xlu0 0
    %185 = vperm.xlu0 %184, %v179
    %v186 = vpop.permute.xlu0 %185
    %189 = vset.pattern.permute.xlu0 0
    %190 = vperm.xlu0 %189, %v180
    %v191 = vpop.permute.xlu0 %190
    %194 = vset.pattern.permute.xlu0 0
    %195 = vperm.xlu0 %194, %v181
    %v196 = vpop.permute.xlu0 %195
    %199 = vset.pattern.permute.xlu0 0
    %200 = vperm.xlu0 %199, %v182
    %v201 = vpop.permute.xlu0 %200
    %v203 = vperm.slane %v177, 0
    %v204 = vmul.f32 %v186, %v203
    %v205 = vmul.f32 %v191, %v203
    %v206 = vmul.f32 %v196, %v203
    %v207 = vmul.f32 %v201, %v203
    %v208 = vadd.f32 %v168, %v204
    %v209 = vadd.f32 %v169, %v205
    %v210 = vadd.f32 %v170, %v206
    %v211 = vadd.f32 %v171, %v207
    %212 = vrot.lane.b32.xlu0 %v97, 1
    %v213 = vpop.permute.xlu0 %212
    %v215 = vrot.slane %v93, 3
    %v217 = vmul.f32 %v213, %v215
    %s218 = scalar_lea.vmem %s3, 96
    %v219 = vld [vmem:[%s218] sm:$0xff]
    %v220 = vld [vmem:[%s218 + $0x8] sm:$0xff]
    %v221 = vld [vmem:[%s218 + $0x10] sm:$0xff]
    %v222 = vld [vmem:[%s218 + $0x18] sm:$0xff]
    %224 = vset.pattern.permute.xlu0 0
    %225 = vperm.xlu0 %224, %v219
    %v226 = vpop.permute.xlu0 %225
    %229 = vset.pattern.permute.xlu0 0
    %230 = vperm.xlu0 %229, %v220
    %v231 = vpop.permute.xlu0 %230
    %234 = vset.pattern.permute.xlu0 0
    %235 = vperm.xlu0 %234, %v221
    %v236 = vpop.permute.xlu0 %235
    %239 = vset.pattern.permute.xlu0 0
    %240 = vperm.xlu0 %239, %v222
    %v241 = vpop.permute.xlu0 %240
    %v243 = vperm.slane %v217, 0
    %v244 = vmul.f32 %v226, %v243
    %v245 = vmul.f32 %v231, %v243
    %v246 = vmul.f32 %v236, %v243
    %v247 = vmul.f32 %v241, %v243
    %v248 = vadd.f32 %v208, %v244
    %v249 = vadd.f32 %v209, %v245
    %v250 = vadd.f32 %v210, %v246
    %v251 = vadd.f32 %v211, %v247
    %252 = vst [vmem:[#allocation1] sm:$0xff] %v93
    %s253 = scalar_lea.vmem [#allocation1], 4
    %v254 = vld [vmem:[%s253] ss:$9 sm:$0xff]
    %v256 = vmul.f32 %v95, %v254
    %s257 = scalar_lea.vmem %s3, 128
    %v258 = vld [vmem:[%s257] sm:$0xff]
    %v259 = vld [vmem:[%s257 + $0x8] sm:$0xff]
    %v260 = vld [vmem:[%s257 + $0x10] sm:$0xff]
    %v261 = vld [vmem:[%s257 + $0x18] sm:$0xff]
    %263 = vset.pattern.permute.xlu0 0
    %264 = vperm.xlu0 %263, %v258
    %v265 = vpop.permute.xlu0 %264
    %268 = vset.pattern.permute.xlu0 0
    %269 = vperm.xlu0 %268, %v259
    %v270 = vpop.permute.xlu0 %269
    %273 = vset.pattern.permute.xlu0 0
    %274 = vperm.xlu0 %273, %v260
    %v275 = vpop.permute.xlu0 %274
    %278 = vset.pattern.permute.xlu0 0
    %279 = vperm.xlu0 %278, %v261
    %v280 = vpop.permute.xlu0 %279
    %v283 = vperm.slane %v256, 0
    %v285 = vmul.f32 %v265, %v283
    %v286 = vmul.f32 %v270, %v283
    %v287 = vmul.f32 %v275, %v283
    %v288 = vmul.f32 %v280, %v283
    %v289 = vadd.f32 %v248, %v285
    %v290 = vadd.f32 %v249, %v286
    %v291 = vadd.f32 %v250, %v287
    %v292 = vadd.f32 %v251, %v288
    %293 = vrot.lane.b32.xlu0 %v97, 127
    %v294 = vpop.permute.xlu0 %293
    %v296 = vrot.slane %v93, 5
    %v298 = vmul.f32 %v294, %v296
    %s299 = scalar_lea.vmem %s3, 160
    %v300 = vld [vmem:[%s299] sm:$0xff]
    %v301 = vld [vmem:[%s299 + $0x8] sm:$0xff]
    %v302 = vld [vmem:[%s299 + $0x10] sm:$0xff]
    %v303 = vld [vmem:[%s299 + $0x18] sm:$0xff]
    %305 = vset.pattern.permute.xlu0 0
    %306 = vperm.xlu0 %305, %v300
    %v307 = vpop.permute.xlu0 %306
    %310 = vset.pattern.permute.xlu0 0
    %311 = vperm.xlu0 %310, %v301
    %v312 = vpop.permute.xlu0 %311
    %315 = vset.pattern.permute.xlu0 0
    %316 = vperm.xlu0 %315, %v302
    %v317 = vpop.permute.xlu0 %316
    %320 = vset.pattern.permute.xlu0 0
    %321 = vperm.xlu0 %320, %v303
    %v322 = vpop.permute.xlu0 %321
    %v324 = vperm.slane %v298, 0
    %v325 = vmul.f32 %v307, %v324
    %v326 = vmul.f32 %v312, %v324
    %v327 = vmul.f32 %v317, %v324
    %v328 = vmul.f32 %v322, %v324
    %v329 = vadd.f32 %v289, %v325
    %v330 = vadd.f32 %v290, %v326
    %v331 = vadd.f32 %v291, %v327
    %v332 = vadd.f32 %v292, %v328
    %333 = vrot.lane.b32.xlu0 %v97, 121
    %v334 = vpop.permute.xlu0 %333
    %v336 = vrot.slane %v93, 6
    %v338 = vmul.f32 %v334, %v336
    %s339 = scalar_lea.vmem %s3, 192
    %v340 = vld [vmem:[%s339] sm:$0xff]
    %v341 = vld [vmem:[%s339 + $0x8] sm:$0xff]
    %v342 = vld [vmem:[%s339 + $0x10] sm:$0xff]
    %v343 = vld [vmem:[%s339 + $0x18] sm:$0xff]
    %345 = vset.pattern.permute.xlu0 0
    %346 = vperm.xlu0 %345, %v340
    %v347 = vpop.permute.xlu0 %346
    %350 = vset.pattern.permute.xlu0 0
    %351 = vperm.xlu0 %350, %v341
    %v352 = vpop.permute.xlu0 %351
    %355 = vset.pattern.permute.xlu0 0
    %356 = vperm.xlu0 %355, %v342
    %v357 = vpop.permute.xlu0 %356
    %360 = vset.pattern.permute.xlu0 0
    %361 = vperm.xlu0 %360, %v343
    %v362 = vpop.permute.xlu0 %361
    %v364 = vperm.slane %v338, 0
    %v365 = vmul.f32 %v347, %v364
    %v366 = vmul.f32 %v352, %v364
    %v367 = vmul.f32 %v357, %v364
    %v368 = vmul.f32 %v362, %v364
    %v369 = vadd.f32 %v329, %v365
    %v370 = vadd.f32 %v330, %v366
    %v371 = vadd.f32 %v331, %v367
    %v372 = vadd.f32 %v332, %v368
    %373 = vrot.lane.b32.xlu0 %v97, 120
    %v374 = vpop.permute.xlu0 %373
    %v376 = vrot.slane %v93, 7
    %v378 = vmul.f32 %v374, %v376
    %s379 = scalar_lea.vmem %s3, 224
    %v380 = vld [vmem:[%s379] sm:$0xff]
    %v381 = vld [vmem:[%s379 + $0x8] sm:$0xff]
    %v382 = vld [vmem:[%s379 + $0x10] sm:$0xff]
    %v383 = vld [vmem:[%s379 + $0x18] sm:$0xff]
    %385 = vset.pattern.permute.xlu0 0
    %386 = vperm.xlu0 %385, %v380
    %v387 = vpop.permute.xlu0 %386
    %390 = vset.pattern.permute.xlu0 0
    %391 = vperm.xlu0 %390, %v381
    %v392 = vpop.permute.xlu0 %391
    %395 = vset.pattern.permute.xlu0 0
    %396 = vperm.xlu0 %395, %v382
    %v397 = vpop.permute.xlu0 %396
    %400 = vset.pattern.permute.xlu0 0
    %401 = vperm.xlu0 %400, %v383
    %v402 = vpop.permute.xlu0 %401
    %v404 = vperm.slane %v378, 0
    %v405 = vmul.f32 %v387, %v404
    %v406 = vmul.f32 %v392, %v404
    %v407 = vmul.f32 %v397, %v404
    %v408 = vmul.f32 %v402, %v404
    %v409 = vadd.f32 %v369, %v405
    %v410 = vadd.f32 %v370, %v406
    %v411 = vadd.f32 %v371, %v407
    %v412 = vadd.f32 %v372, %v408
    %413 = vrot.lane.b32.xlu0 %v97, 119
    %v414 = vpop.permute.xlu0 %413
    %v416 = vmul.f32 %v414, %v94
    %s417 = scalar_lea.vmem %s3, 256
    %v418 = vld [vmem:[%s417] sm:$0xff]
    %v419 = vld [vmem:[%s417 + $0x8] sm:$0xff]
    %v420 = vld [vmem:[%s417 + $0x10] sm:$0xff]
    %v421 = vld [vmem:[%s417 + $0x18] sm:$0xff]
    %423 = vset.pattern.permute.xlu0 0
    %424 = vperm.xlu0 %423, %v418
    %v425 = vpop.permute.xlu0 %424
    %428 = vset.pattern.permute.xlu0 0
    %429 = vperm.xlu0 %428, %v419
    %v430 = vpop.permute.xlu0 %429
    %433 = vset.pattern.permute.xlu0 0
    %434 = vperm.xlu0 %433, %v420
    %v435 = vpop.permute.xlu0 %434
    %438 = vset.pattern.permute.xlu0 0
    %439 = vperm.xlu0 %438, %v421
    %v440 = vpop.permute.xlu0 %439
    %v442 = vperm.slane %v416, 0
    %v443 = vmul.f32 %v425, %v442
    %v444 = vmul.f32 %v430, %v442
    %v445 = vmul.f32 %v435, %v442
    %v446 = vmul.f32 %v440, %v442
    %v447 = vadd.f32 %v409, %v443
    %v448 = vadd.f32 %v410, %v444
    %v449 = vadd.f32 %v411, %v445
    %v450 = vadd.f32 %v412, %v446
    %v451 = vld [vmem:[%s4] sm:$0xff]
    %v452 = vld [vmem:[%s4 + $0x8] sm:$0xff]
    %v453 = vld [vmem:[%s4 + $0x10] sm:$0xff]
    %v454 = vld [vmem:[%s4 + $0x18] sm:$0xff]
    %456 = vset.pattern.permute.xlu0 0
    %457 = vperm.xlu0 %456, %v451
    %v458 = vpop.permute.xlu0 %457
    %461 = vset.pattern.permute.xlu0 0
    %462 = vperm.xlu0 %461, %v452
    %v463 = vpop.permute.xlu0 %462
    %466 = vset.pattern.permute.xlu0 0
    %467 = vperm.xlu0 %466, %v453
    %v468 = vpop.permute.xlu0 %467
    %471 = vset.pattern.permute.xlu0 0
    %472 = vperm.xlu0 %471, %v454
    %v473 = vpop.permute.xlu0 %472
    %v475 = vadd.f32 %v447, %v458
    %v476 = vadd.f32 %v448, %v463
    %v477 = vadd.f32 %v449, %v468
    %v478 = vadd.f32 %v450, %v473
    %v479 = vld [vmem:[%s5] sm:$0xf]
    %v480 = vld [vmem:[%s5 + $0x4] sm:$0xf]
    %v481 = vld [vmem:[%s5 + $0x8] sm:$0xf]
    %v482 = vld [vmem:[%s5 + $0xc] sm:$0xf]
    %v483 = vpack.c.bf16 %v476, %v475
    %v484 = vpack.c.bf16 %v478, %v477
    %v485 = vld [vmem:[%s6] sm:$0xff]
    %v486 = vld [vmem:[%s6 + $0x8] sm:$0xff]
    %v487 = vld [vmem:[%s6 + $0x10] sm:$0xff]
    %v488 = vld [vmem:[%s6 + $0x18] sm:$0xff]
    %490 = vset.pattern.permute.xlu0 0
    %491 = vperm.xlu0 %490, %v485
    %v492 = vpop.permute.xlu0 %491
    %495 = vset.pattern.permute.xlu0 0
    %496 = vperm.xlu0 %495, %v486
    %v497 = vpop.permute.xlu0 %496
    %500 = vset.pattern.permute.xlu0 0
    %501 = vperm.xlu0 %500, %v487
    %v502 = vpop.permute.xlu0 %501
    %505 = vset.pattern.permute.xlu0 0
    %506 = vperm.xlu0 %505, %v488
    %v507 = vpop.permute.xlu0 %506
    %v513 = vunpack.c.l.b16 %v479
    %v514 = vunpack.c.l.b16 %v480
    %v515 = vunpack.c.l.b16 %v481
    %v516 = vunpack.c.l.b16 %v482
    %v517 = vpack.c.b16 %v514, %v513
    %v518 = vpack.c.b16 %v516, %v515
    %vm519 = vcmask 261120
    %v521 = vsel %vm519, %v517, 0
    %v524 = vsel %vm519, %v518, 0
    %526 = vmatpush.bf16.msra.mxu0 0
    %527 = vmatpush.bf16.msra.mxu0 0
    %528 = vmatpush.bf16.msra.mxu0 0
    %529 = vmatpush.bf16.msra.mxu0 0
    %530 = vmatpush.bf16.msra.mxu0 0
    %531 = vmatpush.bf16.msra.mxu0 0
    %532 = vmatpush.bf16.msra.mxu0 %v484
    %533 = vmatpush.bf16.msra.mxu0 %v483
    %534 = vmatmul.bf16.gmra.mxu0 %v521
    %v535 = vpop.f32.mrf.mxu0
    %v536 = vadd.f32 %v492, %v535
    %v537 = vpop.f32.mrf.mxu0
    %v538 = vadd.f32 %v497, %v537
    %539 = vmatmul.bf16.gmra.mxu0 %v524
    %v540 = vpop.f32.mrf.mxu0
    %v541 = vadd.f32 %v502, %v540
    %v542 = vpop.f32.mrf.mxu0
    %v543 = vadd.f32 %v507, %v542
    %544 = vdwg.mxu0
    %v545 = vld [vmem:[%s7] sm:$0xff]
    %v546 = vld [vmem:[%s7 + $0x8] sm:$0xff]
    %v547 = vld [vmem:[%s7 + $0x10] sm:$0xff]
    %v548 = vld [vmem:[%s7 + $0x18] sm:$0xff]
    %v549 = vld [vmem:[%s8] sm:$0xff]
    %v550 = vld [vmem:[%s8 + $0x8] sm:$0xff]
    %v551 = vld [vmem:[%s8 + $0x10] sm:$0xff]
    %v552 = vld [vmem:[%s8 + $0x18] sm:$0xff]
    %553 = vadd.xlane.f32.xlu0 %v536
    %v554 = vpop.xlane.xlu0 %553
    %555 = vadd.xlane.f32.xlu0 %v538
    %v556 = vpop.xlane.xlu0 %555
    %557 = vadd.xlane.f32.xlu0 %v541
    %v558 = vpop.xlane.xlu0 %557
    %559 = vadd.xlane.f32.xlu0 %v543
    %v560 = vpop.xlane.xlu0 %559
    %v561 = vrcp.pop 128.0
    %v562 = vmul.f32 128.0, %v561
    %v563 = vsub.f32 1.0, %v562
    %v564 = vmul.f32 %v561, %v563
    %v565 = vadd.f32 %v561, %v564
    %vm566 = vweird.f32 %v561
    %v567 = vsel %vm566, %v561, %v565
    %v568 = vmul.f32 %v554, %v567
    %v569 = vmul.f32 %v556, %v567
    %v570 = vmul.f32 %v558, %v567
    %v571 = vmul.f32 %v560, %v567
    %v572 = vsub.f32 %v536, %v568
    %v573 = vsub.f32 %v538, %v569
    %v574 = vsub.f32 %v541, %v570
    %v575 = vsub.f32 %v543, %v571
    %v576 = vmul.f32 %v572, %v572
    %v577 = vmul.f32 %v573, %v573
    %v578 = vmul.f32 %v574, %v574
    %v579 = vmul.f32 %v575, %v575
    %580 = vadd.xlane.f32.xlu0 %v576
    %v581 = vpop.xlane.xlu0 %580
    %582 = vadd.xlane.f32.xlu0 %v577
    %v583 = vpop.xlane.xlu0 %582
    %584 = vadd.xlane.f32.xlu0 %v578
    %v585 = vpop.xlane.xlu0 %584
    %586 = vadd.xlane.f32.xlu0 %v579
    %v587 = vpop.xlane.xlu0 %586
    %v588 = vmul.f32 %v581, %v567
    %v589 = vmul.f32 %v583, %v567
    %v590 = vmul.f32 %v585, %v567
    %v591 = vmul.f32 %v587, %v567
    %v592 = vadd.f32 %v588, 1e-05
    %v593 = vadd.f32 %v589, 1e-05
    %v594 = vadd.f32 %v590, 1e-05
    %v595 = vadd.f32 %v591, 1e-05
    %v596 = vrsqrt.pop %v592
    %v597 = vmul.f32 %v596, %v592
    %v598 = vmul.f32 %v597, %v596
    %v599 = vmul.f32 0.5, %v598
    %v600 = vsub.f32 1.5, %v599
    %v601 = vmul.f32 %v596, %v600
    %vm602 = vweird.f32 %v592
    %vm603 = vweird.f32 %v596
    %vm604 = vmor %vm602, %vm603
    %v605 = vsel %vm604, %v596, %v601
    %v606 = vrsqrt.pop %v593
    %v607 = vmul.f32 %v606, %v593
    %v608 = vmul.f32 %v607, %v606
    %v609 = vmul.f32 0.5, %v608
    %v610 = vsub.f32 1.5, %v609
    %v611 = vmul.f32 %v606, %v610
    %vm612 = vweird.f32 %v593
    %vm613 = vweird.f32 %v606
    %vm614 = vmor %vm612, %vm613
    %v615 = vsel %vm614, %v606, %v611
    %v616 = vrsqrt.pop %v594
    %v617 = vmul.f32 %v616, %v594
    %v618 = vmul.f32 %v617, %v616
    %v619 = vmul.f32 0.5, %v618
    %v620 = vsub.f32 1.5, %v619
    %v621 = vmul.f32 %v616, %v620
    %vm622 = vweird.f32 %v594
    %vm623 = vweird.f32 %v616
    %vm624 = vmor %vm622, %vm623
    %v625 = vsel %vm624, %v616, %v621
    %v626 = vrsqrt.pop %v595
    %v627 = vmul.f32 %v626, %v595
    %v628 = vmul.f32 %v627, %v626
    %v629 = vmul.f32 0.5, %v628
    %v630 = vsub.f32 1.5, %v629
    %v631 = vmul.f32 %v626, %v630
    %vm632 = vweird.f32 %v595
    %vm633 = vweird.f32 %v626
    %vm634 = vmor %vm632, %vm633
    %v635 = vsel %vm634, %v626, %v631
    %v636 = vmul.f32 %v572, %v605
    %v637 = vmul.f32 %v573, %v615
    %v638 = vmul.f32 %v574, %v625
    %v639 = vmul.f32 %v575, %v635
    %641 = vset.pattern.permute.xlu0 0
    %642 = vperm.xlu0 %641, %v545
    %v643 = vpop.permute.xlu0 %642
    %646 = vset.pattern.permute.xlu0 0
    %647 = vperm.xlu0 %646, %v546
    %v648 = vpop.permute.xlu0 %647
    %651 = vset.pattern.permute.xlu0 0
    %652 = vperm.xlu0 %651, %v547
    %v653 = vpop.permute.xlu0 %652
    %656 = vset.pattern.permute.xlu0 0
    %657 = vperm.xlu0 %656, %v548
    %v658 = vpop.permute.xlu0 %657
    %v660 = vmul.f32 %v636, %v643
    %v661 = vmul.f32 %v637, %v648
    %v662 = vmul.f32 %v638, %v653
    %v663 = vmul.f32 %v639, %v658
    %665 = vset.pattern.permute.xlu0 0
    %666 = vperm.xlu0 %665, %v549
    %v667 = vpop.permute.xlu0 %666
    %670 = vset.pattern.permute.xlu0 0
    %671 = vperm.xlu0 %670, %v550
    %v672 = vpop.permute.xlu0 %671
    %675 = vset.pattern.permute.xlu0 0
    %676 = vperm.xlu0 %675, %v551
    %v677 = vpop.permute.xlu0 %676
    %680 = vset.pattern.permute.xlu0 0
    %681 = vperm.xlu0 %680, %v552
    %v682 = vpop.permute.xlu0 %681
    %v684 = vadd.f32 %v660, %v667
    %v685 = vadd.f32 %v661, %v672
    %v686 = vadd.f32 %v662, %v677
    %v687 = vadd.f32 %v663, %v682
    %v688 = vmax.f32 %v684, 0.0
    %v689 = vmax.f32 %v685, 0.0
    %v690 = vmax.f32 %v686, 0.0
    %v691 = vmax.f32 %v687, 0.0
    %v692 = vld [vmem:[%s10] sm:$0xff]
    %v693 = vld [vmem:[%s10 + $0x8] sm:$0xff]
    %v694 = vld [vmem:[%s10 + $0x10] sm:$0xff]
    %v695 = vld [vmem:[%s10 + $0x18] sm:$0xff]
    %700 = vrot.lane.b32.xlu0 %v688, 9
    %v701 = vpop.permute.xlu0 %700
    %702 = vrot.lane.b32.xlu0 %v689, 9
    %v703 = vpop.permute.xlu0 %702
    %704 = vrot.lane.b32.xlu0 %v690, 9
    %v705 = vpop.permute.xlu0 %704
    %706 = vrot.lane.b32.xlu0 %v691, 9
    %v707 = vpop.permute.xlu0 %706
    %v712 = vpack.c.bf16 %v703, %v701
    %v713 = vpack.c.bf16 %v707, %v705
    %v714 = vld [vmem:[#allocation2] sm:$0xf]
    %v715 = vld [vmem:[#allocation2 + $0x4] sm:$0xf]
    %v716 = vld [vmem:[#allocation2 + $0x8] sm:$0xf]
    %v717 = vld [vmem:[#allocation2 + $0xc] sm:$0xf]
    %v722 = vunpack.c.l.b16 %v714
    %v723 = vunpack.c.l.b16 %v715
    %v724 = vunpack.c.l.b16 %v716
    %v725 = vunpack.c.l.b16 %v717
    %v726 = vpack.c.b16 %v723, %v722
    %v727 = vpack.c.b16 %v725, %v724
    %v729 = vsel %vm519, %v726, 0
    %v732 = vsel %vm519, %v727, 0
    %734 = vmatpush.bf16.msra.mxu0 0
    %735 = vmatpush.bf16.msra.mxu0 0
    %736 = vmatpush.bf16.msra.mxu0 0
    %737 = vmatpush.bf16.msra.mxu0 0
    %738 = vmatpush.bf16.msra.mxu0 0
    %739 = vmatpush.bf16.msra.mxu0 0
    %740 = vmatpush.bf16.msra.mxu0 %v713
    %741 = vmatpush.bf16.msra.mxu0 %v712
    %742 = vmatmul.bf16.gmra.mxu0 %v729
    %v743 = vpop.f32.mrf.mxu0
    %v744 = vadd.f32 0.0, %v743
    %v745 = vpop.f32.mrf.mxu0
    %v746 = vadd.f32 0.0, %v745
    %747 = vmatmul.bf16.gmra.mxu0 %v732
    %v748 = vpop.f32.mrf.mxu0
    %v749 = vadd.f32 0.0, %v748
    %v750 = vpop.f32.mrf.mxu0
    %v751 = vadd.f32 0.0, %v750
    %752 = vdwg.mxu0
    %v753 = vperm.slane %v93, 0
    %v754 = vmul.f32 %v744, %v753
    %v755 = vmul.f32 %v746, %v753
    %v756 = vmul.f32 %v749, %v753
    %v757 = vmul.f32 %v751, %v753
    %758 = vrot.lane.b32.xlu0 %v688, 8
    %v759 = vpop.permute.xlu0 %758
    %760 = vrot.lane.b32.xlu0 %v689, 8
    %v761 = vpop.permute.xlu0 %760
    %762 = vrot.lane.b32.xlu0 %v690, 8
    %v763 = vpop.permute.xlu0 %762
    %764 = vrot.lane.b32.xlu0 %v691, 8
    %v765 = vpop.permute.xlu0 %764
    %v770 = vpack.c.bf16 %v761, %v759
    %v771 = vpack.c.bf16 %v765, %v763
    %s772 = scalar_lea.vmem [#allocation2], 16
    %v773 = vld [vmem:[%s772] sm:$0xf]
    %v774 = vld [vmem:[%s772 + $0x4] sm:$0xf]
    %v775 = vld [vmem:[%s772 + $0x8] sm:$0xf]
    %v776 = vld [vmem:[%s772 + $0xc] sm:$0xf]
    %v781 = vunpack.c.l.b16 %v773
    %v782 = vunpack.c.l.b16 %v774
    %v783 = vunpack.c.l.b16 %v775
    %v784 = vunpack.c.l.b16 %v776
    %v785 = vpack.c.b16 %v782, %v781
    %v786 = vpack.c.b16 %v784, %v783
    %v788 = vsel %vm519, %v785, 0
    %v791 = vsel %vm519, %v786, 0
    %793 = vmatpush.bf16.msra.mxu0 0
    %794 = vmatpush.bf16.msra.mxu0 0
    %795 = vmatpush.bf16.msra.mxu0 0
    %796 = vmatpush.bf16.msra.mxu0 0
    %797 = vmatpush.bf16.msra.mxu0 0
    %798 = vmatpush.bf16.msra.mxu0 0
    %799 = vmatpush.bf16.msra.mxu0 %v771
    %800 = vmatpush.bf16.msra.mxu0 %v770
    %801 = vmatmul.bf16.gmra.mxu0 %v788
    %v802 = vpop.f32.mrf.mxu0
    %v803 = vadd.f32 0.0, %v802
    %v804 = vpop.f32.mrf.mxu0
    %v805 = vadd.f32 0.0, %v804
    %806 = vmatmul.bf16.gmra.mxu0 %v791
    %v807 = vpop.f32.mrf.mxu0
    %v808 = vadd.f32 0.0, %v807
    %v809 = vpop.f32.mrf.mxu0
    %v810 = vadd.f32 0.0, %v809
    %811 = vdwg.mxu0
    %v812 = vperm.slane %v93, 1
    %v813 = vmul.f32 %v803, %v812
    %v814 = vmul.f32 %v805, %v812
    %v815 = vmul.f32 %v808, %v812
    %v816 = vmul.f32 %v810, %v812
    %v817 = vadd.f32 %v754, %v813
    %v818 = vadd.f32 %v755, %v814
    %v819 = vadd.f32 %v756, %v815
    %v820 = vadd.f32 %v757, %v816
    %821 = vrot.lane.b32.xlu0 %v688, 7
    %v822 = vpop.permute.xlu0 %821
    %823 = vrot.lane.b32.xlu0 %v689, 7
    %v824 = vpop.permute.xlu0 %823
    %825 = vrot.lane.b32.xlu0 %v690, 7
    %v826 = vpop.permute.xlu0 %825
    %827 = vrot.lane.b32.xlu0 %v691, 7
    %v828 = vpop.permute.xlu0 %827
    %v833 = vpack.c.bf16 %v824, %v822
    %v834 = vpack.c.bf16 %v828, %v826
    %s835 = scalar_lea.vmem [#allocation2], 32
    %v836 = vld [vmem:[%s835] sm:$0xf]
    %v837 = vld [vmem:[%s835 + $0x4] sm:$0xf]
    %v838 = vld [vmem:[%s835 + $0x8] sm:$0xf]
    %v839 = vld [vmem:[%s835 + $0xc] sm:$0xf]
    %v844 = vunpack.c.l.b16 %v836
    %v845 = vunpack.c.l.b16 %v837
    %v846 = vunpack.c.l.b16 %v838
    %v847 = vunpack.c.l.b16 %v839
    %v848 = vpack.c.b16 %v845, %v844
    %v849 = vpack.c.b16 %v847, %v846
    %v851 = vsel %vm519, %v848, 0
    %v854 = vsel %vm519, %v849, 0
    %856 = vmatpush.bf16.msra.mxu0 0
    %857 = vmatpush.bf16.msra.mxu0 0
    %858 = vmatpush.bf16.msra.mxu0 0
    %859 = vmatpush.bf16.msra.mxu0 0
    %860 = vmatpush.bf16.msra.mxu0 0
    %861 = vmatpush.bf16.msra.mxu0 0
    %862 = vmatpush.bf16.msra.mxu0 %v834
    %863 = vmatpush.bf16.msra.mxu0 %v833
    %864 = vmatmul.bf16.gmra.mxu0 %v851
    %v865 = vpop.f32.mrf.mxu0
    %v866 = vadd.f32 0.0, %v865
    %v867 = vpop.f32.mrf.mxu0
    %v868 = vadd.f32 0.0, %v867
    %869 = vmatmul.bf16.gmra.mxu0 %v854
    %v870 = vpop.f32.mrf.mxu0
    %v871 = vadd.f32 0.0, %v870
    %v872 = vpop.f32.mrf.mxu0
    %v873 = vadd.f32 0.0, %v872
    %874 = vdwg.mxu0
    %v875 = vperm.slane %v93, 2
    %v876 = vmul.f32 %v866, %v875
    %v877 = vmul.f32 %v868, %v875
    %v878 = vmul.f32 %v871, %v875
    %v879 = vmul.f32 %v873, %v875
    %v880 = vadd.f32 %v817, %v876
    %v881 = vadd.f32 %v818, %v877
    %v882 = vadd.f32 %v819, %v878
    %v883 = vadd.f32 %v820, %v879
    %884 = vrot.lane.b32.xlu0 %v688, 1
    %v885 = vpop.permute.xlu0 %884
    %886 = vrot.lane.b32.xlu0 %v689, 1
    %v887 = vpop.permute.xlu0 %886
    %888 = vrot.lane.b32.xlu0 %v690, 1
    %v889 = vpop.permute.xlu0 %888
    %890 = vrot.lane.b32.xlu0 %v691, 1
    %v891 = vpop.permute.xlu0 %890
    %v896 = vpack.c.bf16 %v887, %v885
    %v897 = vpack.c.bf16 %v891, %v889
    %s898 = scalar_lea.vmem [#allocation2], 48
    %v899 = vld [vmem:[%s898] sm:$0xf]
    %v900 = vld [vmem:[%s898 + $0x4] sm:$0xf]
    %v901 = vld [vmem:[%s898 + $0x8] sm:$0xf]
    %v902 = vld [vmem:[%s898 + $0xc] sm:$0xf]
    %v907 = vunpack.c.l.b16 %v899
    %v908 = vunpack.c.l.b16 %v900
    %v909 = vunpack.c.l.b16 %v901
    %v910 = vunpack.c.l.b16 %v902
    %v911 = vpack.c.b16 %v908, %v907
    %v912 = vpack.c.b16 %v910, %v909
    %v914 = vsel %vm519, %v911, 0
    %v917 = vsel %vm519, %v912, 0
    %919 = vmatpush.bf16.msra.mxu0 0
    %920 = vmatpush.bf16.msra.mxu0 0
    %921 = vmatpush.bf16.msra.mxu0 0
    %922 = vmatpush.bf16.msra.mxu0 0
    %923 = vmatpush.bf16.msra.mxu0 0
    %924 = vmatpush.bf16.msra.mxu0 0
    %925 = vmatpush.bf16.msra.mxu0 %v897
    %926 = vmatpush.bf16.msra.mxu0 %v896
    %927 = vmatmul.bf16.gmra.mxu0 %v914
    %v928 = vpop.f32.mrf.mxu0
    %v929 = vadd.f32 0.0, %v928
    %v930 = vpop.f32.mrf.mxu0
    %v931 = vadd.f32 0.0, %v930
    %932 = vmatmul.bf16.gmra.mxu0 %v917
    %v933 = vpop.f32.mrf.mxu0
    %v934 = vadd.f32 0.0, %v933
    %v935 = vpop.f32.mrf.mxu0
    %v936 = vadd.f32 0.0, %v935
    %937 = vdwg.mxu0
    %v938 = vperm.slane %v93, 3
    %v939 = vmul.f32 %v929, %v938
    %v940 = vmul.f32 %v931, %v938
    %v941 = vmul.f32 %v934, %v938
    %v942 = vmul.f32 %v936, %v938
    %v943 = vadd.f32 %v880, %v939
    %v944 = vadd.f32 %v881, %v940
    %v945 = vadd.f32 %v882, %v941
    %v946 = vadd.f32 %v883, %v942
    %v947 = vpack.c.bf16 %v689, %v688
    %v948 = vpack.c.bf16 %v691, %v690
    %s949 = scalar_lea.vmem [#allocation2], 64
    %v950 = vld [vmem:[%s949] sm:$0xf]
    %v951 = vld [vmem:[%s949 + $0x4] sm:$0xf]
    %v952 = vld [vmem:[%s949 + $0x8] sm:$0xf]
    %v953 = vld [vmem:[%s949 + $0xc] sm:$0xf]
    %v958 = vunpack.c.l.b16 %v950
    %v959 = vunpack.c.l.b16 %v951
    %v960 = vunpack.c.l.b16 %v952
    %v961 = vunpack.c.l.b16 %v953
    %v962 = vpack.c.b16 %v959, %v958
    %v963 = vpack.c.b16 %v961, %v960
    %v965 = vsel %vm519, %v962, 0
    %v968 = vsel %vm519, %v963, 0
    %970 = vmatpush.bf16.msra.mxu0 0
    %971 = vmatpush.bf16.msra.mxu0 0
    %972 = vmatpush.bf16.msra.mxu0 0
    %973 = vmatpush.bf16.msra.mxu0 0
    %974 = vmatpush.bf16.msra.mxu0 0
    %975 = vmatpush.bf16.msra.mxu0 0
    %976 = vmatpush.bf16.msra.mxu0 %v948
    %977 = vmatpush.bf16.msra.mxu0 %v947
    %978 = vmatmul.bf16.gmra.mxu0 %v965
    %v979 = vpop.f32.mrf.mxu0
    %v980 = vadd.f32 0.0, %v979
    %v981 = vpop.f32.mrf.mxu0
    %v982 = vadd.f32 0.0, %v981
    %983 = vmatmul.bf16.gmra.mxu0 %v968
    %v984 = vpop.f32.mrf.mxu0
    %v985 = vadd.f32 0.0, %v984
    %v986 = vpop.f32.mrf.mxu0
    %v987 = vadd.f32 0.0, %v986
    %988 = vdwg.mxu0
    %v989 = vperm.slane %v93, 4
    %v990 = vmul.f32 %v980, %v989
    %v991 = vmul.f32 %v982, %v989
    %v992 = vmul.f32 %v985, %v989
    %v993 = vmul.f32 %v987, %v989
    %v994 = vadd.f32 %v943, %v990
    %v995 = vadd.f32 %v944, %v991
    %v996 = vadd.f32 %v945, %v992
    %v997 = vadd.f32 %v946, %v993
    %998 = vrot.lane.b32.xlu0 %v688, 127
    %v999 = vpop.permute.xlu0 %998
    %1000 = vrot.lane.b32.xlu0 %v689, 127
    %v1001 = vpop.permute.xlu0 %1000
    %1002 = vrot.lane.b32.xlu0 %v690, 127
    %v1003 = vpop.permute.xlu0 %1002
    %1004 = vrot.lane.b32.xlu0 %v691, 127
    %v1005 = vpop.permute.xlu0 %1004
    %v1010 = vpack.c.bf16 %v1001, %v999
    %v1011 = vpack.c.bf16 %v1005, %v1003
    %s1012 = scalar_lea.vmem [#allocation2], 80
    %v1013 = vld [vmem:[%s1012] sm:$0xf]
    %v1014 = vld [vmem:[%s1012 + $0x4] sm:$0xf]
    %v1015 = vld [vmem:[%s1012 + $0x8] sm:$0xf]
    %v1016 = vld [vmem:[%s1012 + $0xc] sm:$0xf]
    %v1021 = vunpack.c.l.b16 %v1013
    %v1022 = vunpack.c.l.b16 %v1014
    %v1023 = vunpack.c.l.b16 %v1015
    %v1024 = vunpack.c.l.b16 %v1016
    %v1025 = vpack.c.b16 %v1022, %v1021
    %v1026 = vpack.c.b16 %v1024, %v1023
    %v1028 = vsel %vm519, %v1025, 0
    %v1031 = vsel %vm519, %v1026, 0
    %1033 = vmatpush.bf16.msra.mxu0 0
    %1034 = vmatpush.bf16.msra.mxu0 0
    %1035 = vmatpush.bf16.msra.mxu0 0
    %1036 = vmatpush.bf16.msra.mxu0 0
    %1037 = vmatpush.bf16.msra.mxu0 0
    %1038 = vmatpush.bf16.msra.mxu0 0
    %1039 = vmatpush.bf16.msra.mxu0 %v1011
    %1040 = vmatpush.bf16.msra.mxu0 %v1010
    %1041 = vmatmul.bf16.gmra.mxu0 %v1028
    %v1042 = vpop.f32.mrf.mxu0
    %v1043 = vadd.f32 0.0, %v1042
    %v1044 = vpop.f32.mrf.mxu0
    %v1045 = vadd.f32 0.0, %v1044
    %1046 = vmatmul.bf16.gmra.mxu0 %v1031
    %v1047 = vpop.f32.mrf.mxu0
    %v1048 = vadd.f32 0.0, %v1047
    %v1049 = vpop.f32.mrf.mxu0
    %v1050 = vadd.f32 0.0, %v1049
    %1051 = vdwg.mxu0
    %v1052 = vperm.slane %v93, 5
    %v1053 = vmul.f32 %v1043, %v1052
    %v1054 = vmul.f32 %v1045, %v1052
    %v1055 = vmul.f32 %v1048, %v1052
    %v1056 = vmul.f32 %v1050, %v1052
    %v1057 = vadd.f32 %v994, %v1053
    %v1058 = vadd.f32 %v995, %v1054
    %v1059 = vadd.f32 %v996, %v1055
    %v1060 = vadd.f32 %v997, %v1056
    %1061 = vrot.lane.b32.xlu0 %v688, 121
    %v1062 = vpop.permute.xlu0 %1061
    %1063 = vrot.lane.b32.xlu0 %v689, 121
    %v1064 = vpop.permute.xlu0 %1063
    %1065 = vrot.lane.b32.xlu0 %v690, 121
    %v1066 = vpop.permute.xlu0 %1065
    %1067 = vrot.lane.b32.xlu0 %v691, 121
    %v1068 = vpop.permute.xlu0 %1067
    %v1073 = vpack.c.bf16 %v1064, %v1062
    %v1074 = vpack.c.bf16 %v1068, %v1066
    %s1075 = scalar_lea.vmem [#allocation2], 96
    %v1076 = vld [vmem:[%s1075] sm:$0xf]
    %v1077 = vld [vmem:[%s1075 + $0x4] sm:$0xf]
    %v1078 = vld [vmem:[%s1075 + $0x8] sm:$0xf]
    %v1079 = vld [vmem:[%s1075 + $0xc] sm:$0xf]
    %v1084 = vunpack.c.l.b16 %v1076
    %v1085 = vunpack.c.l.b16 %v1077
    %v1086 = vunpack.c.l.b16 %v1078
    %v1087 = vunpack.c.l.b16 %v1079
    %v1088 = vpack.c.b16 %v1085, %v1084
    %v1089 = vpack.c.b16 %v1087, %v1086
    %v1091 = vsel %vm519, %v1088, 0
    %v1094 = vsel %vm519, %v1089, 0
    %1096 = vmatpush.bf16.msra.mxu0 0
    %1097 = vmatpush.bf16.msra.mxu0 0
    %1098 = vmatpush.bf16.msra.mxu0 0
    %1099 = vmatpush.bf16.msra.mxu0 0
    %1100 = vmatpush.bf16.msra.mxu0 0
    %1101 = vmatpush.bf16.msra.mxu0 0
    %1102 = vmatpush.bf16.msra.mxu0 %v1074
    %1103 = vmatpush.bf16.msra.mxu0 %v1073
    %1104 = vmatmul.bf16.gmra.mxu0 %v1091
    %v1105 = vpop.f32.mrf.mxu0
    %v1106 = vadd.f32 0.0, %v1105
    %v1107 = vpop.f32.mrf.mxu0
    %v1108 = vadd.f32 0.0, %v1107
    %1109 = vmatmul.bf16.gmra.mxu0 %v1094
    %v1110 = vpop.f32.mrf.mxu0
    %v1111 = vadd.f32 0.0, %v1110
    %v1112 = vpop.f32.mrf.mxu0
    %v1113 = vadd.f32 0.0, %v1112
    %1114 = vdwg.mxu0
    %v1115 = vperm.slane %v93, 6
    %v1116 = vmul.f32 %v1106, %v1115
    %v1117 = vmul.f32 %v1108, %v1115
    %v1118 = vmul.f32 %v1111, %v1115
    %v1119 = vmul.f32 %v1113, %v1115
    %v1120 = vadd.f32 %v1057, %v1116
    %v1121 = vadd.f32 %v1058, %v1117
    %v1122 = vadd.f32 %v1059, %v1118
    %v1123 = vadd.f32 %v1060, %v1119
    %1124 = vrot.lane.b32.xlu0 %v688, 120
    %v1125 = vpop.permute.xlu0 %1124
    %1126 = vrot.lane.b32.xlu0 %v689, 120
    %v1127 = vpop.permute.xlu0 %1126
    %1128 = vrot.lane.b32.xlu0 %v690, 120
    %v1129 = vpop.permute.xlu0 %1128
    %1130 = vrot.lane.b32.xlu0 %v691, 120
    %v1131 = vpop.permute.xlu0 %1130
    %v1136 = vpack.c.bf16 %v1127, %v1125
    %v1137 = vpack.c.bf16 %v1131, %v1129
    %s1138 = scalar_lea.vmem [#allocation2], 112
    %v1139 = vld [vmem:[%s1138] sm:$0xf]
    %v1140 = vld [vmem:[%s1138 + $0x4] sm:$0xf]
    %v1141 = vld [vmem:[%s1138 + $0x8] sm:$0xf]
    %v1142 = vld [vmem:[%s1138 + $0xc] sm:$0xf]
    %v1147 = vunpack.c.l.b16 %v1139
    %v1148 = vunpack.c.l.b16 %v1140
    %v1149 = vunpack.c.l.b16 %v1141
    %v1150 = vunpack.c.l.b16 %v1142
    %v1151 = vpack.c.b16 %v1148, %v1147
    %v1152 = vpack.c.b16 %v1150, %v1149
    %v1154 = vsel %vm519, %v1151, 0
    %v1157 = vsel %vm519, %v1152, 0
    %1159 = vmatpush.bf16.msra.mxu0 0
    %1160 = vmatpush.bf16.msra.mxu0 0
    %1161 = vmatpush.bf16.msra.mxu0 0
    %1162 = vmatpush.bf16.msra.mxu0 0
    %1163 = vmatpush.bf16.msra.mxu0 0
    %1164 = vmatpush.bf16.msra.mxu0 0
    %1165 = vmatpush.bf16.msra.mxu0 %v1137
    %1166 = vmatpush.bf16.msra.mxu0 %v1136
    %1167 = vmatmul.bf16.gmra.mxu0 %v1154
    %v1168 = vpop.f32.mrf.mxu0
    %v1169 = vadd.f32 0.0, %v1168
    %v1170 = vpop.f32.mrf.mxu0
    %v1171 = vadd.f32 0.0, %v1170
    %1172 = vmatmul.bf16.gmra.mxu0 %v1157
    %v1173 = vpop.f32.mrf.mxu0
    %v1174 = vadd.f32 0.0, %v1173
    %v1175 = vpop.f32.mrf.mxu0
    %v1176 = vadd.f32 0.0, %v1175
    %1177 = vdwg.mxu0
    %v1178 = vperm.slane %v93, 7
    %v1179 = vmul.f32 %v1169, %v1178
    %v1180 = vmul.f32 %v1171, %v1178
    %v1181 = vmul.f32 %v1174, %v1178
    %v1182 = vmul.f32 %v1176, %v1178
    %v1183 = vadd.f32 %v1120, %v1179
    %v1184 = vadd.f32 %v1121, %v1180
    %v1185 = vadd.f32 %v1122, %v1181
    %v1186 = vadd.f32 %v1123, %v1182
    %1187 = vrot.lane.b32.xlu0 %v688, 119
    %v1188 = vpop.permute.xlu0 %1187
    %1189 = vrot.lane.b32.xlu0 %v689, 119
    %v1190 = vpop.permute.xlu0 %1189
    %1191 = vrot.lane.b32.xlu0 %v690, 119
    %v1192 = vpop.permute.xlu0 %1191
    %1193 = vrot.lane.b32.xlu0 %v691, 119
    %v1194 = vpop.permute.xlu0 %1193
    %v1199 = vpack.c.bf16 %v1190, %v1188
    %v1200 = vpack.c.bf16 %v1194, %v1192
    %s1201 = scalar_lea.vmem [#allocation2], 128
    %v1202 = vld [vmem:[%s1201] sm:$0xf]
    %v1203 = vld [vmem:[%s1201 + $0x4] sm:$0xf]
    %v1204 = vld [vmem:[%s1201 + $0x8] sm:$0xf]
    %v1205 = vld [vmem:[%s1201 + $0xc] sm:$0xf]
    %v1210 = vunpack.c.l.b16 %v1202
    %v1211 = vunpack.c.l.b16 %v1203
    %v1212 = vunpack.c.l.b16 %v1204
    %v1213 = vunpack.c.l.b16 %v1205
    %v1214 = vpack.c.b16 %v1211, %v1210
    %v1215 = vpack.c.b16 %v1213, %v1212
    %v1217 = vsel %vm519, %v1214, 0
    %v1220 = vsel %vm519, %v1215, 0
    %1222 = vmatpush.bf16.msra.mxu0 0
    %1223 = vmatpush.bf16.msra.mxu0 0
    %1224 = vmatpush.bf16.msra.mxu0 0
    %1225 = vmatpush.bf16.msra.mxu0 0
    %1226 = vmatpush.bf16.msra.mxu0 0
    %1227 = vmatpush.bf16.msra.mxu0 0
    %1228 = vmatpush.bf16.msra.mxu0 %v1200
    %1229 = vmatpush.bf16.msra.mxu0 %v1199
    %1230 = vmatmul.bf16.gmra.mxu0 %v1217
    %v1231 = vpop.f32.mrf.mxu0
    %v1232 = vadd.f32 0.0, %v1231
    %v1233 = vpop.f32.mrf.mxu0
    %v1234 = vadd.f32 0.0, %v1233
    %1235 = vmatmul.bf16.gmra.mxu0 %v1220
    %v1236 = vpop.f32.mrf.mxu0
    %v1237 = vadd.f32 0.0, %v1236
    %v1238 = vpop.f32.mrf.mxu0
    %v1239 = vadd.f32 0.0, %v1238
    %1240 = vdwg.mxu0
    %v1241 = vperm.slane %v94, 0
    %v1242 = vmul.f32 %v1232, %v1241
    %v1243 = vmul.f32 %v1234, %v1241
    %v1244 = vmul.f32 %v1237, %v1241
    %v1245 = vmul.f32 %v1239, %v1241
    %v1246 = vadd.f32 %v1183, %v1242
    %v1247 = vadd.f32 %v1184, %v1243
    %v1248 = vadd.f32 %v1185, %v1244
    %v1249 = vadd.f32 %v1186, %v1245
    %1251 = vset.pattern.permute.xlu0 0
    %1252 = vperm.xlu0 %1251, %v692
    %v1253 = vpop.permute.xlu0 %1252
    %1256 = vset.pattern.permute.xlu0 0
    %1257 = vperm.xlu0 %1256, %v693
    %v1258 = vpop.permute.xlu0 %1257
    %1261 = vset.pattern.permute.xlu0 0
    %1262 = vperm.xlu0 %1261, %v694
    %v1263 = vpop.permute.xlu0 %1262
    %1266 = vset.pattern.permute.xlu0 0
    %1267 = vperm.xlu0 %1266, %v695
    %v1268 = vpop.permute.xlu0 %1267
    %v1270 = vadd.f32 %v1246, %v1253
    %v1271 = vadd.f32 %v1247, %v1258
    %v1272 = vadd.f32 %v1248, %v1263
    %v1273 = vadd.f32 %v1249, %v1268
    %v1274 = vld [vmem:[%s11] sm:$0xff]
    %v1275 = vld [vmem:[%s11 + $0x8] sm:$0xff]
    %v1276 = vld [vmem:[%s11 + $0x10] sm:$0xff]
    %v1277 = vld [vmem:[%s11 + $0x18] sm:$0xff]
    %v1278 = vld [vmem:[%s12] sm:$0xff]
    %v1279 = vld [vmem:[%s12 + $0x8] sm:$0xff]
    %v1280 = vld [vmem:[%s12 + $0x10] sm:$0xff]
    %v1281 = vld [vmem:[%s12 + $0x18] sm:$0xff]
    %1282 = vadd.xlane.f32.xlu0 %v1270
    %v1283 = vpop.xlane.xlu0 %1282
    %1284 = vadd.xlane.f32.xlu0 %v1271
    %v1285 = vpop.xlane.xlu0 %1284
    %1286 = vadd.xlane.f32.xlu0 %v1272
    %v1287 = vpop.xlane.xlu0 %1286
    %1288 = vadd.xlane.f32.xlu0 %v1273
    %v1289 = vpop.xlane.xlu0 %1288
    %v1290 = vmul.f32 %v1283, %v567
    %v1291 = vmul.f32 %v1285, %v567
    %v1292 = vmul.f32 %v1287, %v567
    %v1293 = vmul.f32 %v1289, %v567
    %v1294 = vsub.f32 %v1270, %v1290
    %v1295 = vsub.f32 %v1271, %v1291
    %v1296 = vsub.f32 %v1272, %v1292
    %v1297 = vsub.f32 %v1273, %v1293
    %v1298 = vmul.f32 %v1294, %v1294
    %v1299 = vmul.f32 %v1295, %v1295
    %v1300 = vmul.f32 %v1296, %v1296
    %v1301 = vmul.f32 %v1297, %v1297
    %1302 = vadd.xlane.f32.xlu0 %v1298
    %v1303 = vpop.xlane.xlu0 %1302
    %1304 = vadd.xlane.f32.xlu0 %v1299
    %v1305 = vpop.xlane.xlu0 %1304
    %1306 = vadd.xlane.f32.xlu0 %v1300
    %v1307 = vpop.xlane.xlu0 %1306
    %1308 = vadd.xlane.f32.xlu0 %v1301
    %v1309 = vpop.xlane.xlu0 %1308
    %v1310 = vmul.f32 %v1303, %v567
    %v1311 = vmul.f32 %v1305, %v567
    %v1312 = vmul.f32 %v1307, %v567
    %v1313 = vmul.f32 %v1309, %v567
    %v1314 = vadd.f32 %v1310, 1e-05
    %v1315 = vadd.f32 %v1311, 1e-05
    %v1316 = vadd.f32 %v1312, 1e-05
    %v1317 = vadd.f32 %v1313, 1e-05
    %v1318 = vrsqrt.pop %v1314
    %v1319 = vmul.f32 %v1318, %v1314
    %v1320 = vmul.f32 %v1319, %v1318
    %v1321 = vmul.f32 0.5, %v1320
    %v1322 = vsub.f32 1.5, %v1321
    %v1323 = vmul.f32 %v1318, %v1322
    %vm1324 = vweird.f32 %v1314
    %vm1325 = vweird.f32 %v1318
    %vm1326 = vmor %vm1324, %vm1325
    %v1327 = vsel %vm1326, %v1318, %v1323
    %v1328 = vrsqrt.pop %v1315
    %v1329 = vmul.f32 %v1328, %v1315
    %v1330 = vmul.f32 %v1329, %v1328
    %v1331 = vmul.f32 0.5, %v1330
    %v1332 = vsub.f32 1.5, %v1331
    %v1333 = vmul.f32 %v1328, %v1332
    %vm1334 = vweird.f32 %v1315
    %vm1335 = vweird.f32 %v1328
    %vm1336 = vmor %vm1334, %vm1335
    %v1337 = vsel %vm1336, %v1328, %v1333
    %v1338 = vrsqrt.pop %v1316
    %v1339 = vmul.f32 %v1338, %v1316
    %v1340 = vmul.f32 %v1339, %v1338
    %v1341 = vmul.f32 0.5, %v1340
    %v1342 = vsub.f32 1.5, %v1341
    %v1343 = vmul.f32 %v1338, %v1342
    %vm1344 = vweird.f32 %v1316
    %vm1345 = vweird.f32 %v1338
    %vm1346 = vmor %vm1344, %vm1345
    %v1347 = vsel %vm1346, %v1338, %v1343
    %v1348 = vrsqrt.pop %v1317
    %v1349 = vmul.f32 %v1348, %v1317
    %v1350 = vmul.f32 %v1349, %v1348
    %v1351 = vmul.f32 0.5, %v1350
    %v1352 = vsub.f32 1.5, %v1351
    %v1353 = vmul.f32 %v1348, %v1352
    %vm1354 = vweird.f32 %v1317
    %vm1355 = vweird.f32 %v1348
    %vm1356 = vmor %vm1354, %vm1355
    %v1357 = vsel %vm1356, %v1348, %v1353
    %v1358 = vmul.f32 %v1294, %v1327
    %v1359 = vmul.f32 %v1295, %v1337
    %v1360 = vmul.f32 %v1296, %v1347
    %v1361 = vmul.f32 %v1297, %v1357
    %1363 = vset.pattern.permute.xlu0 0
    %1364 = vperm.xlu0 %1363, %v1274
    %v1365 = vpop.permute.xlu0 %1364
    %1368 = vset.pattern.permute.xlu0 0
    %1369 = vperm.xlu0 %1368, %v1275
    %v1370 = vpop.permute.xlu0 %1369
    %1373 = vset.pattern.permute.xlu0 0
    %1374 = vperm.xlu0 %1373, %v1276
    %v1375 = vpop.permute.xlu0 %1374
    %1378 = vset.pattern.permute.xlu0 0
    %1379 = vperm.xlu0 %1378, %v1277
    %v1380 = vpop.permute.xlu0 %1379
    %v1382 = vmul.f32 %v1358, %v1365
    %v1383 = vmul.f32 %v1359, %v1370
    %v1384 = vmul.f32 %v1360, %v1375
    %v1385 = vmul.f32 %v1361, %v1380
    %1387 = vset.pattern.permute.xlu0 0
    %1388 = vperm.xlu0 %1387, %v1278
    %v1389 = vpop.permute.xlu0 %1388
    %1392 = vset.pattern.permute.xlu0 0
    %1393 = vperm.xlu0 %1392, %v1279
    %v1394 = vpop.permute.xlu0 %1393
    %1397 = vset.pattern.permute.xlu0 0
    %1398 = vperm.xlu0 %1397, %v1280
    %v1399 = vpop.permute.xlu0 %1398
    %1402 = vset.pattern.permute.xlu0 0
    %1403 = vperm.xlu0 %1402, %v1281
    %v1404 = vpop.permute.xlu0 %1403
    %v1406 = vadd.f32 %v1382, %v1389
    %v1407 = vadd.f32 %v1383, %v1394
    %v1408 = vadd.f32 %v1384, %v1399
    %v1409 = vadd.f32 %v1385, %v1404
    %v1410 = vmax.f32 %v1406, 0.0
    %v1411 = vmax.f32 %v1407, 0.0
    %v1412 = vmax.f32 %v1408, 0.0
    %v1413 = vmax.f32 %v1409, 0.0
    %v1414 = vld [vmem:[%s13] sm:$0xf]
    %v1415 = vld [vmem:[%s13 + $0x4] sm:$0xf]
    %v1416 = vld [vmem:[%s13 + $0x8] sm:$0xf]
    %v1417 = vld [vmem:[%s13 + $0xc] sm:$0xf]
    %v1418 = vpack.c.bf16 %v1411, %v1410
    %v1419 = vpack.c.bf16 %v1413, %v1412
    %v1420 = vld [vmem:[%s14] sm:$0xff]
    %v1421 = vld [vmem:[%s14 + $0x8] sm:$0xff]
    %v1422 = vld [vmem:[%s14 + $0x10] sm:$0xff]
    %v1423 = vld [vmem:[%s14 + $0x18] sm:$0xff]
    %1425 = vset.pattern.permute.xlu0 0
    %1426 = vperm.xlu0 %1425, %v1420
    %v1427 = vpop.permute.xlu0 %1426
    %1430 = vset.pattern.permute.xlu0 0
    %1431 = vperm.xlu0 %1430, %v1421
    %v1432 = vpop.permute.xlu0 %1431
    %1435 = vset.pattern.permute.xlu0 0
    %1436 = vperm.xlu0 %1435, %v1422
    %v1437 = vpop.permute.xlu0 %1436
    %1440 = vset.pattern.permute.xlu0 0
    %1441 = vperm.xlu0 %1440, %v1423
    %v1442 = vpop.permute.xlu0 %1441
    %v1448 = vunpack.c.l.b16 %v1414
    %v1449 = vunpack.c.l.b16 %v1415
    %v1450 = vunpack.c.l.b16 %v1416
    %v1451 = vunpack.c.l.b16 %v1417
    %v1452 = vpack.c.b16 %v1449, %v1448
    %v1453 = vpack.c.b16 %v1451, %v1450
    %v1455 = vsel %vm519, %v1452, 0
    %v1458 = vsel %vm519, %v1453, 0
    %1460 = vmatpush.bf16.msra.mxu0 0
    %1461 = vmatpush.bf16.msra.mxu0 0
    %1462 = vmatpush.bf16.msra.mxu0 0
    %1463 = vmatpush.bf16.msra.mxu0 0
    %1464 = vmatpush.bf16.msra.mxu0 0
    %1465 = vmatpush.bf16.msra.mxu0 0
    %1466 = vmatpush.bf16.msra.mxu0 %v1419
    %1467 = vmatpush.bf16.msra.mxu0 %v1418
    %1468 = vmatmul.bf16.gmra.mxu0 %v1455
    %v1469 = vpop.f32.mrf.mxu0
    %v1470 = vadd.f32 %v1427, %v1469
    %v1471 = vpop.f32.mrf.mxu0
    %v1472 = vadd.f32 %v1432, %v1471
    %1473 = vmatmul.bf16.gmra.mxu0 %v1458
    %v1474 = vpop.f32.mrf.mxu0
    %v1475 = vadd.f32 %v1437, %v1474
    %v1476 = vpop.f32.mrf.mxu0
    %v1477 = vadd.f32 %v1442, %v1476
    %1478 = vdwg.mxu0
    %v1479 = vadd.f32 %v1470, %v475
    %v1480 = vadd.f32 %v1472, %v476
    %v1481 = vadd.f32 %v1475, %v477
    %v1482 = vadd.f32 %v1477, %v478
    %s1483 = scalar_lea.vmem %s5, 16
    %v1484 = vld [vmem:[%s1483] sm:$0xf]
    %v1485 = vld [vmem:[%s1483 + $0x4] sm:$0xf]
    %v1486 = vld [vmem:[%s1483 + $0x8] sm:$0xf]
    %v1487 = vld [vmem:[%s1483 + $0xc] sm:$0xf]
    %v1488 = vpack.c.bf16 %v1480, %v1479
    %v1489 = vpack.c.bf16 %v1482, %v1481
    %s1490 = scalar_lea.vmem %s6, 32
    %v1491 = vld [vmem:[%s1490] sm:$0xff]
    %v1492 = vld [vmem:[%s1490 + $0x8] sm:$0xff]
    %v1493 = vld [vmem:[%s1490 + $0x10] sm:$0xff]
    %v1494 = vld [vmem:[%s1490 + $0x18] sm:$0xff]
    %1496 = vset.pattern.permute.xlu0 0
    %1497 = vperm.xlu0 %1496, %v1491
    %v1498 = vpop.permute.xlu0 %1497
    %1501 = vset.pattern.permute.xlu0 0
    %1502 = vperm.xlu0 %1501, %v1492
    %v1503 = vpop.permute.xlu0 %1502
    %1506 = vset.pattern.permute.xlu0 0
    %1507 = vperm.xlu0 %1506, %v1493
    %v1508 = vpop.permute.xlu0 %1507
    %1511 = vset.pattern.permute.xlu0 0
    %1512 = vperm.xlu0 %1511, %v1494
    %v1513 = vpop.permute.xlu0 %1512
    %v1519 = vunpack.c.l.b16 %v1484
    %v1520 = vunpack.c.l.b16 %v1485
    %v1521 = vunpack.c.l.b16 %v1486
    %v1522 = vunpack.c.l.b16 %v1487
    %v1523 = vpack.c.b16 %v1520, %v1519
    %v1524 = vpack.c.b16 %v1522, %v1521
    %v1526 = vsel %vm519, %v1523, 0
    %v1529 = vsel %vm519, %v1524, 0
    %1531 = vmatpush.bf16.msra.mxu0 0
    %1532 = vmatpush.bf16.msra.mxu0 0
    %1533 = vmatpush.bf16.msra.mxu0 0
    %1534 = vmatpush.bf16.msra.mxu0 0
    %1535 = vmatpush.bf16.msra.mxu0 0
    %1536 = vmatpush.bf16.msra.mxu0 0
    %1537 = vmatpush.bf16.msra.mxu0 %v1489
    %1538 = vmatpush.bf16.msra.mxu0 %v1488
    %1539 = vmatmul.bf16.gmra.mxu0 %v1526
    %v1540 = vpop.f32.mrf.mxu0
    %v1541 = vadd.f32 %v1498, %v1540
    %v1542 = vpop.f32.mrf.mxu0
    %v1543 = vadd.f32 %v1503, %v1542
    %1544 = vmatmul.bf16.gmra.mxu0 %v1529
    %v1545 = vpop.f32.mrf.mxu0
    %v1546 = vadd.f32 %v1508, %v1545
    %v1547 = vpop.f32.mrf.mxu0
    %v1548 = vadd.f32 %v1513, %v1547
    %1549 = vdwg.mxu0
    %s1550 = scalar_lea.vmem %s7, 32
    %v1551 = vld [vmem:[%s1550] sm:$0xff]
    %v1552 = vld [vmem:[%s1550 + $0x8] sm:$0xff]
    %v1553 = vld [vmem:[%s1550 + $0x10] sm:$0xff]
    %v1554 = vld [vmem:[%s1550 + $0x18] sm:$0xff]
    %s1555 = scalar_lea.vmem %s8, 32
    %v1556 = vld [vmem:[%s1555] sm:$0xff]
    %v1557 = vld [vmem:[%s1555 + $0x8] sm:$0xff]
    %v1558 = vld [vmem:[%s1555 + $0x10] sm:$0xff]
    %v1559 = vld [vmem:[%s1555 + $0x18] sm:$0xff]
    %1560 = vadd.xlane.f32.xlu0 %v1541
    %v1561 = vpop.xlane.xlu0 %1560
    %1562 = vadd.xlane.f32.xlu0 %v1543
    %v1563 = vpop.xlane.xlu0 %1562
    %1564 = vadd.xlane.f32.xlu0 %v1546
    %v1565 = vpop.xlane.xlu0 %1564
    %1566 = vadd.xlane.f32.xlu0 %v1548
    %v1567 = vpop.xlane.xlu0 %1566
    %v1568 = vmul.f32 %v1561, %v567
    %v1569 = vmul.f32 %v1563, %v567
    %v1570 = vmul.f32 %v1565, %v567
    %v1571 = vmul.f32 %v1567, %v567
    %v1572 = vsub.f32 %v1541, %v1568
    %v1573 = vsub.f32 %v1543, %v1569
    %v1574 = vsub.f32 %v1546, %v1570
    %v1575 = vsub.f32 %v1548, %v1571
    %v1576 = vmul.f32 %v1572, %v1572
    %v1577 = vmul.f32 %v1573, %v1573
    %v1578 = vmul.f32 %v1574, %v1574
    %v1579 = vmul.f32 %v1575, %v1575
    %1580 = vadd.xlane.f32.xlu0 %v1576
    %v1581 = vpop.xlane.xlu0 %1580
    %1582 = vadd.xlane.f32.xlu0 %v1577
    %v1583 = vpop.xlane.xlu0 %1582
    %1584 = vadd.xlane.f32.xlu0 %v1578
    %v1585 = vpop.xlane.xlu0 %1584
    %1586 = vadd.xlane.f32.xlu0 %v1579
    %v1587 = vpop.xlane.xlu0 %1586
    %v1588 = vmul.f32 %v1581, %v567
    %v1589 = vmul.f32 %v1583, %v567
    %v1590 = vmul.f32 %v1585, %v567
    %v1591 = vmul.f32 %v1587, %v567
    %v1592 = vadd.f32 %v1588, 1e-05
    %v1593 = vadd.f32 %v1589, 1e-05
    %v1594 = vadd.f32 %v1590, 1e-05
    %v1595 = vadd.f32 %v1591, 1e-05
    %v1596 = vrsqrt.pop %v1592
    %v1597 = vmul.f32 %v1596, %v1592
    %v1598 = vmul.f32 %v1597, %v1596
    %v1599 = vmul.f32 0.5, %v1598
    %v1600 = vsub.f32 1.5, %v1599
    %v1601 = vmul.f32 %v1596, %v1600
    %vm1602 = vweird.f32 %v1592
    %vm1603 = vweird.f32 %v1596
    %vm1604 = vmor %vm1602, %vm1603
    %v1605 = vsel %vm1604, %v1596, %v1601
    %v1606 = vrsqrt.pop %v1593
    %v1607 = vmul.f32 %v1606, %v1593
    %v1608 = vmul.f32 %v1607, %v1606
    %v1609 = vmul.f32 0.5, %v1608
    %v1610 = vsub.f32 1.5, %v1609
    %v1611 = vmul.f32 %v1606, %v1610
    %vm1612 = vweird.f32 %v1593
    %vm1613 = vweird.f32 %v1606
    %vm1614 = vmor %vm1612, %vm1613
    %v1615 = vsel %vm1614, %v1606, %v1611
    %v1616 = vrsqrt.pop %v1594
    %v1617 = vmul.f32 %v1616, %v1594
    %v1618 = vmul.f32 %v1617, %v1616
    %v1619 = vmul.f32 0.5, %v1618
    %v1620 = vsub.f32 1.5, %v1619
    %v1621 = vmul.f32 %v1616, %v1620
    %vm1622 = vweird.f32 %v1594
    %vm1623 = vweird.f32 %v1616
    %vm1624 = vmor %vm1622, %vm1623
    %v1625 = vsel %vm1624, %v1616, %v1621
    %v1626 = vrsqrt.pop %v1595
    %v1627 = vmul.f32 %v1626, %v1595
    %v1628 = vmul.f32 %v1627, %v1626
    %v1629 = vmul.f32 0.5, %v1628
    %v1630 = vsub.f32 1.5, %v1629
    %v1631 = vmul.f32 %v1626, %v1630
    %vm1632 = vweird.f32 %v1595
    %vm1633 = vweird.f32 %v1626
    %vm1634 = vmor %vm1632, %vm1633
    %v1635 = vsel %vm1634, %v1626, %v1631
    %v1636 = vmul.f32 %v1572, %v1605
    %v1637 = vmul.f32 %v1573, %v1615
    %v1638 = vmul.f32 %v1574, %v1625
    %v1639 = vmul.f32 %v1575, %v1635
    %1641 = vset.pattern.permute.xlu0 0
    %1642 = vperm.xlu0 %1641, %v1551
    %v1643 = vpop.permute.xlu0 %1642
    %1646 = vset.pattern.permute.xlu0 0
    %1647 = vperm.xlu0 %1646, %v1552
    %v1648 = vpop.permute.xlu0 %1647
    %1651 = vset.pattern.permute.xlu0 0
    %1652 = vperm.xlu0 %1651, %v1553
    %v1653 = vpop.permute.xlu0 %1652
    %1656 = vset.pattern.permute.xlu0 0
    %1657 = vperm.xlu0 %1656, %v1554
    %v1658 = vpop.permute.xlu0 %1657
    %v1660 = vmul.f32 %v1636, %v1643
    %v1661 = vmul.f32 %v1637, %v1648
    %v1662 = vmul.f32 %v1638, %v1653
    %v1663 = vmul.f32 %v1639, %v1658
    %1665 = vset.pattern.permute.xlu0 0
    %1666 = vperm.xlu0 %1665, %v1556
    %v1667 = vpop.permute.xlu0 %1666
    %1670 = vset.pattern.permute.xlu0 0
    %1671 = vperm.xlu0 %1670, %v1557
    %v1672 = vpop.permute.xlu0 %1671
    %1675 = vset.pattern.permute.xlu0 0
    %1676 = vperm.xlu0 %1675, %v1558
    %v1677 = vpop.permute.xlu0 %1676
    %1680 = vset.pattern.permute.xlu0 0
    %1681 = vperm.xlu0 %1680, %v1559
    %v1682 = vpop.permute.xlu0 %1681
    %v1684 = vadd.f32 %v1660, %v1667
    %v1685 = vadd.f32 %v1661, %v1672
    %v1686 = vadd.f32 %v1662, %v1677
    %v1687 = vadd.f32 %v1663, %v1682
    %v1688 = vmax.f32 %v1684, 0.0
    %v1689 = vmax.f32 %v1685, 0.0
    %v1690 = vmax.f32 %v1686, 0.0
    %v1691 = vmax.f32 %v1687, 0.0
    %s1692 = scalar_lea.vmem %s10, 32
    %v1693 = vld [vmem:[%s1692] sm:$0xff]
    %v1694 = vld [vmem:[%s1692 + $0x8] sm:$0xff]
    %v1695 = vld [vmem:[%s1692 + $0x10] sm:$0xff]
    %v1696 = vld [vmem:[%s1692 + $0x18] sm:$0xff]
    %1701 = vrot.lane.b32.xlu0 %v1688, 9
    %v1702 = vpop.permute.xlu0 %1701
    %1703 = vrot.lane.b32.xlu0 %v1689, 9
    %v1704 = vpop.permute.xlu0 %1703
    %1705 = vrot.lane.b32.xlu0 %v1690, 9
    %v1706 = vpop.permute.xlu0 %1705
    %1707 = vrot.lane.b32.xlu0 %v1691, 9
    %v1708 = vpop.permute.xlu0 %1707
    %v1713 = vpack.c.bf16 %v1704, %v1702
    %v1714 = vpack.c.bf16 %v1708, %v1706
    %s1715 = scalar_lea.vmem [#allocation2], 144
    %v1716 = vld [vmem:[%s1715] sm:$0xf]
    %v1717 = vld [vmem:[%s1715 + $0x4] sm:$0xf]
    %v1718 = vld [vmem:[%s1715 + $0x8] sm:$0xf]
    %v1719 = vld [vmem:[%s1715 + $0xc] sm:$0xf]
    %v1724 = vunpack.c.l.b16 %v1716
    %v1725 = vunpack.c.l.b16 %v1717
    %v1726 = vunpack.c.l.b16 %v1718
    %v1727 = vunpack.c.l.b16 %v1719
    %v1728 = vpack.c.b16 %v1725, %v1724
    %v1729 = vpack.c.b16 %v1727, %v1726
    %v1731 = vsel %vm519, %v1728, 0
    %v1734 = vsel %vm519, %v1729, 0
    %1736 = vmatpush.bf16.msra.mxu0 0
    %1737 = vmatpush.bf16.msra.mxu0 0
    %1738 = vmatpush.bf16.msra.mxu0 0
    %1739 = vmatpush.bf16.msra.mxu0 0
    %1740 = vmatpush.bf16.msra.mxu0 0
    %1741 = vmatpush.bf16.msra.mxu0 0
    %1742 = vmatpush.bf16.msra.mxu0 %v1714
    %1743 = vmatpush.bf16.msra.mxu0 %v1713
    %1744 = vmatmul.bf16.gmra.mxu0 %v1731
    %v1745 = vpop.f32.mrf.mxu0
    %v1746 = vadd.f32 0.0, %v1745
    %v1747 = vpop.f32.mrf.mxu0
    %v1748 = vadd.f32 0.0, %v1747
    %1749 = vmatmul.bf16.gmra.mxu0 %v1734
    %v1750 = vpop.f32.mrf.mxu0
    %v1751 = vadd.f32 0.0, %v1750
    %v1752 = vpop.f32.mrf.mxu0
    %v1753 = vadd.f32 0.0, %v1752
    %1754 = vdwg.mxu0
    %v1755 = vmul.f32 %v1746, %v753
    %v1756 = vmul.f32 %v1748, %v753
    %v1757 = vmul.f32 %v1751, %v753
    %v1758 = vmul.f32 %v1753, %v753
    %1759 = vrot.lane.b32.xlu0 %v1688, 8
    %v1760 = vpop.permute.xlu0 %1759
    %1761 = vrot.lane.b32.xlu0 %v1689, 8
    %v1762 = vpop.permute.xlu0 %1761
    %1763 = vrot.lane.b32.xlu0 %v1690, 8
    %v1764 = vpop.permute.xlu0 %1763
    %1765 = vrot.lane.b32.xlu0 %v1691, 8
    %v1766 = vpop.permute.xlu0 %1765
    %v1771 = vpack.c.bf16 %v1762, %v1760
    %v1772 = vpack.c.bf16 %v1766, %v1764
    %s1773 = scalar_lea.vmem [#allocation2], 160
    %v1774 = vld [vmem:[%s1773] sm:$0xf]
    %v1775 = vld [vmem:[%s1773 + $0x4] sm:$0xf]
    %v1776 = vld [vmem:[%s1773 + $0x8] sm:$0xf]
    %v1777 = vld [vmem:[%s1773 + $0xc] sm:$0xf]
    %v1782 = vunpack.c.l.b16 %v1774
    %v1783 = vunpack.c.l.b16 %v1775
    %v1784 = vunpack.c.l.b16 %v1776
    %v1785 = vunpack.c.l.b16 %v1777
    %v1786 = vpack.c.b16 %v1783, %v1782
    %v1787 = vpack.c.b16 %v1785, %v1784
    %v1789 = vsel %vm519, %v1786, 0
    %v1792 = vsel %vm519, %v1787, 0
    %1794 = vmatpush.bf16.msra.mxu0 0
    %1795 = vmatpush.bf16.msra.mxu0 0
    %1796 = vmatpush.bf16.msra.mxu0 0
    %1797 = vmatpush.bf16.msra.mxu0 0
    %1798 = vmatpush.bf16.msra.mxu0 0
    %1799 = vmatpush.bf16.msra.mxu0 0
    %1800 = vmatpush.bf16.msra.mxu0 %v1772
    %1801 = vmatpush.bf16.msra.mxu0 %v1771
    %1802 = vmatmul.bf16.gmra.mxu0 %v1789
    %v1803 = vpop.f32.mrf.mxu0
    %v1804 = vadd.f32 0.0, %v1803
    %v1805 = vpop.f32.mrf.mxu0
    %v1806 = vadd.f32 0.0, %v1805
    %1807 = vmatmul.bf16.gmra.mxu0 %v1792
    %v1808 = vpop.f32.mrf.mxu0
    %v1809 = vadd.f32 0.0, %v1808
    %v1810 = vpop.f32.mrf.mxu0
    %v1811 = vadd.f32 0.0, %v1810
    %1812 = vdwg.mxu0
    %v1813 = vmul.f32 %v1804, %v812
    %v1814 = vmul.f32 %v1806, %v812
    %v1815 = vmul.f32 %v1809, %v812
    %v1816 = vmul.f32 %v1811, %v812
    %v1817 = vadd.f32 %v1755, %v1813
    %v1818 = vadd.f32 %v1756, %v1814
    %v1819 = vadd.f32 %v1757, %v1815
    %v1820 = vadd.f32 %v1758, %v1816
    %1821 = vrot.lane.b32.xlu0 %v1688, 7
    %v1822 = vpop.permute.xlu0 %1821
    %1823 = vrot.lane.b32.xlu0 %v1689, 7
    %v1824 = vpop.permute.xlu0 %1823
    %1825 = vrot.lane.b32.xlu0 %v1690, 7
    %v1826 = vpop.permute.xlu0 %1825
    %1827 = vrot.lane.b32.xlu0 %v1691, 7
    %v1828 = vpop.permute.xlu0 %1827
    %v1833 = vpack.c.bf16 %v1824, %v1822
    %v1834 = vpack.c.bf16 %v1828, %v1826
    %s1835 = scalar_lea.vmem [#allocation2], 176
    %v1836 = vld [vmem:[%s1835] sm:$0xf]
    %v1837 = vld [vmem:[%s1835 + $0x4] sm:$0xf]
    %v1838 = vld [vmem:[%s1835 + $0x8] sm:$0xf]
    %v1839 = vld [vmem:[%s1835 + $0xc] sm:$0xf]
    %v1844 = vunpack.c.l.b16 %v1836
    %v1845 = vunpack.c.l.b16 %v1837
    %v1846 = vunpack.c.l.b16 %v1838
    %v1847 = vunpack.c.l.b16 %v1839
    %v1848 = vpack.c.b16 %v1845, %v1844
    %v1849 = vpack.c.b16 %v1847, %v1846
    %v1851 = vsel %vm519, %v1848, 0
    %v1854 = vsel %vm519, %v1849, 0
    %1856 = vmatpush.bf16.msra.mxu0 0
    %1857 = vmatpush.bf16.msra.mxu0 0
    %1858 = vmatpush.bf16.msra.mxu0 0
    %1859 = vmatpush.bf16.msra.mxu0 0
    %1860 = vmatpush.bf16.msra.mxu0 0
    %1861 = vmatpush.bf16.msra.mxu0 0
    %1862 = vmatpush.bf16.msra.mxu0 %v1834
    %1863 = vmatpush.bf16.msra.mxu0 %v1833
    %1864 = vmatmul.bf16.gmra.mxu0 %v1851
    %v1865 = vpop.f32.mrf.mxu0
    %v1866 = vadd.f32 0.0, %v1865
    %v1867 = vpop.f32.mrf.mxu0
    %v1868 = vadd.f32 0.0, %v1867
    %1869 = vmatmul.bf16.gmra.mxu0 %v1854
    %v1870 = vpop.f32.mrf.mxu0
    %v1871 = vadd.f32 0.0, %v1870
    %v1872 = vpop.f32.mrf.mxu0
    %v1873 = vadd.f32 0.0, %v1872
    %1874 = vdwg.mxu0
    %v1875 = vmul.f32 %v1866, %v875
    %v1876 = vmul.f32 %v1868, %v875
    %v1877 = vmul.f32 %v1871, %v875
    %v1878 = vmul.f32 %v1873, %v875
    %v1879 = vadd.f32 %v1817, %v1875
    %v1880 = vadd.f32 %v1818, %v1876
    %v1881 = vadd.f32 %v1819, %v1877
    %v1882 = vadd.f32 %v1820, %v1878
    %1883 = vrot.lane.b32.xlu0 %v1688, 1
    %v1884 = vpop.permute.xlu0 %1883
    %1885 = vrot.lane.b32.xlu0 %v1689, 1
    %v1886 = vpop.permute.xlu0 %1885
    %1887 = vrot.lane.b32.xlu0 %v1690, 1
    %v1888 = vpop.permute.xlu0 %1887
    %1889 = vrot.lane.b32.xlu0 %v1691, 1
    %v1890 = vpop.permute.xlu0 %1889
    %v1895 = vpack.c.bf16 %v1886, %v1884
    %v1896 = vpack.c.bf16 %v1890, %v1888
    %s1897 = scalar_lea.vmem [#allocation2], 192
    %v1898 = vld [vmem:[%s1897] sm:$0xf]
    %v1899 = vld [vmem:[%s1897 + $0x4] sm:$0xf]
    %v1900 = vld [vmem:[%s1897 + $0x8] sm:$0xf]
    %v1901 = vld [vmem:[%s1897 + $0xc] sm:$0xf]
    %v1906 = vunpack.c.l.b16 %v1898
    %v1907 = vunpack.c.l.b16 %v1899
    %v1908 = vunpack.c.l.b16 %v1900
    %v1909 = vunpack.c.l.b16 %v1901
    %v1910 = vpack.c.b16 %v1907, %v1906
    %v1911 = vpack.c.b16 %v1909, %v1908
    %v1913 = vsel %vm519, %v1910, 0
    %v1916 = vsel %vm519, %v1911, 0
    %1918 = vmatpush.bf16.msra.mxu0 0
    %1919 = vmatpush.bf16.msra.mxu0 0
    %1920 = vmatpush.bf16.msra.mxu0 0
    %1921 = vmatpush.bf16.msra.mxu0 0
    %1922 = vmatpush.bf16.msra.mxu0 0
    %1923 = vmatpush.bf16.msra.mxu0 0
    %1924 = vmatpush.bf16.msra.mxu0 %v1896
    %1925 = vmatpush.bf16.msra.mxu0 %v1895
    %1926 = vmatmul.bf16.gmra.mxu0 %v1913
    %v1927 = vpop.f32.mrf.mxu0
    %v1928 = vadd.f32 0.0, %v1927
    %v1929 = vpop.f32.mrf.mxu0
    %v1930 = vadd.f32 0.0, %v1929
    %1931 = vmatmul.bf16.gmra.mxu0 %v1916
    %v1932 = vpop.f32.mrf.mxu0
    %v1933 = vadd.f32 0.0, %v1932
    %v1934 = vpop.f32.mrf.mxu0
    %v1935 = vadd.f32 0.0, %v1934
    %1936 = vdwg.mxu0
    %v1937 = vmul.f32 %v1928, %v938
    %v1938 = vmul.f32 %v1930, %v938
    %v1939 = vmul.f32 %v1933, %v938
    %v1940 = vmul.f32 %v1935, %v938
    %v1941 = vadd.f32 %v1879, %v1937
    %v1942 = vadd.f32 %v1880, %v1938
    %v1943 = vadd.f32 %v1881, %v1939
    %v1944 = vadd.f32 %v1882, %v1940
    %v1945 = vpack.c.bf16 %v1689, %v1688
    %v1946 = vpack.c.bf16 %v1691, %v1690
    %s1947 = scalar_lea.vmem [#allocation2], 208
    %v1948 = vld [vmem:[%s1947] sm:$0xf]
    %v1949 = vld [vmem:[%s1947 + $0x4] sm:$0xf]
    %v1950 = vld [vmem:[%s1947 + $0x8] sm:$0xf]
    %v1951 = vld [vmem:[%s1947 + $0xc] sm:$0xf]
    %v1956 = vunpack.c.l.b16 %v1948
    %v1957 = vunpack.c.l.b16 %v1949
    %v1958 = vunpack.c.l.b16 %v1950
    %v1959 = vunpack.c.l.b16 %v1951
    %v1960 = vpack.c.b16 %v1957, %v1956
    %v1961 = vpack.c.b16 %v1959, %v1958
    %v1963 = vsel %vm519, %v1960, 0
    %v1966 = vsel %vm519, %v1961, 0
    %1968 = vmatpush.bf16.msra.mxu0 0
    %1969 = vmatpush.bf16.msra.mxu0 0
    %1970 = vmatpush.bf16.msra.mxu0 0
    %1971 = vmatpush.bf16.msra.mxu0 0
    %1972 = vmatpush.bf16.msra.mxu0 0
    %1973 = vmatpush.bf16.msra.mxu0 0
    %1974 = vmatpush.bf16.msra.mxu0 %v1946
    %1975 = vmatpush.bf16.msra.mxu0 %v1945
    %1976 = vmatmul.bf16.gmra.mxu0 %v1963
    %v1977 = vpop.f32.mrf.mxu0
    %v1978 = vadd.f32 0.0, %v1977
    %v1979 = vpop.f32.mrf.mxu0
    %v1980 = vadd.f32 0.0, %v1979
    %1981 = vmatmul.bf16.gmra.mxu0 %v1966
    %v1982 = vpop.f32.mrf.mxu0
    %v1983 = vadd.f32 0.0, %v1982
    %v1984 = vpop.f32.mrf.mxu0
    %v1985 = vadd.f32 0.0, %v1984
    %1986 = vdwg.mxu0
    %v1987 = vmul.f32 %v1978, %v989
    %v1988 = vmul.f32 %v1980, %v989
    %v1989 = vmul.f32 %v1983, %v989
    %v1990 = vmul.f32 %v1985, %v989
    %v1991 = vadd.f32 %v1941, %v1987
    %v1992 = vadd.f32 %v1942, %v1988
    %v1993 = vadd.f32 %v1943, %v1989
    %v1994 = vadd.f32 %v1944, %v1990
    %1995 = vrot.lane.b32.xlu0 %v1688, 127
    %v1996 = vpop.permute.xlu0 %1995
    %1997 = vrot.lane.b32.xlu0 %v1689, 127
    %v1998 = vpop.permute.xlu0 %1997
    %1999 = vrot.lane.b32.xlu0 %v1690, 127
    %v2000 = vpop.permute.xlu0 %1999
    %2001 = vrot.lane.b32.xlu0 %v1691, 127
    %v2002 = vpop.permute.xlu0 %2001
    %v2007 = vpack.c.bf16 %v1998, %v1996
    %v2008 = vpack.c.bf16 %v2002, %v2000
    %s2009 = scalar_lea.vmem [#allocation2], 224
    %v2010 = vld [vmem:[%s2009] sm:$0xf]
    %v2011 = vld [vmem:[%s2009 + $0x4] sm:$0xf]
    %v2012 = vld [vmem:[%s2009 + $0x8] sm:$0xf]
    %v2013 = vld [vmem:[%s2009 + $0xc] sm:$0xf]
    %v2018 = vunpack.c.l.b16 %v2010
    %v2019 = vunpack.c.l.b16 %v2011
    %v2020 = vunpack.c.l.b16 %v2012
    %v2021 = vunpack.c.l.b16 %v2013
    %v2022 = vpack.c.b16 %v2019, %v2018
    %v2023 = vpack.c.b16 %v2021, %v2020
    %v2025 = vsel %vm519, %v2022, 0
    %v2028 = vsel %vm519, %v2023, 0
    %2030 = vmatpush.bf16.msra.mxu0 0
    %2031 = vmatpush.bf16.msra.mxu0 0
    %2032 = vmatpush.bf16.msra.mxu0 0
    %2033 = vmatpush.bf16.msra.mxu0 0
    %2034 = vmatpush.bf16.msra.mxu0 0
    %2035 = vmatpush.bf16.msra.mxu0 0
    %2036 = vmatpush.bf16.msra.mxu0 %v2008
    %2037 = vmatpush.bf16.msra.mxu0 %v2007
    %2038 = vmatmul.bf16.gmra.mxu0 %v2025
    %v2039 = vpop.f32.mrf.mxu0
    %v2040 = vadd.f32 0.0, %v2039
    %v2041 = vpop.f32.mrf.mxu0
    %v2042 = vadd.f32 0.0, %v2041
    %2043 = vmatmul.bf16.gmra.mxu0 %v2028
    %v2044 = vpop.f32.mrf.mxu0
    %v2045 = vadd.f32 0.0, %v2044
    %v2046 = vpop.f32.mrf.mxu0
    %v2047 = vadd.f32 0.0, %v2046
    %2048 = vdwg.mxu0
    %v2049 = vmul.f32 %v2040, %v1052
    %v2050 = vmul.f32 %v2042, %v1052
    %v2051 = vmul.f32 %v2045, %v1052
    %v2052 = vmul.f32 %v2047, %v1052
    %v2053 = vadd.f32 %v1991, %v2049
    %v2054 = vadd.f32 %v1992, %v2050
    %v2055 = vadd.f32 %v1993, %v2051
    %v2056 = vadd.f32 %v1994, %v2052
    %2057 = vrot.lane.b32.xlu0 %v1688, 121
    %v2058 = vpop.permute.xlu0 %2057
    %2059 = vrot.lane.b32.xlu0 %v1689, 121
    %v2060 = vpop.permute.xlu0 %2059
    %2061 = vrot.lane.b32.xlu0 %v1690, 121
    %v2062 = vpop.permute.xlu0 %2061
    %2063 = vrot.lane.b32.xlu0 %v1691, 121
    %v2064 = vpop.permute.xlu0 %2063
    %v2069 = vpack.c.bf16 %v2060, %v2058
    %v2070 = vpack.c.bf16 %v2064, %v2062
    %s2071 = scalar_lea.vmem [#allocation2], 240
    %v2072 = vld [vmem:[%s2071] sm:$0xf]
    %v2073 = vld [vmem:[%s2071 + $0x4] sm:$0xf]
    %v2074 = vld [vmem:[%s2071 + $0x8] sm:$0xf]
    %v2075 = vld [vmem:[%s2071 + $0xc] sm:$0xf]
    %v2080 = vunpack.c.l.b16 %v2072
    %v2081 = vunpack.c.l.b16 %v2073
    %v2082 = vunpack.c.l.b16 %v2074
    %v2083 = vunpack.c.l.b16 %v2075
    %v2084 = vpack.c.b16 %v2081, %v2080
    %v2085 = vpack.c.b16 %v2083, %v2082
    %v2087 = vsel %vm519, %v2084, 0
    %v2090 = vsel %vm519, %v2085, 0
    %2092 = vmatpush.bf16.msra.mxu0 0
    %2093 = vmatpush.bf16.msra.mxu0 0
    %2094 = vmatpush.bf16.msra.mxu0 0
    %2095 = vmatpush.bf16.msra.mxu0 0
    %2096 = vmatpush.bf16.msra.mxu0 0
    %2097 = vmatpush.bf16.msra.mxu0 0
    %2098 = vmatpush.bf16.msra.mxu0 %v2070
    %2099 = vmatpush.bf16.msra.mxu0 %v2069
    %2100 = vmatmul.bf16.gmra.mxu0 %v2087
    %v2101 = vpop.f32.mrf.mxu0
    %v2102 = vadd.f32 0.0, %v2101
    %v2103 = vpop.f32.mrf.mxu0
    %v2104 = vadd.f32 0.0, %v2103
    %2105 = vmatmul.bf16.gmra.mxu0 %v2090
    %v2106 = vpop.f32.mrf.mxu0
    %v2107 = vadd.f32 0.0, %v2106
    %v2108 = vpop.f32.mrf.mxu0
    %v2109 = vadd.f32 0.0, %v2108
    %2110 = vdwg.mxu0
    %v2111 = vmul.f32 %v2102, %v1115
    %v2112 = vmul.f32 %v2104, %v1115
    %v2113 = vmul.f32 %v2107, %v1115
    %v2114 = vmul.f32 %v2109, %v1115
    %v2115 = vadd.f32 %v2053, %v2111
    %v2116 = vadd.f32 %v2054, %v2112
    %v2117 = vadd.f32 %v2055, %v2113
    %v2118 = vadd.f32 %v2056, %v2114
    %2119 = vrot.lane.b32.xlu0 %v1688, 120
    %v2120 = vpop.permute.xlu0 %2119
    %2121 = vrot.lane.b32.xlu0 %v1689, 120
    %v2122 = vpop.permute.xlu0 %2121
    %2123 = vrot.lane.b32.xlu0 %v1690, 120
    %v2124 = vpop.permute.xlu0 %2123
    %2125 = vrot.lane.b32.xlu0 %v1691, 120
    %v2126 = vpop.permute.xlu0 %2125
    %v2131 = vpack.c.bf16 %v2122, %v2120
    %v2132 = vpack.c.bf16 %v2126, %v2124
    %s2133 = scalar_lea.vmem [#allocation2], 256
    %v2134 = vld [vmem:[%s2133] sm:$0xf]
    %v2135 = vld [vmem:[%s2133 + $0x4] sm:$0xf]
    %v2136 = vld [vmem:[%s2133 + $0x8] sm:$0xf]
    %v2137 = vld [vmem:[%s2133 + $0xc] sm:$0xf]
    %v2142 = vunpack.c.l.b16 %v2134
    %v2143 = vunpack.c.l.b16 %v2135
    %v2144 = vunpack.c.l.b16 %v2136
    %v2145 = vunpack.c.l.b16 %v2137
    %v2146 = vpack.c.b16 %v2143, %v2142
    %v2147 = vpack.c.b16 %v2145, %v2144
    %v2149 = vsel %vm519, %v2146, 0
    %v2152 = vsel %vm519, %v2147, 0
    %2154 = vmatpush.bf16.msra.mxu0 0
    %2155 = vmatpush.bf16.msra.mxu0 0
    %2156 = vmatpush.bf16.msra.mxu0 0
    %2157 = vmatpush.bf16.msra.mxu0 0
    %2158 = vmatpush.bf16.msra.mxu0 0
    %2159 = vmatpush.bf16.msra.mxu0 0
    %2160 = vmatpush.bf16.msra.mxu0 %v2132
    %2161 = vmatpush.bf16.msra.mxu0 %v2131
    %2162 = vmatmul.bf16.gmra.mxu0 %v2149
    %v2163 = vpop.f32.mrf.mxu0
    %v2164 = vadd.f32 0.0, %v2163
    %v2165 = vpop.f32.mrf.mxu0
    %v2166 = vadd.f32 0.0, %v2165
    %2167 = vmatmul.bf16.gmra.mxu0 %v2152
    %v2168 = vpop.f32.mrf.mxu0
    %v2169 = vadd.f32 0.0, %v2168
    %v2170 = vpop.f32.mrf.mxu0
    %v2171 = vadd.f32 0.0, %v2170
    %2172 = vdwg.mxu0
    %v2173 = vmul.f32 %v2164, %v1178
    %v2174 = vmul.f32 %v2166, %v1178
    %v2175 = vmul.f32 %v2169, %v1178
    %v2176 = vmul.f32 %v2171, %v1178
    %v2177 = vadd.f32 %v2115, %v2173
    %v2178 = vadd.f32 %v2116, %v2174
    %v2179 = vadd.f32 %v2117, %v2175
    %v2180 = vadd.f32 %v2118, %v2176
    %2181 = vrot.lane.b32.xlu0 %v1688, 119
    %v2182 = vpop.permute.xlu0 %2181
    %2183 = vrot.lane.b32.xlu0 %v1689, 119
    %v2184 = vpop.permute.xlu0 %2183
    %2185 = vrot.lane.b32.xlu0 %v1690, 119
    %v2186 = vpop.permute.xlu0 %2185
    %2187 = vrot.lane.b32.xlu0 %v1691, 119
    %v2188 = vpop.permute.xlu0 %2187
    %v2193 = vpack.c.bf16 %v2184, %v2182
    %v2194 = vpack.c.bf16 %v2188, %v2186
    %s2195 = scalar_lea.vmem [#allocation2], 272
    %v2196 = vld [vmem:[%s2195] sm:$0xf]
    %v2197 = vld [vmem:[%s2195 + $0x4] sm:$0xf]
    %v2198 = vld [vmem:[%s2195 + $0x8] sm:$0xf]
    %v2199 = vld [vmem:[%s2195 + $0xc] sm:$0xf]
    %v2204 = vunpack.c.l.b16 %v2196
    %v2205 = vunpack.c.l.b16 %v2197
    %v2206 = vunpack.c.l.b16 %v2198
    %v2207 = vunpack.c.l.b16 %v2199
    %v2208 = vpack.c.b16 %v2205, %v2204
    %v2209 = vpack.c.b16 %v2207, %v2206
    %v2211 = vsel %vm519, %v2208, 0
    %v2214 = vsel %vm519, %v2209, 0
    %2216 = vmatpush.bf16.msra.mxu0 0
    %2217 = vmatpush.bf16.msra.mxu0 0
    %2218 = vmatpush.bf16.msra.mxu0 0
    %2219 = vmatpush.bf16.msra.mxu0 0
    %2220 = vmatpush.bf16.msra.mxu0 0
    %2221 = vmatpush.bf16.msra.mxu0 0
    %2222 = vmatpush.bf16.msra.mxu0 %v2194
    %2223 = vmatpush.bf16.msra.mxu0 %v2193
    %2224 = vmatmul.bf16.gmra.mxu0 %v2211
    %v2225 = vpop.f32.mrf.mxu0
    %v2226 = vadd.f32 0.0, %v2225
    %v2227 = vpop.f32.mrf.mxu0
    %v2228 = vadd.f32 0.0, %v2227
    %2229 = vmatmul.bf16.gmra.mxu0 %v2214
    %v2230 = vpop.f32.mrf.mxu0
    %v2231 = vadd.f32 0.0, %v2230
    %v2232 = vpop.f32.mrf.mxu0
    %v2233 = vadd.f32 0.0, %v2232
    %2234 = vdwg.mxu0
    %v2235 = vmul.f32 %v2226, %v1241
    %v2236 = vmul.f32 %v2228, %v1241
    %v2237 = vmul.f32 %v2231, %v1241
    %v2238 = vmul.f32 %v2233, %v1241
    %v2239 = vadd.f32 %v2177, %v2235
    %v2240 = vadd.f32 %v2178, %v2236
    %v2241 = vadd.f32 %v2179, %v2237
    %v2242 = vadd.f32 %v2180, %v2238
    %2244 = vset.pattern.permute.xlu0 0
    %2245 = vperm.xlu0 %2244, %v1693
    %v2246 = vpop.permute.xlu0 %2245
    %2249 = vset.pattern.permute.xlu0 0
    %2250 = vperm.xlu0 %2249, %v1694
    %v2251 = vpop.permute.xlu0 %2250
    %2254 = vset.pattern.permute.xlu0 0
    %2255 = vperm.xlu0 %2254, %v1695
    %v2256 = vpop.permute.xlu0 %2255
    %2259 = vset.pattern.permute.xlu0 0
    %2260 = vperm.xlu0 %2259, %v1696
    %v2261 = vpop.permute.xlu0 %2260
    %v2263 = vadd.f32 %v2239, %v2246
    %v2264 = vadd.f32 %v2240, %v2251
    %v2265 = vadd.f32 %v2241, %v2256
    %v2266 = vadd.f32 %v2242, %v2261
    %s2267 = scalar_lea.vmem %s11, 32
    %v2268 = vld [vmem:[%s2267] sm:$0xff]
    %v2269 = vld [vmem:[%s2267 + $0x8] sm:$0xff]
    %v2270 = vld [vmem:[%s2267 + $0x10] sm:$0xff]
    %v2271 = vld [vmem:[%s2267 + $0x18] sm:$0xff]
    %s2272 = scalar_lea.vmem %s12, 32
    %v2273 = vld [vmem:[%s2272] sm:$0xff]
    %v2274 = vld [vmem:[%s2272 + $0x8] sm:$0xff]
    %v2275 = vld [vmem:[%s2272 + $0x10] sm:$0xff]
    %v2276 = vld [vmem:[%s2272 + $0x18] sm:$0xff]
    %2277 = vadd.xlane.f32.xlu0 %v2263
    %v2278 = vpop.xlane.xlu0 %2277
    %2279 = vadd.xlane.f32.xlu0 %v2264
    %v2280 = vpop.xlane.xlu0 %2279
    %2281 = vadd.xlane.f32.xlu0 %v2265
    %v2282 = vpop.xlane.xlu0 %2281
    %2283 = vadd.xlane.f32.xlu0 %v2266
    %v2284 = vpop.xlane.xlu0 %2283
    %v2285 = vmul.f32 %v2278, %v567
    %v2286 = vmul.f32 %v2280, %v567
    %v2287 = vmul.f32 %v2282, %v567
    %v2288 = vmul.f32 %v2284, %v567
    %v2289 = vsub.f32 %v2263, %v2285
    %v2290 = vsub.f32 %v2264, %v2286
    %v2291 = vsub.f32 %v2265, %v2287
    %v2292 = vsub.f32 %v2266, %v2288
    %v2293 = vmul.f32 %v2289, %v2289
    %v2294 = vmul.f32 %v2290, %v2290
    %v2295 = vmul.f32 %v2291, %v2291
    %v2296 = vmul.f32 %v2292, %v2292
    %2297 = vadd.xlane.f32.xlu0 %v2293
    %v2298 = vpop.xlane.xlu0 %2297
    %2299 = vadd.xlane.f32.xlu0 %v2294
    %v2300 = vpop.xlane.xlu0 %2299
    %2301 = vadd.xlane.f32.xlu0 %v2295
    %v2302 = vpop.xlane.xlu0 %2301
    %2303 = vadd.xlane.f32.xlu0 %v2296
    %v2304 = vpop.xlane.xlu0 %2303
    %v2305 = vmul.f32 %v2298, %v567
    %v2306 = vmul.f32 %v2300, %v567
    %v2307 = vmul.f32 %v2302, %v567
    %v2308 = vmul.f32 %v2304, %v567
    %v2309 = vadd.f32 %v2305, 1e-05
    %v2310 = vadd.f32 %v2306, 1e-05
    %v2311 = vadd.f32 %v2307, 1e-05
    %v2312 = vadd.f32 %v2308, 1e-05
    %v2313 = vrsqrt.pop %v2309
    %v2314 = vmul.f32 %v2313, %v2309
    %v2315 = vmul.f32 %v2314, %v2313
    %v2316 = vmul.f32 0.5, %v2315
    %v2317 = vsub.f32 1.5, %v2316
    %v2318 = vmul.f32 %v2313, %v2317
    %vm2319 = vweird.f32 %v2309
    %vm2320 = vweird.f32 %v2313
    %vm2321 = vmor %vm2319, %vm2320
    %v2322 = vsel %vm2321, %v2313, %v2318
    %v2323 = vrsqrt.pop %v2310
    %v2324 = vmul.f32 %v2323, %v2310
    %v2325 = vmul.f32 %v2324, %v2323
    %v2326 = vmul.f32 0.5, %v2325
    %v2327 = vsub.f32 1.5, %v2326
    %v2328 = vmul.f32 %v2323, %v2327
    %vm2329 = vweird.f32 %v2310
    %vm2330 = vweird.f32 %v2323
    %vm2331 = vmor %vm2329, %vm2330
    %v2332 = vsel %vm2331, %v2323, %v2328
    %v2333 = vrsqrt.pop %v2311
    %v2334 = vmul.f32 %v2333, %v2311
    %v2335 = vmul.f32 %v2334, %v2333
    %v2336 = vmul.f32 0.5, %v2335
    %v2337 = vsub.f32 1.5, %v2336
    %v2338 = vmul.f32 %v2333, %v2337
    %vm2339 = vweird.f32 %v2311
    %vm2340 = vweird.f32 %v2333
    %vm2341 = vmor %vm2339, %vm2340
    %v2342 = vsel %vm2341, %v2333, %v2338
    %v2343 = vrsqrt.pop %v2312
    %v2344 = vmul.f32 %v2343, %v2312
    %v2345 = vmul.f32 %v2344, %v2343
    %v2346 = vmul.f32 0.5, %v2345
    %v2347 = vsub.f32 1.5, %v2346
    %v2348 = vmul.f32 %v2343, %v2347
    %vm2349 = vweird.f32 %v2312
    %vm2350 = vweird.f32 %v2343
    %vm2351 = vmor %vm2349, %vm2350
    %v2352 = vsel %vm2351, %v2343, %v2348
    %v2353 = vmul.f32 %v2289, %v2322
    %v2354 = vmul.f32 %v2290, %v2332
    %v2355 = vmul.f32 %v2291, %v2342
    %v2356 = vmul.f32 %v2292, %v2352
    %2358 = vset.pattern.permute.xlu0 0
    %2359 = vperm.xlu0 %2358, %v2268
    %v2360 = vpop.permute.xlu0 %2359
    %2363 = vset.pattern.permute.xlu0 0
    %2364 = vperm.xlu0 %2363, %v2269
    %v2365 = vpop.permute.xlu0 %2364
    %2368 = vset.pattern.permute.xlu0 0
    %2369 = vperm.xlu0 %2368, %v2270
    %v2370 = vpop.permute.xlu0 %2369
    %2373 = vset.pattern.permute.xlu0 0
    %2374 = vperm.xlu0 %2373, %v2271
    %v2375 = vpop.permute.xlu0 %2374
    %v2377 = vmul.f32 %v2353, %v2360
    %v2378 = vmul.f32 %v2354, %v2365
    %v2379 = vmul.f32 %v2355, %v2370
    %v2380 = vmul.f32 %v2356, %v2375
    %2382 = vset.pattern.permute.xlu0 0
    %2383 = vperm.xlu0 %2382, %v2273
    %v2384 = vpop.permute.xlu0 %2383
    %2387 = vset.pattern.permute.xlu0 0
    %2388 = vperm.xlu0 %2387, %v2274
    %v2389 = vpop.permute.xlu0 %2388
    %2392 = vset.pattern.permute.xlu0 0
    %2393 = vperm.xlu0 %2392, %v2275
    %v2394 = vpop.permute.xlu0 %2393
    %2397 = vset.pattern.permute.xlu0 0
    %2398 = vperm.xlu0 %2397, %v2276
    %v2399 = vpop.permute.xlu0 %2398
    %v2401 = vadd.f32 %v2377, %v2384
    %v2402 = vadd.f32 %v2378, %v2389
    %v2403 = vadd.f32 %v2379, %v2394
    %v2404 = vadd.f32 %v2380, %v2399
    %v2405 = vmax.f32 %v2401, 0.0
    %v2406 = vmax.f32 %v2402, 0.0
    %v2407 = vmax.f32 %v2403, 0.0
    %v2408 = vmax.f32 %v2404, 0.0
    %s2409 = scalar_lea.vmem %s13, 16
    %v2410 = vld [vmem:[%s2409] sm:$0xf]
    %v2411 = vld [vmem:[%s2409 + $0x4] sm:$0xf]
    %v2412 = vld [vmem:[%s2409 + $0x8] sm:$0xf]
    %v2413 = vld [vmem:[%s2409 + $0xc] sm:$0xf]
    %v2414 = vpack.c.bf16 %v2406, %v2405
    %v2415 = vpack.c.bf16 %v2408, %v2407
    %s2416 = scalar_lea.vmem %s14, 32
    %v2417 = vld [vmem:[%s2416] sm:$0xff]
    %v2418 = vld [vmem:[%s2416 + $0x8] sm:$0xff]
    %v2419 = vld [vmem:[%s2416 + $0x10] sm:$0xff]
    %v2420 = vld [vmem:[%s2416 + $0x18] sm:$0xff]
    %2422 = vset.pattern.permute.xlu0 0
    %2423 = vperm.xlu0 %2422, %v2417
    %v2424 = vpop.permute.xlu0 %2423
    %2427 = vset.pattern.permute.xlu0 0
    %2428 = vperm.xlu0 %2427, %v2418
    %v2429 = vpop.permute.xlu0 %2428
    %2432 = vset.pattern.permute.xlu0 0
    %2433 = vperm.xlu0 %2432, %v2419
    %v2434 = vpop.permute.xlu0 %2433
    %2437 = vset.pattern.permute.xlu0 0
    %2438 = vperm.xlu0 %2437, %v2420
    %v2439 = vpop.permute.xlu0 %2438
    %v2445 = vunpack.c.l.b16 %v2410
    %v2446 = vunpack.c.l.b16 %v2411
    %v2447 = vunpack.c.l.b16 %v2412
    %v2448 = vunpack.c.l.b16 %v2413
    %v2449 = vpack.c.b16 %v2446, %v2445
    %v2450 = vpack.c.b16 %v2448, %v2447
    %v2452 = vsel %vm519, %v2449, 0
    %v2455 = vsel %vm519, %v2450, 0
    %2457 = vmatpush.bf16.msra.mxu0 0
    %2458 = vmatpush.bf16.msra.mxu0 0
    %2459 = vmatpush.bf16.msra.mxu0 0
    %2460 = vmatpush.bf16.msra.mxu0 0
    %2461 = vmatpush.bf16.msra.mxu0 0
    %2462 = vmatpush.bf16.msra.mxu0 0
    %2463 = vmatpush.bf16.msra.mxu0 %v2415
    %2464 = vmatpush.bf16.msra.mxu0 %v2414
    %2465 = vmatmul.bf16.gmra.mxu0 %v2452
    %v2466 = vpop.f32.mrf.mxu0
    %v2467 = vadd.f32 %v2424, %v2466
    %v2468 = vpop.f32.mrf.mxu0
    %v2469 = vadd.f32 %v2429, %v2468
    %2470 = vmatmul.bf16.gmra.mxu0 %v2455
    %v2471 = vpop.f32.mrf.mxu0
    %v2472 = vadd.f32 %v2434, %v2471
    %v2473 = vpop.f32.mrf.mxu0
    %v2474 = vadd.f32 %v2439, %v2473
    %2475 = vdwg.mxu0
    %v2476 = vadd.f32 %v2467, %v1479
    %v2477 = vadd.f32 %v2469, %v1480
    %v2478 = vadd.f32 %v2472, %v1481
    %v2479 = vadd.f32 %v2474, %v1482
    %s2480 = scalar_lea.vmem %s5, 32
    %v2481 = vld [vmem:[%s2480] sm:$0xf]
    %v2482 = vld [vmem:[%s2480 + $0x4] sm:$0xf]
    %v2483 = vld [vmem:[%s2480 + $0x8] sm:$0xf]
    %v2484 = vld [vmem:[%s2480 + $0xc] sm:$0xf]
    %v2485 = vpack.c.bf16 %v2477, %v2476
    %v2486 = vpack.c.bf16 %v2479, %v2478
    %s2487 = scalar_lea.vmem %s6, 64
    %v2488 = vld [vmem:[%s2487] sm:$0xff]
    %v2489 = vld [vmem:[%s2487 + $0x8] sm:$0xff]
    %v2490 = vld [vmem:[%s2487 + $0x10] sm:$0xff]
    %v2491 = vld [vmem:[%s2487 + $0x18] sm:$0xff]
    %2493 = vset.pattern.permute.xlu0 0
    %2494 = vperm.xlu0 %2493, %v2488
    %v2495 = vpop.permute.xlu0 %2494
    %2498 = vset.pattern.permute.xlu0 0
    %2499 = vperm.xlu0 %2498, %v2489
    %v2500 = vpop.permute.xlu0 %2499
    %2503 = vset.pattern.permute.xlu0 0
    %2504 = vperm.xlu0 %2503, %v2490
    %v2505 = vpop.permute.xlu0 %2504
    %2508 = vset.pattern.permute.xlu0 0
    %2509 = vperm.xlu0 %2508, %v2491
    %v2510 = vpop.permute.xlu0 %2509
    %v2516 = vunpack.c.l.b16 %v2481
    %v2517 = vunpack.c.l.b16 %v2482
    %v2518 = vunpack.c.l.b16 %v2483
    %v2519 = vunpack.c.l.b16 %v2484
    %v2520 = vpack.c.b16 %v2517, %v2516
    %v2521 = vpack.c.b16 %v2519, %v2518
    %v2523 = vsel %vm519, %v2520, 0
    %v2526 = vsel %vm519, %v2521, 0
    %2528 = vmatpush.bf16.msra.mxu0 0
    %2529 = vmatpush.bf16.msra.mxu0 0
    %2530 = vmatpush.bf16.msra.mxu0 0
    %2531 = vmatpush.bf16.msra.mxu0 0
    %2532 = vmatpush.bf16.msra.mxu0 0
    %2533 = vmatpush.bf16.msra.mxu0 0
    %2534 = vmatpush.bf16.msra.mxu0 %v2486
    %2535 = vmatpush.bf16.msra.mxu0 %v2485
    %2536 = vmatmul.bf16.gmra.mxu0 %v2523
    %v2537 = vpop.f32.mrf.mxu0
    %v2538 = vadd.f32 %v2495, %v2537
    %v2539 = vpop.f32.mrf.mxu0
    %v2540 = vadd.f32 %v2500, %v2539
    %2541 = vmatmul.bf16.gmra.mxu0 %v2526
    %v2542 = vpop.f32.mrf.mxu0
    %v2543 = vadd.f32 %v2505, %v2542
    %v2544 = vpop.f32.mrf.mxu0
    %v2545 = vadd.f32 %v2510, %v2544
    %2546 = vdwg.mxu0
    %s2547 = scalar_lea.vmem %s7, 64
    %v2548 = vld [vmem:[%s2547] sm:$0xff]
    %v2549 = vld [vmem:[%s2547 + $0x8] sm:$0xff]
    %v2550 = vld [vmem:[%s2547 + $0x10] sm:$0xff]
    %v2551 = vld [vmem:[%s2547 + $0x18] sm:$0xff]
    %s2552 = scalar_lea.vmem %s8, 64
    %v2553 = vld [vmem:[%s2552] sm:$0xff]
    %v2554 = vld [vmem:[%s2552 + $0x8] sm:$0xff]
    %v2555 = vld [vmem:[%s2552 + $0x10] sm:$0xff]
    %v2556 = vld [vmem:[%s2552 + $0x18] sm:$0xff]
    %2557 = vadd.xlane.f32.xlu0 %v2538
    %v2558 = vpop.xlane.xlu0 %2557
    %2559 = vadd.xlane.f32.xlu0 %v2540
    %v2560 = vpop.xlane.xlu0 %2559
    %2561 = vadd.xlane.f32.xlu0 %v2543
    %v2562 = vpop.xlane.xlu0 %2561
    %2563 = vadd.xlane.f32.xlu0 %v2545
    %v2564 = vpop.xlane.xlu0 %2563
    %v2565 = vmul.f32 %v2558, %v567
    %v2566 = vmul.f32 %v2560, %v567
    %v2567 = vmul.f32 %v2562, %v567
    %v2568 = vmul.f32 %v2564, %v567
    %v2569 = vsub.f32 %v2538, %v2565
    %v2570 = vsub.f32 %v2540, %v2566
    %v2571 = vsub.f32 %v2543, %v2567
    %v2572 = vsub.f32 %v2545, %v2568
    %v2573 = vmul.f32 %v2569, %v2569
    %v2574 = vmul.f32 %v2570, %v2570
    %v2575 = vmul.f32 %v2571, %v2571
    %v2576 = vmul.f32 %v2572, %v2572
    %2577 = vadd.xlane.f32.xlu0 %v2573
    %v2578 = vpop.xlane.xlu0 %2577
    %2579 = vadd.xlane.f32.xlu0 %v2574
    %v2580 = vpop.xlane.xlu0 %2579
    %2581 = vadd.xlane.f32.xlu0 %v2575
    %v2582 = vpop.xlane.xlu0 %2581
    %2583 = vadd.xlane.f32.xlu0 %v2576
    %v2584 = vpop.xlane.xlu0 %2583
    %v2585 = vmul.f32 %v2578, %v567
    %v2586 = vmul.f32 %v2580, %v567
    %v2587 = vmul.f32 %v2582, %v567
    %v2588 = vmul.f32 %v2584, %v567
    %v2589 = vadd.f32 %v2585, 1e-05
    %v2590 = vadd.f32 %v2586, 1e-05
    %v2591 = vadd.f32 %v2587, 1e-05
    %v2592 = vadd.f32 %v2588, 1e-05
    %v2593 = vrsqrt.pop %v2589
    %v2594 = vmul.f32 %v2593, %v2589
    %v2595 = vmul.f32 %v2594, %v2593
    %v2596 = vmul.f32 0.5, %v2595
    %v2597 = vsub.f32 1.5, %v2596
    %v2598 = vmul.f32 %v2593, %v2597
    %vm2599 = vweird.f32 %v2589
    %vm2600 = vweird.f32 %v2593
    %vm2601 = vmor %vm2599, %vm2600
    %v2602 = vsel %vm2601, %v2593, %v2598
    %v2603 = vrsqrt.pop %v2590
    %v2604 = vmul.f32 %v2603, %v2590
    %v2605 = vmul.f32 %v2604, %v2603
    %v2606 = vmul.f32 0.5, %v2605
    %v2607 = vsub.f32 1.5, %v2606
    %v2608 = vmul.f32 %v2603, %v2607
    %vm2609 = vweird.f32 %v2590
    %vm2610 = vweird.f32 %v2603
    %vm2611 = vmor %vm2609, %vm2610
    %v2612 = vsel %vm2611, %v2603, %v2608
    %v2613 = vrsqrt.pop %v2591
    %v2614 = vmul.f32 %v2613, %v2591
    %v2615 = vmul.f32 %v2614, %v2613
    %v2616 = vmul.f32 0.5, %v2615
    %v2617 = vsub.f32 1.5, %v2616
    %v2618 = vmul.f32 %v2613, %v2617
    %vm2619 = vweird.f32 %v2591
    %vm2620 = vweird.f32 %v2613
    %vm2621 = vmor %vm2619, %vm2620
    %v2622 = vsel %vm2621, %v2613, %v2618
    %v2623 = vrsqrt.pop %v2592
    %v2624 = vmul.f32 %v2623, %v2592
    %v2625 = vmul.f32 %v2624, %v2623
    %v2626 = vmul.f32 0.5, %v2625
    %v2627 = vsub.f32 1.5, %v2626
    %v2628 = vmul.f32 %v2623, %v2627
    %vm2629 = vweird.f32 %v2592
    %vm2630 = vweird.f32 %v2623
    %vm2631 = vmor %vm2629, %vm2630
    %v2632 = vsel %vm2631, %v2623, %v2628
    %v2633 = vmul.f32 %v2569, %v2602
    %v2634 = vmul.f32 %v2570, %v2612
    %v2635 = vmul.f32 %v2571, %v2622
    %v2636 = vmul.f32 %v2572, %v2632
    %2638 = vset.pattern.permute.xlu0 0
    %2639 = vperm.xlu0 %2638, %v2548
    %v2640 = vpop.permute.xlu0 %2639
    %2643 = vset.pattern.permute.xlu0 0
    %2644 = vperm.xlu0 %2643, %v2549
    %v2645 = vpop.permute.xlu0 %2644
    %2648 = vset.pattern.permute.xlu0 0
    %2649 = vperm.xlu0 %2648, %v2550
    %v2650 = vpop.permute.xlu0 %2649
    %2653 = vset.pattern.permute.xlu0 0
    %2654 = vperm.xlu0 %2653, %v2551
    %v2655 = vpop.permute.xlu0 %2654
    %v2657 = vmul.f32 %v2633, %v2640
    %v2658 = vmul.f32 %v2634, %v2645
    %v2659 = vmul.f32 %v2635, %v2650
    %v2660 = vmul.f32 %v2636, %v2655
    %2662 = vset.pattern.permute.xlu0 0
    %2663 = vperm.xlu0 %2662, %v2553
    %v2664 = vpop.permute.xlu0 %2663
    %2667 = vset.pattern.permute.xlu0 0
    %2668 = vperm.xlu0 %2667, %v2554
    %v2669 = vpop.permute.xlu0 %2668
    %2672 = vset.pattern.permute.xlu0 0
    %2673 = vperm.xlu0 %2672, %v2555
    %v2674 = vpop.permute.xlu0 %2673
    %2677 = vset.pattern.permute.xlu0 0
    %2678 = vperm.xlu0 %2677, %v2556
    %v2679 = vpop.permute.xlu0 %2678
    %v2681 = vadd.f32 %v2657, %v2664
    %v2682 = vadd.f32 %v2658, %v2669
    %v2683 = vadd.f32 %v2659, %v2674
    %v2684 = vadd.f32 %v2660, %v2679
    %v2685 = vmax.f32 %v2681, 0.0
    %v2686 = vmax.f32 %v2682, 0.0
    %v2687 = vmax.f32 %v2683, 0.0
    %v2688 = vmax.f32 %v2684, 0.0
    %s2689 = scalar_lea.vmem %s10, 64
    %v2690 = vld [vmem:[%s2689] sm:$0xff]
    %v2691 = vld [vmem:[%s2689 + $0x8] sm:$0xff]
    %v2692 = vld [vmem:[%s2689 + $0x10] sm:$0xff]
    %v2693 = vld [vmem:[%s2689 + $0x18] sm:$0xff]
    %2698 = vrot.lane.b32.xlu0 %v2685, 9
    %v2699 = vpop.permute.xlu0 %2698
    %2700 = vrot.lane.b32.xlu0 %v2686, 9
    %v2701 = vpop.permute.xlu0 %2700
    %2702 = vrot.lane.b32.xlu0 %v2687, 9
    %v2703 = vpop.permute.xlu0 %2702
    %2704 = vrot.lane.b32.xlu0 %v2688, 9
    %v2705 = vpop.permute.xlu0 %2704
    %v2710 = vpack.c.bf16 %v2701, %v2699
    %v2711 = vpack.c.bf16 %v2705, %v2703
    %s2712 = scalar_lea.vmem [#allocation2], 288
    %v2713 = vld [vmem:[%s2712] sm:$0xf]
    %v2714 = vld [vmem:[%s2712 + $0x4] sm:$0xf]
    %v2715 = vld [vmem:[%s2712 + $0x8] sm:$0xf]
    %v2716 = vld [vmem:[%s2712 + $0xc] sm:$0xf]
    %v2721 = vunpack.c.l.b16 %v2713
    %v2722 = vunpack.c.l.b16 %v2714
    %v2723 = vunpack.c.l.b16 %v2715
    %v2724 = vunpack.c.l.b16 %v2716
    %v2725 = vpack.c.b16 %v2722, %v2721
    %v2726 = vpack.c.b16 %v2724, %v2723
    %v2728 = vsel %vm519, %v2725, 0
    %v2731 = vsel %vm519, %v2726, 0
    %2733 = vmatpush.bf16.msra.mxu0 0
    %2734 = vmatpush.bf16.msra.mxu0 0
    %2735 = vmatpush.bf16.msra.mxu0 0
    %2736 = vmatpush.bf16.msra.mxu0 0
    %2737 = vmatpush.bf16.msra.mxu0 0
    %2738 = vmatpush.bf16.msra.mxu0 0
    %2739 = vmatpush.bf16.msra.mxu0 %v2711
    %2740 = vmatpush.bf16.msra.mxu0 %v2710
    %2741 = vmatmul.bf16.gmra.mxu0 %v2728
    %v2742 = vpop.f32.mrf.mxu0
    %v2743 = vadd.f32 0.0, %v2742
    %v2744 = vpop.f32.mrf.mxu0
    %v2745 = vadd.f32 0.0, %v2744
    %2746 = vmatmul.bf16.gmra.mxu0 %v2731
    %v2747 = vpop.f32.mrf.mxu0
    %v2748 = vadd.f32 0.0, %v2747
    %v2749 = vpop.f32.mrf.mxu0
    %v2750 = vadd.f32 0.0, %v2749
    %2751 = vdwg.mxu0
    %v2752 = vmul.f32 %v2743, %v753
    %v2753 = vmul.f32 %v2745, %v753
    %v2754 = vmul.f32 %v2748, %v753
    %v2755 = vmul.f32 %v2750, %v753
    %2756 = vrot.lane.b32.xlu0 %v2685, 8
    %v2757 = vpop.permute.xlu0 %2756
    %2758 = vrot.lane.b32.xlu0 %v2686, 8
    %v2759 = vpop.permute.xlu0 %2758
    %2760 = vrot.lane.b32.xlu0 %v2687, 8
    %v2761 = vpop.permute.xlu0 %2760
    %2762 = vrot.lane.b32.xlu0 %v2688, 8
    %v2763 = vpop.permute.xlu0 %2762
    %v2768 = vpack.c.bf16 %v2759, %v2757
    %v2769 = vpack.c.bf16 %v2763, %v2761
    %s2770 = scalar_lea.vmem [#allocation2], 304
    %v2771 = vld [vmem:[%s2770] sm:$0xf]
    %v2772 = vld [vmem:[%s2770 + $0x4] sm:$0xf]
    %v2773 = vld [vmem:[%s2770 + $0x8] sm:$0xf]
    %v2774 = vld [vmem:[%s2770 + $0xc] sm:$0xf]
    %v2779 = vunpack.c.l.b16 %v2771
    %v2780 = vunpack.c.l.b16 %v2772
    %v2781 = vunpack.c.l.b16 %v2773
    %v2782 = vunpack.c.l.b16 %v2774
    %v2783 = vpack.c.b16 %v2780, %v2779
    %v2784 = vpack.c.b16 %v2782, %v2781
    %v2786 = vsel %vm519, %v2783, 0
    %v2789 = vsel %vm519, %v2784, 0
    %2791 = vmatpush.bf16.msra.mxu0 0
    %2792 = vmatpush.bf16.msra.mxu0 0
    %2793 = vmatpush.bf16.msra.mxu0 0
    %2794 = vmatpush.bf16.msra.mxu0 0
    %2795 = vmatpush.bf16.msra.mxu0 0
    %2796 = vmatpush.bf16.msra.mxu0 0
    %2797 = vmatpush.bf16.msra.mxu0 %v2769
    %2798 = vmatpush.bf16.msra.mxu0 %v2768
    %2799 = vmatmul.bf16.gmra.mxu0 %v2786
    %v2800 = vpop.f32.mrf.mxu0
    %v2801 = vadd.f32 0.0, %v2800
    %v2802 = vpop.f32.mrf.mxu0
    %v2803 = vadd.f32 0.0, %v2802
    %2804 = vmatmul.bf16.gmra.mxu0 %v2789
    %v2805 = vpop.f32.mrf.mxu0
    %v2806 = vadd.f32 0.0, %v2805
    %v2807 = vpop.f32.mrf.mxu0
    %v2808 = vadd.f32 0.0, %v2807
    %2809 = vdwg.mxu0
    %v2810 = vmul.f32 %v2801, %v812
    %v2811 = vmul.f32 %v2803, %v812
    %v2812 = vmul.f32 %v2806, %v812
    %v2813 = vmul.f32 %v2808, %v812
    %v2814 = vadd.f32 %v2752, %v2810
    %v2815 = vadd.f32 %v2753, %v2811
    %v2816 = vadd.f32 %v2754, %v2812
    %v2817 = vadd.f32 %v2755, %v2813
    %2818 = vrot.lane.b32.xlu0 %v2685, 7
    %v2819 = vpop.permute.xlu0 %2818
    %2820 = vrot.lane.b32.xlu0 %v2686, 7
    %v2821 = vpop.permute.xlu0 %2820
    %2822 = vrot.lane.b32.xlu0 %v2687, 7
    %v2823 = vpop.permute.xlu0 %2822
    %2824 = vrot.lane.b32.xlu0 %v2688, 7
    %v2825 = vpop.permute.xlu0 %2824
    %v2830 = vpack.c.bf16 %v2821, %v2819
    %v2831 = vpack.c.bf16 %v2825, %v2823
    %s2832 = scalar_lea.vmem [#allocation2], 320
    %v2833 = vld [vmem:[%s2832] sm:$0xf]
    %v2834 = vld [vmem:[%s2832 + $0x4] sm:$0xf]
    %v2835 = vld [vmem:[%s2832 + $0x8] sm:$0xf]
    %v2836 = vld [vmem:[%s2832 + $0xc] sm:$0xf]
    %v2841 = vunpack.c.l.b16 %v2833
    %v2842 = vunpack.c.l.b16 %v2834
    %v2843 = vunpack.c.l.b16 %v2835
    %v2844 = vunpack.c.l.b16 %v2836
    %v2845 = vpack.c.b16 %v2842, %v2841
    %v2846 = vpack.c.b16 %v2844, %v2843
    %v2848 = vsel %vm519, %v2845, 0
    %v2851 = vsel %vm519, %v2846, 0
    %2853 = vmatpush.bf16.msra.mxu0 0
    %2854 = vmatpush.bf16.msra.mxu0 0
    %2855 = vmatpush.bf16.msra.mxu0 0
    %2856 = vmatpush.bf16.msra.mxu0 0
    %2857 = vmatpush.bf16.msra.mxu0 0
    %2858 = vmatpush.bf16.msra.mxu0 0
    %2859 = vmatpush.bf16.msra.mxu0 %v2831
    %2860 = vmatpush.bf16.msra.mxu0 %v2830
    %2861 = vmatmul.bf16.gmra.mxu0 %v2848
    %v2862 = vpop.f32.mrf.mxu0
    %v2863 = vadd.f32 0.0, %v2862
    %v2864 = vpop.f32.mrf.mxu0
    %v2865 = vadd.f32 0.0, %v2864
    %2866 = vmatmul.bf16.gmra.mxu0 %v2851
    %v2867 = vpop.f32.mrf.mxu0
    %v2868 = vadd.f32 0.0, %v2867
    %v2869 = vpop.f32.mrf.mxu0
    %v2870 = vadd.f32 0.0, %v2869
    %2871 = vdwg.mxu0
    %v2872 = vmul.f32 %v2863, %v875
    %v2873 = vmul.f32 %v2865, %v875
    %v2874 = vmul.f32 %v2868, %v875
    %v2875 = vmul.f32 %v2870, %v875
    %v2876 = vadd.f32 %v2814, %v2872
    %v2877 = vadd.f32 %v2815, %v2873
    %v2878 = vadd.f32 %v2816, %v2874
    %v2879 = vadd.f32 %v2817, %v2875
    %2880 = vrot.lane.b32.xlu0 %v2685, 1
    %v2881 = vpop.permute.xlu0 %2880
    %2882 = vrot.lane.b32.xlu0 %v2686, 1
    %v2883 = vpop.permute.xlu0 %2882
    %2884 = vrot.lane.b32.xlu0 %v2687, 1
    %v2885 = vpop.permute.xlu0 %2884
    %2886 = vrot.lane.b32.xlu0 %v2688, 1
    %v2887 = vpop.permute.xlu0 %2886
    %v2892 = vpack.c.bf16 %v2883, %v2881
    %v2893 = vpack.c.bf16 %v2887, %v2885
    %s2894 = scalar_lea.vmem [#allocation2], 336
    %v2895 = vld [vmem:[%s2894] sm:$0xf]
    %v2896 = vld [vmem:[%s2894 + $0x4] sm:$0xf]
    %v2897 = vld [vmem:[%s2894 + $0x8] sm:$0xf]
    %v2898 = vld [vmem:[%s2894 + $0xc] sm:$0xf]
    %v2903 = vunpack.c.l.b16 %v2895
    %v2904 = vunpack.c.l.b16 %v2896
    %v2905 = vunpack.c.l.b16 %v2897
    %v2906 = vunpack.c.l.b16 %v2898
    %v2907 = vpack.c.b16 %v2904, %v2903
    %v2908 = vpack.c.b16 %v2906, %v2905
    %v2910 = vsel %vm519, %v2907, 0
    %v2913 = vsel %vm519, %v2908, 0
    %2915 = vmatpush.bf16.msra.mxu0 0
    %2916 = vmatpush.bf16.msra.mxu0 0
    %2917 = vmatpush.bf16.msra.mxu0 0
    %2918 = vmatpush.bf16.msra.mxu0 0
    %2919 = vmatpush.bf16.msra.mxu0 0
    %2920 = vmatpush.bf16.msra.mxu0 0
    %2921 = vmatpush.bf16.msra.mxu0 %v2893
    %2922 = vmatpush.bf16.msra.mxu0 %v2892
    %2923 = vmatmul.bf16.gmra.mxu0 %v2910
    %v2924 = vpop.f32.mrf.mxu0
    %v2925 = vadd.f32 0.0, %v2924
    %v2926 = vpop.f32.mrf.mxu0
    %v2927 = vadd.f32 0.0, %v2926
    %2928 = vmatmul.bf16.gmra.mxu0 %v2913
    %v2929 = vpop.f32.mrf.mxu0
    %v2930 = vadd.f32 0.0, %v2929
    %v2931 = vpop.f32.mrf.mxu0
    %v2932 = vadd.f32 0.0, %v2931
    %2933 = vdwg.mxu0
    %v2934 = vmul.f32 %v2925, %v938
    %v2935 = vmul.f32 %v2927, %v938
    %v2936 = vmul.f32 %v2930, %v938
    %v2937 = vmul.f32 %v2932, %v938
    %v2938 = vadd.f32 %v2876, %v2934
    %v2939 = vadd.f32 %v2877, %v2935
    %v2940 = vadd.f32 %v2878, %v2936
    %v2941 = vadd.f32 %v2879, %v2937
    %v2942 = vpack.c.bf16 %v2686, %v2685
    %v2943 = vpack.c.bf16 %v2688, %v2687
    %s2944 = scalar_lea.vmem [#allocation2], 352
    %v2945 = vld [vmem:[%s2944] sm:$0xf]
    %v2946 = vld [vmem:[%s2944 + $0x4] sm:$0xf]
    %v2947 = vld [vmem:[%s2944 + $0x8] sm:$0xf]
    %v2948 = vld [vmem:[%s2944 + $0xc] sm:$0xf]
    %v2953 = vunpack.c.l.b16 %v2945
    %v2954 = vunpack.c.l.b16 %v2946
    %v2955 = vunpack.c.l.b16 %v2947
    %v2956 = vunpack.c.l.b16 %v2948
    %v2957 = vpack.c.b16 %v2954, %v2953
    %v2958 = vpack.c.b16 %v2956, %v2955
    %v2960 = vsel %vm519, %v2957, 0
    %v2963 = vsel %vm519, %v2958, 0
    %2965 = vmatpush.bf16.msra.mxu0 0
    %2966 = vmatpush.bf16.msra.mxu0 0
    %2967 = vmatpush.bf16.msra.mxu0 0
    %2968 = vmatpush.bf16.msra.mxu0 0
    %2969 = vmatpush.bf16.msra.mxu0 0
    %2970 = vmatpush.bf16.msra.mxu0 0
    %2971 = vmatpush.bf16.msra.mxu0 %v2943
    %2972 = vmatpush.bf16.msra.mxu0 %v2942
    %2973 = vmatmul.bf16.gmra.mxu0 %v2960
    %v2974 = vpop.f32.mrf.mxu0
    %v2975 = vadd.f32 0.0, %v2974
    %v2976 = vpop.f32.mrf.mxu0
    %v2977 = vadd.f32 0.0, %v2976
    %2978 = vmatmul.bf16.gmra.mxu0 %v2963
    %v2979 = vpop.f32.mrf.mxu0
    %v2980 = vadd.f32 0.0, %v2979
    %v2981 = vpop.f32.mrf.mxu0
    %v2982 = vadd.f32 0.0, %v2981
    %2983 = vdwg.mxu0
    %v2984 = vmul.f32 %v2975, %v989
    %v2985 = vmul.f32 %v2977, %v989
    %v2986 = vmul.f32 %v2980, %v989
    %v2987 = vmul.f32 %v2982, %v989
    %v2988 = vadd.f32 %v2938, %v2984
    %v2989 = vadd.f32 %v2939, %v2985
    %v2990 = vadd.f32 %v2940, %v2986
    %v2991 = vadd.f32 %v2941, %v2987
    %2992 = vrot.lane.b32.xlu0 %v2685, 127
    %v2993 = vpop.permute.xlu0 %2992
    %2994 = vrot.lane.b32.xlu0 %v2686, 127
    %v2995 = vpop.permute.xlu0 %2994
    %2996 = vrot.lane.b32.xlu0 %v2687, 127
    %v2997 = vpop.permute.xlu0 %2996
    %2998 = vrot.lane.b32.xlu0 %v2688, 127
    %v2999 = vpop.permute.xlu0 %2998
    %v3004 = vpack.c.bf16 %v2995, %v2993
    %v3005 = vpack.c.bf16 %v2999, %v2997
    %s3006 = scalar_lea.vmem [#allocation2], 368
    %v3007 = vld [vmem:[%s3006] sm:$0xf]
    %v3008 = vld [vmem:[%s3006 + $0x4] sm:$0xf]
    %v3009 = vld [vmem:[%s3006 + $0x8] sm:$0xf]
    %v3010 = vld [vmem:[%s3006 + $0xc] sm:$0xf]
    %v3015 = vunpack.c.l.b16 %v3007
    %v3016 = vunpack.c.l.b16 %v3008
    %v3017 = vunpack.c.l.b16 %v3009
    %v3018 = vunpack.c.l.b16 %v3010
    %v3019 = vpack.c.b16 %v3016, %v3015
    %v3020 = vpack.c.b16 %v3018, %v3017
    %v3022 = vsel %vm519, %v3019, 0
    %v3025 = vsel %vm519, %v3020, 0
    %3027 = vmatpush.bf16.msra.mxu0 0
    %3028 = vmatpush.bf16.msra.mxu0 0
    %3029 = vmatpush.bf16.msra.mxu0 0
    %3030 = vmatpush.bf16.msra.mxu0 0
    %3031 = vmatpush.bf16.msra.mxu0 0
    %3032 = vmatpush.bf16.msra.mxu0 0
    %3033 = vmatpush.bf16.msra.mxu0 %v3005
    %3034 = vmatpush.bf16.msra.mxu0 %v3004
    %3035 = vmatmul.bf16.gmra.mxu0 %v3022
    %v3036 = vpop.f32.mrf.mxu0
    %v3037 = vadd.f32 0.0, %v3036
    %v3038 = vpop.f32.mrf.mxu0
    %v3039 = vadd.f32 0.0, %v3038
    %3040 = vmatmul.bf16.gmra.mxu0 %v3025
    %v3041 = vpop.f32.mrf.mxu0
    %v3042 = vadd.f32 0.0, %v3041
    %v3043 = vpop.f32.mrf.mxu0
    %v3044 = vadd.f32 0.0, %v3043
    %3045 = vdwg.mxu0
    %v3046 = vmul.f32 %v3037, %v1052
    %v3047 = vmul.f32 %v3039, %v1052
    %v3048 = vmul.f32 %v3042, %v1052
    %v3049 = vmul.f32 %v3044, %v1052
    %v3050 = vadd.f32 %v2988, %v3046
    %v3051 = vadd.f32 %v2989, %v3047
    %v3052 = vadd.f32 %v2990, %v3048
    %v3053 = vadd.f32 %v2991, %v3049
    %3054 = vrot.lane.b32.xlu0 %v2685, 121
    %v3055 = vpop.permute.xlu0 %3054
    %3056 = vrot.lane.b32.xlu0 %v2686, 121
    %v3057 = vpop.permute.xlu0 %3056
    %3058 = vrot.lane.b32.xlu0 %v2687, 121
    %v3059 = vpop.permute.xlu0 %3058
    %3060 = vrot.lane.b32.xlu0 %v2688, 121
    %v3061 = vpop.permute.xlu0 %3060
    %v3066 = vpack.c.bf16 %v3057, %v3055
    %v3067 = vpack.c.bf16 %v3061, %v3059
    %s3068 = scalar_lea.vmem [#allocation2], 384
    %v3069 = vld [vmem:[%s3068] sm:$0xf]
    %v3070 = vld [vmem:[%s3068 + $0x4] sm:$0xf]
    %v3071 = vld [vmem:[%s3068 + $0x8] sm:$0xf]
    %v3072 = vld [vmem:[%s3068 + $0xc] sm:$0xf]
    %v3077 = vunpack.c.l.b16 %v3069
    %v3078 = vunpack.c.l.b16 %v3070
    %v3079 = vunpack.c.l.b16 %v3071
    %v3080 = vunpack.c.l.b16 %v3072
    %v3081 = vpack.c.b16 %v3078, %v3077
    %v3082 = vpack.c.b16 %v3080, %v3079
    %v3084 = vsel %vm519, %v3081, 0
    %v3087 = vsel %vm519, %v3082, 0
    %3089 = vmatpush.bf16.msra.mxu0 0
    %3090 = vmatpush.bf16.msra.mxu0 0
    %3091 = vmatpush.bf16.msra.mxu0 0
    %3092 = vmatpush.bf16.msra.mxu0 0
    %3093 = vmatpush.bf16.msra.mxu0 0
    %3094 = vmatpush.bf16.msra.mxu0 0
    %3095 = vmatpush.bf16.msra.mxu0 %v3067
    %3096 = vmatpush.bf16.msra.mxu0 %v3066
    %3097 = vmatmul.bf16.gmra.mxu0 %v3084
    %v3098 = vpop.f32.mrf.mxu0
    %v3099 = vadd.f32 0.0, %v3098
    %v3100 = vpop.f32.mrf.mxu0
    %v3101 = vadd.f32 0.0, %v3100
    %3102 = vmatmul.bf16.gmra.mxu0 %v3087
    %v3103 = vpop.f32.mrf.mxu0
    %v3104 = vadd.f32 0.0, %v3103
    %v3105 = vpop.f32.mrf.mxu0
    %v3106 = vadd.f32 0.0, %v3105
    %3107 = vdwg.mxu0
    %v3108 = vmul.f32 %v3099, %v1115
    %v3109 = vmul.f32 %v3101, %v1115
    %v3110 = vmul.f32 %v3104, %v1115
    %v3111 = vmul.f32 %v3106, %v1115
    %v3112 = vadd.f32 %v3050, %v3108
    %v3113 = vadd.f32 %v3051, %v3109
    %v3114 = vadd.f32 %v3052, %v3110
    %v3115 = vadd.f32 %v3053, %v3111
    %3116 = vrot.lane.b32.xlu0 %v2685, 120
    %v3117 = vpop.permute.xlu0 %3116
    %3118 = vrot.lane.b32.xlu0 %v2686, 120
    %v3119 = vpop.permute.xlu0 %3118
    %3120 = vrot.lane.b32.xlu0 %v2687, 120
    %v3121 = vpop.permute.xlu0 %3120
    %3122 = vrot.lane.b32.xlu0 %v2688, 120
    %v3123 = vpop.permute.xlu0 %3122
    %v3128 = vpack.c.bf16 %v3119, %v3117
    %v3129 = vpack.c.bf16 %v3123, %v3121
    %s3130 = scalar_lea.vmem [#allocation2], 400
    %v3131 = vld [vmem:[%s3130] sm:$0xf]
    %v3132 = vld [vmem:[%s3130 + $0x4] sm:$0xf]
    %v3133 = vld [vmem:[%s3130 + $0x8] sm:$0xf]
    %v3134 = vld [vmem:[%s3130 + $0xc] sm:$0xf]
    %v3139 = vunpack.c.l.b16 %v3131
    %v3140 = vunpack.c.l.b16 %v3132
    %v3141 = vunpack.c.l.b16 %v3133
    %v3142 = vunpack.c.l.b16 %v3134
    %v3143 = vpack.c.b16 %v3140, %v3139
    %v3144 = vpack.c.b16 %v3142, %v3141
    %v3146 = vsel %vm519, %v3143, 0
    %v3149 = vsel %vm519, %v3144, 0
    %3151 = vmatpush.bf16.msra.mxu0 0
    %3152 = vmatpush.bf16.msra.mxu0 0
    %3153 = vmatpush.bf16.msra.mxu0 0
    %3154 = vmatpush.bf16.msra.mxu0 0
    %3155 = vmatpush.bf16.msra.mxu0 0
    %3156 = vmatpush.bf16.msra.mxu0 0
    %3157 = vmatpush.bf16.msra.mxu0 %v3129
    %3158 = vmatpush.bf16.msra.mxu0 %v3128
    %3159 = vmatmul.bf16.gmra.mxu0 %v3146
    %v3160 = vpop.f32.mrf.mxu0
    %v3161 = vadd.f32 0.0, %v3160
    %v3162 = vpop.f32.mrf.mxu0
    %v3163 = vadd.f32 0.0, %v3162
    %3164 = vmatmul.bf16.gmra.mxu0 %v3149
    %v3165 = vpop.f32.mrf.mxu0
    %v3166 = vadd.f32 0.0, %v3165
    %v3167 = vpop.f32.mrf.mxu0
    %v3168 = vadd.f32 0.0, %v3167
    %3169 = vdwg.mxu0
    %v3170 = vmul.f32 %v3161, %v1178
    %v3171 = vmul.f32 %v3163, %v1178
    %v3172 = vmul.f32 %v3166, %v1178
    %v3173 = vmul.f32 %v3168, %v1178
    %v3174 = vadd.f32 %v3112, %v3170
    %v3175 = vadd.f32 %v3113, %v3171
    %v3176 = vadd.f32 %v3114, %v3172
    %v3177 = vadd.f32 %v3115, %v3173
    %3178 = vrot.lane.b32.xlu0 %v2685, 119
    %v3179 = vpop.permute.xlu0 %3178
    %3180 = vrot.lane.b32.xlu0 %v2686, 119
    %v3181 = vpop.permute.xlu0 %3180
    %3182 = vrot.lane.b32.xlu0 %v2687, 119
    %v3183 = vpop.permute.xlu0 %3182
    %3184 = vrot.lane.b32.xlu0 %v2688, 119
    %v3185 = vpop.permute.xlu0 %3184
    %v3190 = vpack.c.bf16 %v3181, %v3179
    %v3191 = vpack.c.bf16 %v3185, %v3183
    %s3192 = scalar_lea.vmem [#allocation2], 416
    %v3193 = vld [vmem:[%s3192] sm:$0xf]
    %v3194 = vld [vmem:[%s3192 + $0x4] sm:$0xf]
    %v3195 = vld [vmem:[%s3192 + $0x8] sm:$0xf]
    %v3196 = vld [vmem:[%s3192 + $0xc] sm:$0xf]
    %v3201 = vunpack.c.l.b16 %v3193
    %v3202 = vunpack.c.l.b16 %v3194
    %v3203 = vunpack.c.l.b16 %v3195
    %v3204 = vunpack.c.l.b16 %v3196
    %v3205 = vpack.c.b16 %v3202, %v3201
    %v3206 = vpack.c.b16 %v3204, %v3203
    %v3208 = vsel %vm519, %v3205, 0
    %v3211 = vsel %vm519, %v3206, 0
    %3213 = vmatpush.bf16.msra.mxu0 0
    %3214 = vmatpush.bf16.msra.mxu0 0
    %3215 = vmatpush.bf16.msra.mxu0 0
    %3216 = vmatpush.bf16.msra.mxu0 0
    %3217 = vmatpush.bf16.msra.mxu0 0
    %3218 = vmatpush.bf16.msra.mxu0 0
    %3219 = vmatpush.bf16.msra.mxu0 %v3191
    %3220 = vmatpush.bf16.msra.mxu0 %v3190
    %3221 = vmatmul.bf16.gmra.mxu0 %v3208
    %v3222 = vpop.f32.mrf.mxu0
    %v3223 = vadd.f32 0.0, %v3222
    %v3224 = vpop.f32.mrf.mxu0
    %v3225 = vadd.f32 0.0, %v3224
    %3226 = vmatmul.bf16.gmra.mxu0 %v3211
    %v3227 = vpop.f32.mrf.mxu0
    %v3228 = vadd.f32 0.0, %v3227
    %v3229 = vpop.f32.mrf.mxu0
    %v3230 = vadd.f32 0.0, %v3229
    %3231 = vdwg.mxu0
    %v3232 = vmul.f32 %v3223, %v1241
    %v3233 = vmul.f32 %v3225, %v1241
    %v3234 = vmul.f32 %v3228, %v1241
    %v3235 = vmul.f32 %v3230, %v1241
    %v3236 = vadd.f32 %v3174, %v3232
    %v3237 = vadd.f32 %v3175, %v3233
    %v3238 = vadd.f32 %v3176, %v3234
    %v3239 = vadd.f32 %v3177, %v3235
    %3241 = vset.pattern.permute.xlu0 0
    %3242 = vperm.xlu0 %3241, %v2690
    %v3243 = vpop.permute.xlu0 %3242
    %3246 = vset.pattern.permute.xlu0 0
    %3247 = vperm.xlu0 %3246, %v2691
    %v3248 = vpop.permute.xlu0 %3247
    %3251 = vset.pattern.permute.xlu0 0
    %3252 = vperm.xlu0 %3251, %v2692
    %v3253 = vpop.permute.xlu0 %3252
    %3256 = vset.pattern.permute.xlu0 0
    %3257 = vperm.xlu0 %3256, %v2693
    %v3258 = vpop.permute.xlu0 %3257
    %v3260 = vadd.f32 %v3236, %v3243
    %v3261 = vadd.f32 %v3237, %v3248
    %v3262 = vadd.f32 %v3238, %v3253
    %v3263 = vadd.f32 %v3239, %v3258
    %s3264 = scalar_lea.vmem %s11, 64
    %v3265 = vld [vmem:[%s3264] sm:$0xff]
    %v3266 = vld [vmem:[%s3264 + $0x8] sm:$0xff]
    %v3267 = vld [vmem:[%s3264 + $0x10] sm:$0xff]
    %v3268 = vld [vmem:[%s3264 + $0x18] sm:$0xff]
    %s3269 = scalar_lea.vmem %s12, 64
    %v3270 = vld [vmem:[%s3269] sm:$0xff]
    %v3271 = vld [vmem:[%s3269 + $0x8] sm:$0xff]
    %v3272 = vld [vmem:[%s3269 + $0x10] sm:$0xff]
    %v3273 = vld [vmem:[%s3269 + $0x18] sm:$0xff]
    %3274 = vadd.xlane.f32.xlu0 %v3260
    %v3275 = vpop.xlane.xlu0 %3274
    %3276 = vadd.xlane.f32.xlu0 %v3261
    %v3277 = vpop.xlane.xlu0 %3276
    %3278 = vadd.xlane.f32.xlu0 %v3262
    %v3279 = vpop.xlane.xlu0 %3278
    %3280 = vadd.xlane.f32.xlu0 %v3263
    %v3281 = vpop.xlane.xlu0 %3280
    %v3282 = vmul.f32 %v3275, %v567
    %v3283 = vmul.f32 %v3277, %v567
    %v3284 = vmul.f32 %v3279, %v567
    %v3285 = vmul.f32 %v3281, %v567
    %v3286 = vsub.f32 %v3260, %v3282
    %v3287 = vsub.f32 %v3261, %v3283
    %v3288 = vsub.f32 %v3262, %v3284
    %v3289 = vsub.f32 %v3263, %v3285
    %v3290 = vmul.f32 %v3286, %v3286
    %v3291 = vmul.f32 %v3287, %v3287
    %v3292 = vmul.f32 %v3288, %v3288
    %v3293 = vmul.f32 %v3289, %v3289
    %3294 = vadd.xlane.f32.xlu0 %v3290
    %v3295 = vpop.xlane.xlu0 %3294
    %3296 = vadd.xlane.f32.xlu0 %v3291
    %v3297 = vpop.xlane.xlu0 %3296
    %3298 = vadd.xlane.f32.xlu0 %v3292
    %v3299 = vpop.xlane.xlu0 %3298
    %3300 = vadd.xlane.f32.xlu0 %v3293
    %v3301 = vpop.xlane.xlu0 %3300
    %v3302 = vmul.f32 %v3295, %v567
    %v3303 = vmul.f32 %v3297, %v567
    %v3304 = vmul.f32 %v3299, %v567
    %v3305 = vmul.f32 %v3301, %v567
    %v3306 = vadd.f32 %v3302, 1e-05
    %v3307 = vadd.f32 %v3303, 1e-05
    %v3308 = vadd.f32 %v3304, 1e-05
    %v3309 = vadd.f32 %v3305, 1e-05
    %v3310 = vrsqrt.pop %v3306
    %v3311 = vmul.f32 %v3310, %v3306
    %v3312 = vmul.f32 %v3311, %v3310
    %v3313 = vmul.f32 0.5, %v3312
    %v3314 = vsub.f32 1.5, %v3313
    %v3315 = vmul.f32 %v3310, %v3314
    %vm3316 = vweird.f32 %v3306
    %vm3317 = vweird.f32 %v3310
    %vm3318 = vmor %vm3316, %vm3317
    %v3319 = vsel %vm3318, %v3310, %v3315
    %v3320 = vrsqrt.pop %v3307
    %v3321 = vmul.f32 %v3320, %v3307
    %v3322 = vmul.f32 %v3321, %v3320
    %v3323 = vmul.f32 0.5, %v3322
    %v3324 = vsub.f32 1.5, %v3323
    %v3325 = vmul.f32 %v3320, %v3324
    %vm3326 = vweird.f32 %v3307
    %vm3327 = vweird.f32 %v3320
    %vm3328 = vmor %vm3326, %vm3327
    %v3329 = vsel %vm3328, %v3320, %v3325
    %v3330 = vrsqrt.pop %v3308
    %v3331 = vmul.f32 %v3330, %v3308
    %v3332 = vmul.f32 %v3331, %v3330
    %v3333 = vmul.f32 0.5, %v3332
    %v3334 = vsub.f32 1.5, %v3333
    %v3335 = vmul.f32 %v3330, %v3334
    %vm3336 = vweird.f32 %v3308
    %vm3337 = vweird.f32 %v3330
    %vm3338 = vmor %vm3336, %vm3337
    %v3339 = vsel %vm3338, %v3330, %v3335
    %v3340 = vrsqrt.pop %v3309
    %v3341 = vmul.f32 %v3340, %v3309
    %v3342 = vmul.f32 %v3341, %v3340
    %v3343 = vmul.f32 0.5, %v3342
    %v3344 = vsub.f32 1.5, %v3343
    %v3345 = vmul.f32 %v3340, %v3344
    %vm3346 = vweird.f32 %v3309
    %vm3347 = vweird.f32 %v3340
    %vm3348 = vmor %vm3346, %vm3347
    %v3349 = vsel %vm3348, %v3340, %v3345
    %v3350 = vmul.f32 %v3286, %v3319
    %v3351 = vmul.f32 %v3287, %v3329
    %v3352 = vmul.f32 %v3288, %v3339
    %v3353 = vmul.f32 %v3289, %v3349
    %3355 = vset.pattern.permute.xlu0 0
    %3356 = vperm.xlu0 %3355, %v3265
    %v3357 = vpop.permute.xlu0 %3356
    %3360 = vset.pattern.permute.xlu0 0
    %3361 = vperm.xlu0 %3360, %v3266
    %v3362 = vpop.permute.xlu0 %3361
    %3365 = vset.pattern.permute.xlu0 0
    %3366 = vperm.xlu0 %3365, %v3267
    %v3367 = vpop.permute.xlu0 %3366
    %3370 = vset.pattern.permute.xlu0 0
    %3371 = vperm.xlu0 %3370, %v3268
    %v3372 = vpop.permute.xlu0 %3371
    %v3374 = vmul.f32 %v3350, %v3357
    %v3375 = vmul.f32 %v3351, %v3362
    %v3376 = vmul.f32 %v3352, %v3367
    %v3377 = vmul.f32 %v3353, %v3372
    %3379 = vset.pattern.permute.xlu0 0
    %3380 = vperm.xlu0 %3379, %v3270
    %v3381 = vpop.permute.xlu0 %3380
    %3384 = vset.pattern.permute.xlu0 0
    %3385 = vperm.xlu0 %3384, %v3271
    %v3386 = vpop.permute.xlu0 %3385
    %3389 = vset.pattern.permute.xlu0 0
    %3390 = vperm.xlu0 %3389, %v3272
    %v3391 = vpop.permute.xlu0 %3390
    %3394 = vset.pattern.permute.xlu0 0
    %3395 = vperm.xlu0 %3394, %v3273
    %v3396 = vpop.permute.xlu0 %3395
    %v3398 = vadd.f32 %v3374, %v3381
    %v3399 = vadd.f32 %v3375, %v3386
    %v3400 = vadd.f32 %v3376, %v3391
    %v3401 = vadd.f32 %v3377, %v3396
    %v3402 = vmax.f32 %v3398, 0.0
    %v3403 = vmax.f32 %v3399, 0.0
    %v3404 = vmax.f32 %v3400, 0.0
    %v3405 = vmax.f32 %v3401, 0.0
    %s3406 = scalar_lea.vmem %s13, 32
    %v3407 = vld [vmem:[%s3406] sm:$0xf]
    %v3408 = vld [vmem:[%s3406 + $0x4] sm:$0xf]
    %v3409 = vld [vmem:[%s3406 + $0x8] sm:$0xf]
    %v3410 = vld [vmem:[%s3406 + $0xc] sm:$0xf]
    %v3411 = vpack.c.bf16 %v3403, %v3402
    %v3412 = vpack.c.bf16 %v3405, %v3404
    %s3413 = scalar_lea.vmem %s14, 64
    %v3414 = vld [vmem:[%s3413] sm:$0xff]
    %v3415 = vld [vmem:[%s3413 + $0x8] sm:$0xff]
    %v3416 = vld [vmem:[%s3413 + $0x10] sm:$0xff]
    %v3417 = vld [vmem:[%s3413 + $0x18] sm:$0xff]
    %3419 = vset.pattern.permute.xlu0 0
    %3420 = vperm.xlu0 %3419, %v3414
    %v3421 = vpop.permute.xlu0 %3420
    %3424 = vset.pattern.permute.xlu0 0
    %3425 = vperm.xlu0 %3424, %v3415
    %v3426 = vpop.permute.xlu0 %3425
    %3429 = vset.pattern.permute.xlu0 0
    %3430 = vperm.xlu0 %3429, %v3416
    %v3431 = vpop.permute.xlu0 %3430
    %3434 = vset.pattern.permute.xlu0 0
    %3435 = vperm.xlu0 %3434, %v3417
    %v3436 = vpop.permute.xlu0 %3435
    %v3442 = vunpack.c.l.b16 %v3407
    %v3443 = vunpack.c.l.b16 %v3408
    %v3444 = vunpack.c.l.b16 %v3409
    %v3445 = vunpack.c.l.b16 %v3410
    %v3446 = vpack.c.b16 %v3443, %v3442
    %v3447 = vpack.c.b16 %v3445, %v3444
    %v3449 = vsel %vm519, %v3446, 0
    %v3452 = vsel %vm519, %v3447, 0
    %3454 = vmatpush.bf16.msra.mxu0 0
    %3455 = vmatpush.bf16.msra.mxu0 0
    %3456 = vmatpush.bf16.msra.mxu0 0
    %3457 = vmatpush.bf16.msra.mxu0 0
    %3458 = vmatpush.bf16.msra.mxu0 0
    %3459 = vmatpush.bf16.msra.mxu0 0
    %3460 = vmatpush.bf16.msra.mxu0 %v3412
    %3461 = vmatpush.bf16.msra.mxu0 %v3411
    %3462 = vmatmul.bf16.gmra.mxu0 %v3449
    %v3463 = vpop.f32.mrf.mxu0
    %v3464 = vadd.f32 %v3421, %v3463
    %v3465 = vpop.f32.mrf.mxu0
    %v3466 = vadd.f32 %v3426, %v3465
    %3467 = vmatmul.bf16.gmra.mxu0 %v3452
    %v3468 = vpop.f32.mrf.mxu0
    %v3469 = vadd.f32 %v3431, %v3468
    %v3470 = vpop.f32.mrf.mxu0
    %v3471 = vadd.f32 %v3436, %v3470
    %3472 = vdwg.mxu0
    %v3473 = vadd.f32 %v3464, %v2476
    %v3474 = vadd.f32 %v3466, %v2477
    %v3475 = vadd.f32 %v3469, %v2478
    %v3476 = vadd.f32 %v3471, %v2479
    %s3477 = scalar_lea.vmem %s5, 48
    %v3478 = vld [vmem:[%s3477] sm:$0xf]
    %v3479 = vld [vmem:[%s3477 + $0x4] sm:$0xf]
    %v3480 = vld [vmem:[%s3477 + $0x8] sm:$0xf]
    %v3481 = vld [vmem:[%s3477 + $0xc] sm:$0xf]
    %v3482 = vpack.c.bf16 %v3474, %v3473
    %v3483 = vpack.c.bf16 %v3476, %v3475
    %s3484 = scalar_lea.vmem %s6, 96
    %v3485 = vld [vmem:[%s3484] sm:$0xff]
    %v3486 = vld [vmem:[%s3484 + $0x8] sm:$0xff]
    %v3487 = vld [vmem:[%s3484 + $0x10] sm:$0xff]
    %v3488 = vld [vmem:[%s3484 + $0x18] sm:$0xff]
    %3490 = vset.pattern.permute.xlu0 0
    %3491 = vperm.xlu0 %3490, %v3485
    %v3492 = vpop.permute.xlu0 %3491
    %3495 = vset.pattern.permute.xlu0 0
    %3496 = vperm.xlu0 %3495, %v3486
    %v3497 = vpop.permute.xlu0 %3496
    %3500 = vset.pattern.permute.xlu0 0
    %3501 = vperm.xlu0 %3500, %v3487
    %v3502 = vpop.permute.xlu0 %3501
    %3505 = vset.pattern.permute.xlu0 0
    %3506 = vperm.xlu0 %3505, %v3488
    %v3507 = vpop.permute.xlu0 %3506
    %v3513 = vunpack.c.l.b16 %v3478
    %v3514 = vunpack.c.l.b16 %v3479
    %v3515 = vunpack.c.l.b16 %v3480
    %v3516 = vunpack.c.l.b16 %v3481
    %v3517 = vpack.c.b16 %v3514, %v3513
    %v3518 = vpack.c.b16 %v3516, %v3515
    %v3520 = vsel %vm519, %v3517, 0
    %v3523 = vsel %vm519, %v3518, 0
    %3525 = vmatpush.bf16.msra.mxu0 0
    %3526 = vmatpush.bf16.msra.mxu0 0
    %3527 = vmatpush.bf16.msra.mxu0 0
    %3528 = vmatpush.bf16.msra.mxu0 0
    %3529 = vmatpush.bf16.msra.mxu0 0
    %3530 = vmatpush.bf16.msra.mxu0 0
    %3531 = vmatpush.bf16.msra.mxu0 %v3483
    %3532 = vmatpush.bf16.msra.mxu0 %v3482
    %3533 = vmatmul.bf16.gmra.mxu0 %v3520
    %v3534 = vpop.f32.mrf.mxu0
    %v3535 = vadd.f32 %v3492, %v3534
    %v3536 = vpop.f32.mrf.mxu0
    %v3537 = vadd.f32 %v3497, %v3536
    %3538 = vmatmul.bf16.gmra.mxu0 %v3523
    %v3539 = vpop.f32.mrf.mxu0
    %v3540 = vadd.f32 %v3502, %v3539
    %v3541 = vpop.f32.mrf.mxu0
    %v3542 = vadd.f32 %v3507, %v3541
    %3543 = vdwg.mxu0
    %s3544 = scalar_lea.vmem %s7, 96
    %v3545 = vld [vmem:[%s3544] sm:$0xff]
    %v3546 = vld [vmem:[%s3544 + $0x8] sm:$0xff]
    %v3547 = vld [vmem:[%s3544 + $0x10] sm:$0xff]
    %v3548 = vld [vmem:[%s3544 + $0x18] sm:$0xff]
    %s3549 = scalar_lea.vmem %s8, 96
    %v3550 = vld [vmem:[%s3549] sm:$0xff]
    %v3551 = vld [vmem:[%s3549 + $0x8] sm:$0xff]
    %v3552 = vld [vmem:[%s3549 + $0x10] sm:$0xff]
    %v3553 = vld [vmem:[%s3549 + $0x18] sm:$0xff]
    %3554 = vadd.xlane.f32.xlu0 %v3535
    %v3555 = vpop.xlane.xlu0 %3554
    %3556 = vadd.xlane.f32.xlu0 %v3537
    %v3557 = vpop.xlane.xlu0 %3556
    %3558 = vadd.xlane.f32.xlu0 %v3540
    %v3559 = vpop.xlane.xlu0 %3558
    %3560 = vadd.xlane.f32.xlu0 %v3542
    %v3561 = vpop.xlane.xlu0 %3560
    %v3562 = vmul.f32 %v3555, %v567
    %v3563 = vmul.f32 %v3557, %v567
    %v3564 = vmul.f32 %v3559, %v567
    %v3565 = vmul.f32 %v3561, %v567
    %v3566 = vsub.f32 %v3535, %v3562
    %v3567 = vsub.f32 %v3537, %v3563
    %v3568 = vsub.f32 %v3540, %v3564
    %v3569 = vsub.f32 %v3542, %v3565
    %v3570 = vmul.f32 %v3566, %v3566
    %v3571 = vmul.f32 %v3567, %v3567
    %v3572 = vmul.f32 %v3568, %v3568
    %v3573 = vmul.f32 %v3569, %v3569
    %3574 = vadd.xlane.f32.xlu0 %v3570
    %v3575 = vpop.xlane.xlu0 %3574
    %3576 = vadd.xlane.f32.xlu0 %v3571
    %v3577 = vpop.xlane.xlu0 %3576
    %3578 = vadd.xlane.f32.xlu0 %v3572
    %v3579 = vpop.xlane.xlu0 %3578
    %3580 = vadd.xlane.f32.xlu0 %v3573
    %v3581 = vpop.xlane.xlu0 %3580
    %v3582 = vmul.f32 %v3575, %v567
    %v3583 = vmul.f32 %v3577, %v567
    %v3584 = vmul.f32 %v3579, %v567
    %v3585 = vmul.f32 %v3581, %v567
    %v3586 = vadd.f32 %v3582, 1e-05
    %v3587 = vadd.f32 %v3583, 1e-05
    %v3588 = vadd.f32 %v3584, 1e-05
    %v3589 = vadd.f32 %v3585, 1e-05
    %v3590 = vrsqrt.pop %v3586
    %v3591 = vmul.f32 %v3590, %v3586
    %v3592 = vmul.f32 %v3591, %v3590
    %v3593 = vmul.f32 0.5, %v3592
    %v3594 = vsub.f32 1.5, %v3593
    %v3595 = vmul.f32 %v3590, %v3594
    %vm3596 = vweird.f32 %v3586
    %vm3597 = vweird.f32 %v3590
    %vm3598 = vmor %vm3596, %vm3597
    %v3599 = vsel %vm3598, %v3590, %v3595
    %v3600 = vrsqrt.pop %v3587
    %v3601 = vmul.f32 %v3600, %v3587
    %v3602 = vmul.f32 %v3601, %v3600
    %v3603 = vmul.f32 0.5, %v3602
    %v3604 = vsub.f32 1.5, %v3603
    %v3605 = vmul.f32 %v3600, %v3604
    %vm3606 = vweird.f32 %v3587
    %vm3607 = vweird.f32 %v3600
    %vm3608 = vmor %vm3606, %vm3607
    %v3609 = vsel %vm3608, %v3600, %v3605
    %v3610 = vrsqrt.pop %v3588
    %v3611 = vmul.f32 %v3610, %v3588
    %v3612 = vmul.f32 %v3611, %v3610
    %v3613 = vmul.f32 0.5, %v3612
    %v3614 = vsub.f32 1.5, %v3613
    %v3615 = vmul.f32 %v3610, %v3614
    %vm3616 = vweird.f32 %v3588
    %vm3617 = vweird.f32 %v3610
    %vm3618 = vmor %vm3616, %vm3617
    %v3619 = vsel %vm3618, %v3610, %v3615
    %v3620 = vrsqrt.pop %v3589
    %v3621 = vmul.f32 %v3620, %v3589
    %v3622 = vmul.f32 %v3621, %v3620
    %v3623 = vmul.f32 0.5, %v3622
    %v3624 = vsub.f32 1.5, %v3623
    %v3625 = vmul.f32 %v3620, %v3624
    %vm3626 = vweird.f32 %v3589
    %vm3627 = vweird.f32 %v3620
    %vm3628 = vmor %vm3626, %vm3627
    %v3629 = vsel %vm3628, %v3620, %v3625
    %v3630 = vmul.f32 %v3566, %v3599
    %v3631 = vmul.f32 %v3567, %v3609
    %v3632 = vmul.f32 %v3568, %v3619
    %v3633 = vmul.f32 %v3569, %v3629
    %3635 = vset.pattern.permute.xlu0 0
    %3636 = vperm.xlu0 %3635, %v3545
    %v3637 = vpop.permute.xlu0 %3636
    %3640 = vset.pattern.permute.xlu0 0
    %3641 = vperm.xlu0 %3640, %v3546
    %v3642 = vpop.permute.xlu0 %3641
    %3645 = vset.pattern.permute.xlu0 0
    %3646 = vperm.xlu0 %3645, %v3547
    %v3647 = vpop.permute.xlu0 %3646
    %3650 = vset.pattern.permute.xlu0 0
    %3651 = vperm.xlu0 %3650, %v3548
    %v3652 = vpop.permute.xlu0 %3651
    %v3654 = vmul.f32 %v3630, %v3637
    %v3655 = vmul.f32 %v3631, %v3642
    %v3656 = vmul.f32 %v3632, %v3647
    %v3657 = vmul.f32 %v3633, %v3652
    %3659 = vset.pattern.permute.xlu0 0
    %3660 = vperm.xlu0 %3659, %v3550
    %v3661 = vpop.permute.xlu0 %3660
    %3664 = vset.pattern.permute.xlu0 0
    %3665 = vperm.xlu0 %3664, %v3551
    %v3666 = vpop.permute.xlu0 %3665
    %3669 = vset.pattern.permute.xlu0 0
    %3670 = vperm.xlu0 %3669, %v3552
    %v3671 = vpop.permute.xlu0 %3670
    %3674 = vset.pattern.permute.xlu0 0
    %3675 = vperm.xlu0 %3674, %v3553
    %v3676 = vpop.permute.xlu0 %3675
    %v3678 = vadd.f32 %v3654, %v3661
    %v3679 = vadd.f32 %v3655, %v3666
    %v3680 = vadd.f32 %v3656, %v3671
    %v3681 = vadd.f32 %v3657, %v3676
    %v3682 = vmax.f32 %v3678, 0.0
    %v3683 = vmax.f32 %v3679, 0.0
    %v3684 = vmax.f32 %v3680, 0.0
    %v3685 = vmax.f32 %v3681, 0.0
    %s3686 = scalar_lea.vmem %s10, 96
    %v3687 = vld [vmem:[%s3686] sm:$0xff]
    %v3688 = vld [vmem:[%s3686 + $0x8] sm:$0xff]
    %v3689 = vld [vmem:[%s3686 + $0x10] sm:$0xff]
    %v3690 = vld [vmem:[%s3686 + $0x18] sm:$0xff]
    %3695 = vrot.lane.b32.xlu0 %v3682, 9
    %v3696 = vpop.permute.xlu0 %3695
    %3697 = vrot.lane.b32.xlu0 %v3683, 9
    %v3698 = vpop.permute.xlu0 %3697
    %3699 = vrot.lane.b32.xlu0 %v3684, 9
    %v3700 = vpop.permute.xlu0 %3699
    %3701 = vrot.lane.b32.xlu0 %v3685, 9
    %v3702 = vpop.permute.xlu0 %3701
    %v3707 = vpack.c.bf16 %v3698, %v3696
    %v3708 = vpack.c.bf16 %v3702, %v3700
    %s3709 = scalar_lea.vmem [#allocation2], 432
    %v3710 = vld [vmem:[%s3709] sm:$0xf]
    %v3711 = vld [vmem:[%s3709 + $0x4] sm:$0xf]
    %v3712 = vld [vmem:[%s3709 + $0x8] sm:$0xf]
    %v3713 = vld [vmem:[%s3709 + $0xc] sm:$0xf]
    %v3718 = vunpack.c.l.b16 %v3710
    %v3719 = vunpack.c.l.b16 %v3711
    %v3720 = vunpack.c.l.b16 %v3712
    %v3721 = vunpack.c.l.b16 %v3713
    %v3722 = vpack.c.b16 %v3719, %v3718
    %v3723 = vpack.c.b16 %v3721, %v3720
    %v3725 = vsel %vm519, %v3722, 0
    %v3728 = vsel %vm519, %v3723, 0
    %3730 = vmatpush.bf16.msra.mxu0 0
    %3731 = vmatpush.bf16.msra.mxu0 0
    %3732 = vmatpush.bf16.msra.mxu0 0
    %3733 = vmatpush.bf16.msra.mxu0 0
    %3734 = vmatpush.bf16.msra.mxu0 0
    %3735 = vmatpush.bf16.msra.mxu0 0
    %3736 = vmatpush.bf16.msra.mxu0 %v3708
    %3737 = vmatpush.bf16.msra.mxu0 %v3707
    %3738 = vmatmul.bf16.gmra.mxu0 %v3725
    %v3739 = vpop.f32.mrf.mxu0
    %v3740 = vadd.f32 0.0, %v3739
    %v3741 = vpop.f32.mrf.mxu0
    %v3742 = vadd.f32 0.0, %v3741
    %3743 = vmatmul.bf16.gmra.mxu0 %v3728
    %v3744 = vpop.f32.mrf.mxu0
    %v3745 = vadd.f32 0.0, %v3744
    %v3746 = vpop.f32.mrf.mxu0
    %v3747 = vadd.f32 0.0, %v3746
    %3748 = vdwg.mxu0
    %v3749 = vmul.f32 %v3740, %v753
    %v3750 = vmul.f32 %v3742, %v753
    %v3751 = vmul.f32 %v3745, %v753
    %v3752 = vmul.f32 %v3747, %v753
    %3753 = vrot.lane.b32.xlu0 %v3682, 8
    %v3754 = vpop.permute.xlu0 %3753
    %3755 = vrot.lane.b32.xlu0 %v3683, 8
    %v3756 = vpop.permute.xlu0 %3755
    %3757 = vrot.lane.b32.xlu0 %v3684, 8
    %v3758 = vpop.permute.xlu0 %3757
    %3759 = vrot.lane.b32.xlu0 %v3685, 8
    %v3760 = vpop.permute.xlu0 %3759
    %v3765 = vpack.c.bf16 %v3756, %v3754
    %v3766 = vpack.c.bf16 %v3760, %v3758
    %s3767 = scalar_lea.vmem [#allocation2], 448
    %v3768 = vld [vmem:[%s3767] sm:$0xf]
    %v3769 = vld [vmem:[%s3767 + $0x4] sm:$0xf]
    %v3770 = vld [vmem:[%s3767 + $0x8] sm:$0xf]
    %v3771 = vld [vmem:[%s3767 + $0xc] sm:$0xf]
    %v3776 = vunpack.c.l.b16 %v3768
    %v3777 = vunpack.c.l.b16 %v3769
    %v3778 = vunpack.c.l.b16 %v3770
    %v3779 = vunpack.c.l.b16 %v3771
    %v3780 = vpack.c.b16 %v3777, %v3776
    %v3781 = vpack.c.b16 %v3779, %v3778
    %v3783 = vsel %vm519, %v3780, 0
    %v3786 = vsel %vm519, %v3781, 0
    %3788 = vmatpush.bf16.msra.mxu0 0
    %3789 = vmatpush.bf16.msra.mxu0 0
    %3790 = vmatpush.bf16.msra.mxu0 0
    %3791 = vmatpush.bf16.msra.mxu0 0
    %3792 = vmatpush.bf16.msra.mxu0 0
    %3793 = vmatpush.bf16.msra.mxu0 0
    %3794 = vmatpush.bf16.msra.mxu0 %v3766
    %3795 = vmatpush.bf16.msra.mxu0 %v3765
    %3796 = vmatmul.bf16.gmra.mxu0 %v3783
    %v3797 = vpop.f32.mrf.mxu0
    %v3798 = vadd.f32 0.0, %v3797
    %v3799 = vpop.f32.mrf.mxu0
    %v3800 = vadd.f32 0.0, %v3799
    %3801 = vmatmul.bf16.gmra.mxu0 %v3786
    %v3802 = vpop.f32.mrf.mxu0
    %v3803 = vadd.f32 0.0, %v3802
    %v3804 = vpop.f32.mrf.mxu0
    %v3805 = vadd.f32 0.0, %v3804
    %3806 = vdwg.mxu0
    %v3807 = vmul.f32 %v3798, %v812
    %v3808 = vmul.f32 %v3800, %v812
    %v3809 = vmul.f32 %v3803, %v812
    %v3810 = vmul.f32 %v3805, %v812
    %v3811 = vadd.f32 %v3749, %v3807
    %v3812 = vadd.f32 %v3750, %v3808
    %v3813 = vadd.f32 %v3751, %v3809
    %v3814 = vadd.f32 %v3752, %v3810
    %3815 = vrot.lane.b32.xlu0 %v3682, 7
    %v3816 = vpop.permute.xlu0 %3815
    %3817 = vrot.lane.b32.xlu0 %v3683, 7
    %v3818 = vpop.permute.xlu0 %3817
    %3819 = vrot.lane.b32.xlu0 %v3684, 7
    %v3820 = vpop.permute.xlu0 %3819
    %3821 = vrot.lane.b32.xlu0 %v3685, 7
    %v3822 = vpop.permute.xlu0 %3821
    %v3827 = vpack.c.bf16 %v3818, %v3816
    %v3828 = vpack.c.bf16 %v3822, %v3820
    %s3829 = scalar_lea.vmem [#allocation2], 464
    %v3830 = vld [vmem:[%s3829] sm:$0xf]
    %v3831 = vld [vmem:[%s3829 + $0x4] sm:$0xf]
    %v3832 = vld [vmem:[%s3829 + $0x8] sm:$0xf]
    %v3833 = vld [vmem:[%s3829 + $0xc] sm:$0xf]
    %v3838 = vunpack.c.l.b16 %v3830
    %v3839 = vunpack.c.l.b16 %v3831
    %v3840 = vunpack.c.l.b16 %v3832
    %v3841 = vunpack.c.l.b16 %v3833
    %v3842 = vpack.c.b16 %v3839, %v3838
    %v3843 = vpack.c.b16 %v3841, %v3840
    %v3845 = vsel %vm519, %v3842, 0
    %v3848 = vsel %vm519, %v3843, 0
    %3850 = vmatpush.bf16.msra.mxu0 0
    %3851 = vmatpush.bf16.msra.mxu0 0
    %3852 = vmatpush.bf16.msra.mxu0 0
    %3853 = vmatpush.bf16.msra.mxu0 0
    %3854 = vmatpush.bf16.msra.mxu0 0
    %3855 = vmatpush.bf16.msra.mxu0 0
    %3856 = vmatpush.bf16.msra.mxu0 %v3828
    %3857 = vmatpush.bf16.msra.mxu0 %v3827
    %3858 = vmatmul.bf16.gmra.mxu0 %v3845
    %v3859 = vpop.f32.mrf.mxu0
    %v3860 = vadd.f32 0.0, %v3859
    %v3861 = vpop.f32.mrf.mxu0
    %v3862 = vadd.f32 0.0, %v3861
    %3863 = vmatmul.bf16.gmra.mxu0 %v3848
    %v3864 = vpop.f32.mrf.mxu0
    %v3865 = vadd.f32 0.0, %v3864
    %v3866 = vpop.f32.mrf.mxu0
    %v3867 = vadd.f32 0.0, %v3866
    %3868 = vdwg.mxu0
    %v3869 = vmul.f32 %v3860, %v875
    %v3870 = vmul.f32 %v3862, %v875
    %v3871 = vmul.f32 %v3865, %v875
    %v3872 = vmul.f32 %v3867, %v875
    %v3873 = vadd.f32 %v3811, %v3869
    %v3874 = vadd.f32 %v3812, %v3870
    %v3875 = vadd.f32 %v3813, %v3871
    %v3876 = vadd.f32 %v3814, %v3872
    %3877 = vrot.lane.b32.xlu0 %v3682, 1
    %v3878 = vpop.permute.xlu0 %3877
    %3879 = vrot.lane.b32.xlu0 %v3683, 1
    %v3880 = vpop.permute.xlu0 %3879
    %3881 = vrot.lane.b32.xlu0 %v3684, 1
    %v3882 = vpop.permute.xlu0 %3881
    %3883 = vrot.lane.b32.xlu0 %v3685, 1
    %v3884 = vpop.permute.xlu0 %3883
    %v3889 = vpack.c.bf16 %v3880, %v3878
    %v3890 = vpack.c.bf16 %v3884, %v3882
    %s3891 = scalar_lea.vmem [#allocation2], 480
    %v3892 = vld [vmem:[%s3891] sm:$0xf]
    %v3893 = vld [vmem:[%s3891 + $0x4] sm:$0xf]
    %v3894 = vld [vmem:[%s3891 + $0x8] sm:$0xf]
    %v3895 = vld [vmem:[%s3891 + $0xc] sm:$0xf]
    %v3900 = vunpack.c.l.b16 %v3892
    %v3901 = vunpack.c.l.b16 %v3893
    %v3902 = vunpack.c.l.b16 %v3894
    %v3903 = vunpack.c.l.b16 %v3895
    %v3904 = vpack.c.b16 %v3901, %v3900
    %v3905 = vpack.c.b16 %v3903, %v3902
    %v3907 = vsel %vm519, %v3904, 0
    %v3910 = vsel %vm519, %v3905, 0
    %3912 = vmatpush.bf16.msra.mxu0 0
    %3913 = vmatpush.bf16.msra.mxu0 0
    %3914 = vmatpush.bf16.msra.mxu0 0
    %3915 = vmatpush.bf16.msra.mxu0 0
    %3916 = vmatpush.bf16.msra.mxu0 0
    %3917 = vmatpush.bf16.msra.mxu0 0
    %3918 = vmatpush.bf16.msra.mxu0 %v3890
    %3919 = vmatpush.bf16.msra.mxu0 %v3889
    %3920 = vmatmul.bf16.gmra.mxu0 %v3907
    %v3921 = vpop.f32.mrf.mxu0
    %v3922 = vadd.f32 0.0, %v3921
    %v3923 = vpop.f32.mrf.mxu0
    %v3924 = vadd.f32 0.0, %v3923
    %3925 = vmatmul.bf16.gmra.mxu0 %v3910
    %v3926 = vpop.f32.mrf.mxu0
    %v3927 = vadd.f32 0.0, %v3926
    %v3928 = vpop.f32.mrf.mxu0
    %v3929 = vadd.f32 0.0, %v3928
    %3930 = vdwg.mxu0
    %v3931 = vmul.f32 %v3922, %v938
    %v3932 = vmul.f32 %v3924, %v938
    %v3933 = vmul.f32 %v3927, %v938
    %v3934 = vmul.f32 %v3929, %v938
    %v3935 = vadd.f32 %v3873, %v3931
    %v3936 = vadd.f32 %v3874, %v3932
    %v3937 = vadd.f32 %v3875, %v3933
    %v3938 = vadd.f32 %v3876, %v3934
    %v3939 = vpack.c.bf16 %v3683, %v3682
    %v3940 = vpack.c.bf16 %v3685, %v3684
    %s3941 = scalar_lea.vmem [#allocation2], 496
    %v3942 = vld [vmem:[%s3941] sm:$0xf]
    %v3943 = vld [vmem:[%s3941 + $0x4] sm:$0xf]
    %v3944 = vld [vmem:[%s3941 + $0x8] sm:$0xf]
    %v3945 = vld [vmem:[%s3941 + $0xc] sm:$0xf]
    %v3950 = vunpack.c.l.b16 %v3942
    %v3951 = vunpack.c.l.b16 %v3943
    %v3952 = vunpack.c.l.b16 %v3944
    %v3953 = vunpack.c.l.b16 %v3945
    %v3954 = vpack.c.b16 %v3951, %v3950
    %v3955 = vpack.c.b16 %v3953, %v3952
    %v3957 = vsel %vm519, %v3954, 0
    %v3960 = vsel %vm519, %v3955, 0
    %3962 = vmatpush.bf16.msra.mxu0 0
    %3963 = vmatpush.bf16.msra.mxu0 0
    %3964 = vmatpush.bf16.msra.mxu0 0
    %3965 = vmatpush.bf16.msra.mxu0 0
    %3966 = vmatpush.bf16.msra.mxu0 0
    %3967 = vmatpush.bf16.msra.mxu0 0
    %3968 = vmatpush.bf16.msra.mxu0 %v3940
    %3969 = vmatpush.bf16.msra.mxu0 %v3939
    %3970 = vmatmul.bf16.gmra.mxu0 %v3957
    %v3971 = vpop.f32.mrf.mxu0
    %v3972 = vadd.f32 0.0, %v3971
    %v3973 = vpop.f32.mrf.mxu0
    %v3974 = vadd.f32 0.0, %v3973
    %3975 = vmatmul.bf16.gmra.mxu0 %v3960
    %v3976 = vpop.f32.mrf.mxu0
    %v3977 = vadd.f32 0.0, %v3976
    %v3978 = vpop.f32.mrf.mxu0
    %v3979 = vadd.f32 0.0, %v3978
    %3980 = vdwg.mxu0
    %v3981 = vmul.f32 %v3972, %v989
    %v3982 = vmul.f32 %v3974, %v989
    %v3983 = vmul.f32 %v3977, %v989
    %v3984 = vmul.f32 %v3979, %v989
    %v3985 = vadd.f32 %v3935, %v3981
    %v3986 = vadd.f32 %v3936, %v3982
    %v3987 = vadd.f32 %v3937, %v3983
    %v3988 = vadd.f32 %v3938, %v3984
    %3989 = vrot.lane.b32.xlu0 %v3682, 127
    %v3990 = vpop.permute.xlu0 %3989
    %3991 = vrot.lane.b32.xlu0 %v3683, 127
    %v3992 = vpop.permute.xlu0 %3991
    %3993 = vrot.lane.b32.xlu0 %v3684, 127
    %v3994 = vpop.permute.xlu0 %3993
    %3995 = vrot.lane.b32.xlu0 %v3685, 127
    %v3996 = vpop.permute.xlu0 %3995
    %v4001 = vpack.c.bf16 %v3992, %v3990
    %v4002 = vpack.c.bf16 %v3996, %v3994
    %s4003 = scalar_lea.vmem [#allocation2], 512
    %v4004 = vld [vmem:[%s4003] sm:$0xf]
    %v4005 = vld [vmem:[%s4003 + $0x4] sm:$0xf]
    %v4006 = vld [vmem:[%s4003 + $0x8] sm:$0xf]
    %v4007 = vld [vmem:[%s4003 + $0xc] sm:$0xf]
    %v4012 = vunpack.c.l.b16 %v4004
    %v4013 = vunpack.c.l.b16 %v4005
    %v4014 = vunpack.c.l.b16 %v4006
    %v4015 = vunpack.c.l.b16 %v4007
    %v4016 = vpack.c.b16 %v4013, %v4012
    %v4017 = vpack.c.b16 %v4015, %v4014
    %v4019 = vsel %vm519, %v4016, 0
    %v4022 = vsel %vm519, %v4017, 0
    %4024 = vmatpush.bf16.msra.mxu0 0
    %4025 = vmatpush.bf16.msra.mxu0 0
    %4026 = vmatpush.bf16.msra.mxu0 0
    %4027 = vmatpush.bf16.msra.mxu0 0
    %4028 = vmatpush.bf16.msra.mxu0 0
    %4029 = vmatpush.bf16.msra.mxu0 0
    %4030 = vmatpush.bf16.msra.mxu0 %v4002
    %4031 = vmatpush.bf16.msra.mxu0 %v4001
    %4032 = vmatmul.bf16.gmra.mxu0 %v4019
    %v4033 = vpop.f32.mrf.mxu0
    %v4034 = vadd.f32 0.0, %v4033
    %v4035 = vpop.f32.mrf.mxu0
    %v4036 = vadd.f32 0.0, %v4035
    %4037 = vmatmul.bf16.gmra.mxu0 %v4022
    %v4038 = vpop.f32.mrf.mxu0
    %v4039 = vadd.f32 0.0, %v4038
    %v4040 = vpop.f32.mrf.mxu0
    %v4041 = vadd.f32 0.0, %v4040
    %4042 = vdwg.mxu0
    %v4043 = vmul.f32 %v4034, %v1052
    %v4044 = vmul.f32 %v4036, %v1052
    %v4045 = vmul.f32 %v4039, %v1052
    %v4046 = vmul.f32 %v4041, %v1052
    %v4047 = vadd.f32 %v3985, %v4043
    %v4048 = vadd.f32 %v3986, %v4044
    %v4049 = vadd.f32 %v3987, %v4045
    %v4050 = vadd.f32 %v3988, %v4046
    %4051 = vrot.lane.b32.xlu0 %v3682, 121
    %v4052 = vpop.permute.xlu0 %4051
    %4053 = vrot.lane.b32.xlu0 %v3683, 121
    %v4054 = vpop.permute.xlu0 %4053
    %4055 = vrot.lane.b32.xlu0 %v3684, 121
    %v4056 = vpop.permute.xlu0 %4055
    %4057 = vrot.lane.b32.xlu0 %v3685, 121
    %v4058 = vpop.permute.xlu0 %4057
    %v4063 = vpack.c.bf16 %v4054, %v4052
    %v4064 = vpack.c.bf16 %v4058, %v4056
    %s4065 = scalar_lea.vmem [#allocation2], 528
    %v4066 = vld [vmem:[%s4065] sm:$0xf]
    %v4067 = vld [vmem:[%s4065 + $0x4] sm:$0xf]
    %v4068 = vld [vmem:[%s4065 + $0x8] sm:$0xf]
    %v4069 = vld [vmem:[%s4065 + $0xc] sm:$0xf]
    %v4074 = vunpack.c.l.b16 %v4066
    %v4075 = vunpack.c.l.b16 %v4067
    %v4076 = vunpack.c.l.b16 %v4068
    %v4077 = vunpack.c.l.b16 %v4069
    %v4078 = vpack.c.b16 %v4075, %v4074
    %v4079 = vpack.c.b16 %v4077, %v4076
    %v4081 = vsel %vm519, %v4078, 0
    %v4084 = vsel %vm519, %v4079, 0
    %4086 = vmatpush.bf16.msra.mxu0 0
    %4087 = vmatpush.bf16.msra.mxu0 0
    %4088 = vmatpush.bf16.msra.mxu0 0
    %4089 = vmatpush.bf16.msra.mxu0 0
    %4090 = vmatpush.bf16.msra.mxu0 0
    %4091 = vmatpush.bf16.msra.mxu0 0
    %4092 = vmatpush.bf16.msra.mxu0 %v4064
    %4093 = vmatpush.bf16.msra.mxu0 %v4063
    %4094 = vmatmul.bf16.gmra.mxu0 %v4081
    %v4095 = vpop.f32.mrf.mxu0
    %v4096 = vadd.f32 0.0, %v4095
    %v4097 = vpop.f32.mrf.mxu0
    %v4098 = vadd.f32 0.0, %v4097
    %4099 = vmatmul.bf16.gmra.mxu0 %v4084
    %v4100 = vpop.f32.mrf.mxu0
    %v4101 = vadd.f32 0.0, %v4100
    %v4102 = vpop.f32.mrf.mxu0
    %v4103 = vadd.f32 0.0, %v4102
    %4104 = vdwg.mxu0
    %v4105 = vmul.f32 %v4096, %v1115
    %v4106 = vmul.f32 %v4098, %v1115
    %v4107 = vmul.f32 %v4101, %v1115
    %v4108 = vmul.f32 %v4103, %v1115
    %v4109 = vadd.f32 %v4047, %v4105
    %v4110 = vadd.f32 %v4048, %v4106
    %v4111 = vadd.f32 %v4049, %v4107
    %v4112 = vadd.f32 %v4050, %v4108
    %4113 = vrot.lane.b32.xlu0 %v3682, 120
    %v4114 = vpop.permute.xlu0 %4113
    %4115 = vrot.lane.b32.xlu0 %v3683, 120
    %v4116 = vpop.permute.xlu0 %4115
    %4117 = vrot.lane.b32.xlu0 %v3684, 120
    %v4118 = vpop.permute.xlu0 %4117
    %4119 = vrot.lane.b32.xlu0 %v3685, 120
    %v4120 = vpop.permute.xlu0 %4119
    %v4125 = vpack.c.bf16 %v4116, %v4114
    %v4126 = vpack.c.bf16 %v4120, %v4118
    %s4127 = scalar_lea.vmem [#allocation2], 544
    %v4128 = vld [vmem:[%s4127] sm:$0xf]
    %v4129 = vld [vmem:[%s4127 + $0x4] sm:$0xf]
    %v4130 = vld [vmem:[%s4127 + $0x8] sm:$0xf]
    %v4131 = vld [vmem:[%s4127 + $0xc] sm:$0xf]
    %v4136 = vunpack.c.l.b16 %v4128
    %v4137 = vunpack.c.l.b16 %v4129
    %v4138 = vunpack.c.l.b16 %v4130
    %v4139 = vunpack.c.l.b16 %v4131
    %v4140 = vpack.c.b16 %v4137, %v4136
    %v4141 = vpack.c.b16 %v4139, %v4138
    %v4143 = vsel %vm519, %v4140, 0
    %v4146 = vsel %vm519, %v4141, 0
    %4148 = vmatpush.bf16.msra.mxu0 0
    %4149 = vmatpush.bf16.msra.mxu0 0
    %4150 = vmatpush.bf16.msra.mxu0 0
    %4151 = vmatpush.bf16.msra.mxu0 0
    %4152 = vmatpush.bf16.msra.mxu0 0
    %4153 = vmatpush.bf16.msra.mxu0 0
    %4154 = vmatpush.bf16.msra.mxu0 %v4126
    %4155 = vmatpush.bf16.msra.mxu0 %v4125
    %4156 = vmatmul.bf16.gmra.mxu0 %v4143
    %v4157 = vpop.f32.mrf.mxu0
    %v4158 = vadd.f32 0.0, %v4157
    %v4159 = vpop.f32.mrf.mxu0
    %v4160 = vadd.f32 0.0, %v4159
    %4161 = vmatmul.bf16.gmra.mxu0 %v4146
    %v4162 = vpop.f32.mrf.mxu0
    %v4163 = vadd.f32 0.0, %v4162
    %v4164 = vpop.f32.mrf.mxu0
    %v4165 = vadd.f32 0.0, %v4164
    %4166 = vdwg.mxu0
    %v4167 = vmul.f32 %v4158, %v1178
    %v4168 = vmul.f32 %v4160, %v1178
    %v4169 = vmul.f32 %v4163, %v1178
    %v4170 = vmul.f32 %v4165, %v1178
    %v4171 = vadd.f32 %v4109, %v4167
    %v4172 = vadd.f32 %v4110, %v4168
    %v4173 = vadd.f32 %v4111, %v4169
    %v4174 = vadd.f32 %v4112, %v4170
    %4175 = vrot.lane.b32.xlu0 %v3682, 119
    %v4176 = vpop.permute.xlu0 %4175
    %4177 = vrot.lane.b32.xlu0 %v3683, 119
    %v4178 = vpop.permute.xlu0 %4177
    %4179 = vrot.lane.b32.xlu0 %v3684, 119
    %v4180 = vpop.permute.xlu0 %4179
    %4181 = vrot.lane.b32.xlu0 %v3685, 119
    %v4182 = vpop.permute.xlu0 %4181
    %v4187 = vpack.c.bf16 %v4178, %v4176
    %v4188 = vpack.c.bf16 %v4182, %v4180
    %s4189 = scalar_lea.vmem [#allocation2], 560
    %v4190 = vld [vmem:[%s4189] sm:$0xf]
    %v4191 = vld [vmem:[%s4189 + $0x4] sm:$0xf]
    %v4192 = vld [vmem:[%s4189 + $0x8] sm:$0xf]
    %v4193 = vld [vmem:[%s4189 + $0xc] sm:$0xf]
    %v4198 = vunpack.c.l.b16 %v4190
    %v4199 = vunpack.c.l.b16 %v4191
    %v4200 = vunpack.c.l.b16 %v4192
    %v4201 = vunpack.c.l.b16 %v4193
    %v4202 = vpack.c.b16 %v4199, %v4198
    %v4203 = vpack.c.b16 %v4201, %v4200
    %v4205 = vsel %vm519, %v4202, 0
    %v4208 = vsel %vm519, %v4203, 0
    %4210 = vmatpush.bf16.msra.mxu0 0
    %4211 = vmatpush.bf16.msra.mxu0 0
    %4212 = vmatpush.bf16.msra.mxu0 0
    %4213 = vmatpush.bf16.msra.mxu0 0
    %4214 = vmatpush.bf16.msra.mxu0 0
    %4215 = vmatpush.bf16.msra.mxu0 0
    %4216 = vmatpush.bf16.msra.mxu0 %v4188
    %4217 = vmatpush.bf16.msra.mxu0 %v4187
    %4218 = vmatmul.bf16.gmra.mxu0 %v4205
    %v4219 = vpop.f32.mrf.mxu0
    %v4220 = vadd.f32 0.0, %v4219
    %v4221 = vpop.f32.mrf.mxu0
    %v4222 = vadd.f32 0.0, %v4221
    %4223 = vmatmul.bf16.gmra.mxu0 %v4208
    %v4224 = vpop.f32.mrf.mxu0
    %v4225 = vadd.f32 0.0, %v4224
    %v4226 = vpop.f32.mrf.mxu0
    %v4227 = vadd.f32 0.0, %v4226
    %4228 = vdwg.mxu0
    %v4229 = vmul.f32 %v4220, %v1241
    %v4230 = vmul.f32 %v4222, %v1241
    %v4231 = vmul.f32 %v4225, %v1241
    %v4232 = vmul.f32 %v4227, %v1241
    %v4233 = vadd.f32 %v4171, %v4229
    %v4234 = vadd.f32 %v4172, %v4230
    %v4235 = vadd.f32 %v4173, %v4231
    %v4236 = vadd.f32 %v4174, %v4232
    %4238 = vset.pattern.permute.xlu0 0
    %4239 = vperm.xlu0 %4238, %v3687
    %v4240 = vpop.permute.xlu0 %4239
    %4243 = vset.pattern.permute.xlu0 0
    %4244 = vperm.xlu0 %4243, %v3688
    %v4245 = vpop.permute.xlu0 %4244
    %4248 = vset.pattern.permute.xlu0 0
    %4249 = vperm.xlu0 %4248, %v3689
    %v4250 = vpop.permute.xlu0 %4249
    %4253 = vset.pattern.permute.xlu0 0
    %4254 = vperm.xlu0 %4253, %v3690
    %v4255 = vpop.permute.xlu0 %4254
    %v4257 = vadd.f32 %v4233, %v4240
    %v4258 = vadd.f32 %v4234, %v4245
    %v4259 = vadd.f32 %v4235, %v4250
    %v4260 = vadd.f32 %v4236, %v4255
    %s4261 = scalar_lea.vmem %s11, 96
    %v4262 = vld [vmem:[%s4261] sm:$0xff]
    %v4263 = vld [vmem:[%s4261 + $0x8] sm:$0xff]
    %v4264 = vld [vmem:[%s4261 + $0x10] sm:$0xff]
    %v4265 = vld [vmem:[%s4261 + $0x18] sm:$0xff]
    %s4266 = scalar_lea.vmem %s12, 96
    %v4267 = vld [vmem:[%s4266] sm:$0xff]
    %v4268 = vld [vmem:[%s4266 + $0x8] sm:$0xff]
    %v4269 = vld [vmem:[%s4266 + $0x10] sm:$0xff]
    %v4270 = vld [vmem:[%s4266 + $0x18] sm:$0xff]
    %4271 = vadd.xlane.f32.xlu0 %v4257
    %v4272 = vpop.xlane.xlu0 %4271
    %4273 = vadd.xlane.f32.xlu0 %v4258
    %v4274 = vpop.xlane.xlu0 %4273
    %4275 = vadd.xlane.f32.xlu0 %v4259
    %v4276 = vpop.xlane.xlu0 %4275
    %4277 = vadd.xlane.f32.xlu0 %v4260
    %v4278 = vpop.xlane.xlu0 %4277
    %v4279 = vmul.f32 %v4272, %v567
    %v4280 = vmul.f32 %v4274, %v567
    %v4281 = vmul.f32 %v4276, %v567
    %v4282 = vmul.f32 %v4278, %v567
    %v4283 = vsub.f32 %v4257, %v4279
    %v4284 = vsub.f32 %v4258, %v4280
    %v4285 = vsub.f32 %v4259, %v4281
    %v4286 = vsub.f32 %v4260, %v4282
    %v4287 = vmul.f32 %v4283, %v4283
    %v4288 = vmul.f32 %v4284, %v4284
    %v4289 = vmul.f32 %v4285, %v4285
    %v4290 = vmul.f32 %v4286, %v4286
    %4291 = vadd.xlane.f32.xlu0 %v4287
    %v4292 = vpop.xlane.xlu0 %4291
    %4293 = vadd.xlane.f32.xlu0 %v4288
    %v4294 = vpop.xlane.xlu0 %4293
    %4295 = vadd.xlane.f32.xlu0 %v4289
    %v4296 = vpop.xlane.xlu0 %4295
    %4297 = vadd.xlane.f32.xlu0 %v4290
    %v4298 = vpop.xlane.xlu0 %4297
    %v4299 = vmul.f32 %v4292, %v567
    %v4300 = vmul.f32 %v4294, %v567
    %v4301 = vmul.f32 %v4296, %v567
    %v4302 = vmul.f32 %v4298, %v567
    %v4303 = vadd.f32 %v4299, 1e-05
    %v4304 = vadd.f32 %v4300, 1e-05
    %v4305 = vadd.f32 %v4301, 1e-05
    %v4306 = vadd.f32 %v4302, 1e-05
    %v4307 = vrsqrt.pop %v4303
    %v4308 = vmul.f32 %v4307, %v4303
    %v4309 = vmul.f32 %v4308, %v4307
    %v4310 = vmul.f32 0.5, %v4309
    %v4311 = vsub.f32 1.5, %v4310
    %v4312 = vmul.f32 %v4307, %v4311
    %vm4313 = vweird.f32 %v4303
    %vm4314 = vweird.f32 %v4307
    %vm4315 = vmor %vm4313, %vm4314
    %v4316 = vsel %vm4315, %v4307, %v4312
    %v4317 = vrsqrt.pop %v4304
    %v4318 = vmul.f32 %v4317, %v4304
    %v4319 = vmul.f32 %v4318, %v4317
    %v4320 = vmul.f32 0.5, %v4319
    %v4321 = vsub.f32 1.5, %v4320
    %v4322 = vmul.f32 %v4317, %v4321
    %vm4323 = vweird.f32 %v4304
    %vm4324 = vweird.f32 %v4317
    %vm4325 = vmor %vm4323, %vm4324
    %v4326 = vsel %vm4325, %v4317, %v4322
    %v4327 = vrsqrt.pop %v4305
    %v4328 = vmul.f32 %v4327, %v4305
    %v4329 = vmul.f32 %v4328, %v4327
    %v4330 = vmul.f32 0.5, %v4329
    %v4331 = vsub.f32 1.5, %v4330
    %v4332 = vmul.f32 %v4327, %v4331
    %vm4333 = vweird.f32 %v4305
    %vm4334 = vweird.f32 %v4327
    %vm4335 = vmor %vm4333, %vm4334
    %v4336 = vsel %vm4335, %v4327, %v4332
    %v4337 = vrsqrt.pop %v4306
    %v4338 = vmul.f32 %v4337, %v4306
    %v4339 = vmul.f32 %v4338, %v4337
    %v4340 = vmul.f32 0.5, %v4339
    %v4341 = vsub.f32 1.5, %v4340
    %v4342 = vmul.f32 %v4337, %v4341
    %vm4343 = vweird.f32 %v4306
    %vm4344 = vweird.f32 %v4337
    %vm4345 = vmor %vm4343, %vm4344
    %v4346 = vsel %vm4345, %v4337, %v4342
    %v4347 = vmul.f32 %v4283, %v4316
    %v4348 = vmul.f32 %v4284, %v4326
    %v4349 = vmul.f32 %v4285, %v4336
    %v4350 = vmul.f32 %v4286, %v4346
    %4352 = vset.pattern.permute.xlu0 0
    %4353 = vperm.xlu0 %4352, %v4262
    %v4354 = vpop.permute.xlu0 %4353
    %4357 = vset.pattern.permute.xlu0 0
    %4358 = vperm.xlu0 %4357, %v4263
    %v4359 = vpop.permute.xlu0 %4358
    %4362 = vset.pattern.permute.xlu0 0
    %4363 = vperm.xlu0 %4362, %v4264
    %v4364 = vpop.permute.xlu0 %4363
    %4367 = vset.pattern.permute.xlu0 0
    %4368 = vperm.xlu0 %4367, %v4265
    %v4369 = vpop.permute.xlu0 %4368
    %v4371 = vmul.f32 %v4347, %v4354
    %v4372 = vmul.f32 %v4348, %v4359
    %v4373 = vmul.f32 %v4349, %v4364
    %v4374 = vmul.f32 %v4350, %v4369
    %4376 = vset.pattern.permute.xlu0 0
    %4377 = vperm.xlu0 %4376, %v4267
    %v4378 = vpop.permute.xlu0 %4377
    %4381 = vset.pattern.permute.xlu0 0
    %4382 = vperm.xlu0 %4381, %v4268
    %v4383 = vpop.permute.xlu0 %4382
    %4386 = vset.pattern.permute.xlu0 0
    %4387 = vperm.xlu0 %4386, %v4269
    %v4388 = vpop.permute.xlu0 %4387
    %4391 = vset.pattern.permute.xlu0 0
    %4392 = vperm.xlu0 %4391, %v4270
    %v4393 = vpop.permute.xlu0 %4392
    %v4395 = vadd.f32 %v4371, %v4378
    %v4396 = vadd.f32 %v4372, %v4383
    %v4397 = vadd.f32 %v4373, %v4388
    %v4398 = vadd.f32 %v4374, %v4393
    %v4399 = vmax.f32 %v4395, 0.0
    %v4400 = vmax.f32 %v4396, 0.0
    %v4401 = vmax.f32 %v4397, 0.0
    %v4402 = vmax.f32 %v4398, 0.0
    %s4403 = scalar_lea.vmem %s13, 48
    %v4404 = vld [vmem:[%s4403] sm:$0xf]
    %v4405 = vld [vmem:[%s4403 + $0x4] sm:$0xf]
    %v4406 = vld [vmem:[%s4403 + $0x8] sm:$0xf]
    %v4407 = vld [vmem:[%s4403 + $0xc] sm:$0xf]
    %v4408 = vpack.c.bf16 %v4400, %v4399
    %v4409 = vpack.c.bf16 %v4402, %v4401
    %s4410 = scalar_lea.vmem %s14, 96
    %v4411 = vld [vmem:[%s4410] sm:$0xff]
    %v4412 = vld [vmem:[%s4410 + $0x8] sm:$0xff]
    %v4413 = vld [vmem:[%s4410 + $0x10] sm:$0xff]
    %v4414 = vld [vmem:[%s4410 + $0x18] sm:$0xff]
    %4416 = vset.pattern.permute.xlu0 0
    %4417 = vperm.xlu0 %4416, %v4411
    %v4418 = vpop.permute.xlu0 %4417
    %4421 = vset.pattern.permute.xlu0 0
    %4422 = vperm.xlu0 %4421, %v4412
    %v4423 = vpop.permute.xlu0 %4422
    %4426 = vset.pattern.permute.xlu0 0
    %4427 = vperm.xlu0 %4426, %v4413
    %v4428 = vpop.permute.xlu0 %4427
    %4431 = vset.pattern.permute.xlu0 0
    %4432 = vperm.xlu0 %4431, %v4414
    %v4433 = vpop.permute.xlu0 %4432
    %v4439 = vunpack.c.l.b16 %v4404
    %v4440 = vunpack.c.l.b16 %v4405
    %v4441 = vunpack.c.l.b16 %v4406
    %v4442 = vunpack.c.l.b16 %v4407
    %v4443 = vpack.c.b16 %v4440, %v4439
    %v4444 = vpack.c.b16 %v4442, %v4441
    %v4446 = vsel %vm519, %v4443, 0
    %v4449 = vsel %vm519, %v4444, 0
    %4451 = vmatpush.bf16.msra.mxu0 0
    %4452 = vmatpush.bf16.msra.mxu0 0
    %4453 = vmatpush.bf16.msra.mxu0 0
    %4454 = vmatpush.bf16.msra.mxu0 0
    %4455 = vmatpush.bf16.msra.mxu0 0
    %4456 = vmatpush.bf16.msra.mxu0 0
    %4457 = vmatpush.bf16.msra.mxu0 %v4409
    %4458 = vmatpush.bf16.msra.mxu0 %v4408
    %4459 = vmatmul.bf16.gmra.mxu0 %v4446
    %v4460 = vpop.f32.mrf.mxu0
    %v4461 = vadd.f32 %v4418, %v4460
    %v4462 = vpop.f32.mrf.mxu0
    %v4463 = vadd.f32 %v4423, %v4462
    %4464 = vmatmul.bf16.gmra.mxu0 %v4449
    %v4465 = vpop.f32.mrf.mxu0
    %v4466 = vadd.f32 %v4428, %v4465
    %v4467 = vpop.f32.mrf.mxu0
    %v4468 = vadd.f32 %v4433, %v4467
    %4469 = vdwg.mxu0
    %v4470 = vadd.f32 %v4461, %v3473
    %v4471 = vadd.f32 %v4463, %v3474
    %v4472 = vadd.f32 %v4466, %v3475
    %v4473 = vadd.f32 %v4468, %v3476
    %s4474 = scalar_lea.vmem %s5, 64
    %v4475 = vld [vmem:[%s4474] sm:$0xf]
    %v4476 = vld [vmem:[%s4474 + $0x4] sm:$0xf]
    %v4477 = vld [vmem:[%s4474 + $0x8] sm:$0xf]
    %v4478 = vld [vmem:[%s4474 + $0xc] sm:$0xf]
    %v4479 = vpack.c.bf16 %v4471, %v4470
    %v4480 = vpack.c.bf16 %v4473, %v4472
    %s4481 = scalar_lea.vmem %s6, 128
    %v4482 = vld [vmem:[%s4481] sm:$0xff]
    %v4483 = vld [vmem:[%s4481 + $0x8] sm:$0xff]
    %v4484 = vld [vmem:[%s4481 + $0x10] sm:$0xff]
    %v4485 = vld [vmem:[%s4481 + $0x18] sm:$0xff]
    %4487 = vset.pattern.permute.xlu0 0
    %4488 = vperm.xlu0 %4487, %v4482
    %v4489 = vpop.permute.xlu0 %4488
    %4492 = vset.pattern.permute.xlu0 0
    %4493 = vperm.xlu0 %4492, %v4483
    %v4494 = vpop.permute.xlu0 %4493
    %4497 = vset.pattern.permute.xlu0 0
    %4498 = vperm.xlu0 %4497, %v4484
    %v4499 = vpop.permute.xlu0 %4498
    %4502 = vset.pattern.permute.xlu0 0
    %4503 = vperm.xlu0 %4502, %v4485
    %v4504 = vpop.permute.xlu0 %4503
    %v4510 = vunpack.c.l.b16 %v4475
    %v4511 = vunpack.c.l.b16 %v4476
    %v4512 = vunpack.c.l.b16 %v4477
    %v4513 = vunpack.c.l.b16 %v4478
    %v4514 = vpack.c.b16 %v4511, %v4510
    %v4515 = vpack.c.b16 %v4513, %v4512
    %v4517 = vsel %vm519, %v4514, 0
    %v4520 = vsel %vm519, %v4515, 0
    %4522 = vmatpush.bf16.msra.mxu0 0
    %4523 = vmatpush.bf16.msra.mxu0 0
    %4524 = vmatpush.bf16.msra.mxu0 0
    %4525 = vmatpush.bf16.msra.mxu0 0
    %4526 = vmatpush.bf16.msra.mxu0 0
    %4527 = vmatpush.bf16.msra.mxu0 0
    %4528 = vmatpush.bf16.msra.mxu0 %v4480
    %4529 = vmatpush.bf16.msra.mxu0 %v4479
    %4530 = vmatmul.bf16.gmra.mxu0 %v4517
    %v4531 = vpop.f32.mrf.mxu0
    %v4532 = vadd.f32 %v4489, %v4531
    %v4533 = vpop.f32.mrf.mxu0
    %v4534 = vadd.f32 %v4494, %v4533
    %4535 = vmatmul.bf16.gmra.mxu0 %v4520
    %v4536 = vpop.f32.mrf.mxu0
    %v4537 = vadd.f32 %v4499, %v4536
    %v4538 = vpop.f32.mrf.mxu0
    %v4539 = vadd.f32 %v4504, %v4538
    %4540 = vdwg.mxu0
    %s4541 = scalar_lea.vmem %s7, 128
    %v4542 = vld [vmem:[%s4541] sm:$0xff]
    %v4543 = vld [vmem:[%s4541 + $0x8] sm:$0xff]
    %v4544 = vld [vmem:[%s4541 + $0x10] sm:$0xff]
    %v4545 = vld [vmem:[%s4541 + $0x18] sm:$0xff]
    %s4546 = scalar_lea.vmem %s8, 128
    %v4547 = vld [vmem:[%s4546] sm:$0xff]
    %v4548 = vld [vmem:[%s4546 + $0x8] sm:$0xff]
    %v4549 = vld [vmem:[%s4546 + $0x10] sm:$0xff]
    %v4550 = vld [vmem:[%s4546 + $0x18] sm:$0xff]
    %4551 = vadd.xlane.f32.xlu0 %v4532
    %v4552 = vpop.xlane.xlu0 %4551
    %4553 = vadd.xlane.f32.xlu0 %v4534
    %v4554 = vpop.xlane.xlu0 %4553
    %4555 = vadd.xlane.f32.xlu0 %v4537
    %v4556 = vpop.xlane.xlu0 %4555
    %4557 = vadd.xlane.f32.xlu0 %v4539
    %v4558 = vpop.xlane.xlu0 %4557
    %v4559 = vmul.f32 %v4552, %v567
    %v4560 = vmul.f32 %v4554, %v567
    %v4561 = vmul.f32 %v4556, %v567
    %v4562 = vmul.f32 %v4558, %v567
    %v4563 = vsub.f32 %v4532, %v4559
    %v4564 = vsub.f32 %v4534, %v4560
    %v4565 = vsub.f32 %v4537, %v4561
    %v4566 = vsub.f32 %v4539, %v4562
    %v4567 = vmul.f32 %v4563, %v4563
    %v4568 = vmul.f32 %v4564, %v4564
    %v4569 = vmul.f32 %v4565, %v4565
    %v4570 = vmul.f32 %v4566, %v4566
    %4571 = vadd.xlane.f32.xlu0 %v4567
    %v4572 = vpop.xlane.xlu0 %4571
    %4573 = vadd.xlane.f32.xlu0 %v4568
    %v4574 = vpop.xlane.xlu0 %4573
    %4575 = vadd.xlane.f32.xlu0 %v4569
    %v4576 = vpop.xlane.xlu0 %4575
    %4577 = vadd.xlane.f32.xlu0 %v4570
    %v4578 = vpop.xlane.xlu0 %4577
    %v4579 = vmul.f32 %v4572, %v567
    %v4580 = vmul.f32 %v4574, %v567
    %v4581 = vmul.f32 %v4576, %v567
    %v4582 = vmul.f32 %v4578, %v567
    %v4583 = vadd.f32 %v4579, 1e-05
    %v4584 = vadd.f32 %v4580, 1e-05
    %v4585 = vadd.f32 %v4581, 1e-05
    %v4586 = vadd.f32 %v4582, 1e-05
    %v4587 = vrsqrt.pop %v4583
    %v4588 = vmul.f32 %v4587, %v4583
    %v4589 = vmul.f32 %v4588, %v4587
    %v4590 = vmul.f32 0.5, %v4589
    %v4591 = vsub.f32 1.5, %v4590
    %v4592 = vmul.f32 %v4587, %v4591
    %vm4593 = vweird.f32 %v4583
    %vm4594 = vweird.f32 %v4587
    %vm4595 = vmor %vm4593, %vm4594
    %v4596 = vsel %vm4595, %v4587, %v4592
    %v4597 = vrsqrt.pop %v4584
    %v4598 = vmul.f32 %v4597, %v4584
    %v4599 = vmul.f32 %v4598, %v4597
    %v4600 = vmul.f32 0.5, %v4599
    %v4601 = vsub.f32 1.5, %v4600
    %v4602 = vmul.f32 %v4597, %v4601
    %vm4603 = vweird.f32 %v4584
    %vm4604 = vweird.f32 %v4597
    %vm4605 = vmor %vm4603, %vm4604
    %v4606 = vsel %vm4605, %v4597, %v4602
    %v4607 = vrsqrt.pop %v4585
    %v4608 = vmul.f32 %v4607, %v4585
    %v4609 = vmul.f32 %v4608, %v4607
    %v4610 = vmul.f32 0.5, %v4609
    %v4611 = vsub.f32 1.5, %v4610
    %v4612 = vmul.f32 %v4607, %v4611
    %vm4613 = vweird.f32 %v4585
    %vm4614 = vweird.f32 %v4607
    %vm4615 = vmor %vm4613, %vm4614
    %v4616 = vsel %vm4615, %v4607, %v4612
    %v4617 = vrsqrt.pop %v4586
    %v4618 = vmul.f32 %v4617, %v4586
    %v4619 = vmul.f32 %v4618, %v4617
    %v4620 = vmul.f32 0.5, %v4619
    %v4621 = vsub.f32 1.5, %v4620
    %v4622 = vmul.f32 %v4617, %v4621
    %vm4623 = vweird.f32 %v4586
    %vm4624 = vweird.f32 %v4617
    %vm4625 = vmor %vm4623, %vm4624
    %v4626 = vsel %vm4625, %v4617, %v4622
    %v4627 = vmul.f32 %v4563, %v4596
    %v4628 = vmul.f32 %v4564, %v4606
    %v4629 = vmul.f32 %v4565, %v4616
    %v4630 = vmul.f32 %v4566, %v4626
    %4632 = vset.pattern.permute.xlu0 0
    %4633 = vperm.xlu0 %4632, %v4542
    %v4634 = vpop.permute.xlu0 %4633
    %4637 = vset.pattern.permute.xlu0 0
    %4638 = vperm.xlu0 %4637, %v4543
    %v4639 = vpop.permute.xlu0 %4638
    %4642 = vset.pattern.permute.xlu0 0
    %4643 = vperm.xlu0 %4642, %v4544
    %v4644 = vpop.permute.xlu0 %4643
    %4647 = vset.pattern.permute.xlu0 0
    %4648 = vperm.xlu0 %4647, %v4545
    %v4649 = vpop.permute.xlu0 %4648
    %v4651 = vmul.f32 %v4627, %v4634
    %v4652 = vmul.f32 %v4628, %v4639
    %v4653 = vmul.f32 %v4629, %v4644
    %v4654 = vmul.f32 %v4630, %v4649
    %4656 = vset.pattern.permute.xlu0 0
    %4657 = vperm.xlu0 %4656, %v4547
    %v4658 = vpop.permute.xlu0 %4657
    %4661 = vset.pattern.permute.xlu0 0
    %4662 = vperm.xlu0 %4661, %v4548
    %v4663 = vpop.permute.xlu0 %4662
    %4666 = vset.pattern.permute.xlu0 0
    %4667 = vperm.xlu0 %4666, %v4549
    %v4668 = vpop.permute.xlu0 %4667
    %4671 = vset.pattern.permute.xlu0 0
    %4672 = vperm.xlu0 %4671, %v4550
    %v4673 = vpop.permute.xlu0 %4672
    %v4675 = vadd.f32 %v4651, %v4658
    %v4676 = vadd.f32 %v4652, %v4663
    %v4677 = vadd.f32 %v4653, %v4668
    %v4678 = vadd.f32 %v4654, %v4673
    %v4679 = vmax.f32 %v4675, 0.0
    %v4680 = vmax.f32 %v4676, 0.0
    %v4681 = vmax.f32 %v4677, 0.0
    %v4682 = vmax.f32 %v4678, 0.0
    %s4683 = scalar_lea.vmem %s10, 128
    %v4684 = vld [vmem:[%s4683] sm:$0xff]
    %v4685 = vld [vmem:[%s4683 + $0x8] sm:$0xff]
    %v4686 = vld [vmem:[%s4683 + $0x10] sm:$0xff]
    %v4687 = vld [vmem:[%s4683 + $0x18] sm:$0xff]
    %4692 = vrot.lane.b32.xlu0 %v4679, 9
    %v4693 = vpop.permute.xlu0 %4692
    %4694 = vrot.lane.b32.xlu0 %v4680, 9
    %v4695 = vpop.permute.xlu0 %4694
    %4696 = vrot.lane.b32.xlu0 %v4681, 9
    %v4697 = vpop.permute.xlu0 %4696
    %4698 = vrot.lane.b32.xlu0 %v4682, 9
    %v4699 = vpop.permute.xlu0 %4698
    %v4704 = vpack.c.bf16 %v4695, %v4693
    %v4705 = vpack.c.bf16 %v4699, %v4697
    %s4706 = scalar_lea.vmem [#allocation2], 576
    %v4707 = vld [vmem:[%s4706] sm:$0xf]
    %v4708 = vld [vmem:[%s4706 + $0x4] sm:$0xf]
    %v4709 = vld [vmem:[%s4706 + $0x8] sm:$0xf]
    %v4710 = vld [vmem:[%s4706 + $0xc] sm:$0xf]
    %v4715 = vunpack.c.l.b16 %v4707
    %v4716 = vunpack.c.l.b16 %v4708
    %v4717 = vunpack.c.l.b16 %v4709
    %v4718 = vunpack.c.l.b16 %v4710
    %v4719 = vpack.c.b16 %v4716, %v4715
    %v4720 = vpack.c.b16 %v4718, %v4717
    %v4722 = vsel %vm519, %v4719, 0
    %v4725 = vsel %vm519, %v4720, 0
    %4727 = vmatpush.bf16.msra.mxu0 0
    %4728 = vmatpush.bf16.msra.mxu0 0
    %4729 = vmatpush.bf16.msra.mxu0 0
    %4730 = vmatpush.bf16.msra.mxu0 0
    %4731 = vmatpush.bf16.msra.mxu0 0
    %4732 = vmatpush.bf16.msra.mxu0 0
    %4733 = vmatpush.bf16.msra.mxu0 %v4705
    %4734 = vmatpush.bf16.msra.mxu0 %v4704
    %4735 = vmatmul.bf16.gmra.mxu0 %v4722
    %v4736 = vpop.f32.mrf.mxu0
    %v4737 = vadd.f32 0.0, %v4736
    %v4738 = vpop.f32.mrf.mxu0
    %v4739 = vadd.f32 0.0, %v4738
    %4740 = vmatmul.bf16.gmra.mxu0 %v4725
    %v4741 = vpop.f32.mrf.mxu0
    %v4742 = vadd.f32 0.0, %v4741
    %v4743 = vpop.f32.mrf.mxu0
    %v4744 = vadd.f32 0.0, %v4743
    %4745 = vdwg.mxu0
    %v4746 = vmul.f32 %v4737, %v753
    %v4747 = vmul.f32 %v4739, %v753
    %v4748 = vmul.f32 %v4742, %v753
    %v4749 = vmul.f32 %v4744, %v753
    %4750 = vrot.lane.b32.xlu0 %v4679, 8
    %v4751 = vpop.permute.xlu0 %4750
    %4752 = vrot.lane.b32.xlu0 %v4680, 8
    %v4753 = vpop.permute.xlu0 %4752
    %4754 = vrot.lane.b32.xlu0 %v4681, 8
    %v4755 = vpop.permute.xlu0 %4754
    %4756 = vrot.lane.b32.xlu0 %v4682, 8
    %v4757 = vpop.permute.xlu0 %4756
    %v4762 = vpack.c.bf16 %v4753, %v4751
    %v4763 = vpack.c.bf16 %v4757, %v4755
    %s4764 = scalar_lea.vmem [#allocation2], 592
    %v4765 = vld [vmem:[%s4764] sm:$0xf]
    %v4766 = vld [vmem:[%s4764 + $0x4] sm:$0xf]
    %v4767 = vld [vmem:[%s4764 + $0x8] sm:$0xf]
    %v4768 = vld [vmem:[%s4764 + $0xc] sm:$0xf]
    %v4773 = vunpack.c.l.b16 %v4765
    %v4774 = vunpack.c.l.b16 %v4766
    %v4775 = vunpack.c.l.b16 %v4767
    %v4776 = vunpack.c.l.b16 %v4768
    %v4777 = vpack.c.b16 %v4774, %v4773
    %v4778 = vpack.c.b16 %v4776, %v4775
    %v4780 = vsel %vm519, %v4777, 0
    %v4783 = vsel %vm519, %v4778, 0
    %4785 = vmatpush.bf16.msra.mxu0 0
    %4786 = vmatpush.bf16.msra.mxu0 0
    %4787 = vmatpush.bf16.msra.mxu0 0
    %4788 = vmatpush.bf16.msra.mxu0 0
    %4789 = vmatpush.bf16.msra.mxu0 0
    %4790 = vmatpush.bf16.msra.mxu0 0
    %4791 = vmatpush.bf16.msra.mxu0 %v4763
    %4792 = vmatpush.bf16.msra.mxu0 %v4762
    %4793 = vmatmul.bf16.gmra.mxu0 %v4780
    %v4794 = vpop.f32.mrf.mxu0
    %v4795 = vadd.f32 0.0, %v4794
    %v4796 = vpop.f32.mrf.mxu0
    %v4797 = vadd.f32 0.0, %v4796
    %4798 = vmatmul.bf16.gmra.mxu0 %v4783
    %v4799 = vpop.f32.mrf.mxu0
    %v4800 = vadd.f32 0.0, %v4799
    %v4801 = vpop.f32.mrf.mxu0
    %v4802 = vadd.f32 0.0, %v4801
    %4803 = vdwg.mxu0
    %v4804 = vmul.f32 %v4795, %v812
    %v4805 = vmul.f32 %v4797, %v812
    %v4806 = vmul.f32 %v4800, %v812
    %v4807 = vmul.f32 %v4802, %v812
    %v4808 = vadd.f32 %v4746, %v4804
    %v4809 = vadd.f32 %v4747, %v4805
    %v4810 = vadd.f32 %v4748, %v4806
    %v4811 = vadd.f32 %v4749, %v4807
    %4812 = vrot.lane.b32.xlu0 %v4679, 7
    %v4813 = vpop.permute.xlu0 %4812
    %4814 = vrot.lane.b32.xlu0 %v4680, 7
    %v4815 = vpop.permute.xlu0 %4814
    %4816 = vrot.lane.b32.xlu0 %v4681, 7
    %v4817 = vpop.permute.xlu0 %4816
    %4818 = vrot.lane.b32.xlu0 %v4682, 7
    %v4819 = vpop.permute.xlu0 %4818
    %v4824 = vpack.c.bf16 %v4815, %v4813
    %v4825 = vpack.c.bf16 %v4819, %v4817
    %s4826 = scalar_lea.vmem [#allocation2], 608
    %v4827 = vld [vmem:[%s4826] sm:$0xf]
    %v4828 = vld [vmem:[%s4826 + $0x4] sm:$0xf]
    %v4829 = vld [vmem:[%s4826 + $0x8] sm:$0xf]
    %v4830 = vld [vmem:[%s4826 + $0xc] sm:$0xf]
    %v4835 = vunpack.c.l.b16 %v4827
    %v4836 = vunpack.c.l.b16 %v4828
    %v4837 = vunpack.c.l.b16 %v4829
    %v4838 = vunpack.c.l.b16 %v4830
    %v4839 = vpack.c.b16 %v4836, %v4835
    %v4840 = vpack.c.b16 %v4838, %v4837
    %v4842 = vsel %vm519, %v4839, 0
    %v4845 = vsel %vm519, %v4840, 0
    %4847 = vmatpush.bf16.msra.mxu0 0
    %4848 = vmatpush.bf16.msra.mxu0 0
    %4849 = vmatpush.bf16.msra.mxu0 0
    %4850 = vmatpush.bf16.msra.mxu0 0
    %4851 = vmatpush.bf16.msra.mxu0 0
    %4852 = vmatpush.bf16.msra.mxu0 0
    %4853 = vmatpush.bf16.msra.mxu0 %v4825
    %4854 = vmatpush.bf16.msra.mxu0 %v4824
    %4855 = vmatmul.bf16.gmra.mxu0 %v4842
    %v4856 = vpop.f32.mrf.mxu0
    %v4857 = vadd.f32 0.0, %v4856
    %v4858 = vpop.f32.mrf.mxu0
    %v4859 = vadd.f32 0.0, %v4858
    %4860 = vmatmul.bf16.gmra.mxu0 %v4845
    %v4861 = vpop.f32.mrf.mxu0
    %v4862 = vadd.f32 0.0, %v4861
    %v4863 = vpop.f32.mrf.mxu0
    %v4864 = vadd.f32 0.0, %v4863
    %4865 = vdwg.mxu0
    %v4866 = vmul.f32 %v4857, %v875
    %v4867 = vmul.f32 %v4859, %v875
    %v4868 = vmul.f32 %v4862, %v875
    %v4869 = vmul.f32 %v4864, %v875
    %v4870 = vadd.f32 %v4808, %v4866
    %v4871 = vadd.f32 %v4809, %v4867
    %v4872 = vadd.f32 %v4810, %v4868
    %v4873 = vadd.f32 %v4811, %v4869
    %4874 = vrot.lane.b32.xlu0 %v4679, 1
    %v4875 = vpop.permute.xlu0 %4874
    %4876 = vrot.lane.b32.xlu0 %v4680, 1
    %v4877 = vpop.permute.xlu0 %4876
    %4878 = vrot.lane.b32.xlu0 %v4681, 1
    %v4879 = vpop.permute.xlu0 %4878
    %4880 = vrot.lane.b32.xlu0 %v4682, 1
    %v4881 = vpop.permute.xlu0 %4880
    %v4886 = vpack.c.bf16 %v4877, %v4875
    %v4887 = vpack.c.bf16 %v4881, %v4879
    %s4888 = scalar_lea.vmem [#allocation2], 624
    %v4889 = vld [vmem:[%s4888] sm:$0xf]
    %v4890 = vld [vmem:[%s4888 + $0x4] sm:$0xf]
    %v4891 = vld [vmem:[%s4888 + $0x8] sm:$0xf]
    %v4892 = vld [vmem:[%s4888 + $0xc] sm:$0xf]
    %v4897 = vunpack.c.l.b16 %v4889
    %v4898 = vunpack.c.l.b16 %v4890
    %v4899 = vunpack.c.l.b16 %v4891
    %v4900 = vunpack.c.l.b16 %v4892
    %v4901 = vpack.c.b16 %v4898, %v4897
    %v4902 = vpack.c.b16 %v4900, %v4899
    %v4904 = vsel %vm519, %v4901, 0
    %v4907 = vsel %vm519, %v4902, 0
    %4909 = vmatpush.bf16.msra.mxu0 0
    %4910 = vmatpush.bf16.msra.mxu0 0
    %4911 = vmatpush.bf16.msra.mxu0 0
    %4912 = vmatpush.bf16.msra.mxu0 0
    %4913 = vmatpush.bf16.msra.mxu0 0
    %4914 = vmatpush.bf16.msra.mxu0 0
    %4915 = vmatpush.bf16.msra.mxu0 %v4887
    %4916 = vmatpush.bf16.msra.mxu0 %v4886
    %4917 = vmatmul.bf16.gmra.mxu0 %v4904
    %v4918 = vpop.f32.mrf.mxu0
    %v4919 = vadd.f32 0.0, %v4918
    %v4920 = vpop.f32.mrf.mxu0
    %v4921 = vadd.f32 0.0, %v4920
    %4922 = vmatmul.bf16.gmra.mxu0 %v4907
    %v4923 = vpop.f32.mrf.mxu0
    %v4924 = vadd.f32 0.0, %v4923
    %v4925 = vpop.f32.mrf.mxu0
    %v4926 = vadd.f32 0.0, %v4925
    %4927 = vdwg.mxu0
    %v4928 = vmul.f32 %v4919, %v938
    %v4929 = vmul.f32 %v4921, %v938
    %v4930 = vmul.f32 %v4924, %v938
    %v4931 = vmul.f32 %v4926, %v938
    %v4932 = vadd.f32 %v4870, %v4928
    %v4933 = vadd.f32 %v4871, %v4929
    %v4934 = vadd.f32 %v4872, %v4930
    %v4935 = vadd.f32 %v4873, %v4931
    %v4936 = vpack.c.bf16 %v4680, %v4679
    %v4937 = vpack.c.bf16 %v4682, %v4681
    %s4938 = scalar_lea.vmem [#allocation2], 640
    %v4939 = vld [vmem:[%s4938] sm:$0xf]
    %v4940 = vld [vmem:[%s4938 + $0x4] sm:$0xf]
    %v4941 = vld [vmem:[%s4938 + $0x8] sm:$0xf]
    %v4942 = vld [vmem:[%s4938 + $0xc] sm:$0xf]
    %v4947 = vunpack.c.l.b16 %v4939
    %v4948 = vunpack.c.l.b16 %v4940
    %v4949 = vunpack.c.l.b16 %v4941
    %v4950 = vunpack.c.l.b16 %v4942
    %v4951 = vpack.c.b16 %v4948, %v4947
    %v4952 = vpack.c.b16 %v4950, %v4949
    %v4954 = vsel %vm519, %v4951, 0
    %v4957 = vsel %vm519, %v4952, 0
    %4959 = vmatpush.bf16.msra.mxu0 0
    %4960 = vmatpush.bf16.msra.mxu0 0
    %4961 = vmatpush.bf16.msra.mxu0 0
    %4962 = vmatpush.bf16.msra.mxu0 0
    %4963 = vmatpush.bf16.msra.mxu0 0
    %4964 = vmatpush.bf16.msra.mxu0 0
    %4965 = vmatpush.bf16.msra.mxu0 %v4937
    %4966 = vmatpush.bf16.msra.mxu0 %v4936
    %4967 = vmatmul.bf16.gmra.mxu0 %v4954
    %v4968 = vpop.f32.mrf.mxu0
    %v4969 = vadd.f32 0.0, %v4968
    %v4970 = vpop.f32.mrf.mxu0
    %v4971 = vadd.f32 0.0, %v4970
    %4972 = vmatmul.bf16.gmra.mxu0 %v4957
    %v4973 = vpop.f32.mrf.mxu0
    %v4974 = vadd.f32 0.0, %v4973
    %v4975 = vpop.f32.mrf.mxu0
    %v4976 = vadd.f32 0.0, %v4975
    %4977 = vdwg.mxu0
    %v4978 = vmul.f32 %v4969, %v989
    %v4979 = vmul.f32 %v4971, %v989
    %v4980 = vmul.f32 %v4974, %v989
    %v4981 = vmul.f32 %v4976, %v989
    %v4982 = vadd.f32 %v4932, %v4978
    %v4983 = vadd.f32 %v4933, %v4979
    %v4984 = vadd.f32 %v4934, %v4980
    %v4985 = vadd.f32 %v4935, %v4981
    %4986 = vrot.lane.b32.xlu0 %v4679, 127
    %v4987 = vpop.permute.xlu0 %4986
    %4988 = vrot.lane.b32.xlu0 %v4680, 127
    %v4989 = vpop.permute.xlu0 %4988
    %4990 = vrot.lane.b32.xlu0 %v4681, 127
    %v4991 = vpop.permute.xlu0 %4990
    %4992 = vrot.lane.b32.xlu0 %v4682, 127
    %v4993 = vpop.permute.xlu0 %4992
    %v4998 = vpack.c.bf16 %v4989, %v4987
    %v4999 = vpack.c.bf16 %v4993, %v4991
    %s5000 = scalar_lea.vmem [#allocation2], 656
    %v5001 = vld [vmem:[%s5000] sm:$0xf]
    %v5002 = vld [vmem:[%s5000 + $0x4] sm:$0xf]
    %v5003 = vld [vmem:[%s5000 + $0x8] sm:$0xf]
    %v5004 = vld [vmem:[%s5000 + $0xc] sm:$0xf]
    %v5009 = vunpack.c.l.b16 %v5001
    %v5010 = vunpack.c.l.b16 %v5002
    %v5011 = vunpack.c.l.b16 %v5003
    %v5012 = vunpack.c.l.b16 %v5004
    %v5013 = vpack.c.b16 %v5010, %v5009
    %v5014 = vpack.c.b16 %v5012, %v5011
    %v5016 = vsel %vm519, %v5013, 0
    %v5019 = vsel %vm519, %v5014, 0
    %5021 = vmatpush.bf16.msra.mxu0 0
    %5022 = vmatpush.bf16.msra.mxu0 0
    %5023 = vmatpush.bf16.msra.mxu0 0
    %5024 = vmatpush.bf16.msra.mxu0 0
    %5025 = vmatpush.bf16.msra.mxu0 0
    %5026 = vmatpush.bf16.msra.mxu0 0
    %5027 = vmatpush.bf16.msra.mxu0 %v4999
    %5028 = vmatpush.bf16.msra.mxu0 %v4998
    %5029 = vmatmul.bf16.gmra.mxu0 %v5016
    %v5030 = vpop.f32.mrf.mxu0
    %v5031 = vadd.f32 0.0, %v5030
    %v5032 = vpop.f32.mrf.mxu0
    %v5033 = vadd.f32 0.0, %v5032
    %5034 = vmatmul.bf16.gmra.mxu0 %v5019
    %v5035 = vpop.f32.mrf.mxu0
    %v5036 = vadd.f32 0.0, %v5035
    %v5037 = vpop.f32.mrf.mxu0
    %v5038 = vadd.f32 0.0, %v5037
    %5039 = vdwg.mxu0
    %v5040 = vmul.f32 %v5031, %v1052
    %v5041 = vmul.f32 %v5033, %v1052
    %v5042 = vmul.f32 %v5036, %v1052
    %v5043 = vmul.f32 %v5038, %v1052
    %v5044 = vadd.f32 %v4982, %v5040
    %v5045 = vadd.f32 %v4983, %v5041
    %v5046 = vadd.f32 %v4984, %v5042
    %v5047 = vadd.f32 %v4985, %v5043
    %5048 = vrot.lane.b32.xlu0 %v4679, 121
    %v5049 = vpop.permute.xlu0 %5048
    %5050 = vrot.lane.b32.xlu0 %v4680, 121
    %v5051 = vpop.permute.xlu0 %5050
    %5052 = vrot.lane.b32.xlu0 %v4681, 121
    %v5053 = vpop.permute.xlu0 %5052
    %5054 = vrot.lane.b32.xlu0 %v4682, 121
    %v5055 = vpop.permute.xlu0 %5054
    %v5060 = vpack.c.bf16 %v5051, %v5049
    %v5061 = vpack.c.bf16 %v5055, %v5053
    %s5062 = scalar_lea.vmem [#allocation2], 672
    %v5063 = vld [vmem:[%s5062] sm:$0xf]
    %v5064 = vld [vmem:[%s5062 + $0x4] sm:$0xf]
    %v5065 = vld [vmem:[%s5062 + $0x8] sm:$0xf]
    %v5066 = vld [vmem:[%s5062 + $0xc] sm:$0xf]
    %v5071 = vunpack.c.l.b16 %v5063
    %v5072 = vunpack.c.l.b16 %v5064
    %v5073 = vunpack.c.l.b16 %v5065
    %v5074 = vunpack.c.l.b16 %v5066
    %v5075 = vpack.c.b16 %v5072, %v5071
    %v5076 = vpack.c.b16 %v5074, %v5073
    %v5078 = vsel %vm519, %v5075, 0
    %v5081 = vsel %vm519, %v5076, 0
    %5083 = vmatpush.bf16.msra.mxu0 0
    %5084 = vmatpush.bf16.msra.mxu0 0
    %5085 = vmatpush.bf16.msra.mxu0 0
    %5086 = vmatpush.bf16.msra.mxu0 0
    %5087 = vmatpush.bf16.msra.mxu0 0
    %5088 = vmatpush.bf16.msra.mxu0 0
    %5089 = vmatpush.bf16.msra.mxu0 %v5061
    %5090 = vmatpush.bf16.msra.mxu0 %v5060
    %5091 = vmatmul.bf16.gmra.mxu0 %v5078
    %v5092 = vpop.f32.mrf.mxu0
    %v5093 = vadd.f32 0.0, %v5092
    %v5094 = vpop.f32.mrf.mxu0
    %v5095 = vadd.f32 0.0, %v5094
    %5096 = vmatmul.bf16.gmra.mxu0 %v5081
    %v5097 = vpop.f32.mrf.mxu0
    %v5098 = vadd.f32 0.0, %v5097
    %v5099 = vpop.f32.mrf.mxu0
    %v5100 = vadd.f32 0.0, %v5099
    %5101 = vdwg.mxu0
    %v5102 = vmul.f32 %v5093, %v1115
    %v5103 = vmul.f32 %v5095, %v1115
    %v5104 = vmul.f32 %v5098, %v1115
    %v5105 = vmul.f32 %v5100, %v1115
    %v5106 = vadd.f32 %v5044, %v5102
    %v5107 = vadd.f32 %v5045, %v5103
    %v5108 = vadd.f32 %v5046, %v5104
    %v5109 = vadd.f32 %v5047, %v5105
    %5110 = vrot.lane.b32.xlu0 %v4679, 120
    %v5111 = vpop.permute.xlu0 %5110
    %5112 = vrot.lane.b32.xlu0 %v4680, 120
    %v5113 = vpop.permute.xlu0 %5112
    %5114 = vrot.lane.b32.xlu0 %v4681, 120
    %v5115 = vpop.permute.xlu0 %5114
    %5116 = vrot.lane.b32.xlu0 %v4682, 120
    %v5117 = vpop.permute.xlu0 %5116
    %v5122 = vpack.c.bf16 %v5113, %v5111
    %v5123 = vpack.c.bf16 %v5117, %v5115
    %s5124 = scalar_lea.vmem [#allocation2], 688
    %v5125 = vld [vmem:[%s5124] sm:$0xf]
    %v5126 = vld [vmem:[%s5124 + $0x4] sm:$0xf]
    %v5127 = vld [vmem:[%s5124 + $0x8] sm:$0xf]
    %v5128 = vld [vmem:[%s5124 + $0xc] sm:$0xf]
    %v5133 = vunpack.c.l.b16 %v5125
    %v5134 = vunpack.c.l.b16 %v5126
    %v5135 = vunpack.c.l.b16 %v5127
    %v5136 = vunpack.c.l.b16 %v5128
    %v5137 = vpack.c.b16 %v5134, %v5133
    %v5138 = vpack.c.b16 %v5136, %v5135
    %v5140 = vsel %vm519, %v5137, 0
    %v5143 = vsel %vm519, %v5138, 0
    %5145 = vmatpush.bf16.msra.mxu0 0
    %5146 = vmatpush.bf16.msra.mxu0 0
    %5147 = vmatpush.bf16.msra.mxu0 0
    %5148 = vmatpush.bf16.msra.mxu0 0
    %5149 = vmatpush.bf16.msra.mxu0 0
    %5150 = vmatpush.bf16.msra.mxu0 0
    %5151 = vmatpush.bf16.msra.mxu0 %v5123
    %5152 = vmatpush.bf16.msra.mxu0 %v5122
    %5153 = vmatmul.bf16.gmra.mxu0 %v5140
    %v5154 = vpop.f32.mrf.mxu0
    %v5155 = vadd.f32 0.0, %v5154
    %v5156 = vpop.f32.mrf.mxu0
    %v5157 = vadd.f32 0.0, %v5156
    %5158 = vmatmul.bf16.gmra.mxu0 %v5143
    %v5159 = vpop.f32.mrf.mxu0
    %v5160 = vadd.f32 0.0, %v5159
    %v5161 = vpop.f32.mrf.mxu0
    %v5162 = vadd.f32 0.0, %v5161
    %5163 = vdwg.mxu0
    %v5164 = vmul.f32 %v5155, %v1178
    %v5165 = vmul.f32 %v5157, %v1178
    %v5166 = vmul.f32 %v5160, %v1178
    %v5167 = vmul.f32 %v5162, %v1178
    %v5168 = vadd.f32 %v5106, %v5164
    %v5169 = vadd.f32 %v5107, %v5165
    %v5170 = vadd.f32 %v5108, %v5166
    %v5171 = vadd.f32 %v5109, %v5167
    %5172 = vrot.lane.b32.xlu0 %v4679, 119
    %v5173 = vpop.permute.xlu0 %5172
    %5174 = vrot.lane.b32.xlu0 %v4680, 119
    %v5175 = vpop.permute.xlu0 %5174
    %5176 = vrot.lane.b32.xlu0 %v4681, 119
    %v5177 = vpop.permute.xlu0 %5176
    %5178 = vrot.lane.b32.xlu0 %v4682, 119
    %v5179 = vpop.permute.xlu0 %5178
    %v5184 = vpack.c.bf16 %v5175, %v5173
    %v5185 = vpack.c.bf16 %v5179, %v5177
    %s5186 = scalar_lea.vmem [#allocation2], 704
    %v5187 = vld [vmem:[%s5186] sm:$0xf]
    %v5188 = vld [vmem:[%s5186 + $0x4] sm:$0xf]
    %v5189 = vld [vmem:[%s5186 + $0x8] sm:$0xf]
    %v5190 = vld [vmem:[%s5186 + $0xc] sm:$0xf]
    %v5195 = vunpack.c.l.b16 %v5187
    %v5196 = vunpack.c.l.b16 %v5188
    %v5197 = vunpack.c.l.b16 %v5189
    %v5198 = vunpack.c.l.b16 %v5190
    %v5199 = vpack.c.b16 %v5196, %v5195
    %v5200 = vpack.c.b16 %v5198, %v5197
    %v5202 = vsel %vm519, %v5199, 0
    %v5205 = vsel %vm519, %v5200, 0
    %5207 = vmatpush.bf16.msra.mxu0 0
    %5208 = vmatpush.bf16.msra.mxu0 0
    %5209 = vmatpush.bf16.msra.mxu0 0
    %5210 = vmatpush.bf16.msra.mxu0 0
    %5211 = vmatpush.bf16.msra.mxu0 0
    %5212 = vmatpush.bf16.msra.mxu0 0
    %5213 = vmatpush.bf16.msra.mxu0 %v5185
    %5214 = vmatpush.bf16.msra.mxu0 %v5184
    %5215 = vmatmul.bf16.gmra.mxu0 %v5202
    %v5216 = vpop.f32.mrf.mxu0
    %v5217 = vadd.f32 0.0, %v5216
    %v5218 = vpop.f32.mrf.mxu0
    %v5219 = vadd.f32 0.0, %v5218
    %5220 = vmatmul.bf16.gmra.mxu0 %v5205
    %v5221 = vpop.f32.mrf.mxu0
    %v5222 = vadd.f32 0.0, %v5221
    %v5223 = vpop.f32.mrf.mxu0
    %v5224 = vadd.f32 0.0, %v5223
    %5225 = vdwg.mxu0
    %v5226 = vmul.f32 %v5217, %v1241
    %v5227 = vmul.f32 %v5219, %v1241
    %v5228 = vmul.f32 %v5222, %v1241
    %v5229 = vmul.f32 %v5224, %v1241
    %v5230 = vadd.f32 %v5168, %v5226
    %v5231 = vadd.f32 %v5169, %v5227
    %v5232 = vadd.f32 %v5170, %v5228
    %v5233 = vadd.f32 %v5171, %v5229
    %5235 = vset.pattern.permute.xlu0 0
    %5236 = vperm.xlu0 %5235, %v4684
    %v5237 = vpop.permute.xlu0 %5236
    %5240 = vset.pattern.permute.xlu0 0
    %5241 = vperm.xlu0 %5240, %v4685
    %v5242 = vpop.permute.xlu0 %5241
    %5245 = vset.pattern.permute.xlu0 0
    %5246 = vperm.xlu0 %5245, %v4686
    %v5247 = vpop.permute.xlu0 %5246
    %5250 = vset.pattern.permute.xlu0 0
    %5251 = vperm.xlu0 %5250, %v4687
    %v5252 = vpop.permute.xlu0 %5251
    %v5254 = vadd.f32 %v5230, %v5237
    %v5255 = vadd.f32 %v5231, %v5242
    %v5256 = vadd.f32 %v5232, %v5247
    %v5257 = vadd.f32 %v5233, %v5252
    %s5258 = scalar_lea.vmem %s11, 128
    %v5259 = vld [vmem:[%s5258] sm:$0xff]
    %v5260 = vld [vmem:[%s5258 + $0x8] sm:$0xff]
    %v5261 = vld [vmem:[%s5258 + $0x10] sm:$0xff]
    %v5262 = vld [vmem:[%s5258 + $0x18] sm:$0xff]
    %s5263 = scalar_lea.vmem %s12, 128
    %v5264 = vld [vmem:[%s5263] sm:$0xff]
    %v5265 = vld [vmem:[%s5263 + $0x8] sm:$0xff]
    %v5266 = vld [vmem:[%s5263 + $0x10] sm:$0xff]
    %v5267 = vld [vmem:[%s5263 + $0x18] sm:$0xff]
    %5268 = vadd.xlane.f32.xlu0 %v5254
    %v5269 = vpop.xlane.xlu0 %5268
    %5270 = vadd.xlane.f32.xlu0 %v5255
    %v5271 = vpop.xlane.xlu0 %5270
    %5272 = vadd.xlane.f32.xlu0 %v5256
    %v5273 = vpop.xlane.xlu0 %5272
    %5274 = vadd.xlane.f32.xlu0 %v5257
    %v5275 = vpop.xlane.xlu0 %5274
    %v5276 = vmul.f32 %v5269, %v567
    %v5277 = vmul.f32 %v5271, %v567
    %v5278 = vmul.f32 %v5273, %v567
    %v5279 = vmul.f32 %v5275, %v567
    %v5280 = vsub.f32 %v5254, %v5276
    %v5281 = vsub.f32 %v5255, %v5277
    %v5282 = vsub.f32 %v5256, %v5278
    %v5283 = vsub.f32 %v5257, %v5279
    %v5284 = vmul.f32 %v5280, %v5280
    %v5285 = vmul.f32 %v5281, %v5281
    %v5286 = vmul.f32 %v5282, %v5282
    %v5287 = vmul.f32 %v5283, %v5283
    %5288 = vadd.xlane.f32.xlu0 %v5284
    %v5289 = vpop.xlane.xlu0 %5288
    %5290 = vadd.xlane.f32.xlu0 %v5285
    %v5291 = vpop.xlane.xlu0 %5290
    %5292 = vadd.xlane.f32.xlu0 %v5286
    %v5293 = vpop.xlane.xlu0 %5292
    %5294 = vadd.xlane.f32.xlu0 %v5287
    %v5295 = vpop.xlane.xlu0 %5294
    %v5296 = vmul.f32 %v5289, %v567
    %v5297 = vmul.f32 %v5291, %v567
    %v5298 = vmul.f32 %v5293, %v567
    %v5299 = vmul.f32 %v5295, %v567
    %v5300 = vadd.f32 %v5296, 1e-05
    %v5301 = vadd.f32 %v5297, 1e-05
    %v5302 = vadd.f32 %v5298, 1e-05
    %v5303 = vadd.f32 %v5299, 1e-05
    %v5304 = vrsqrt.pop %v5300
    %v5305 = vmul.f32 %v5304, %v5300
    %v5306 = vmul.f32 %v5305, %v5304
    %v5307 = vmul.f32 0.5, %v5306
    %v5308 = vsub.f32 1.5, %v5307
    %v5309 = vmul.f32 %v5304, %v5308
    %vm5310 = vweird.f32 %v5300
    %vm5311 = vweird.f32 %v5304
    %vm5312 = vmor %vm5310, %vm5311
    %v5313 = vsel %vm5312, %v5304, %v5309
    %v5314 = vrsqrt.pop %v5301
    %v5315 = vmul.f32 %v5314, %v5301
    %v5316 = vmul.f32 %v5315, %v5314
    %v5317 = vmul.f32 0.5, %v5316
    %v5318 = vsub.f32 1.5, %v5317
    %v5319 = vmul.f32 %v5314, %v5318
    %vm5320 = vweird.f32 %v5301
    %vm5321 = vweird.f32 %v5314
    %vm5322 = vmor %vm5320, %vm5321
    %v5323 = vsel %vm5322, %v5314, %v5319
    %v5324 = vrsqrt.pop %v5302
    %v5325 = vmul.f32 %v5324, %v5302
    %v5326 = vmul.f32 %v5325, %v5324
    %v5327 = vmul.f32 0.5, %v5326
    %v5328 = vsub.f32 1.5, %v5327
    %v5329 = vmul.f32 %v5324, %v5328
    %vm5330 = vweird.f32 %v5302
    %vm5331 = vweird.f32 %v5324
    %vm5332 = vmor %vm5330, %vm5331
    %v5333 = vsel %vm5332, %v5324, %v5329
    %v5334 = vrsqrt.pop %v5303
    %v5335 = vmul.f32 %v5334, %v5303
    %v5336 = vmul.f32 %v5335, %v5334
    %v5337 = vmul.f32 0.5, %v5336
    %v5338 = vsub.f32 1.5, %v5337
    %v5339 = vmul.f32 %v5334, %v5338
    %vm5340 = vweird.f32 %v5303
    %vm5341 = vweird.f32 %v5334
    %vm5342 = vmor %vm5340, %vm5341
    %v5343 = vsel %vm5342, %v5334, %v5339
    %v5344 = vmul.f32 %v5280, %v5313
    %v5345 = vmul.f32 %v5281, %v5323
    %v5346 = vmul.f32 %v5282, %v5333
    %v5347 = vmul.f32 %v5283, %v5343
    %5349 = vset.pattern.permute.xlu0 0
    %5350 = vperm.xlu0 %5349, %v5259
    %v5351 = vpop.permute.xlu0 %5350
    %5354 = vset.pattern.permute.xlu0 0
    %5355 = vperm.xlu0 %5354, %v5260
    %v5356 = vpop.permute.xlu0 %5355
    %5359 = vset.pattern.permute.xlu0 0
    %5360 = vperm.xlu0 %5359, %v5261
    %v5361 = vpop.permute.xlu0 %5360
    %5364 = vset.pattern.permute.xlu0 0
    %5365 = vperm.xlu0 %5364, %v5262
    %v5366 = vpop.permute.xlu0 %5365
    %v5368 = vmul.f32 %v5344, %v5351
    %v5369 = vmul.f32 %v5345, %v5356
    %v5370 = vmul.f32 %v5346, %v5361
    %v5371 = vmul.f32 %v5347, %v5366
    %5373 = vset.pattern.permute.xlu0 0
    %5374 = vperm.xlu0 %5373, %v5264
    %v5375 = vpop.permute.xlu0 %5374
    %5378 = vset.pattern.permute.xlu0 0
    %5379 = vperm.xlu0 %5378, %v5265
    %v5380 = vpop.permute.xlu0 %5379
    %5383 = vset.pattern.permute.xlu0 0
    %5384 = vperm.xlu0 %5383, %v5266
    %v5385 = vpop.permute.xlu0 %5384
    %5388 = vset.pattern.permute.xlu0 0
    %5389 = vperm.xlu0 %5388, %v5267
    %v5390 = vpop.permute.xlu0 %5389
    %v5392 = vadd.f32 %v5368, %v5375
    %v5393 = vadd.f32 %v5369, %v5380
    %v5394 = vadd.f32 %v5370, %v5385
    %v5395 = vadd.f32 %v5371, %v5390
    %v5396 = vmax.f32 %v5392, 0.0
    %v5397 = vmax.f32 %v5393, 0.0
    %v5398 = vmax.f32 %v5394, 0.0
    %v5399 = vmax.f32 %v5395, 0.0
    %s5400 = scalar_lea.vmem %s13, 64
    %v5401 = vld [vmem:[%s5400] sm:$0xf]
    %v5402 = vld [vmem:[%s5400 + $0x4] sm:$0xf]
    %v5403 = vld [vmem:[%s5400 + $0x8] sm:$0xf]
    %v5404 = vld [vmem:[%s5400 + $0xc] sm:$0xf]
    %v5405 = vpack.c.bf16 %v5397, %v5396
    %v5406 = vpack.c.bf16 %v5399, %v5398
    %s5407 = scalar_lea.vmem %s14, 128
    %v5408 = vld [vmem:[%s5407] sm:$0xff]
    %v5409 = vld [vmem:[%s5407 + $0x8] sm:$0xff]
    %v5410 = vld [vmem:[%s5407 + $0x10] sm:$0xff]
    %v5411 = vld [vmem:[%s5407 + $0x18] sm:$0xff]
    %5413 = vset.pattern.permute.xlu0 0
    %5414 = vperm.xlu0 %5413, %v5408
    %v5415 = vpop.permute.xlu0 %5414
    %5418 = vset.pattern.permute.xlu0 0
    %5419 = vperm.xlu0 %5418, %v5409
    %v5420 = vpop.permute.xlu0 %5419
    %5423 = vset.pattern.permute.xlu0 0
    %5424 = vperm.xlu0 %5423, %v5410
    %v5425 = vpop.permute.xlu0 %5424
    %5428 = vset.pattern.permute.xlu0 0
    %5429 = vperm.xlu0 %5428, %v5411
    %v5430 = vpop.permute.xlu0 %5429
    %v5436 = vunpack.c.l.b16 %v5401
    %v5437 = vunpack.c.l.b16 %v5402
    %v5438 = vunpack.c.l.b16 %v5403
    %v5439 = vunpack.c.l.b16 %v5404
    %v5440 = vpack.c.b16 %v5437, %v5436
    %v5441 = vpack.c.b16 %v5439, %v5438
    %v5443 = vsel %vm519, %v5440, 0
    %v5446 = vsel %vm519, %v5441, 0
    %5448 = vmatpush.bf16.msra.mxu0 0
    %5449 = vmatpush.bf16.msra.mxu0 0
    %5450 = vmatpush.bf16.msra.mxu0 0
    %5451 = vmatpush.bf16.msra.mxu0 0
    %5452 = vmatpush.bf16.msra.mxu0 0
    %5453 = vmatpush.bf16.msra.mxu0 0
    %5454 = vmatpush.bf16.msra.mxu0 %v5406
    %5455 = vmatpush.bf16.msra.mxu0 %v5405
    %5456 = vmatmul.bf16.gmra.mxu0 %v5443
    %v5457 = vpop.f32.mrf.mxu0
    %v5458 = vadd.f32 %v5415, %v5457
    %v5459 = vpop.f32.mrf.mxu0
    %v5460 = vadd.f32 %v5420, %v5459
    %5461 = vmatmul.bf16.gmra.mxu0 %v5446
    %v5462 = vpop.f32.mrf.mxu0
    %v5463 = vadd.f32 %v5425, %v5462
    %v5464 = vpop.f32.mrf.mxu0
    %v5465 = vadd.f32 %v5430, %v5464
    %5466 = vdwg.mxu0
    %v5467 = vadd.f32 %v5458, %v4470
    %v5468 = vadd.f32 %v5460, %v4471
    %v5469 = vadd.f32 %v5463, %v4472
    %v5470 = vadd.f32 %v5465, %v4473
    %s5471 = scalar_lea.vmem %s5, 80
    %v5472 = vld [vmem:[%s5471] sm:$0xf]
    %v5473 = vld [vmem:[%s5471 + $0x4] sm:$0xf]
    %v5474 = vld [vmem:[%s5471 + $0x8] sm:$0xf]
    %v5475 = vld [vmem:[%s5471 + $0xc] sm:$0xf]
    %v5476 = vpack.c.bf16 %v5468, %v5467
    %v5477 = vpack.c.bf16 %v5470, %v5469
    %s5478 = scalar_lea.vmem %s6, 160
    %v5479 = vld [vmem:[%s5478] sm:$0xff]
    %v5480 = vld [vmem:[%s5478 + $0x8] sm:$0xff]
    %v5481 = vld [vmem:[%s5478 + $0x10] sm:$0xff]
    %v5482 = vld [vmem:[%s5478 + $0x18] sm:$0xff]
    %5484 = vset.pattern.permute.xlu0 0
    %5485 = vperm.xlu0 %5484, %v5479
    %v5486 = vpop.permute.xlu0 %5485
    %5489 = vset.pattern.permute.xlu0 0
    %5490 = vperm.xlu0 %5489, %v5480
    %v5491 = vpop.permute.xlu0 %5490
    %5494 = vset.pattern.permute.xlu0 0
    %5495 = vperm.xlu0 %5494, %v5481
    %v5496 = vpop.permute.xlu0 %5495
    %5499 = vset.pattern.permute.xlu0 0
    %5500 = vperm.xlu0 %5499, %v5482
    %v5501 = vpop.permute.xlu0 %5500
    %v5507 = vunpack.c.l.b16 %v5472
    %v5508 = vunpack.c.l.b16 %v5473
    %v5509 = vunpack.c.l.b16 %v5474
    %v5510 = vunpack.c.l.b16 %v5475
    %v5511 = vpack.c.b16 %v5508, %v5507
    %v5512 = vpack.c.b16 %v5510, %v5509
    %v5514 = vsel %vm519, %v5511, 0
    %v5517 = vsel %vm519, %v5512, 0
    %5519 = vmatpush.bf16.msra.mxu0 0
    %5520 = vmatpush.bf16.msra.mxu0 0
    %5521 = vmatpush.bf16.msra.mxu0 0
    %5522 = vmatpush.bf16.msra.mxu0 0
    %5523 = vmatpush.bf16.msra.mxu0 0
    %5524 = vmatpush.bf16.msra.mxu0 0
    %5525 = vmatpush.bf16.msra.mxu0 %v5477
    %5526 = vmatpush.bf16.msra.mxu0 %v5476
    %5527 = vmatmul.bf16.gmra.mxu0 %v5514
    %v5528 = vpop.f32.mrf.mxu0
    %v5529 = vadd.f32 %v5486, %v5528
    %v5530 = vpop.f32.mrf.mxu0
    %v5531 = vadd.f32 %v5491, %v5530
    %5532 = vmatmul.bf16.gmra.mxu0 %v5517
    %v5533 = vpop.f32.mrf.mxu0
    %v5534 = vadd.f32 %v5496, %v5533
    %v5535 = vpop.f32.mrf.mxu0
    %v5536 = vadd.f32 %v5501, %v5535
    %5537 = vdwg.mxu0
    %s5538 = scalar_lea.vmem %s7, 160
    %v5539 = vld [vmem:[%s5538] sm:$0xff]
    %v5540 = vld [vmem:[%s5538 + $0x8] sm:$0xff]
    %v5541 = vld [vmem:[%s5538 + $0x10] sm:$0xff]
    %v5542 = vld [vmem:[%s5538 + $0x18] sm:$0xff]
    %s5543 = scalar_lea.vmem %s8, 160
    %v5544 = vld [vmem:[%s5543] sm:$0xff]
    %v5545 = vld [vmem:[%s5543 + $0x8] sm:$0xff]
    %v5546 = vld [vmem:[%s5543 + $0x10] sm:$0xff]
    %v5547 = vld [vmem:[%s5543 + $0x18] sm:$0xff]
    %5548 = vadd.xlane.f32.xlu0 %v5529
    %v5549 = vpop.xlane.xlu0 %5548
    %5550 = vadd.xlane.f32.xlu0 %v5531
    %v5551 = vpop.xlane.xlu0 %5550
    %5552 = vadd.xlane.f32.xlu0 %v5534
    %v5553 = vpop.xlane.xlu0 %5552
    %5554 = vadd.xlane.f32.xlu0 %v5536
    %v5555 = vpop.xlane.xlu0 %5554
    %v5556 = vmul.f32 %v5549, %v567
    %v5557 = vmul.f32 %v5551, %v567
    %v5558 = vmul.f32 %v5553, %v567
    %v5559 = vmul.f32 %v5555, %v567
    %v5560 = vsub.f32 %v5529, %v5556
    %v5561 = vsub.f32 %v5531, %v5557
    %v5562 = vsub.f32 %v5534, %v5558
    %v5563 = vsub.f32 %v5536, %v5559
    %v5564 = vmul.f32 %v5560, %v5560
    %v5565 = vmul.f32 %v5561, %v5561
    %v5566 = vmul.f32 %v5562, %v5562
    %v5567 = vmul.f32 %v5563, %v5563
    %5568 = vadd.xlane.f32.xlu0 %v5564
    %v5569 = vpop.xlane.xlu0 %5568
    %5570 = vadd.xlane.f32.xlu0 %v5565
    %v5571 = vpop.xlane.xlu0 %5570
    %5572 = vadd.xlane.f32.xlu0 %v5566
    %v5573 = vpop.xlane.xlu0 %5572
    %5574 = vadd.xlane.f32.xlu0 %v5567
    %v5575 = vpop.xlane.xlu0 %5574
    %v5576 = vmul.f32 %v5569, %v567
    %v5577 = vmul.f32 %v5571, %v567
    %v5578 = vmul.f32 %v5573, %v567
    %v5579 = vmul.f32 %v5575, %v567
    %v5580 = vadd.f32 %v5576, 1e-05
    %v5581 = vadd.f32 %v5577, 1e-05
    %v5582 = vadd.f32 %v5578, 1e-05
    %v5583 = vadd.f32 %v5579, 1e-05
    %v5584 = vrsqrt.pop %v5580
    %v5585 = vmul.f32 %v5584, %v5580
    %v5586 = vmul.f32 %v5585, %v5584
    %v5587 = vmul.f32 0.5, %v5586
    %v5588 = vsub.f32 1.5, %v5587
    %v5589 = vmul.f32 %v5584, %v5588
    %vm5590 = vweird.f32 %v5580
    %vm5591 = vweird.f32 %v5584
    %vm5592 = vmor %vm5590, %vm5591
    %v5593 = vsel %vm5592, %v5584, %v5589
    %v5594 = vrsqrt.pop %v5581
    %v5595 = vmul.f32 %v5594, %v5581
    %v5596 = vmul.f32 %v5595, %v5594
    %v5597 = vmul.f32 0.5, %v5596
    %v5598 = vsub.f32 1.5, %v5597
    %v5599 = vmul.f32 %v5594, %v5598
    %vm5600 = vweird.f32 %v5581
    %vm5601 = vweird.f32 %v5594
    %vm5602 = vmor %vm5600, %vm5601
    %v5603 = vsel %vm5602, %v5594, %v5599
    %v5604 = vrsqrt.pop %v5582
    %v5605 = vmul.f32 %v5604, %v5582
    %v5606 = vmul.f32 %v5605, %v5604
    %v5607 = vmul.f32 0.5, %v5606
    %v5608 = vsub.f32 1.5, %v5607
    %v5609 = vmul.f32 %v5604, %v5608
    %vm5610 = vweird.f32 %v5582
    %vm5611 = vweird.f32 %v5604
    %vm5612 = vmor %vm5610, %vm5611
    %v5613 = vsel %vm5612, %v5604, %v5609
    %v5614 = vrsqrt.pop %v5583
    %v5615 = vmul.f32 %v5614, %v5583
    %v5616 = vmul.f32 %v5615, %v5614
    %v5617 = vmul.f32 0.5, %v5616
    %v5618 = vsub.f32 1.5, %v5617
    %v5619 = vmul.f32 %v5614, %v5618
    %vm5620 = vweird.f32 %v5583
    %vm5621 = vweird.f32 %v5614
    %vm5622 = vmor %vm5620, %vm5621
    %v5623 = vsel %vm5622, %v5614, %v5619
    %v5624 = vmul.f32 %v5560, %v5593
    %v5625 = vmul.f32 %v5561, %v5603
    %v5626 = vmul.f32 %v5562, %v5613
    %v5627 = vmul.f32 %v5563, %v5623
    %5629 = vset.pattern.permute.xlu0 0
    %5630 = vperm.xlu0 %5629, %v5539
    %v5631 = vpop.permute.xlu0 %5630
    %5634 = vset.pattern.permute.xlu0 0
    %5635 = vperm.xlu0 %5634, %v5540
    %v5636 = vpop.permute.xlu0 %5635
    %5639 = vset.pattern.permute.xlu0 0
    %5640 = vperm.xlu0 %5639, %v5541
    %v5641 = vpop.permute.xlu0 %5640
    %5644 = vset.pattern.permute.xlu0 0
    %5645 = vperm.xlu0 %5644, %v5542
    %v5646 = vpop.permute.xlu0 %5645
    %v5648 = vmul.f32 %v5624, %v5631
    %v5649 = vmul.f32 %v5625, %v5636
    %v5650 = vmul.f32 %v5626, %v5641
    %v5651 = vmul.f32 %v5627, %v5646
    %5653 = vset.pattern.permute.xlu0 0
    %5654 = vperm.xlu0 %5653, %v5544
    %v5655 = vpop.permute.xlu0 %5654
    %5658 = vset.pattern.permute.xlu0 0
    %5659 = vperm.xlu0 %5658, %v5545
    %v5660 = vpop.permute.xlu0 %5659
    %5663 = vset.pattern.permute.xlu0 0
    %5664 = vperm.xlu0 %5663, %v5546
    %v5665 = vpop.permute.xlu0 %5664
    %5668 = vset.pattern.permute.xlu0 0
    %5669 = vperm.xlu0 %5668, %v5547
    %v5670 = vpop.permute.xlu0 %5669
    %v5672 = vadd.f32 %v5648, %v5655
    %v5673 = vadd.f32 %v5649, %v5660
    %v5674 = vadd.f32 %v5650, %v5665
    %v5675 = vadd.f32 %v5651, %v5670
    %v5676 = vmax.f32 %v5672, 0.0
    %v5677 = vmax.f32 %v5673, 0.0
    %v5678 = vmax.f32 %v5674, 0.0
    %v5679 = vmax.f32 %v5675, 0.0
    %s5680 = scalar_lea.vmem %s10, 160
    %v5681 = vld [vmem:[%s5680] sm:$0xff]
    %v5682 = vld [vmem:[%s5680 + $0x8] sm:$0xff]
    %v5683 = vld [vmem:[%s5680 + $0x10] sm:$0xff]
    %v5684 = vld [vmem:[%s5680 + $0x18] sm:$0xff]
    %5689 = vrot.lane.b32.xlu0 %v5676, 9
    %v5690 = vpop.permute.xlu0 %5689
    %5691 = vrot.lane.b32.xlu0 %v5677, 9
    %v5692 = vpop.permute.xlu0 %5691
    %5693 = vrot.lane.b32.xlu0 %v5678, 9
    %v5694 = vpop.permute.xlu0 %5693
    %5695 = vrot.lane.b32.xlu0 %v5679, 9
    %v5696 = vpop.permute.xlu0 %5695
    %v5701 = vpack.c.bf16 %v5692, %v5690
    %v5702 = vpack.c.bf16 %v5696, %v5694
    %s5703 = scalar_lea.vmem [#allocation2], 720
    %v5704 = vld [vmem:[%s5703] sm:$0xf]
    %v5705 = vld [vmem:[%s5703 + $0x4] sm:$0xf]
    %v5706 = vld [vmem:[%s5703 + $0x8] sm:$0xf]
    %v5707 = vld [vmem:[%s5703 + $0xc] sm:$0xf]
    %v5712 = vunpack.c.l.b16 %v5704
    %v5713 = vunpack.c.l.b16 %v5705
    %v5714 = vunpack.c.l.b16 %v5706
    %v5715 = vunpack.c.l.b16 %v5707
    %v5716 = vpack.c.b16 %v5713, %v5712
    %v5717 = vpack.c.b16 %v5715, %v5714
    %v5719 = vsel %vm519, %v5716, 0
    %v5722 = vsel %vm519, %v5717, 0
    %5724 = vmatpush.bf16.msra.mxu0 0
    %5725 = vmatpush.bf16.msra.mxu0 0
    %5726 = vmatpush.bf16.msra.mxu0 0
    %5727 = vmatpush.bf16.msra.mxu0 0
    %5728 = vmatpush.bf16.msra.mxu0 0
    %5729 = vmatpush.bf16.msra.mxu0 0
    %5730 = vmatpush.bf16.msra.mxu0 %v5702
    %5731 = vmatpush.bf16.msra.mxu0 %v5701
    %5732 = vmatmul.bf16.gmra.mxu0 %v5719
    %v5733 = vpop.f32.mrf.mxu0
    %v5734 = vadd.f32 0.0, %v5733
    %v5735 = vpop.f32.mrf.mxu0
    %v5736 = vadd.f32 0.0, %v5735
    %5737 = vmatmul.bf16.gmra.mxu0 %v5722
    %v5738 = vpop.f32.mrf.mxu0
    %v5739 = vadd.f32 0.0, %v5738
    %v5740 = vpop.f32.mrf.mxu0
    %v5741 = vadd.f32 0.0, %v5740
    %5742 = vdwg.mxu0
    %v5743 = vmul.f32 %v5734, %v753
    %v5744 = vmul.f32 %v5736, %v753
    %v5745 = vmul.f32 %v5739, %v753
    %v5746 = vmul.f32 %v5741, %v753
    %5747 = vrot.lane.b32.xlu0 %v5676, 8
    %v5748 = vpop.permute.xlu0 %5747
    %5749 = vrot.lane.b32.xlu0 %v5677, 8
    %v5750 = vpop.permute.xlu0 %5749
    %5751 = vrot.lane.b32.xlu0 %v5678, 8
    %v5752 = vpop.permute.xlu0 %5751
    %5753 = vrot.lane.b32.xlu0 %v5679, 8
    %v5754 = vpop.permute.xlu0 %5753
    %v5759 = vpack.c.bf16 %v5750, %v5748
    %v5760 = vpack.c.bf16 %v5754, %v5752
    %s5761 = scalar_lea.vmem [#allocation2], 736
    %v5762 = vld [vmem:[%s5761] sm:$0xf]
    %v5763 = vld [vmem:[%s5761 + $0x4] sm:$0xf]
    %v5764 = vld [vmem:[%s5761 + $0x8] sm:$0xf]
    %v5765 = vld [vmem:[%s5761 + $0xc] sm:$0xf]
    %v5770 = vunpack.c.l.b16 %v5762
    %v5771 = vunpack.c.l.b16 %v5763
    %v5772 = vunpack.c.l.b16 %v5764
    %v5773 = vunpack.c.l.b16 %v5765
    %v5774 = vpack.c.b16 %v5771, %v5770
    %v5775 = vpack.c.b16 %v5773, %v5772
    %v5777 = vsel %vm519, %v5774, 0
    %v5780 = vsel %vm519, %v5775, 0
    %5782 = vmatpush.bf16.msra.mxu0 0
    %5783 = vmatpush.bf16.msra.mxu0 0
    %5784 = vmatpush.bf16.msra.mxu0 0
    %5785 = vmatpush.bf16.msra.mxu0 0
    %5786 = vmatpush.bf16.msra.mxu0 0
    %5787 = vmatpush.bf16.msra.mxu0 0
    %5788 = vmatpush.bf16.msra.mxu0 %v5760
    %5789 = vmatpush.bf16.msra.mxu0 %v5759
    %5790 = vmatmul.bf16.gmra.mxu0 %v5777
    %v5791 = vpop.f32.mrf.mxu0
    %v5792 = vadd.f32 0.0, %v5791
    %v5793 = vpop.f32.mrf.mxu0
    %v5794 = vadd.f32 0.0, %v5793
    %5795 = vmatmul.bf16.gmra.mxu0 %v5780
    %v5796 = vpop.f32.mrf.mxu0
    %v5797 = vadd.f32 0.0, %v5796
    %v5798 = vpop.f32.mrf.mxu0
    %v5799 = vadd.f32 0.0, %v5798
    %5800 = vdwg.mxu0
    %v5801 = vmul.f32 %v5792, %v812
    %v5802 = vmul.f32 %v5794, %v812
    %v5803 = vmul.f32 %v5797, %v812
    %v5804 = vmul.f32 %v5799, %v812
    %v5805 = vadd.f32 %v5743, %v5801
    %v5806 = vadd.f32 %v5744, %v5802
    %v5807 = vadd.f32 %v5745, %v5803
    %v5808 = vadd.f32 %v5746, %v5804
    %5809 = vrot.lane.b32.xlu0 %v5676, 7
    %v5810 = vpop.permute.xlu0 %5809
    %5811 = vrot.lane.b32.xlu0 %v5677, 7
    %v5812 = vpop.permute.xlu0 %5811
    %5813 = vrot.lane.b32.xlu0 %v5678, 7
    %v5814 = vpop.permute.xlu0 %5813
    %5815 = vrot.lane.b32.xlu0 %v5679, 7
    %v5816 = vpop.permute.xlu0 %5815
    %v5821 = vpack.c.bf16 %v5812, %v5810
    %v5822 = vpack.c.bf16 %v5816, %v5814
    %s5823 = scalar_lea.vmem [#allocation2], 752
    %v5824 = vld [vmem:[%s5823] sm:$0xf]
    %v5825 = vld [vmem:[%s5823 + $0x4] sm:$0xf]
    %v5826 = vld [vmem:[%s5823 + $0x8] sm:$0xf]
    %v5827 = vld [vmem:[%s5823 + $0xc] sm:$0xf]
    %v5832 = vunpack.c.l.b16 %v5824
    %v5833 = vunpack.c.l.b16 %v5825
    %v5834 = vunpack.c.l.b16 %v5826
    %v5835 = vunpack.c.l.b16 %v5827
    %v5836 = vpack.c.b16 %v5833, %v5832
    %v5837 = vpack.c.b16 %v5835, %v5834
    %v5839 = vsel %vm519, %v5836, 0
    %v5842 = vsel %vm519, %v5837, 0
    %5844 = vmatpush.bf16.msra.mxu0 0
    %5845 = vmatpush.bf16.msra.mxu0 0
    %5846 = vmatpush.bf16.msra.mxu0 0
    %5847 = vmatpush.bf16.msra.mxu0 0
    %5848 = vmatpush.bf16.msra.mxu0 0
    %5849 = vmatpush.bf16.msra.mxu0 0
    %5850 = vmatpush.bf16.msra.mxu0 %v5822
    %5851 = vmatpush.bf16.msra.mxu0 %v5821
    %5852 = vmatmul.bf16.gmra.mxu0 %v5839
    %v5853 = vpop.f32.mrf.mxu0
    %v5854 = vadd.f32 0.0, %v5853
    %v5855 = vpop.f32.mrf.mxu0
    %v5856 = vadd.f32 0.0, %v5855
    %5857 = vmatmul.bf16.gmra.mxu0 %v5842
    %v5858 = vpop.f32.mrf.mxu0
    %v5859 = vadd.f32 0.0, %v5858
    %v5860 = vpop.f32.mrf.mxu0
    %v5861 = vadd.f32 0.0, %v5860
    %5862 = vdwg.mxu0
    %v5863 = vmul.f32 %v5854, %v875
    %v5864 = vmul.f32 %v5856, %v875
    %v5865 = vmul.f32 %v5859, %v875
    %v5866 = vmul.f32 %v5861, %v875
    %v5867 = vadd.f32 %v5805, %v5863
    %v5868 = vadd.f32 %v5806, %v5864
    %v5869 = vadd.f32 %v5807, %v5865
    %v5870 = vadd.f32 %v5808, %v5866
    %5871 = vrot.lane.b32.xlu0 %v5676, 1
    %v5872 = vpop.permute.xlu0 %5871
    %5873 = vrot.lane.b32.xlu0 %v5677, 1
    %v5874 = vpop.permute.xlu0 %5873
    %5875 = vrot.lane.b32.xlu0 %v5678, 1
    %v5876 = vpop.permute.xlu0 %5875
    %5877 = vrot.lane.b32.xlu0 %v5679, 1
    %v5878 = vpop.permute.xlu0 %5877
    %v5883 = vpack.c.bf16 %v5874, %v5872
    %v5884 = vpack.c.bf16 %v5878, %v5876
    %s5885 = scalar_lea.vmem [#allocation2], 768
    %v5886 = vld [vmem:[%s5885] sm:$0xf]
    %v5887 = vld [vmem:[%s5885 + $0x4] sm:$0xf]
    %v5888 = vld [vmem:[%s5885 + $0x8] sm:$0xf]
    %v5889 = vld [vmem:[%s5885 + $0xc] sm:$0xf]
    %v5894 = vunpack.c.l.b16 %v5886
    %v5895 = vunpack.c.l.b16 %v5887
    %v5896 = vunpack.c.l.b16 %v5888
    %v5897 = vunpack.c.l.b16 %v5889
    %v5898 = vpack.c.b16 %v5895, %v5894
    %v5899 = vpack.c.b16 %v5897, %v5896
    %v5901 = vsel %vm519, %v5898, 0
    %v5904 = vsel %vm519, %v5899, 0
    %5906 = vmatpush.bf16.msra.mxu0 0
    %5907 = vmatpush.bf16.msra.mxu0 0
    %5908 = vmatpush.bf16.msra.mxu0 0
    %5909 = vmatpush.bf16.msra.mxu0 0
    %5910 = vmatpush.bf16.msra.mxu0 0
    %5911 = vmatpush.bf16.msra.mxu0 0
    %5912 = vmatpush.bf16.msra.mxu0 %v5884
    %5913 = vmatpush.bf16.msra.mxu0 %v5883
    %5914 = vmatmul.bf16.gmra.mxu0 %v5901
    %v5915 = vpop.f32.mrf.mxu0
    %v5916 = vadd.f32 0.0, %v5915
    %v5917 = vpop.f32.mrf.mxu0
    %v5918 = vadd.f32 0.0, %v5917
    %5919 = vmatmul.bf16.gmra.mxu0 %v5904
    %v5920 = vpop.f32.mrf.mxu0
    %v5921 = vadd.f32 0.0, %v5920
    %v5922 = vpop.f32.mrf.mxu0
    %v5923 = vadd.f32 0.0, %v5922
    %5924 = vdwg.mxu0
    %v5925 = vmul.f32 %v5916, %v938
    %v5926 = vmul.f32 %v5918, %v938
    %v5927 = vmul.f32 %v5921, %v938
    %v5928 = vmul.f32 %v5923, %v938
    %v5929 = vadd.f32 %v5867, %v5925
    %v5930 = vadd.f32 %v5868, %v5926
    %v5931 = vadd.f32 %v5869, %v5927
    %v5932 = vadd.f32 %v5870, %v5928
    %v5933 = vpack.c.bf16 %v5677, %v5676
    %v5934 = vpack.c.bf16 %v5679, %v5678
    %s5935 = scalar_lea.vmem [#allocation2], 784
    %v5936 = vld [vmem:[%s5935] sm:$0xf]
    %v5937 = vld [vmem:[%s5935 + $0x4] sm:$0xf]
    %v5938 = vld [vmem:[%s5935 + $0x8] sm:$0xf]
    %v5939 = vld [vmem:[%s5935 + $0xc] sm:$0xf]
    %v5944 = vunpack.c.l.b16 %v5936
    %v5945 = vunpack.c.l.b16 %v5937
    %v5946 = vunpack.c.l.b16 %v5938
    %v5947 = vunpack.c.l.b16 %v5939
    %v5948 = vpack.c.b16 %v5945, %v5944
    %v5949 = vpack.c.b16 %v5947, %v5946
    %v5951 = vsel %vm519, %v5948, 0
    %v5954 = vsel %vm519, %v5949, 0
    %5956 = vmatpush.bf16.msra.mxu0 0
    %5957 = vmatpush.bf16.msra.mxu0 0
    %5958 = vmatpush.bf16.msra.mxu0 0
    %5959 = vmatpush.bf16.msra.mxu0 0
    %5960 = vmatpush.bf16.msra.mxu0 0
    %5961 = vmatpush.bf16.msra.mxu0 0
    %5962 = vmatpush.bf16.msra.mxu0 %v5934
    %5963 = vmatpush.bf16.msra.mxu0 %v5933
    %5964 = vmatmul.bf16.gmra.mxu0 %v5951
    %v5965 = vpop.f32.mrf.mxu0
    %v5966 = vadd.f32 0.0, %v5965
    %v5967 = vpop.f32.mrf.mxu0
    %v5968 = vadd.f32 0.0, %v5967
    %5969 = vmatmul.bf16.gmra.mxu0 %v5954
    %v5970 = vpop.f32.mrf.mxu0
    %v5971 = vadd.f32 0.0, %v5970
    %v5972 = vpop.f32.mrf.mxu0
    %v5973 = vadd.f32 0.0, %v5972
    %5974 = vdwg.mxu0
    %v5975 = vmul.f32 %v5966, %v989
    %v5976 = vmul.f32 %v5968, %v989
    %v5977 = vmul.f32 %v5971, %v989
    %v5978 = vmul.f32 %v5973, %v989
    %v5979 = vadd.f32 %v5929, %v5975
    %v5980 = vadd.f32 %v5930, %v5976
    %v5981 = vadd.f32 %v5931, %v5977
    %v5982 = vadd.f32 %v5932, %v5978
    %5983 = vrot.lane.b32.xlu0 %v5676, 127
    %v5984 = vpop.permute.xlu0 %5983
    %5985 = vrot.lane.b32.xlu0 %v5677, 127
    %v5986 = vpop.permute.xlu0 %5985
    %5987 = vrot.lane.b32.xlu0 %v5678, 127
    %v5988 = vpop.permute.xlu0 %5987
    %5989 = vrot.lane.b32.xlu0 %v5679, 127
    %v5990 = vpop.permute.xlu0 %5989
    %v5995 = vpack.c.bf16 %v5986, %v5984
    %v5996 = vpack.c.bf16 %v5990, %v5988
    %s5997 = scalar_lea.vmem [#allocation2], 800
    %v5998 = vld [vmem:[%s5997] sm:$0xf]
    %v5999 = vld [vmem:[%s5997 + $0x4] sm:$0xf]
    %v6000 = vld [vmem:[%s5997 + $0x8] sm:$0xf]
    %v6001 = vld [vmem:[%s5997 + $0xc] sm:$0xf]
    %v6006 = vunpack.c.l.b16 %v5998
    %v6007 = vunpack.c.l.b16 %v5999
    %v6008 = vunpack.c.l.b16 %v6000
    %v6009 = vunpack.c.l.b16 %v6001
    %v6010 = vpack.c.b16 %v6007, %v6006
    %v6011 = vpack.c.b16 %v6009, %v6008
    %v6013 = vsel %vm519, %v6010, 0
    %v6016 = vsel %vm519, %v6011, 0
    %6018 = vmatpush.bf16.msra.mxu0 0
    %6019 = vmatpush.bf16.msra.mxu0 0
    %6020 = vmatpush.bf16.msra.mxu0 0
    %6021 = vmatpush.bf16.msra.mxu0 0
    %6022 = vmatpush.bf16.msra.mxu0 0
    %6023 = vmatpush.bf16.msra.mxu0 0
    %6024 = vmatpush.bf16.msra.mxu0 %v5996
    %6025 = vmatpush.bf16.msra.mxu0 %v5995
    %6026 = vmatmul.bf16.gmra.mxu0 %v6013
    %v6027 = vpop.f32.mrf.mxu0
    %v6028 = vadd.f32 0.0, %v6027
    %v6029 = vpop.f32.mrf.mxu0
    %v6030 = vadd.f32 0.0, %v6029
    %6031 = vmatmul.bf16.gmra.mxu0 %v6016
    %v6032 = vpop.f32.mrf.mxu0
    %v6033 = vadd.f32 0.0, %v6032
    %v6034 = vpop.f32.mrf.mxu0
    %v6035 = vadd.f32 0.0, %v6034
    %6036 = vdwg.mxu0
    %v6037 = vmul.f32 %v6028, %v1052
    %v6038 = vmul.f32 %v6030, %v1052
    %v6039 = vmul.f32 %v6033, %v1052
    %v6040 = vmul.f32 %v6035, %v1052
    %v6041 = vadd.f32 %v5979, %v6037
    %v6042 = vadd.f32 %v5980, %v6038
    %v6043 = vadd.f32 %v5981, %v6039
    %v6044 = vadd.f32 %v5982, %v6040
    %6045 = vrot.lane.b32.xlu0 %v5676, 121
    %v6046 = vpop.permute.xlu0 %6045
    %6047 = vrot.lane.b32.xlu0 %v5677, 121
    %v6048 = vpop.permute.xlu0 %6047
    %6049 = vrot.lane.b32.xlu0 %v5678, 121
    %v6050 = vpop.permute.xlu0 %6049
    %6051 = vrot.lane.b32.xlu0 %v5679, 121
    %v6052 = vpop.permute.xlu0 %6051
    %v6057 = vpack.c.bf16 %v6048, %v6046
    %v6058 = vpack.c.bf16 %v6052, %v6050
    %s6059 = scalar_lea.vmem [#allocation2], 816
    %v6060 = vld [vmem:[%s6059] sm:$0xf]
    %v6061 = vld [vmem:[%s6059 + $0x4] sm:$0xf]
    %v6062 = vld [vmem:[%s6059 + $0x8] sm:$0xf]
    %v6063 = vld [vmem:[%s6059 + $0xc] sm:$0xf]
    %v6068 = vunpack.c.l.b16 %v6060
    %v6069 = vunpack.c.l.b16 %v6061
    %v6070 = vunpack.c.l.b16 %v6062
    %v6071 = vunpack.c.l.b16 %v6063
    %v6072 = vpack.c.b16 %v6069, %v6068
    %v6073 = vpack.c.b16 %v6071, %v6070
    %v6075 = vsel %vm519, %v6072, 0
    %v6078 = vsel %vm519, %v6073, 0
    %6080 = vmatpush.bf16.msra.mxu0 0
    %6081 = vmatpush.bf16.msra.mxu0 0
    %6082 = vmatpush.bf16.msra.mxu0 0
    %6083 = vmatpush.bf16.msra.mxu0 0
    %6084 = vmatpush.bf16.msra.mxu0 0
    %6085 = vmatpush.bf16.msra.mxu0 0
    %6086 = vmatpush.bf16.msra.mxu0 %v6058
    %6087 = vmatpush.bf16.msra.mxu0 %v6057
    %6088 = vmatmul.bf16.gmra.mxu0 %v6075
    %v6089 = vpop.f32.mrf.mxu0
    %v6090 = vadd.f32 0.0, %v6089
    %v6091 = vpop.f32.mrf.mxu0
    %v6092 = vadd.f32 0.0, %v6091
    %6093 = vmatmul.bf16.gmra.mxu0 %v6078
    %v6094 = vpop.f32.mrf.mxu0
    %v6095 = vadd.f32 0.0, %v6094
    %v6096 = vpop.f32.mrf.mxu0
    %v6097 = vadd.f32 0.0, %v6096
    %6098 = vdwg.mxu0
    %v6099 = vmul.f32 %v6090, %v1115
    %v6100 = vmul.f32 %v6092, %v1115
    %v6101 = vmul.f32 %v6095, %v1115
    %v6102 = vmul.f32 %v6097, %v1115
    %v6103 = vadd.f32 %v6041, %v6099
    %v6104 = vadd.f32 %v6042, %v6100
    %v6105 = vadd.f32 %v6043, %v6101
    %v6106 = vadd.f32 %v6044, %v6102
    %6107 = vrot.lane.b32.xlu0 %v5676, 120
    %v6108 = vpop.permute.xlu0 %6107
    %6109 = vrot.lane.b32.xlu0 %v5677, 120
    %v6110 = vpop.permute.xlu0 %6109
    %6111 = vrot.lane.b32.xlu0 %v5678, 120
    %v6112 = vpop.permute.xlu0 %6111
    %6113 = vrot.lane.b32.xlu0 %v5679, 120
    %v6114 = vpop.permute.xlu0 %6113
    %v6119 = vpack.c.bf16 %v6110, %v6108
    %v6120 = vpack.c.bf16 %v6114, %v6112
    %s6121 = scalar_lea.vmem [#allocation2], 832
    %v6122 = vld [vmem:[%s6121] sm:$0xf]
    %v6123 = vld [vmem:[%s6121 + $0x4] sm:$0xf]
    %v6124 = vld [vmem:[%s6121 + $0x8] sm:$0xf]
    %v6125 = vld [vmem:[%s6121 + $0xc] sm:$0xf]
    %v6130 = vunpack.c.l.b16 %v6122
    %v6131 = vunpack.c.l.b16 %v6123
    %v6132 = vunpack.c.l.b16 %v6124
    %v6133 = vunpack.c.l.b16 %v6125
    %v6134 = vpack.c.b16 %v6131, %v6130
    %v6135 = vpack.c.b16 %v6133, %v6132
    %v6137 = vsel %vm519, %v6134, 0
    %v6140 = vsel %vm519, %v6135, 0
    %6142 = vmatpush.bf16.msra.mxu0 0
    %6143 = vmatpush.bf16.msra.mxu0 0
    %6144 = vmatpush.bf16.msra.mxu0 0
    %6145 = vmatpush.bf16.msra.mxu0 0
    %6146 = vmatpush.bf16.msra.mxu0 0
    %6147 = vmatpush.bf16.msra.mxu0 0
    %6148 = vmatpush.bf16.msra.mxu0 %v6120
    %6149 = vmatpush.bf16.msra.mxu0 %v6119
    %6150 = vmatmul.bf16.gmra.mxu0 %v6137
    %v6151 = vpop.f32.mrf.mxu0
    %v6152 = vadd.f32 0.0, %v6151
    %v6153 = vpop.f32.mrf.mxu0
    %v6154 = vadd.f32 0.0, %v6153
    %6155 = vmatmul.bf16.gmra.mxu0 %v6140
    %v6156 = vpop.f32.mrf.mxu0
    %v6157 = vadd.f32 0.0, %v6156
    %v6158 = vpop.f32.mrf.mxu0
    %v6159 = vadd.f32 0.0, %v6158
    %6160 = vdwg.mxu0
    %v6161 = vmul.f32 %v6152, %v1178
    %v6162 = vmul.f32 %v6154, %v1178
    %v6163 = vmul.f32 %v6157, %v1178
    %v6164 = vmul.f32 %v6159, %v1178
    %v6165 = vadd.f32 %v6103, %v6161
    %v6166 = vadd.f32 %v6104, %v6162
    %v6167 = vadd.f32 %v6105, %v6163
    %v6168 = vadd.f32 %v6106, %v6164
    %6169 = vrot.lane.b32.xlu0 %v5676, 119
    %v6170 = vpop.permute.xlu0 %6169
    %6171 = vrot.lane.b32.xlu0 %v5677, 119
    %v6172 = vpop.permute.xlu0 %6171
    %6173 = vrot.lane.b32.xlu0 %v5678, 119
    %v6174 = vpop.permute.xlu0 %6173
    %6175 = vrot.lane.b32.xlu0 %v5679, 119
    %v6176 = vpop.permute.xlu0 %6175
    %v6181 = vpack.c.bf16 %v6172, %v6170
    %v6182 = vpack.c.bf16 %v6176, %v6174
    %s6183 = scalar_lea.vmem [#allocation2], 848
    %v6184 = vld [vmem:[%s6183] sm:$0xf]
    %v6185 = vld [vmem:[%s6183 + $0x4] sm:$0xf]
    %v6186 = vld [vmem:[%s6183 + $0x8] sm:$0xf]
    %v6187 = vld [vmem:[%s6183 + $0xc] sm:$0xf]
    %v6192 = vunpack.c.l.b16 %v6184
    %v6193 = vunpack.c.l.b16 %v6185
    %v6194 = vunpack.c.l.b16 %v6186
    %v6195 = vunpack.c.l.b16 %v6187
    %v6196 = vpack.c.b16 %v6193, %v6192
    %v6197 = vpack.c.b16 %v6195, %v6194
    %v6199 = vsel %vm519, %v6196, 0
    %v6202 = vsel %vm519, %v6197, 0
    %6204 = vmatpush.bf16.msra.mxu0 0
    %6205 = vmatpush.bf16.msra.mxu0 0
    %6206 = vmatpush.bf16.msra.mxu0 0
    %6207 = vmatpush.bf16.msra.mxu0 0
    %6208 = vmatpush.bf16.msra.mxu0 0
    %6209 = vmatpush.bf16.msra.mxu0 0
    %6210 = vmatpush.bf16.msra.mxu0 %v6182
    %6211 = vmatpush.bf16.msra.mxu0 %v6181
    %6212 = vmatmul.bf16.gmra.mxu0 %v6199
    %v6213 = vpop.f32.mrf.mxu0
    %v6214 = vadd.f32 0.0, %v6213
    %v6215 = vpop.f32.mrf.mxu0
    %v6216 = vadd.f32 0.0, %v6215
    %6217 = vmatmul.bf16.gmra.mxu0 %v6202
    %v6218 = vpop.f32.mrf.mxu0
    %v6219 = vadd.f32 0.0, %v6218
    %v6220 = vpop.f32.mrf.mxu0
    %v6221 = vadd.f32 0.0, %v6220
    %6222 = vdwg.mxu0
    %v6223 = vmul.f32 %v6214, %v1241
    %v6224 = vmul.f32 %v6216, %v1241
    %v6225 = vmul.f32 %v6219, %v1241
    %v6226 = vmul.f32 %v6221, %v1241
    %v6227 = vadd.f32 %v6165, %v6223
    %v6228 = vadd.f32 %v6166, %v6224
    %v6229 = vadd.f32 %v6167, %v6225
    %v6230 = vadd.f32 %v6168, %v6226
    %6232 = vset.pattern.permute.xlu0 0
    %6233 = vperm.xlu0 %6232, %v5681
    %v6234 = vpop.permute.xlu0 %6233
    %6237 = vset.pattern.permute.xlu0 0
    %6238 = vperm.xlu0 %6237, %v5682
    %v6239 = vpop.permute.xlu0 %6238
    %6242 = vset.pattern.permute.xlu0 0
    %6243 = vperm.xlu0 %6242, %v5683
    %v6244 = vpop.permute.xlu0 %6243
    %6247 = vset.pattern.permute.xlu0 0
    %6248 = vperm.xlu0 %6247, %v5684
    %v6249 = vpop.permute.xlu0 %6248
    %v6251 = vadd.f32 %v6227, %v6234
    %v6252 = vadd.f32 %v6228, %v6239
    %v6253 = vadd.f32 %v6229, %v6244
    %v6254 = vadd.f32 %v6230, %v6249
    %s6255 = scalar_lea.vmem %s11, 160
    %v6256 = vld [vmem:[%s6255] sm:$0xff]
    %v6257 = vld [vmem:[%s6255 + $0x8] sm:$0xff]
    %v6258 = vld [vmem:[%s6255 + $0x10] sm:$0xff]
    %v6259 = vld [vmem:[%s6255 + $0x18] sm:$0xff]
    %s6260 = scalar_lea.vmem %s12, 160
    %v6261 = vld [vmem:[%s6260] sm:$0xff]
    %v6262 = vld [vmem:[%s6260 + $0x8] sm:$0xff]
    %v6263 = vld [vmem:[%s6260 + $0x10] sm:$0xff]
    %v6264 = vld [vmem:[%s6260 + $0x18] sm:$0xff]
    %6265 = vadd.xlane.f32.xlu0 %v6251
    %v6266 = vpop.xlane.xlu0 %6265
    %6267 = vadd.xlane.f32.xlu0 %v6252
    %v6268 = vpop.xlane.xlu0 %6267
    %6269 = vadd.xlane.f32.xlu0 %v6253
    %v6270 = vpop.xlane.xlu0 %6269
    %6271 = vadd.xlane.f32.xlu0 %v6254
    %v6272 = vpop.xlane.xlu0 %6271
    %v6273 = vmul.f32 %v6266, %v567
    %v6274 = vmul.f32 %v6268, %v567
    %v6275 = vmul.f32 %v6270, %v567
    %v6276 = vmul.f32 %v6272, %v567
    %v6277 = vsub.f32 %v6251, %v6273
    %v6278 = vsub.f32 %v6252, %v6274
    %v6279 = vsub.f32 %v6253, %v6275
    %v6280 = vsub.f32 %v6254, %v6276
    %v6281 = vmul.f32 %v6277, %v6277
    %v6282 = vmul.f32 %v6278, %v6278
    %v6283 = vmul.f32 %v6279, %v6279
    %v6284 = vmul.f32 %v6280, %v6280
    %6285 = vadd.xlane.f32.xlu0 %v6281
    %v6286 = vpop.xlane.xlu0 %6285
    %6287 = vadd.xlane.f32.xlu0 %v6282
    %v6288 = vpop.xlane.xlu0 %6287
    %6289 = vadd.xlane.f32.xlu0 %v6283
    %v6290 = vpop.xlane.xlu0 %6289
    %6291 = vadd.xlane.f32.xlu0 %v6284
    %v6292 = vpop.xlane.xlu0 %6291
    %v6293 = vmul.f32 %v6286, %v567
    %v6294 = vmul.f32 %v6288, %v567
    %v6295 = vmul.f32 %v6290, %v567
    %v6296 = vmul.f32 %v6292, %v567
    %v6297 = vadd.f32 %v6293, 1e-05
    %v6298 = vadd.f32 %v6294, 1e-05
    %v6299 = vadd.f32 %v6295, 1e-05
    %v6300 = vadd.f32 %v6296, 1e-05
    %v6301 = vrsqrt.pop %v6297
    %v6302 = vmul.f32 %v6301, %v6297
    %v6303 = vmul.f32 %v6302, %v6301
    %v6304 = vmul.f32 0.5, %v6303
    %v6305 = vsub.f32 1.5, %v6304
    %v6306 = vmul.f32 %v6301, %v6305
    %vm6307 = vweird.f32 %v6297
    %vm6308 = vweird.f32 %v6301
    %vm6309 = vmor %vm6307, %vm6308
    %v6310 = vsel %vm6309, %v6301, %v6306
    %v6311 = vrsqrt.pop %v6298
    %v6312 = vmul.f32 %v6311, %v6298
    %v6313 = vmul.f32 %v6312, %v6311
    %v6314 = vmul.f32 0.5, %v6313
    %v6315 = vsub.f32 1.5, %v6314
    %v6316 = vmul.f32 %v6311, %v6315
    %vm6317 = vweird.f32 %v6298
    %vm6318 = vweird.f32 %v6311
    %vm6319 = vmor %vm6317, %vm6318
    %v6320 = vsel %vm6319, %v6311, %v6316
    %v6321 = vrsqrt.pop %v6299
    %v6322 = vmul.f32 %v6321, %v6299
    %v6323 = vmul.f32 %v6322, %v6321
    %v6324 = vmul.f32 0.5, %v6323
    %v6325 = vsub.f32 1.5, %v6324
    %v6326 = vmul.f32 %v6321, %v6325
    %vm6327 = vweird.f32 %v6299
    %vm6328 = vweird.f32 %v6321
    %vm6329 = vmor %vm6327, %vm6328
    %v6330 = vsel %vm6329, %v6321, %v6326
    %v6331 = vrsqrt.pop %v6300
    %v6332 = vmul.f32 %v6331, %v6300
    %v6333 = vmul.f32 %v6332, %v6331
    %v6334 = vmul.f32 0.5, %v6333
    %v6335 = vsub.f32 1.5, %v6334
    %v6336 = vmul.f32 %v6331, %v6335
    %vm6337 = vweird.f32 %v6300
    %vm6338 = vweird.f32 %v6331
    %vm6339 = vmor %vm6337, %vm6338
    %v6340 = vsel %vm6339, %v6331, %v6336
    %v6341 = vmul.f32 %v6277, %v6310
    %v6342 = vmul.f32 %v6278, %v6320
    %v6343 = vmul.f32 %v6279, %v6330
    %v6344 = vmul.f32 %v6280, %v6340
    %6346 = vset.pattern.permute.xlu0 0
    %6347 = vperm.xlu0 %6346, %v6256
    %v6348 = vpop.permute.xlu0 %6347
    %6351 = vset.pattern.permute.xlu0 0
    %6352 = vperm.xlu0 %6351, %v6257
    %v6353 = vpop.permute.xlu0 %6352
    %6356 = vset.pattern.permute.xlu0 0
    %6357 = vperm.xlu0 %6356, %v6258
    %v6358 = vpop.permute.xlu0 %6357
    %6361 = vset.pattern.permute.xlu0 0
    %6362 = vperm.xlu0 %6361, %v6259
    %v6363 = vpop.permute.xlu0 %6362
    %v6365 = vmul.f32 %v6341, %v6348
    %v6366 = vmul.f32 %v6342, %v6353
    %v6367 = vmul.f32 %v6343, %v6358
    %v6368 = vmul.f32 %v6344, %v6363
    %6370 = vset.pattern.permute.xlu0 0
    %6371 = vperm.xlu0 %6370, %v6261
    %v6372 = vpop.permute.xlu0 %6371
    %6375 = vset.pattern.permute.xlu0 0
    %6376 = vperm.xlu0 %6375, %v6262
    %v6377 = vpop.permute.xlu0 %6376
    %6380 = vset.pattern.permute.xlu0 0
    %6381 = vperm.xlu0 %6380, %v6263
    %v6382 = vpop.permute.xlu0 %6381
    %6385 = vset.pattern.permute.xlu0 0
    %6386 = vperm.xlu0 %6385, %v6264
    %v6387 = vpop.permute.xlu0 %6386
    %v6389 = vadd.f32 %v6365, %v6372
    %v6390 = vadd.f32 %v6366, %v6377
    %v6391 = vadd.f32 %v6367, %v6382
    %v6392 = vadd.f32 %v6368, %v6387
    %v6393 = vmax.f32 %v6389, 0.0
    %v6394 = vmax.f32 %v6390, 0.0
    %v6395 = vmax.f32 %v6391, 0.0
    %v6396 = vmax.f32 %v6392, 0.0
    %s6397 = scalar_lea.vmem %s13, 80
    %v6398 = vld [vmem:[%s6397] sm:$0xf]
    %v6399 = vld [vmem:[%s6397 + $0x4] sm:$0xf]
    %v6400 = vld [vmem:[%s6397 + $0x8] sm:$0xf]
    %v6401 = vld [vmem:[%s6397 + $0xc] sm:$0xf]
    %v6402 = vpack.c.bf16 %v6394, %v6393
    %v6403 = vpack.c.bf16 %v6396, %v6395
    %s6404 = scalar_lea.vmem %s14, 160
    %v6405 = vld [vmem:[%s6404] sm:$0xff]
    %v6406 = vld [vmem:[%s6404 + $0x8] sm:$0xff]
    %v6407 = vld [vmem:[%s6404 + $0x10] sm:$0xff]
    %v6408 = vld [vmem:[%s6404 + $0x18] sm:$0xff]
    %6410 = vset.pattern.permute.xlu0 0
    %6411 = vperm.xlu0 %6410, %v6405
    %v6412 = vpop.permute.xlu0 %6411
    %6415 = vset.pattern.permute.xlu0 0
    %6416 = vperm.xlu0 %6415, %v6406
    %v6417 = vpop.permute.xlu0 %6416
    %6420 = vset.pattern.permute.xlu0 0
    %6421 = vperm.xlu0 %6420, %v6407
    %v6422 = vpop.permute.xlu0 %6421
    %6425 = vset.pattern.permute.xlu0 0
    %6426 = vperm.xlu0 %6425, %v6408
    %v6427 = vpop.permute.xlu0 %6426
    %v6433 = vunpack.c.l.b16 %v6398
    %v6434 = vunpack.c.l.b16 %v6399
    %v6435 = vunpack.c.l.b16 %v6400
    %v6436 = vunpack.c.l.b16 %v6401
    %v6437 = vpack.c.b16 %v6434, %v6433
    %v6438 = vpack.c.b16 %v6436, %v6435
    %v6440 = vsel %vm519, %v6437, 0
    %v6443 = vsel %vm519, %v6438, 0
    %6445 = vmatpush.bf16.msra.mxu0 0
    %6446 = vmatpush.bf16.msra.mxu0 0
    %6447 = vmatpush.bf16.msra.mxu0 0
    %6448 = vmatpush.bf16.msra.mxu0 0
    %6449 = vmatpush.bf16.msra.mxu0 0
    %6450 = vmatpush.bf16.msra.mxu0 0
    %6451 = vmatpush.bf16.msra.mxu0 %v6403
    %6452 = vmatpush.bf16.msra.mxu0 %v6402
    %6453 = vmatmul.bf16.gmra.mxu0 %v6440
    %v6454 = vpop.f32.mrf.mxu0
    %v6455 = vadd.f32 %v6412, %v6454
    %v6456 = vpop.f32.mrf.mxu0
    %v6457 = vadd.f32 %v6417, %v6456
    %6458 = vmatmul.bf16.gmra.mxu0 %v6443
    %v6459 = vpop.f32.mrf.mxu0
    %v6460 = vadd.f32 %v6422, %v6459
    %v6461 = vpop.f32.mrf.mxu0
    %v6462 = vadd.f32 %v6427, %v6461
    %6463 = vdwg.mxu0
    %v6464 = vadd.f32 %v6455, %v5467
    %v6465 = vadd.f32 %v6457, %v5468
    %v6466 = vadd.f32 %v6460, %v5469
    %v6467 = vadd.f32 %v6462, %v5470
    %s6468 = scalar_lea.vmem %s5, 96
    %v6469 = vld [vmem:[%s6468] sm:$0xf]
    %v6470 = vld [vmem:[%s6468 + $0x4] sm:$0xf]
    %v6471 = vld [vmem:[%s6468 + $0x8] sm:$0xf]
    %v6472 = vld [vmem:[%s6468 + $0xc] sm:$0xf]
    %v6473 = vpack.c.bf16 %v6465, %v6464
    %v6474 = vpack.c.bf16 %v6467, %v6466
    %s6475 = scalar_lea.vmem %s6, 192
    %v6476 = vld [vmem:[%s6475] sm:$0xff]
    %v6477 = vld [vmem:[%s6475 + $0x8] sm:$0xff]
    %v6478 = vld [vmem:[%s6475 + $0x10] sm:$0xff]
    %v6479 = vld [vmem:[%s6475 + $0x18] sm:$0xff]
    %6481 = vset.pattern.permute.xlu0 0
    %6482 = vperm.xlu0 %6481, %v6476
    %v6483 = vpop.permute.xlu0 %6482
    %6486 = vset.pattern.permute.xlu0 0
    %6487 = vperm.xlu0 %6486, %v6477
    %v6488 = vpop.permute.xlu0 %6487
    %6491 = vset.pattern.permute.xlu0 0
    %6492 = vperm.xlu0 %6491, %v6478
    %v6493 = vpop.permute.xlu0 %6492
    %6496 = vset.pattern.permute.xlu0 0
    %6497 = vperm.xlu0 %6496, %v6479
    %v6498 = vpop.permute.xlu0 %6497
    %v6504 = vunpack.c.l.b16 %v6469
    %v6505 = vunpack.c.l.b16 %v6470
    %v6506 = vunpack.c.l.b16 %v6471
    %v6507 = vunpack.c.l.b16 %v6472
    %v6508 = vpack.c.b16 %v6505, %v6504
    %v6509 = vpack.c.b16 %v6507, %v6506
    %v6511 = vsel %vm519, %v6508, 0
    %v6514 = vsel %vm519, %v6509, 0
    %6516 = vmatpush.bf16.msra.mxu0 0
    %6517 = vmatpush.bf16.msra.mxu0 0
    %6518 = vmatpush.bf16.msra.mxu0 0
    %6519 = vmatpush.bf16.msra.mxu0 0
    %6520 = vmatpush.bf16.msra.mxu0 0
    %6521 = vmatpush.bf16.msra.mxu0 0
    %6522 = vmatpush.bf16.msra.mxu0 %v6474
    %6523 = vmatpush.bf16.msra.mxu0 %v6473
    %6524 = vmatmul.bf16.gmra.mxu0 %v6511
    %v6525 = vpop.f32.mrf.mxu0
    %v6526 = vadd.f32 %v6483, %v6525
    %v6527 = vpop.f32.mrf.mxu0
    %v6528 = vadd.f32 %v6488, %v6527
    %6529 = vmatmul.bf16.gmra.mxu0 %v6514
    %v6530 = vpop.f32.mrf.mxu0
    %v6531 = vadd.f32 %v6493, %v6530
    %v6532 = vpop.f32.mrf.mxu0
    %v6533 = vadd.f32 %v6498, %v6532
    %6534 = vdwg.mxu0
    %s6535 = scalar_lea.vmem %s7, 192
    %v6536 = vld [vmem:[%s6535] sm:$0xff]
    %v6537 = vld [vmem:[%s6535 + $0x8] sm:$0xff]
    %v6538 = vld [vmem:[%s6535 + $0x10] sm:$0xff]
    %v6539 = vld [vmem:[%s6535 + $0x18] sm:$0xff]
    %s6540 = scalar_lea.vmem %s8, 192
    %v6541 = vld [vmem:[%s6540] sm:$0xff]
    %v6542 = vld [vmem:[%s6540 + $0x8] sm:$0xff]
    %v6543 = vld [vmem:[%s6540 + $0x10] sm:$0xff]
    %v6544 = vld [vmem:[%s6540 + $0x18] sm:$0xff]
    %6545 = vadd.xlane.f32.xlu0 %v6526
    %v6546 = vpop.xlane.xlu0 %6545
    %6547 = vadd.xlane.f32.xlu0 %v6528
    %v6548 = vpop.xlane.xlu0 %6547
    %6549 = vadd.xlane.f32.xlu0 %v6531
    %v6550 = vpop.xlane.xlu0 %6549
    %6551 = vadd.xlane.f32.xlu0 %v6533
    %v6552 = vpop.xlane.xlu0 %6551
    %v6553 = vmul.f32 %v6546, %v567
    %v6554 = vmul.f32 %v6548, %v567
    %v6555 = vmul.f32 %v6550, %v567
    %v6556 = vmul.f32 %v6552, %v567
    %v6557 = vsub.f32 %v6526, %v6553
    %v6558 = vsub.f32 %v6528, %v6554
    %v6559 = vsub.f32 %v6531, %v6555
    %v6560 = vsub.f32 %v6533, %v6556
    %v6561 = vmul.f32 %v6557, %v6557
    %v6562 = vmul.f32 %v6558, %v6558
    %v6563 = vmul.f32 %v6559, %v6559
    %v6564 = vmul.f32 %v6560, %v6560
    %6565 = vadd.xlane.f32.xlu0 %v6561
    %v6566 = vpop.xlane.xlu0 %6565
    %6567 = vadd.xlane.f32.xlu0 %v6562
    %v6568 = vpop.xlane.xlu0 %6567
    %6569 = vadd.xlane.f32.xlu0 %v6563
    %v6570 = vpop.xlane.xlu0 %6569
    %6571 = vadd.xlane.f32.xlu0 %v6564
    %v6572 = vpop.xlane.xlu0 %6571
    %v6573 = vmul.f32 %v6566, %v567
    %v6574 = vmul.f32 %v6568, %v567
    %v6575 = vmul.f32 %v6570, %v567
    %v6576 = vmul.f32 %v6572, %v567
    %v6577 = vadd.f32 %v6573, 1e-05
    %v6578 = vadd.f32 %v6574, 1e-05
    %v6579 = vadd.f32 %v6575, 1e-05
    %v6580 = vadd.f32 %v6576, 1e-05
    %v6581 = vrsqrt.pop %v6577
    %v6582 = vmul.f32 %v6581, %v6577
    %v6583 = vmul.f32 %v6582, %v6581
    %v6584 = vmul.f32 0.5, %v6583
    %v6585 = vsub.f32 1.5, %v6584
    %v6586 = vmul.f32 %v6581, %v6585
    %vm6587 = vweird.f32 %v6577
    %vm6588 = vweird.f32 %v6581
    %vm6589 = vmor %vm6587, %vm6588
    %v6590 = vsel %vm6589, %v6581, %v6586
    %v6591 = vrsqrt.pop %v6578
    %v6592 = vmul.f32 %v6591, %v6578
    %v6593 = vmul.f32 %v6592, %v6591
    %v6594 = vmul.f32 0.5, %v6593
    %v6595 = vsub.f32 1.5, %v6594
    %v6596 = vmul.f32 %v6591, %v6595
    %vm6597 = vweird.f32 %v6578
    %vm6598 = vweird.f32 %v6591
    %vm6599 = vmor %vm6597, %vm6598
    %v6600 = vsel %vm6599, %v6591, %v6596
    %v6601 = vrsqrt.pop %v6579
    %v6602 = vmul.f32 %v6601, %v6579
    %v6603 = vmul.f32 %v6602, %v6601
    %v6604 = vmul.f32 0.5, %v6603
    %v6605 = vsub.f32 1.5, %v6604
    %v6606 = vmul.f32 %v6601, %v6605
    %vm6607 = vweird.f32 %v6579
    %vm6608 = vweird.f32 %v6601
    %vm6609 = vmor %vm6607, %vm6608
    %v6610 = vsel %vm6609, %v6601, %v6606
    %v6611 = vrsqrt.pop %v6580
    %v6612 = vmul.f32 %v6611, %v6580
    %v6613 = vmul.f32 %v6612, %v6611
    %v6614 = vmul.f32 0.5, %v6613
    %v6615 = vsub.f32 1.5, %v6614
    %v6616 = vmul.f32 %v6611, %v6615
    %vm6617 = vweird.f32 %v6580
    %vm6618 = vweird.f32 %v6611
    %vm6619 = vmor %vm6617, %vm6618
    %v6620 = vsel %vm6619, %v6611, %v6616
    %v6621 = vmul.f32 %v6557, %v6590
    %v6622 = vmul.f32 %v6558, %v6600
    %v6623 = vmul.f32 %v6559, %v6610
    %v6624 = vmul.f32 %v6560, %v6620
    %6626 = vset.pattern.permute.xlu0 0
    %6627 = vperm.xlu0 %6626, %v6536
    %v6628 = vpop.permute.xlu0 %6627
    %6631 = vset.pattern.permute.xlu0 0
    %6632 = vperm.xlu0 %6631, %v6537
    %v6633 = vpop.permute.xlu0 %6632
    %6636 = vset.pattern.permute.xlu0 0
    %6637 = vperm.xlu0 %6636, %v6538
    %v6638 = vpop.permute.xlu0 %6637
    %6641 = vset.pattern.permute.xlu0 0
    %6642 = vperm.xlu0 %6641, %v6539
    %v6643 = vpop.permute.xlu0 %6642
    %v6645 = vmul.f32 %v6621, %v6628
    %v6646 = vmul.f32 %v6622, %v6633
    %v6647 = vmul.f32 %v6623, %v6638
    %v6648 = vmul.f32 %v6624, %v6643
    %6650 = vset.pattern.permute.xlu0 0
    %6651 = vperm.xlu0 %6650, %v6541
    %v6652 = vpop.permute.xlu0 %6651
    %6655 = vset.pattern.permute.xlu0 0
    %6656 = vperm.xlu0 %6655, %v6542
    %v6657 = vpop.permute.xlu0 %6656
    %6660 = vset.pattern.permute.xlu0 0
    %6661 = vperm.xlu0 %6660, %v6543
    %v6662 = vpop.permute.xlu0 %6661
    %6665 = vset.pattern.permute.xlu0 0
    %6666 = vperm.xlu0 %6665, %v6544
    %v6667 = vpop.permute.xlu0 %6666
    %v6669 = vadd.f32 %v6645, %v6652
    %v6670 = vadd.f32 %v6646, %v6657
    %v6671 = vadd.f32 %v6647, %v6662
    %v6672 = vadd.f32 %v6648, %v6667
    %v6673 = vmax.f32 %v6669, 0.0
    %v6674 = vmax.f32 %v6670, 0.0
    %v6675 = vmax.f32 %v6671, 0.0
    %v6676 = vmax.f32 %v6672, 0.0
    %s6677 = scalar_lea.vmem %s10, 192
    %v6678 = vld [vmem:[%s6677] sm:$0xff]
    %v6679 = vld [vmem:[%s6677 + $0x8] sm:$0xff]
    %v6680 = vld [vmem:[%s6677 + $0x10] sm:$0xff]
    %v6681 = vld [vmem:[%s6677 + $0x18] sm:$0xff]
    %6686 = vrot.lane.b32.xlu0 %v6673, 9
    %v6687 = vpop.permute.xlu0 %6686
    %6688 = vrot.lane.b32.xlu0 %v6674, 9
    %v6689 = vpop.permute.xlu0 %6688
    %6690 = vrot.lane.b32.xlu0 %v6675, 9
    %v6691 = vpop.permute.xlu0 %6690
    %6692 = vrot.lane.b32.xlu0 %v6676, 9
    %v6693 = vpop.permute.xlu0 %6692
    %v6698 = vpack.c.bf16 %v6689, %v6687
    %v6699 = vpack.c.bf16 %v6693, %v6691
    %s6700 = scalar_lea.vmem [#allocation2], 864
    %v6701 = vld [vmem:[%s6700] sm:$0xf]
    %v6702 = vld [vmem:[%s6700 + $0x4] sm:$0xf]
    %v6703 = vld [vmem:[%s6700 + $0x8] sm:$0xf]
    %v6704 = vld [vmem:[%s6700 + $0xc] sm:$0xf]
    %v6709 = vunpack.c.l.b16 %v6701
    %v6710 = vunpack.c.l.b16 %v6702
    %v6711 = vunpack.c.l.b16 %v6703
    %v6712 = vunpack.c.l.b16 %v6704
    %v6713 = vpack.c.b16 %v6710, %v6709
    %v6714 = vpack.c.b16 %v6712, %v6711
    %v6716 = vsel %vm519, %v6713, 0
    %v6719 = vsel %vm519, %v6714, 0
    %6721 = vmatpush.bf16.msra.mxu0 0
    %6722 = vmatpush.bf16.msra.mxu0 0
    %6723 = vmatpush.bf16.msra.mxu0 0
    %6724 = vmatpush.bf16.msra.mxu0 0
    %6725 = vmatpush.bf16.msra.mxu0 0
    %6726 = vmatpush.bf16.msra.mxu0 0
    %6727 = vmatpush.bf16.msra.mxu0 %v6699
    %6728 = vmatpush.bf16.msra.mxu0 %v6698
    %6729 = vmatmul.bf16.gmra.mxu0 %v6716
    %v6730 = vpop.f32.mrf.mxu0
    %v6731 = vadd.f32 0.0, %v6730
    %v6732 = vpop.f32.mrf.mxu0
    %v6733 = vadd.f32 0.0, %v6732
    %6734 = vmatmul.bf16.gmra.mxu0 %v6719
    %v6735 = vpop.f32.mrf.mxu0
    %v6736 = vadd.f32 0.0, %v6735
    %v6737 = vpop.f32.mrf.mxu0
    %v6738 = vadd.f32 0.0, %v6737
    %6739 = vdwg.mxu0
    %v6740 = vmul.f32 %v6731, %v753
    %v6741 = vmul.f32 %v6733, %v753
    %v6742 = vmul.f32 %v6736, %v753
    %v6743 = vmul.f32 %v6738, %v753
    %6744 = vrot.lane.b32.xlu0 %v6673, 8
    %v6745 = vpop.permute.xlu0 %6744
    %6746 = vrot.lane.b32.xlu0 %v6674, 8
    %v6747 = vpop.permute.xlu0 %6746
    %6748 = vrot.lane.b32.xlu0 %v6675, 8
    %v6749 = vpop.permute.xlu0 %6748
    %6750 = vrot.lane.b32.xlu0 %v6676, 8
    %v6751 = vpop.permute.xlu0 %6750
    %v6756 = vpack.c.bf16 %v6747, %v6745
    %v6757 = vpack.c.bf16 %v6751, %v6749
    %s6758 = scalar_lea.vmem [#allocation2], 880
    %v6759 = vld [vmem:[%s6758] sm:$0xf]
    %v6760 = vld [vmem:[%s6758 + $0x4] sm:$0xf]
    %v6761 = vld [vmem:[%s6758 + $0x8] sm:$0xf]
    %v6762 = vld [vmem:[%s6758 + $0xc] sm:$0xf]
    %v6767 = vunpack.c.l.b16 %v6759
    %v6768 = vunpack.c.l.b16 %v6760
    %v6769 = vunpack.c.l.b16 %v6761
    %v6770 = vunpack.c.l.b16 %v6762
    %v6771 = vpack.c.b16 %v6768, %v6767
    %v6772 = vpack.c.b16 %v6770, %v6769
    %v6774 = vsel %vm519, %v6771, 0
    %v6777 = vsel %vm519, %v6772, 0
    %6779 = vmatpush.bf16.msra.mxu0 0
    %6780 = vmatpush.bf16.msra.mxu0 0
    %6781 = vmatpush.bf16.msra.mxu0 0
    %6782 = vmatpush.bf16.msra.mxu0 0
    %6783 = vmatpush.bf16.msra.mxu0 0
    %6784 = vmatpush.bf16.msra.mxu0 0
    %6785 = vmatpush.bf16.msra.mxu0 %v6757
    %6786 = vmatpush.bf16.msra.mxu0 %v6756
    %6787 = vmatmul.bf16.gmra.mxu0 %v6774
    %v6788 = vpop.f32.mrf.mxu0
    %v6789 = vadd.f32 0.0, %v6788
    %v6790 = vpop.f32.mrf.mxu0
    %v6791 = vadd.f32 0.0, %v6790
    %6792 = vmatmul.bf16.gmra.mxu0 %v6777
    %v6793 = vpop.f32.mrf.mxu0
    %v6794 = vadd.f32 0.0, %v6793
    %v6795 = vpop.f32.mrf.mxu0
    %v6796 = vadd.f32 0.0, %v6795
    %6797 = vdwg.mxu0
    %v6798 = vmul.f32 %v6789, %v812
    %v6799 = vmul.f32 %v6791, %v812
    %v6800 = vmul.f32 %v6794, %v812
    %v6801 = vmul.f32 %v6796, %v812
    %v6802 = vadd.f32 %v6740, %v6798
    %v6803 = vadd.f32 %v6741, %v6799
    %v6804 = vadd.f32 %v6742, %v6800
    %v6805 = vadd.f32 %v6743, %v6801
    %6806 = vrot.lane.b32.xlu0 %v6673, 7
    %v6807 = vpop.permute.xlu0 %6806
    %6808 = vrot.lane.b32.xlu0 %v6674, 7
    %v6809 = vpop.permute.xlu0 %6808
    %6810 = vrot.lane.b32.xlu0 %v6675, 7
    %v6811 = vpop.permute.xlu0 %6810
    %6812 = vrot.lane.b32.xlu0 %v6676, 7
    %v6813 = vpop.permute.xlu0 %6812
    %v6818 = vpack.c.bf16 %v6809, %v6807
    %v6819 = vpack.c.bf16 %v6813, %v6811
    %s6820 = scalar_lea.vmem [#allocation2], 896
    %v6821 = vld [vmem:[%s6820] sm:$0xf]
    %v6822 = vld [vmem:[%s6820 + $0x4] sm:$0xf]
    %v6823 = vld [vmem:[%s6820 + $0x8] sm:$0xf]
    %v6824 = vld [vmem:[%s6820 + $0xc] sm:$0xf]
    %v6829 = vunpack.c.l.b16 %v6821
    %v6830 = vunpack.c.l.b16 %v6822
    %v6831 = vunpack.c.l.b16 %v6823
    %v6832 = vunpack.c.l.b16 %v6824
    %v6833 = vpack.c.b16 %v6830, %v6829
    %v6834 = vpack.c.b16 %v6832, %v6831
    %v6836 = vsel %vm519, %v6833, 0
    %v6839 = vsel %vm519, %v6834, 0
    %6841 = vmatpush.bf16.msra.mxu0 0
    %6842 = vmatpush.bf16.msra.mxu0 0
    %6843 = vmatpush.bf16.msra.mxu0 0
    %6844 = vmatpush.bf16.msra.mxu0 0
    %6845 = vmatpush.bf16.msra.mxu0 0
    %6846 = vmatpush.bf16.msra.mxu0 0
    %6847 = vmatpush.bf16.msra.mxu0 %v6819
    %6848 = vmatpush.bf16.msra.mxu0 %v6818
    %6849 = vmatmul.bf16.gmra.mxu0 %v6836
    %v6850 = vpop.f32.mrf.mxu0
    %v6851 = vadd.f32 0.0, %v6850
    %v6852 = vpop.f32.mrf.mxu0
    %v6853 = vadd.f32 0.0, %v6852
    %6854 = vmatmul.bf16.gmra.mxu0 %v6839
    %v6855 = vpop.f32.mrf.mxu0
    %v6856 = vadd.f32 0.0, %v6855
    %v6857 = vpop.f32.mrf.mxu0
    %v6858 = vadd.f32 0.0, %v6857
    %6859 = vdwg.mxu0
    %v6860 = vmul.f32 %v6851, %v875
    %v6861 = vmul.f32 %v6853, %v875
    %v6862 = vmul.f32 %v6856, %v875
    %v6863 = vmul.f32 %v6858, %v875
    %v6864 = vadd.f32 %v6802, %v6860
    %v6865 = vadd.f32 %v6803, %v6861
    %v6866 = vadd.f32 %v6804, %v6862
    %v6867 = vadd.f32 %v6805, %v6863
    %6868 = vrot.lane.b32.xlu0 %v6673, 1
    %v6869 = vpop.permute.xlu0 %6868
    %6870 = vrot.lane.b32.xlu0 %v6674, 1
    %v6871 = vpop.permute.xlu0 %6870
    %6872 = vrot.lane.b32.xlu0 %v6675, 1
    %v6873 = vpop.permute.xlu0 %6872
    %6874 = vrot.lane.b32.xlu0 %v6676, 1
    %v6875 = vpop.permute.xlu0 %6874
    %v6880 = vpack.c.bf16 %v6871, %v6869
    %v6881 = vpack.c.bf16 %v6875, %v6873
    %s6882 = scalar_lea.vmem [#allocation2], 912
    %v6883 = vld [vmem:[%s6882] sm:$0xf]
    %v6884 = vld [vmem:[%s6882 + $0x4] sm:$0xf]
    %v6885 = vld [vmem:[%s6882 + $0x8] sm:$0xf]
    %v6886 = vld [vmem:[%s6882 + $0xc] sm:$0xf]
    %v6891 = vunpack.c.l.b16 %v6883
    %v6892 = vunpack.c.l.b16 %v6884
    %v6893 = vunpack.c.l.b16 %v6885
    %v6894 = vunpack.c.l.b16 %v6886
    %v6895 = vpack.c.b16 %v6892, %v6891
    %v6896 = vpack.c.b16 %v6894, %v6893
    %v6898 = vsel %vm519, %v6895, 0
    %v6901 = vsel %vm519, %v6896, 0
    %6903 = vmatpush.bf16.msra.mxu0 0
    %6904 = vmatpush.bf16.msra.mxu0 0
    %6905 = vmatpush.bf16.msra.mxu0 0
    %6906 = vmatpush.bf16.msra.mxu0 0
    %6907 = vmatpush.bf16.msra.mxu0 0
    %6908 = vmatpush.bf16.msra.mxu0 0
    %6909 = vmatpush.bf16.msra.mxu0 %v6881
    %6910 = vmatpush.bf16.msra.mxu0 %v6880
    %6911 = vmatmul.bf16.gmra.mxu0 %v6898
    %v6912 = vpop.f32.mrf.mxu0
    %v6913 = vadd.f32 0.0, %v6912
    %v6914 = vpop.f32.mrf.mxu0
    %v6915 = vadd.f32 0.0, %v6914
    %6916 = vmatmul.bf16.gmra.mxu0 %v6901
    %v6917 = vpop.f32.mrf.mxu0
    %v6918 = vadd.f32 0.0, %v6917
    %v6919 = vpop.f32.mrf.mxu0
    %v6920 = vadd.f32 0.0, %v6919
    %6921 = vdwg.mxu0
    %v6922 = vmul.f32 %v6913, %v938
    %v6923 = vmul.f32 %v6915, %v938
    %v6924 = vmul.f32 %v6918, %v938
    %v6925 = vmul.f32 %v6920, %v938
    %v6926 = vadd.f32 %v6864, %v6922
    %v6927 = vadd.f32 %v6865, %v6923
    %v6928 = vadd.f32 %v6866, %v6924
    %v6929 = vadd.f32 %v6867, %v6925
    %v6930 = vpack.c.bf16 %v6674, %v6673
    %v6931 = vpack.c.bf16 %v6676, %v6675
    %s6932 = scalar_lea.vmem [#allocation2], 928
    %v6933 = vld [vmem:[%s6932] sm:$0xf]
    %v6934 = vld [vmem:[%s6932 + $0x4] sm:$0xf]
    %v6935 = vld [vmem:[%s6932 + $0x8] sm:$0xf]
    %v6936 = vld [vmem:[%s6932 + $0xc] sm:$0xf]
    %v6941 = vunpack.c.l.b16 %v6933
    %v6942 = vunpack.c.l.b16 %v6934
    %v6943 = vunpack.c.l.b16 %v6935
    %v6944 = vunpack.c.l.b16 %v6936
    %v6945 = vpack.c.b16 %v6942, %v6941
    %v6946 = vpack.c.b16 %v6944, %v6943
    %v6948 = vsel %vm519, %v6945, 0
    %v6951 = vsel %vm519, %v6946, 0
    %6953 = vmatpush.bf16.msra.mxu0 0
    %6954 = vmatpush.bf16.msra.mxu0 0
    %6955 = vmatpush.bf16.msra.mxu0 0
    %6956 = vmatpush.bf16.msra.mxu0 0
    %6957 = vmatpush.bf16.msra.mxu0 0
    %6958 = vmatpush.bf16.msra.mxu0 0
    %6959 = vmatpush.bf16.msra.mxu0 %v6931
    %6960 = vmatpush.bf16.msra.mxu0 %v6930
    %6961 = vmatmul.bf16.gmra.mxu0 %v6948
    %v6962 = vpop.f32.mrf.mxu0
    %v6963 = vadd.f32 0.0, %v6962
    %v6964 = vpop.f32.mrf.mxu0
    %v6965 = vadd.f32 0.0, %v6964
    %6966 = vmatmul.bf16.gmra.mxu0 %v6951
    %v6967 = vpop.f32.mrf.mxu0
    %v6968 = vadd.f32 0.0, %v6967
    %v6969 = vpop.f32.mrf.mxu0
    %v6970 = vadd.f32 0.0, %v6969
    %6971 = vdwg.mxu0
    %v6972 = vmul.f32 %v6963, %v989
    %v6973 = vmul.f32 %v6965, %v989
    %v6974 = vmul.f32 %v6968, %v989
    %v6975 = vmul.f32 %v6970, %v989
    %v6976 = vadd.f32 %v6926, %v6972
    %v6977 = vadd.f32 %v6927, %v6973
    %v6978 = vadd.f32 %v6928, %v6974
    %v6979 = vadd.f32 %v6929, %v6975
    %6980 = vrot.lane.b32.xlu0 %v6673, 127
    %v6981 = vpop.permute.xlu0 %6980
    %6982 = vrot.lane.b32.xlu0 %v6674, 127
    %v6983 = vpop.permute.xlu0 %6982
    %6984 = vrot.lane.b32.xlu0 %v6675, 127
    %v6985 = vpop.permute.xlu0 %6984
    %6986 = vrot.lane.b32.xlu0 %v6676, 127
    %v6987 = vpop.permute.xlu0 %6986
    %v6992 = vpack.c.bf16 %v6983, %v6981
    %v6993 = vpack.c.bf16 %v6987, %v6985
    %s6994 = scalar_lea.vmem [#allocation2], 944
    %v6995 = vld [vmem:[%s6994] sm:$0xf]
    %v6996 = vld [vmem:[%s6994 + $0x4] sm:$0xf]
    %v6997 = vld [vmem:[%s6994 + $0x8] sm:$0xf]
    %v6998 = vld [vmem:[%s6994 + $0xc] sm:$0xf]
    %v7003 = vunpack.c.l.b16 %v6995
    %v7004 = vunpack.c.l.b16 %v6996
    %v7005 = vunpack.c.l.b16 %v6997
    %v7006 = vunpack.c.l.b16 %v6998
    %v7007 = vpack.c.b16 %v7004, %v7003
    %v7008 = vpack.c.b16 %v7006, %v7005
    %v7010 = vsel %vm519, %v7007, 0
    %v7013 = vsel %vm519, %v7008, 0
    %7015 = vmatpush.bf16.msra.mxu0 0
    %7016 = vmatpush.bf16.msra.mxu0 0
    %7017 = vmatpush.bf16.msra.mxu0 0
    %7018 = vmatpush.bf16.msra.mxu0 0
    %7019 = vmatpush.bf16.msra.mxu0 0
    %7020 = vmatpush.bf16.msra.mxu0 0
    %7021 = vmatpush.bf16.msra.mxu0 %v6993
    %7022 = vmatpush.bf16.msra.mxu0 %v6992
    %7023 = vmatmul.bf16.gmra.mxu0 %v7010
    %v7024 = vpop.f32.mrf.mxu0
    %v7025 = vadd.f32 0.0, %v7024
    %v7026 = vpop.f32.mrf.mxu0
    %v7027 = vadd.f32 0.0, %v7026
    %7028 = vmatmul.bf16.gmra.mxu0 %v7013
    %v7029 = vpop.f32.mrf.mxu0
    %v7030 = vadd.f32 0.0, %v7029
    %v7031 = vpop.f32.mrf.mxu0
    %v7032 = vadd.f32 0.0, %v7031
    %7033 = vdwg.mxu0
    %v7034 = vmul.f32 %v7025, %v1052
    %v7035 = vmul.f32 %v7027, %v1052
    %v7036 = vmul.f32 %v7030, %v1052
    %v7037 = vmul.f32 %v7032, %v1052
    %v7038 = vadd.f32 %v6976, %v7034
    %v7039 = vadd.f32 %v6977, %v7035
    %v7040 = vadd.f32 %v6978, %v7036
    %v7041 = vadd.f32 %v6979, %v7037
    %7042 = vrot.lane.b32.xlu0 %v6673, 121
    %v7043 = vpop.permute.xlu0 %7042
    %7044 = vrot.lane.b32.xlu0 %v6674, 121
    %v7045 = vpop.permute.xlu0 %7044
    %7046 = vrot.lane.b32.xlu0 %v6675, 121
    %v7047 = vpop.permute.xlu0 %7046
    %7048 = vrot.lane.b32.xlu0 %v6676, 121
    %v7049 = vpop.permute.xlu0 %7048
    %v7054 = vpack.c.bf16 %v7045, %v7043
    %v7055 = vpack.c.bf16 %v7049, %v7047
    %s7056 = scalar_lea.vmem [#allocation2], 960
    %v7057 = vld [vmem:[%s7056] sm:$0xf]
    %v7058 = vld [vmem:[%s7056 + $0x4] sm:$0xf]
    %v7059 = vld [vmem:[%s7056 + $0x8] sm:$0xf]
    %v7060 = vld [vmem:[%s7056 + $0xc] sm:$0xf]
    %v7065 = vunpack.c.l.b16 %v7057
    %v7066 = vunpack.c.l.b16 %v7058
    %v7067 = vunpack.c.l.b16 %v7059
    %v7068 = vunpack.c.l.b16 %v7060
    %v7069 = vpack.c.b16 %v7066, %v7065
    %v7070 = vpack.c.b16 %v7068, %v7067
    %v7072 = vsel %vm519, %v7069, 0
    %v7075 = vsel %vm519, %v7070, 0
    %7077 = vmatpush.bf16.msra.mxu0 0
    %7078 = vmatpush.bf16.msra.mxu0 0
    %7079 = vmatpush.bf16.msra.mxu0 0
    %7080 = vmatpush.bf16.msra.mxu0 0
    %7081 = vmatpush.bf16.msra.mxu0 0
    %7082 = vmatpush.bf16.msra.mxu0 0
    %7083 = vmatpush.bf16.msra.mxu0 %v7055
    %7084 = vmatpush.bf16.msra.mxu0 %v7054
    %7085 = vmatmul.bf16.gmra.mxu0 %v7072
    %v7086 = vpop.f32.mrf.mxu0
    %v7087 = vadd.f32 0.0, %v7086
    %v7088 = vpop.f32.mrf.mxu0
    %v7089 = vadd.f32 0.0, %v7088
    %7090 = vmatmul.bf16.gmra.mxu0 %v7075
    %v7091 = vpop.f32.mrf.mxu0
    %v7092 = vadd.f32 0.0, %v7091
    %v7093 = vpop.f32.mrf.mxu0
    %v7094 = vadd.f32 0.0, %v7093
    %7095 = vdwg.mxu0
    %v7096 = vmul.f32 %v7087, %v1115
    %v7097 = vmul.f32 %v7089, %v1115
    %v7098 = vmul.f32 %v7092, %v1115
    %v7099 = vmul.f32 %v7094, %v1115
    %v7100 = vadd.f32 %v7038, %v7096
    %v7101 = vadd.f32 %v7039, %v7097
    %v7102 = vadd.f32 %v7040, %v7098
    %v7103 = vadd.f32 %v7041, %v7099
    %7104 = vrot.lane.b32.xlu0 %v6673, 120
    %v7105 = vpop.permute.xlu0 %7104
    %7106 = vrot.lane.b32.xlu0 %v6674, 120
    %v7107 = vpop.permute.xlu0 %7106
    %7108 = vrot.lane.b32.xlu0 %v6675, 120
    %v7109 = vpop.permute.xlu0 %7108
    %7110 = vrot.lane.b32.xlu0 %v6676, 120
    %v7111 = vpop.permute.xlu0 %7110
    %v7116 = vpack.c.bf16 %v7107, %v7105
    %v7117 = vpack.c.bf16 %v7111, %v7109
    %s7118 = scalar_lea.vmem [#allocation2], 976
    %v7119 = vld [vmem:[%s7118] sm:$0xf]
    %v7120 = vld [vmem:[%s7118 + $0x4] sm:$0xf]
    %v7121 = vld [vmem:[%s7118 + $0x8] sm:$0xf]
    %v7122 = vld [vmem:[%s7118 + $0xc] sm:$0xf]
    %v7127 = vunpack.c.l.b16 %v7119
    %v7128 = vunpack.c.l.b16 %v7120
    %v7129 = vunpack.c.l.b16 %v7121
    %v7130 = vunpack.c.l.b16 %v7122
    %v7131 = vpack.c.b16 %v7128, %v7127
    %v7132 = vpack.c.b16 %v7130, %v7129
    %v7134 = vsel %vm519, %v7131, 0
    %v7137 = vsel %vm519, %v7132, 0
    %7139 = vmatpush.bf16.msra.mxu0 0
    %7140 = vmatpush.bf16.msra.mxu0 0
    %7141 = vmatpush.bf16.msra.mxu0 0
    %7142 = vmatpush.bf16.msra.mxu0 0
    %7143 = vmatpush.bf16.msra.mxu0 0
    %7144 = vmatpush.bf16.msra.mxu0 0
    %7145 = vmatpush.bf16.msra.mxu0 %v7117
    %7146 = vmatpush.bf16.msra.mxu0 %v7116
    %7147 = vmatmul.bf16.gmra.mxu0 %v7134
    %v7148 = vpop.f32.mrf.mxu0
    %v7149 = vadd.f32 0.0, %v7148
    %v7150 = vpop.f32.mrf.mxu0
    %v7151 = vadd.f32 0.0, %v7150
    %7152 = vmatmul.bf16.gmra.mxu0 %v7137
    %v7153 = vpop.f32.mrf.mxu0
    %v7154 = vadd.f32 0.0, %v7153
    %v7155 = vpop.f32.mrf.mxu0
    %v7156 = vadd.f32 0.0, %v7155
    %7157 = vdwg.mxu0
    %v7158 = vmul.f32 %v7149, %v1178
    %v7159 = vmul.f32 %v7151, %v1178
    %v7160 = vmul.f32 %v7154, %v1178
    %v7161 = vmul.f32 %v7156, %v1178
    %v7162 = vadd.f32 %v7100, %v7158
    %v7163 = vadd.f32 %v7101, %v7159
    %v7164 = vadd.f32 %v7102, %v7160
    %v7165 = vadd.f32 %v7103, %v7161
    %7166 = vrot.lane.b32.xlu0 %v6673, 119
    %v7167 = vpop.permute.xlu0 %7166
    %7168 = vrot.lane.b32.xlu0 %v6674, 119
    %v7169 = vpop.permute.xlu0 %7168
    %7170 = vrot.lane.b32.xlu0 %v6675, 119
    %v7171 = vpop.permute.xlu0 %7170
    %7172 = vrot.lane.b32.xlu0 %v6676, 119
    %v7173 = vpop.permute.xlu0 %7172
    %v7178 = vpack.c.bf16 %v7169, %v7167
    %v7179 = vpack.c.bf16 %v7173, %v7171
    %s7180 = scalar_lea.vmem [#allocation2], 992
    %v7181 = vld [vmem:[%s7180] sm:$0xf]
    %v7182 = vld [vmem:[%s7180 + $0x4] sm:$0xf]
    %v7183 = vld [vmem:[%s7180 + $0x8] sm:$0xf]
    %v7184 = vld [vmem:[%s7180 + $0xc] sm:$0xf]
    %v7189 = vunpack.c.l.b16 %v7181
    %v7190 = vunpack.c.l.b16 %v7182
    %v7191 = vunpack.c.l.b16 %v7183
    %v7192 = vunpack.c.l.b16 %v7184
    %v7193 = vpack.c.b16 %v7190, %v7189
    %v7194 = vpack.c.b16 %v7192, %v7191
    %v7196 = vsel %vm519, %v7193, 0
    %v7199 = vsel %vm519, %v7194, 0
    %7201 = vmatpush.bf16.msra.mxu0 0
    %7202 = vmatpush.bf16.msra.mxu0 0
    %7203 = vmatpush.bf16.msra.mxu0 0
    %7204 = vmatpush.bf16.msra.mxu0 0
    %7205 = vmatpush.bf16.msra.mxu0 0
    %7206 = vmatpush.bf16.msra.mxu0 0
    %7207 = vmatpush.bf16.msra.mxu0 %v7179
    %7208 = vmatpush.bf16.msra.mxu0 %v7178
    %7209 = vmatmul.bf16.gmra.mxu0 %v7196
    %v7210 = vpop.f32.mrf.mxu0
    %v7211 = vadd.f32 0.0, %v7210
    %v7212 = vpop.f32.mrf.mxu0
    %v7213 = vadd.f32 0.0, %v7212
    %7214 = vmatmul.bf16.gmra.mxu0 %v7199
    %v7215 = vpop.f32.mrf.mxu0
    %v7216 = vadd.f32 0.0, %v7215
    %v7217 = vpop.f32.mrf.mxu0
    %v7218 = vadd.f32 0.0, %v7217
    %7219 = vdwg.mxu0
    %v7220 = vmul.f32 %v7211, %v1241
    %v7221 = vmul.f32 %v7213, %v1241
    %v7222 = vmul.f32 %v7216, %v1241
    %v7223 = vmul.f32 %v7218, %v1241
    %v7224 = vadd.f32 %v7162, %v7220
    %v7225 = vadd.f32 %v7163, %v7221
    %v7226 = vadd.f32 %v7164, %v7222
    %v7227 = vadd.f32 %v7165, %v7223
    %7229 = vset.pattern.permute.xlu0 0
    %7230 = vperm.xlu0 %7229, %v6678
    %v7231 = vpop.permute.xlu0 %7230
    %7234 = vset.pattern.permute.xlu0 0
    %7235 = vperm.xlu0 %7234, %v6679
    %v7236 = vpop.permute.xlu0 %7235
    %7239 = vset.pattern.permute.xlu0 0
    %7240 = vperm.xlu0 %7239, %v6680
    %v7241 = vpop.permute.xlu0 %7240
    %7244 = vset.pattern.permute.xlu0 0
    %7245 = vperm.xlu0 %7244, %v6681
    %v7246 = vpop.permute.xlu0 %7245
    %v7248 = vadd.f32 %v7224, %v7231
    %v7249 = vadd.f32 %v7225, %v7236
    %v7250 = vadd.f32 %v7226, %v7241
    %v7251 = vadd.f32 %v7227, %v7246
    %s7252 = scalar_lea.vmem %s11, 192
    %v7253 = vld [vmem:[%s7252] sm:$0xff]
    %v7254 = vld [vmem:[%s7252 + $0x8] sm:$0xff]
    %v7255 = vld [vmem:[%s7252 + $0x10] sm:$0xff]
    %v7256 = vld [vmem:[%s7252 + $0x18] sm:$0xff]
    %s7257 = scalar_lea.vmem %s12, 192
    %v7258 = vld [vmem:[%s7257] sm:$0xff]
    %v7259 = vld [vmem:[%s7257 + $0x8] sm:$0xff]
    %v7260 = vld [vmem:[%s7257 + $0x10] sm:$0xff]
    %v7261 = vld [vmem:[%s7257 + $0x18] sm:$0xff]
    %7262 = vadd.xlane.f32.xlu0 %v7248
    %v7263 = vpop.xlane.xlu0 %7262
    %7264 = vadd.xlane.f32.xlu0 %v7249
    %v7265 = vpop.xlane.xlu0 %7264
    %7266 = vadd.xlane.f32.xlu0 %v7250
    %v7267 = vpop.xlane.xlu0 %7266
    %7268 = vadd.xlane.f32.xlu0 %v7251
    %v7269 = vpop.xlane.xlu0 %7268
    %v7270 = vmul.f32 %v7263, %v567
    %v7271 = vmul.f32 %v7265, %v567
    %v7272 = vmul.f32 %v7267, %v567
    %v7273 = vmul.f32 %v7269, %v567
    %v7274 = vsub.f32 %v7248, %v7270
    %v7275 = vsub.f32 %v7249, %v7271
    %v7276 = vsub.f32 %v7250, %v7272
    %v7277 = vsub.f32 %v7251, %v7273
    %v7278 = vmul.f32 %v7274, %v7274
    %v7279 = vmul.f32 %v7275, %v7275
    %v7280 = vmul.f32 %v7276, %v7276
    %v7281 = vmul.f32 %v7277, %v7277
    %7282 = vadd.xlane.f32.xlu0 %v7278
    %v7283 = vpop.xlane.xlu0 %7282
    %7284 = vadd.xlane.f32.xlu0 %v7279
    %v7285 = vpop.xlane.xlu0 %7284
    %7286 = vadd.xlane.f32.xlu0 %v7280
    %v7287 = vpop.xlane.xlu0 %7286
    %7288 = vadd.xlane.f32.xlu0 %v7281
    %v7289 = vpop.xlane.xlu0 %7288
    %v7290 = vmul.f32 %v7283, %v567
    %v7291 = vmul.f32 %v7285, %v567
    %v7292 = vmul.f32 %v7287, %v567
    %v7293 = vmul.f32 %v7289, %v567
    %v7294 = vadd.f32 %v7290, 1e-05
    %v7295 = vadd.f32 %v7291, 1e-05
    %v7296 = vadd.f32 %v7292, 1e-05
    %v7297 = vadd.f32 %v7293, 1e-05
    %v7298 = vrsqrt.pop %v7294
    %v7299 = vmul.f32 %v7298, %v7294
    %v7300 = vmul.f32 %v7299, %v7298
    %v7301 = vmul.f32 0.5, %v7300
    %v7302 = vsub.f32 1.5, %v7301
    %v7303 = vmul.f32 %v7298, %v7302
    %vm7304 = vweird.f32 %v7294
    %vm7305 = vweird.f32 %v7298
    %vm7306 = vmor %vm7304, %vm7305
    %v7307 = vsel %vm7306, %v7298, %v7303
    %v7308 = vrsqrt.pop %v7295
    %v7309 = vmul.f32 %v7308, %v7295
    %v7310 = vmul.f32 %v7309, %v7308
    %v7311 = vmul.f32 0.5, %v7310
    %v7312 = vsub.f32 1.5, %v7311
    %v7313 = vmul.f32 %v7308, %v7312
    %vm7314 = vweird.f32 %v7295
    %vm7315 = vweird.f32 %v7308
    %vm7316 = vmor %vm7314, %vm7315
    %v7317 = vsel %vm7316, %v7308, %v7313
    %v7318 = vrsqrt.pop %v7296
    %v7319 = vmul.f32 %v7318, %v7296
    %v7320 = vmul.f32 %v7319, %v7318
    %v7321 = vmul.f32 0.5, %v7320
    %v7322 = vsub.f32 1.5, %v7321
    %v7323 = vmul.f32 %v7318, %v7322
    %vm7324 = vweird.f32 %v7296
    %vm7325 = vweird.f32 %v7318
    %vm7326 = vmor %vm7324, %vm7325
    %v7327 = vsel %vm7326, %v7318, %v7323
    %v7328 = vrsqrt.pop %v7297
    %v7329 = vmul.f32 %v7328, %v7297
    %v7330 = vmul.f32 %v7329, %v7328
    %v7331 = vmul.f32 0.5, %v7330
    %v7332 = vsub.f32 1.5, %v7331
    %v7333 = vmul.f32 %v7328, %v7332
    %vm7334 = vweird.f32 %v7297
    %vm7335 = vweird.f32 %v7328
    %vm7336 = vmor %vm7334, %vm7335
    %v7337 = vsel %vm7336, %v7328, %v7333
    %v7338 = vmul.f32 %v7274, %v7307
    %v7339 = vmul.f32 %v7275, %v7317
    %v7340 = vmul.f32 %v7276, %v7327
    %v7341 = vmul.f32 %v7277, %v7337
    %7343 = vset.pattern.permute.xlu0 0
    %7344 = vperm.xlu0 %7343, %v7253
    %v7345 = vpop.permute.xlu0 %7344
    %7348 = vset.pattern.permute.xlu0 0
    %7349 = vperm.xlu0 %7348, %v7254
    %v7350 = vpop.permute.xlu0 %7349
    %7353 = vset.pattern.permute.xlu0 0
    %7354 = vperm.xlu0 %7353, %v7255
    %v7355 = vpop.permute.xlu0 %7354
    %7358 = vset.pattern.permute.xlu0 0
    %7359 = vperm.xlu0 %7358, %v7256
    %v7360 = vpop.permute.xlu0 %7359
    %v7362 = vmul.f32 %v7338, %v7345
    %v7363 = vmul.f32 %v7339, %v7350
    %v7364 = vmul.f32 %v7340, %v7355
    %v7365 = vmul.f32 %v7341, %v7360
    %7367 = vset.pattern.permute.xlu0 0
    %7368 = vperm.xlu0 %7367, %v7258
    %v7369 = vpop.permute.xlu0 %7368
    %7372 = vset.pattern.permute.xlu0 0
    %7373 = vperm.xlu0 %7372, %v7259
    %v7374 = vpop.permute.xlu0 %7373
    %7377 = vset.pattern.permute.xlu0 0
    %7378 = vperm.xlu0 %7377, %v7260
    %v7379 = vpop.permute.xlu0 %7378
    %7382 = vset.pattern.permute.xlu0 0
    %7383 = vperm.xlu0 %7382, %v7261
    %v7384 = vpop.permute.xlu0 %7383
    %v7386 = vadd.f32 %v7362, %v7369
    %v7387 = vadd.f32 %v7363, %v7374
    %v7388 = vadd.f32 %v7364, %v7379
    %v7389 = vadd.f32 %v7365, %v7384
    %v7390 = vmax.f32 %v7386, 0.0
    %v7391 = vmax.f32 %v7387, 0.0
    %v7392 = vmax.f32 %v7388, 0.0
    %v7393 = vmax.f32 %v7389, 0.0
    %s7394 = scalar_lea.vmem %s13, 96
    %v7395 = vld [vmem:[%s7394] sm:$0xf]
    %v7396 = vld [vmem:[%s7394 + $0x4] sm:$0xf]
    %v7397 = vld [vmem:[%s7394 + $0x8] sm:$0xf]
    %v7398 = vld [vmem:[%s7394 + $0xc] sm:$0xf]
    %v7399 = vpack.c.bf16 %v7391, %v7390
    %v7400 = vpack.c.bf16 %v7393, %v7392
    %s7401 = scalar_lea.vmem %s14, 192
    %v7402 = vld [vmem:[%s7401] sm:$0xff]
    %v7403 = vld [vmem:[%s7401 + $0x8] sm:$0xff]
    %v7404 = vld [vmem:[%s7401 + $0x10] sm:$0xff]
    %v7405 = vld [vmem:[%s7401 + $0x18] sm:$0xff]
    %7407 = vset.pattern.permute.xlu0 0
    %7408 = vperm.xlu0 %7407, %v7402
    %v7409 = vpop.permute.xlu0 %7408
    %7412 = vset.pattern.permute.xlu0 0
    %7413 = vperm.xlu0 %7412, %v7403
    %v7414 = vpop.permute.xlu0 %7413
    %7417 = vset.pattern.permute.xlu0 0
    %7418 = vperm.xlu0 %7417, %v7404
    %v7419 = vpop.permute.xlu0 %7418
    %7422 = vset.pattern.permute.xlu0 0
    %7423 = vperm.xlu0 %7422, %v7405
    %v7424 = vpop.permute.xlu0 %7423
    %v7430 = vunpack.c.l.b16 %v7395
    %v7431 = vunpack.c.l.b16 %v7396
    %v7432 = vunpack.c.l.b16 %v7397
    %v7433 = vunpack.c.l.b16 %v7398
    %v7434 = vpack.c.b16 %v7431, %v7430
    %v7435 = vpack.c.b16 %v7433, %v7432
    %v7437 = vsel %vm519, %v7434, 0
    %v7440 = vsel %vm519, %v7435, 0
    %7442 = vmatpush.bf16.msra.mxu0 0
    %7443 = vmatpush.bf16.msra.mxu0 0
    %7444 = vmatpush.bf16.msra.mxu0 0
    %7445 = vmatpush.bf16.msra.mxu0 0
    %7446 = vmatpush.bf16.msra.mxu0 0
    %7447 = vmatpush.bf16.msra.mxu0 0
    %7448 = vmatpush.bf16.msra.mxu0 %v7400
    %7449 = vmatpush.bf16.msra.mxu0 %v7399
    %7450 = vmatmul.bf16.gmra.mxu0 %v7437
    %v7451 = vpop.f32.mrf.mxu0
    %v7452 = vadd.f32 %v7409, %v7451
    %v7453 = vpop.f32.mrf.mxu0
    %v7454 = vadd.f32 %v7414, %v7453
    %7455 = vmatmul.bf16.gmra.mxu0 %v7440
    %v7456 = vpop.f32.mrf.mxu0
    %v7457 = vadd.f32 %v7419, %v7456
    %v7458 = vpop.f32.mrf.mxu0
    %v7459 = vadd.f32 %v7424, %v7458
    %7460 = vdwg.mxu0
    %v7461 = vadd.f32 %v7452, %v6464
    %v7462 = vadd.f32 %v7454, %v6465
    %v7463 = vadd.f32 %v7457, %v6466
    %v7464 = vadd.f32 %v7459, %v6467
    %s7465 = scalar_lea.vmem %s5, 112
    %v7466 = vld [vmem:[%s7465] sm:$0xf]
    %v7467 = vld [vmem:[%s7465 + $0x4] sm:$0xf]
    %v7468 = vld [vmem:[%s7465 + $0x8] sm:$0xf]
    %v7469 = vld [vmem:[%s7465 + $0xc] sm:$0xf]
    %v7470 = vpack.c.bf16 %v7462, %v7461
    %v7471 = vpack.c.bf16 %v7464, %v7463
    %s7472 = scalar_lea.vmem %s6, 224
    %v7473 = vld [vmem:[%s7472] sm:$0xff]
    %v7474 = vld [vmem:[%s7472 + $0x8] sm:$0xff]
    %v7475 = vld [vmem:[%s7472 + $0x10] sm:$0xff]
    %v7476 = vld [vmem:[%s7472 + $0x18] sm:$0xff]
    %7478 = vset.pattern.permute.xlu0 0
    %7479 = vperm.xlu0 %7478, %v7473
    %v7480 = vpop.permute.xlu0 %7479
    %7483 = vset.pattern.permute.xlu0 0
    %7484 = vperm.xlu0 %7483, %v7474
    %v7485 = vpop.permute.xlu0 %7484
    %7488 = vset.pattern.permute.xlu0 0
    %7489 = vperm.xlu0 %7488, %v7475
    %v7490 = vpop.permute.xlu0 %7489
    %7493 = vset.pattern.permute.xlu0 0
    %7494 = vperm.xlu0 %7493, %v7476
    %v7495 = vpop.permute.xlu0 %7494
    %v7501 = vunpack.c.l.b16 %v7466
    %v7502 = vunpack.c.l.b16 %v7467
    %v7503 = vunpack.c.l.b16 %v7468
    %v7504 = vunpack.c.l.b16 %v7469
    %v7505 = vpack.c.b16 %v7502, %v7501
    %v7506 = vpack.c.b16 %v7504, %v7503
    %v7508 = vsel %vm519, %v7505, 0
    %v7511 = vsel %vm519, %v7506, 0
    %7513 = vmatpush.bf16.msra.mxu0 0
    %7514 = vmatpush.bf16.msra.mxu0 0
    %7515 = vmatpush.bf16.msra.mxu0 0
    %7516 = vmatpush.bf16.msra.mxu0 0
    %7517 = vmatpush.bf16.msra.mxu0 0
    %7518 = vmatpush.bf16.msra.mxu0 0
    %7519 = vmatpush.bf16.msra.mxu0 %v7471
    %7520 = vmatpush.bf16.msra.mxu0 %v7470
    %7521 = vmatmul.bf16.gmra.mxu0 %v7508
    %v7522 = vpop.f32.mrf.mxu0
    %v7523 = vadd.f32 %v7480, %v7522
    %v7524 = vpop.f32.mrf.mxu0
    %v7525 = vadd.f32 %v7485, %v7524
    %7526 = vmatmul.bf16.gmra.mxu0 %v7511
    %v7527 = vpop.f32.mrf.mxu0
    %v7528 = vadd.f32 %v7490, %v7527
    %v7529 = vpop.f32.mrf.mxu0
    %v7530 = vadd.f32 %v7495, %v7529
    %7531 = vdwg.mxu0
    %s7532 = scalar_lea.vmem %s7, 224
    %v7533 = vld [vmem:[%s7532] sm:$0xff]
    %v7534 = vld [vmem:[%s7532 + $0x8] sm:$0xff]
    %v7535 = vld [vmem:[%s7532 + $0x10] sm:$0xff]
    %v7536 = vld [vmem:[%s7532 + $0x18] sm:$0xff]
    %s7537 = scalar_lea.vmem %s8, 224
    %v7538 = vld [vmem:[%s7537] sm:$0xff]
    %v7539 = vld [vmem:[%s7537 + $0x8] sm:$0xff]
    %v7540 = vld [vmem:[%s7537 + $0x10] sm:$0xff]
    %v7541 = vld [vmem:[%s7537 + $0x18] sm:$0xff]
    %7542 = vadd.xlane.f32.xlu0 %v7523
    %v7543 = vpop.xlane.xlu0 %7542
    %7544 = vadd.xlane.f32.xlu0 %v7525
    %v7545 = vpop.xlane.xlu0 %7544
    %7546 = vadd.xlane.f32.xlu0 %v7528
    %v7547 = vpop.xlane.xlu0 %7546
    %7548 = vadd.xlane.f32.xlu0 %v7530
    %v7549 = vpop.xlane.xlu0 %7548
    %v7550 = vmul.f32 %v7543, %v567
    %v7551 = vmul.f32 %v7545, %v567
    %v7552 = vmul.f32 %v7547, %v567
    %v7553 = vmul.f32 %v7549, %v567
    %v7554 = vsub.f32 %v7523, %v7550
    %v7555 = vsub.f32 %v7525, %v7551
    %v7556 = vsub.f32 %v7528, %v7552
    %v7557 = vsub.f32 %v7530, %v7553
    %v7558 = vmul.f32 %v7554, %v7554
    %v7559 = vmul.f32 %v7555, %v7555
    %v7560 = vmul.f32 %v7556, %v7556
    %v7561 = vmul.f32 %v7557, %v7557
    %7562 = vadd.xlane.f32.xlu0 %v7558
    %v7563 = vpop.xlane.xlu0 %7562
    %7564 = vadd.xlane.f32.xlu0 %v7559
    %v7565 = vpop.xlane.xlu0 %7564
    %7566 = vadd.xlane.f32.xlu0 %v7560
    %v7567 = vpop.xlane.xlu0 %7566
    %7568 = vadd.xlane.f32.xlu0 %v7561
    %v7569 = vpop.xlane.xlu0 %7568
    %v7570 = vmul.f32 %v7563, %v567
    %v7571 = vmul.f32 %v7565, %v567
    %v7572 = vmul.f32 %v7567, %v567
    %v7573 = vmul.f32 %v7569, %v567
    %v7574 = vadd.f32 %v7570, 1e-05
    %v7575 = vadd.f32 %v7571, 1e-05
    %v7576 = vadd.f32 %v7572, 1e-05
    %v7577 = vadd.f32 %v7573, 1e-05
    %v7578 = vrsqrt.pop %v7574
    %v7579 = vmul.f32 %v7578, %v7574
    %v7580 = vmul.f32 %v7579, %v7578
    %v7581 = vmul.f32 0.5, %v7580
    %v7582 = vsub.f32 1.5, %v7581
    %v7583 = vmul.f32 %v7578, %v7582
    %vm7584 = vweird.f32 %v7574
    %vm7585 = vweird.f32 %v7578
    %vm7586 = vmor %vm7584, %vm7585
    %v7587 = vsel %vm7586, %v7578, %v7583
    %v7588 = vrsqrt.pop %v7575
    %v7589 = vmul.f32 %v7588, %v7575
    %v7590 = vmul.f32 %v7589, %v7588
    %v7591 = vmul.f32 0.5, %v7590
    %v7592 = vsub.f32 1.5, %v7591
    %v7593 = vmul.f32 %v7588, %v7592
    %vm7594 = vweird.f32 %v7575
    %vm7595 = vweird.f32 %v7588
    %vm7596 = vmor %vm7594, %vm7595
    %v7597 = vsel %vm7596, %v7588, %v7593
    %v7598 = vrsqrt.pop %v7576
    %v7599 = vmul.f32 %v7598, %v7576
    %v7600 = vmul.f32 %v7599, %v7598
    %v7601 = vmul.f32 0.5, %v7600
    %v7602 = vsub.f32 1.5, %v7601
    %v7603 = vmul.f32 %v7598, %v7602
    %vm7604 = vweird.f32 %v7576
    %vm7605 = vweird.f32 %v7598
    %vm7606 = vmor %vm7604, %vm7605
    %v7607 = vsel %vm7606, %v7598, %v7603
    %v7608 = vrsqrt.pop %v7577
    %v7609 = vmul.f32 %v7608, %v7577
    %v7610 = vmul.f32 %v7609, %v7608
    %v7611 = vmul.f32 0.5, %v7610
    %v7612 = vsub.f32 1.5, %v7611
    %v7613 = vmul.f32 %v7608, %v7612
    %vm7614 = vweird.f32 %v7577
    %vm7615 = vweird.f32 %v7608
    %vm7616 = vmor %vm7614, %vm7615
    %v7617 = vsel %vm7616, %v7608, %v7613
    %v7618 = vmul.f32 %v7554, %v7587
    %v7619 = vmul.f32 %v7555, %v7597
    %v7620 = vmul.f32 %v7556, %v7607
    %v7621 = vmul.f32 %v7557, %v7617
    %7623 = vset.pattern.permute.xlu0 0
    %7624 = vperm.xlu0 %7623, %v7533
    %v7625 = vpop.permute.xlu0 %7624
    %7628 = vset.pattern.permute.xlu0 0
    %7629 = vperm.xlu0 %7628, %v7534
    %v7630 = vpop.permute.xlu0 %7629
    %7633 = vset.pattern.permute.xlu0 0
    %7634 = vperm.xlu0 %7633, %v7535
    %v7635 = vpop.permute.xlu0 %7634
    %7638 = vset.pattern.permute.xlu0 0
    %7639 = vperm.xlu0 %7638, %v7536
    %v7640 = vpop.permute.xlu0 %7639
    %v7642 = vmul.f32 %v7618, %v7625
    %v7643 = vmul.f32 %v7619, %v7630
    %v7644 = vmul.f32 %v7620, %v7635
    %v7645 = vmul.f32 %v7621, %v7640
    %7647 = vset.pattern.permute.xlu0 0
    %7648 = vperm.xlu0 %7647, %v7538
    %v7649 = vpop.permute.xlu0 %7648
    %7652 = vset.pattern.permute.xlu0 0
    %7653 = vperm.xlu0 %7652, %v7539
    %v7654 = vpop.permute.xlu0 %7653
    %7657 = vset.pattern.permute.xlu0 0
    %7658 = vperm.xlu0 %7657, %v7540
    %v7659 = vpop.permute.xlu0 %7658
    %7662 = vset.pattern.permute.xlu0 0
    %7663 = vperm.xlu0 %7662, %v7541
    %v7664 = vpop.permute.xlu0 %7663
    %v7666 = vadd.f32 %v7642, %v7649
    %v7667 = vadd.f32 %v7643, %v7654
    %v7668 = vadd.f32 %v7644, %v7659
    %v7669 = vadd.f32 %v7645, %v7664
    %v7670 = vmax.f32 %v7666, 0.0
    %v7671 = vmax.f32 %v7667, 0.0
    %v7672 = vmax.f32 %v7668, 0.0
    %v7673 = vmax.f32 %v7669, 0.0
    %s7674 = scalar_lea.vmem %s10, 224
    %v7675 = vld [vmem:[%s7674] sm:$0xff]
    %v7676 = vld [vmem:[%s7674 + $0x8] sm:$0xff]
    %v7677 = vld [vmem:[%s7674 + $0x10] sm:$0xff]
    %v7678 = vld [vmem:[%s7674 + $0x18] sm:$0xff]
    %7683 = vrot.lane.b32.xlu0 %v7670, 9
    %v7684 = vpop.permute.xlu0 %7683
    %7685 = vrot.lane.b32.xlu0 %v7671, 9
    %v7686 = vpop.permute.xlu0 %7685
    %7687 = vrot.lane.b32.xlu0 %v7672, 9
    %v7688 = vpop.permute.xlu0 %7687
    %7689 = vrot.lane.b32.xlu0 %v7673, 9
    %v7690 = vpop.permute.xlu0 %7689
    %v7695 = vpack.c.bf16 %v7686, %v7684
    %v7696 = vpack.c.bf16 %v7690, %v7688
    %s7697 = scalar_lea.vmem [#allocation2], 1008
    %v7698 = vld [vmem:[%s7697] sm:$0xf]
    %v7699 = vld [vmem:[%s7697 + $0x4] sm:$0xf]
    %v7700 = vld [vmem:[%s7697 + $0x8] sm:$0xf]
    %v7701 = vld [vmem:[%s7697 + $0xc] sm:$0xf]
    %v7706 = vunpack.c.l.b16 %v7698
    %v7707 = vunpack.c.l.b16 %v7699
    %v7708 = vunpack.c.l.b16 %v7700
    %v7709 = vunpack.c.l.b16 %v7701
    %v7710 = vpack.c.b16 %v7707, %v7706
    %v7711 = vpack.c.b16 %v7709, %v7708
    %v7713 = vsel %vm519, %v7710, 0
    %v7716 = vsel %vm519, %v7711, 0
    %7718 = vmatpush.bf16.msra.mxu0 0
    %7719 = vmatpush.bf16.msra.mxu0 0
    %7720 = vmatpush.bf16.msra.mxu0 0
    %7721 = vmatpush.bf16.msra.mxu0 0
    %7722 = vmatpush.bf16.msra.mxu0 0
    %7723 = vmatpush.bf16.msra.mxu0 0
    %7724 = vmatpush.bf16.msra.mxu0 %v7696
    %7725 = vmatpush.bf16.msra.mxu0 %v7695
    %7726 = vmatmul.bf16.gmra.mxu0 %v7713
    %v7727 = vpop.f32.mrf.mxu0
    %v7728 = vadd.f32 0.0, %v7727
    %v7729 = vpop.f32.mrf.mxu0
    %v7730 = vadd.f32 0.0, %v7729
    %7731 = vmatmul.bf16.gmra.mxu0 %v7716
    %v7732 = vpop.f32.mrf.mxu0
    %v7733 = vadd.f32 0.0, %v7732
    %v7734 = vpop.f32.mrf.mxu0
    %v7735 = vadd.f32 0.0, %v7734
    %7736 = vdwg.mxu0
    %v7737 = vmul.f32 %v7728, %v753
    %v7738 = vmul.f32 %v7730, %v753
    %v7739 = vmul.f32 %v7733, %v753
    %v7740 = vmul.f32 %v7735, %v753
    %7741 = vrot.lane.b32.xlu0 %v7670, 8
    %v7742 = vpop.permute.xlu0 %7741
    %7743 = vrot.lane.b32.xlu0 %v7671, 8
    %v7744 = vpop.permute.xlu0 %7743
    %7745 = vrot.lane.b32.xlu0 %v7672, 8
    %v7746 = vpop.permute.xlu0 %7745
    %7747 = vrot.lane.b32.xlu0 %v7673, 8
    %v7748 = vpop.permute.xlu0 %7747
    %v7753 = vpack.c.bf16 %v7744, %v7742
    %v7754 = vpack.c.bf16 %v7748, %v7746
    %s7755 = scalar_lea.vmem [#allocation2], 1024
    %v7756 = vld [vmem:[%s7755] sm:$0xf]
    %v7757 = vld [vmem:[%s7755 + $0x4] sm:$0xf]
    %v7758 = vld [vmem:[%s7755 + $0x8] sm:$0xf]
    %v7759 = vld [vmem:[%s7755 + $0xc] sm:$0xf]
    %v7764 = vunpack.c.l.b16 %v7756
    %v7765 = vunpack.c.l.b16 %v7757
    %v7766 = vunpack.c.l.b16 %v7758
    %v7767 = vunpack.c.l.b16 %v7759
    %v7768 = vpack.c.b16 %v7765, %v7764
    %v7769 = vpack.c.b16 %v7767, %v7766
    %v7771 = vsel %vm519, %v7768, 0
    %v7774 = vsel %vm519, %v7769, 0
    %7776 = vmatpush.bf16.msra.mxu0 0
    %7777 = vmatpush.bf16.msra.mxu0 0
    %7778 = vmatpush.bf16.msra.mxu0 0
    %7779 = vmatpush.bf16.msra.mxu0 0
    %7780 = vmatpush.bf16.msra.mxu0 0
    %7781 = vmatpush.bf16.msra.mxu0 0
    %7782 = vmatpush.bf16.msra.mxu0 %v7754
    %7783 = vmatpush.bf16.msra.mxu0 %v7753
    %7784 = vmatmul.bf16.gmra.mxu0 %v7771
    %v7785 = vpop.f32.mrf.mxu0
    %v7786 = vadd.f32 0.0, %v7785
    %v7787 = vpop.f32.mrf.mxu0
    %v7788 = vadd.f32 0.0, %v7787
    %7789 = vmatmul.bf16.gmra.mxu0 %v7774
    %v7790 = vpop.f32.mrf.mxu0
    %v7791 = vadd.f32 0.0, %v7790
    %v7792 = vpop.f32.mrf.mxu0
    %v7793 = vadd.f32 0.0, %v7792
    %7794 = vdwg.mxu0
    %v7795 = vmul.f32 %v7786, %v812
    %v7796 = vmul.f32 %v7788, %v812
    %v7797 = vmul.f32 %v7791, %v812
    %v7798 = vmul.f32 %v7793, %v812
    %v7799 = vadd.f32 %v7737, %v7795
    %v7800 = vadd.f32 %v7738, %v7796
    %v7801 = vadd.f32 %v7739, %v7797
    %v7802 = vadd.f32 %v7740, %v7798
    %7803 = vrot.lane.b32.xlu0 %v7670, 7
    %v7804 = vpop.permute.xlu0 %7803
    %7805 = vrot.lane.b32.xlu0 %v7671, 7
    %v7806 = vpop.permute.xlu0 %7805
    %7807 = vrot.lane.b32.xlu0 %v7672, 7
    %v7808 = vpop.permute.xlu0 %7807
    %7809 = vrot.lane.b32.xlu0 %v7673, 7
    %v7810 = vpop.permute.xlu0 %7809
    %v7815 = vpack.c.bf16 %v7806, %v7804
    %v7816 = vpack.c.bf16 %v7810, %v7808
    %s7817 = scalar_lea.vmem [#allocation2], 1040
    %v7818 = vld [vmem:[%s7817] sm:$0xf]
    %v7819 = vld [vmem:[%s7817 + $0x4] sm:$0xf]
    %v7820 = vld [vmem:[%s7817 + $0x8] sm:$0xf]
    %v7821 = vld [vmem:[%s7817 + $0xc] sm:$0xf]
    %v7826 = vunpack.c.l.b16 %v7818
    %v7827 = vunpack.c.l.b16 %v7819
    %v7828 = vunpack.c.l.b16 %v7820
    %v7829 = vunpack.c.l.b16 %v7821
    %v7830 = vpack.c.b16 %v7827, %v7826
    %v7831 = vpack.c.b16 %v7829, %v7828
    %v7833 = vsel %vm519, %v7830, 0
    %v7836 = vsel %vm519, %v7831, 0
    %7838 = vmatpush.bf16.msra.mxu0 0
    %7839 = vmatpush.bf16.msra.mxu0 0
    %7840 = vmatpush.bf16.msra.mxu0 0
    %7841 = vmatpush.bf16.msra.mxu0 0
    %7842 = vmatpush.bf16.msra.mxu0 0
    %7843 = vmatpush.bf16.msra.mxu0 0
    %7844 = vmatpush.bf16.msra.mxu0 %v7816
    %7845 = vmatpush.bf16.msra.mxu0 %v7815
    %7846 = vmatmul.bf16.gmra.mxu0 %v7833
    %v7847 = vpop.f32.mrf.mxu0
    %v7848 = vadd.f32 0.0, %v7847
    %v7849 = vpop.f32.mrf.mxu0
    %v7850 = vadd.f32 0.0, %v7849
    %7851 = vmatmul.bf16.gmra.mxu0 %v7836
    %v7852 = vpop.f32.mrf.mxu0
    %v7853 = vadd.f32 0.0, %v7852
    %v7854 = vpop.f32.mrf.mxu0
    %v7855 = vadd.f32 0.0, %v7854
    %7856 = vdwg.mxu0
    %v7857 = vmul.f32 %v7848, %v875
    %v7858 = vmul.f32 %v7850, %v875
    %v7859 = vmul.f32 %v7853, %v875
    %v7860 = vmul.f32 %v7855, %v875
    %v7861 = vadd.f32 %v7799, %v7857
    %v7862 = vadd.f32 %v7800, %v7858
    %v7863 = vadd.f32 %v7801, %v7859
    %v7864 = vadd.f32 %v7802, %v7860
    %7865 = vrot.lane.b32.xlu0 %v7670, 1
    %v7866 = vpop.permute.xlu0 %7865
    %7867 = vrot.lane.b32.xlu0 %v7671, 1
    %v7868 = vpop.permute.xlu0 %7867
    %7869 = vrot.lane.b32.xlu0 %v7672, 1
    %v7870 = vpop.permute.xlu0 %7869
    %7871 = vrot.lane.b32.xlu0 %v7673, 1
    %v7872 = vpop.permute.xlu0 %7871
    %v7877 = vpack.c.bf16 %v7868, %v7866
    %v7878 = vpack.c.bf16 %v7872, %v7870
    %s7879 = scalar_lea.vmem [#allocation2], 1056
    %v7880 = vld [vmem:[%s7879] sm:$0xf]
    %v7881 = vld [vmem:[%s7879 + $0x4] sm:$0xf]
    %v7882 = vld [vmem:[%s7879 + $0x8] sm:$0xf]
    %v7883 = vld [vmem:[%s7879 + $0xc] sm:$0xf]
    %v7888 = vunpack.c.l.b16 %v7880
    %v7889 = vunpack.c.l.b16 %v7881
    %v7890 = vunpack.c.l.b16 %v7882
    %v7891 = vunpack.c.l.b16 %v7883
    %v7892 = vpack.c.b16 %v7889, %v7888
    %v7893 = vpack.c.b16 %v7891, %v7890
    %v7895 = vsel %vm519, %v7892, 0
    %v7898 = vsel %vm519, %v7893, 0
    %7900 = vmatpush.bf16.msra.mxu0 0
    %7901 = vmatpush.bf16.msra.mxu0 0
    %7902 = vmatpush.bf16.msra.mxu0 0
    %7903 = vmatpush.bf16.msra.mxu0 0
    %7904 = vmatpush.bf16.msra.mxu0 0
    %7905 = vmatpush.bf16.msra.mxu0 0
    %7906 = vmatpush.bf16.msra.mxu0 %v7878
    %7907 = vmatpush.bf16.msra.mxu0 %v7877
    %7908 = vmatmul.bf16.gmra.mxu0 %v7895
    %v7909 = vpop.f32.mrf.mxu0
    %v7910 = vadd.f32 0.0, %v7909
    %v7911 = vpop.f32.mrf.mxu0
    %v7912 = vadd.f32 0.0, %v7911
    %7913 = vmatmul.bf16.gmra.mxu0 %v7898
    %v7914 = vpop.f32.mrf.mxu0
    %v7915 = vadd.f32 0.0, %v7914
    %v7916 = vpop.f32.mrf.mxu0
    %v7917 = vadd.f32 0.0, %v7916
    %7918 = vdwg.mxu0
    %v7919 = vmul.f32 %v7910, %v938
    %v7920 = vmul.f32 %v7912, %v938
    %v7921 = vmul.f32 %v7915, %v938
    %v7922 = vmul.f32 %v7917, %v938
    %v7923 = vadd.f32 %v7861, %v7919
    %v7924 = vadd.f32 %v7862, %v7920
    %v7925 = vadd.f32 %v7863, %v7921
    %v7926 = vadd.f32 %v7864, %v7922
    %v7927 = vpack.c.bf16 %v7671, %v7670
    %v7928 = vpack.c.bf16 %v7673, %v7672
    %s7929 = scalar_lea.vmem [#allocation2], 1072
    %v7930 = vld [vmem:[%s7929] sm:$0xf]
    %v7931 = vld [vmem:[%s7929 + $0x4] sm:$0xf]
    %v7932 = vld [vmem:[%s7929 + $0x8] sm:$0xf]
    %v7933 = vld [vmem:[%s7929 + $0xc] sm:$0xf]
    %v7938 = vunpack.c.l.b16 %v7930
    %v7939 = vunpack.c.l.b16 %v7931
    %v7940 = vunpack.c.l.b16 %v7932
    %v7941 = vunpack.c.l.b16 %v7933
    %v7942 = vpack.c.b16 %v7939, %v7938
    %v7943 = vpack.c.b16 %v7941, %v7940
    %v7945 = vsel %vm519, %v7942, 0
    %v7948 = vsel %vm519, %v7943, 0
    %7950 = vmatpush.bf16.msra.mxu0 0
    %7951 = vmatpush.bf16.msra.mxu0 0
    %7952 = vmatpush.bf16.msra.mxu0 0
    %7953 = vmatpush.bf16.msra.mxu0 0
    %7954 = vmatpush.bf16.msra.mxu0 0
    %7955 = vmatpush.bf16.msra.mxu0 0
    %7956 = vmatpush.bf16.msra.mxu0 %v7928
    %7957 = vmatpush.bf16.msra.mxu0 %v7927
    %7958 = vmatmul.bf16.gmra.mxu0 %v7945
    %v7959 = vpop.f32.mrf.mxu0
    %v7960 = vadd.f32 0.0, %v7959
    %v7961 = vpop.f32.mrf.mxu0
    %v7962 = vadd.f32 0.0, %v7961
    %7963 = vmatmul.bf16.gmra.mxu0 %v7948
    %v7964 = vpop.f32.mrf.mxu0
    %v7965 = vadd.f32 0.0, %v7964
    %v7966 = vpop.f32.mrf.mxu0
    %v7967 = vadd.f32 0.0, %v7966
    %7968 = vdwg.mxu0
    %v7969 = vmul.f32 %v7960, %v989
    %v7970 = vmul.f32 %v7962, %v989
    %v7971 = vmul.f32 %v7965, %v989
    %v7972 = vmul.f32 %v7967, %v989
    %v7973 = vadd.f32 %v7923, %v7969
    %v7974 = vadd.f32 %v7924, %v7970
    %v7975 = vadd.f32 %v7925, %v7971
    %v7976 = vadd.f32 %v7926, %v7972
    %7977 = vrot.lane.b32.xlu0 %v7670, 127
    %v7978 = vpop.permute.xlu0 %7977
    %7979 = vrot.lane.b32.xlu0 %v7671, 127
    %v7980 = vpop.permute.xlu0 %7979
    %7981 = vrot.lane.b32.xlu0 %v7672, 127
    %v7982 = vpop.permute.xlu0 %7981
    %7983 = vrot.lane.b32.xlu0 %v7673, 127
    %v7984 = vpop.permute.xlu0 %7983
    %v7989 = vpack.c.bf16 %v7980, %v7978
    %v7990 = vpack.c.bf16 %v7984, %v7982
    %s7991 = scalar_lea.vmem [#allocation2], 1088
    %v7992 = vld [vmem:[%s7991] sm:$0xf]
    %v7993 = vld [vmem:[%s7991 + $0x4] sm:$0xf]
    %v7994 = vld [vmem:[%s7991 + $0x8] sm:$0xf]
    %v7995 = vld [vmem:[%s7991 + $0xc] sm:$0xf]
    %v8000 = vunpack.c.l.b16 %v7992
    %v8001 = vunpack.c.l.b16 %v7993
    %v8002 = vunpack.c.l.b16 %v7994
    %v8003 = vunpack.c.l.b16 %v7995
    %v8004 = vpack.c.b16 %v8001, %v8000
    %v8005 = vpack.c.b16 %v8003, %v8002
    %v8007 = vsel %vm519, %v8004, 0
    %v8010 = vsel %vm519, %v8005, 0
    %8012 = vmatpush.bf16.msra.mxu0 0
    %8013 = vmatpush.bf16.msra.mxu0 0
    %8014 = vmatpush.bf16.msra.mxu0 0
    %8015 = vmatpush.bf16.msra.mxu0 0
    %8016 = vmatpush.bf16.msra.mxu0 0
    %8017 = vmatpush.bf16.msra.mxu0 0
    %8018 = vmatpush.bf16.msra.mxu0 %v7990
    %8019 = vmatpush.bf16.msra.mxu0 %v7989
    %8020 = vmatmul.bf16.gmra.mxu0 %v8007
    %v8021 = vpop.f32.mrf.mxu0
    %v8022 = vadd.f32 0.0, %v8021
    %v8023 = vpop.f32.mrf.mxu0
    %v8024 = vadd.f32 0.0, %v8023
    %8025 = vmatmul.bf16.gmra.mxu0 %v8010
    %v8026 = vpop.f32.mrf.mxu0
    %v8027 = vadd.f32 0.0, %v8026
    %v8028 = vpop.f32.mrf.mxu0
    %v8029 = vadd.f32 0.0, %v8028
    %8030 = vdwg.mxu0
    %v8031 = vmul.f32 %v8022, %v1052
    %v8032 = vmul.f32 %v8024, %v1052
    %v8033 = vmul.f32 %v8027, %v1052
    %v8034 = vmul.f32 %v8029, %v1052
    %v8035 = vadd.f32 %v7973, %v8031
    %v8036 = vadd.f32 %v7974, %v8032
    %v8037 = vadd.f32 %v7975, %v8033
    %v8038 = vadd.f32 %v7976, %v8034
    %8039 = vrot.lane.b32.xlu0 %v7670, 121
    %v8040 = vpop.permute.xlu0 %8039
    %8041 = vrot.lane.b32.xlu0 %v7671, 121
    %v8042 = vpop.permute.xlu0 %8041
    %8043 = vrot.lane.b32.xlu0 %v7672, 121
    %v8044 = vpop.permute.xlu0 %8043
    %8045 = vrot.lane.b32.xlu0 %v7673, 121
    %v8046 = vpop.permute.xlu0 %8045
    %v8051 = vpack.c.bf16 %v8042, %v8040
    %v8052 = vpack.c.bf16 %v8046, %v8044
    %s8053 = scalar_lea.vmem [#allocation2], 1104
    %v8054 = vld [vmem:[%s8053] sm:$0xf]
    %v8055 = vld [vmem:[%s8053 + $0x4] sm:$0xf]
    %v8056 = vld [vmem:[%s8053 + $0x8] sm:$0xf]
    %v8057 = vld [vmem:[%s8053 + $0xc] sm:$0xf]
    %v8062 = vunpack.c.l.b16 %v8054
    %v8063 = vunpack.c.l.b16 %v8055
    %v8064 = vunpack.c.l.b16 %v8056
    %v8065 = vunpack.c.l.b16 %v8057
    %v8066 = vpack.c.b16 %v8063, %v8062
    %v8067 = vpack.c.b16 %v8065, %v8064
    %v8069 = vsel %vm519, %v8066, 0
    %v8072 = vsel %vm519, %v8067, 0
    %8074 = vmatpush.bf16.msra.mxu0 0
    %8075 = vmatpush.bf16.msra.mxu0 0
    %8076 = vmatpush.bf16.msra.mxu0 0
    %8077 = vmatpush.bf16.msra.mxu0 0
    %8078 = vmatpush.bf16.msra.mxu0 0
    %8079 = vmatpush.bf16.msra.mxu0 0
    %8080 = vmatpush.bf16.msra.mxu0 %v8052
    %8081 = vmatpush.bf16.msra.mxu0 %v8051
    %8082 = vmatmul.bf16.gmra.mxu0 %v8069
    %v8083 = vpop.f32.mrf.mxu0
    %v8084 = vadd.f32 0.0, %v8083
    %v8085 = vpop.f32.mrf.mxu0
    %v8086 = vadd.f32 0.0, %v8085
    %8087 = vmatmul.bf16.gmra.mxu0 %v8072
    %v8088 = vpop.f32.mrf.mxu0
    %v8089 = vadd.f32 0.0, %v8088
    %v8090 = vpop.f32.mrf.mxu0
    %v8091 = vadd.f32 0.0, %v8090
    %8092 = vdwg.mxu0
    %v8093 = vmul.f32 %v8084, %v1115
    %v8094 = vmul.f32 %v8086, %v1115
    %v8095 = vmul.f32 %v8089, %v1115
    %v8096 = vmul.f32 %v8091, %v1115
    %v8097 = vadd.f32 %v8035, %v8093
    %v8098 = vadd.f32 %v8036, %v8094
    %v8099 = vadd.f32 %v8037, %v8095
    %v8100 = vadd.f32 %v8038, %v8096
    %8101 = vrot.lane.b32.xlu0 %v7670, 120
    %v8102 = vpop.permute.xlu0 %8101
    %8103 = vrot.lane.b32.xlu0 %v7671, 120
    %v8104 = vpop.permute.xlu0 %8103
    %8105 = vrot.lane.b32.xlu0 %v7672, 120
    %v8106 = vpop.permute.xlu0 %8105
    %8107 = vrot.lane.b32.xlu0 %v7673, 120
    %v8108 = vpop.permute.xlu0 %8107
    %v8113 = vpack.c.bf16 %v8104, %v8102
    %v8114 = vpack.c.bf16 %v8108, %v8106
    %s8115 = scalar_lea.vmem [#allocation2], 1120
    %v8116 = vld [vmem:[%s8115] sm:$0xf]
    %v8117 = vld [vmem:[%s8115 + $0x4] sm:$0xf]
    %v8118 = vld [vmem:[%s8115 + $0x8] sm:$0xf]
    %v8119 = vld [vmem:[%s8115 + $0xc] sm:$0xf]
    %v8124 = vunpack.c.l.b16 %v8116
    %v8125 = vunpack.c.l.b16 %v8117
    %v8126 = vunpack.c.l.b16 %v8118
    %v8127 = vunpack.c.l.b16 %v8119
    %v8128 = vpack.c.b16 %v8125, %v8124
    %v8129 = vpack.c.b16 %v8127, %v8126
    %v8131 = vsel %vm519, %v8128, 0
    %v8134 = vsel %vm519, %v8129, 0
    %8136 = vmatpush.bf16.msra.mxu0 0
    %8137 = vmatpush.bf16.msra.mxu0 0
    %8138 = vmatpush.bf16.msra.mxu0 0
    %8139 = vmatpush.bf16.msra.mxu0 0
    %8140 = vmatpush.bf16.msra.mxu0 0
    %8141 = vmatpush.bf16.msra.mxu0 0
    %8142 = vmatpush.bf16.msra.mxu0 %v8114
    %8143 = vmatpush.bf16.msra.mxu0 %v8113
    %8144 = vmatmul.bf16.gmra.mxu0 %v8131
    %v8145 = vpop.f32.mrf.mxu0
    %v8146 = vadd.f32 0.0, %v8145
    %v8147 = vpop.f32.mrf.mxu0
    %v8148 = vadd.f32 0.0, %v8147
    %8149 = vmatmul.bf16.gmra.mxu0 %v8134
    %v8150 = vpop.f32.mrf.mxu0
    %v8151 = vadd.f32 0.0, %v8150
    %v8152 = vpop.f32.mrf.mxu0
    %v8153 = vadd.f32 0.0, %v8152
    %8154 = vdwg.mxu0
    %v8155 = vmul.f32 %v8146, %v1178
    %v8156 = vmul.f32 %v8148, %v1178
    %v8157 = vmul.f32 %v8151, %v1178
    %v8158 = vmul.f32 %v8153, %v1178
    %v8159 = vadd.f32 %v8097, %v8155
    %v8160 = vadd.f32 %v8098, %v8156
    %v8161 = vadd.f32 %v8099, %v8157
    %v8162 = vadd.f32 %v8100, %v8158
    %8163 = vrot.lane.b32.xlu0 %v7670, 119
    %v8164 = vpop.permute.xlu0 %8163
    %8165 = vrot.lane.b32.xlu0 %v7671, 119
    %v8166 = vpop.permute.xlu0 %8165
    %8167 = vrot.lane.b32.xlu0 %v7672, 119
    %v8168 = vpop.permute.xlu0 %8167
    %8169 = vrot.lane.b32.xlu0 %v7673, 119
    %v8170 = vpop.permute.xlu0 %8169
    %v8175 = vpack.c.bf16 %v8166, %v8164
    %v8176 = vpack.c.bf16 %v8170, %v8168
    %s8177 = scalar_lea.vmem [#allocation2], 1136
    %v8178 = vld [vmem:[%s8177] sm:$0xf]
    %v8179 = vld [vmem:[%s8177 + $0x4] sm:$0xf]
    %v8180 = vld [vmem:[%s8177 + $0x8] sm:$0xf]
    %v8181 = vld [vmem:[%s8177 + $0xc] sm:$0xf]
    %v8186 = vunpack.c.l.b16 %v8178
    %v8187 = vunpack.c.l.b16 %v8179
    %v8188 = vunpack.c.l.b16 %v8180
    %v8189 = vunpack.c.l.b16 %v8181
    %v8190 = vpack.c.b16 %v8187, %v8186
    %v8191 = vpack.c.b16 %v8189, %v8188
    %v8193 = vsel %vm519, %v8190, 0
    %v8196 = vsel %vm519, %v8191, 0
    %8198 = vmatpush.bf16.msra.mxu0 0
    %8199 = vmatpush.bf16.msra.mxu0 0
    %8200 = vmatpush.bf16.msra.mxu0 0
    %8201 = vmatpush.bf16.msra.mxu0 0
    %8202 = vmatpush.bf16.msra.mxu0 0
    %8203 = vmatpush.bf16.msra.mxu0 0
    %8204 = vmatpush.bf16.msra.mxu0 %v8176
    %8205 = vmatpush.bf16.msra.mxu0 %v8175
    %8206 = vmatmul.bf16.gmra.mxu0 %v8193
    %v8207 = vpop.f32.mrf.mxu0
    %v8208 = vadd.f32 0.0, %v8207
    %v8209 = vpop.f32.mrf.mxu0
    %v8210 = vadd.f32 0.0, %v8209
    %8211 = vmatmul.bf16.gmra.mxu0 %v8196
    %v8212 = vpop.f32.mrf.mxu0
    %v8213 = vadd.f32 0.0, %v8212
    %v8214 = vpop.f32.mrf.mxu0
    %v8215 = vadd.f32 0.0, %v8214
    %8216 = vdwg.mxu0
    %v8217 = vmul.f32 %v8208, %v1241
    %v8218 = vmul.f32 %v8210, %v1241
    %v8219 = vmul.f32 %v8213, %v1241
    %v8220 = vmul.f32 %v8215, %v1241
    %v8221 = vadd.f32 %v8159, %v8217
    %v8222 = vadd.f32 %v8160, %v8218
    %v8223 = vadd.f32 %v8161, %v8219
    %v8224 = vadd.f32 %v8162, %v8220
    %8226 = vset.pattern.permute.xlu0 0
    %8227 = vperm.xlu0 %8226, %v7675
    %v8228 = vpop.permute.xlu0 %8227
    %8231 = vset.pattern.permute.xlu0 0
    %8232 = vperm.xlu0 %8231, %v7676
    %v8233 = vpop.permute.xlu0 %8232
    %8236 = vset.pattern.permute.xlu0 0
    %8237 = vperm.xlu0 %8236, %v7677
    %v8238 = vpop.permute.xlu0 %8237
    %8241 = vset.pattern.permute.xlu0 0
    %8242 = vperm.xlu0 %8241, %v7678
    %v8243 = vpop.permute.xlu0 %8242
    %v8245 = vadd.f32 %v8221, %v8228
    %v8246 = vadd.f32 %v8222, %v8233
    %v8247 = vadd.f32 %v8223, %v8238
    %v8248 = vadd.f32 %v8224, %v8243
    %s8249 = scalar_lea.vmem %s11, 224
    %v8250 = vld [vmem:[%s8249] sm:$0xff]
    %v8251 = vld [vmem:[%s8249 + $0x8] sm:$0xff]
    %v8252 = vld [vmem:[%s8249 + $0x10] sm:$0xff]
    %v8253 = vld [vmem:[%s8249 + $0x18] sm:$0xff]
    %s8254 = scalar_lea.vmem %s12, 224
    %v8255 = vld [vmem:[%s8254] sm:$0xff]
    %v8256 = vld [vmem:[%s8254 + $0x8] sm:$0xff]
    %v8257 = vld [vmem:[%s8254 + $0x10] sm:$0xff]
    %v8258 = vld [vmem:[%s8254 + $0x18] sm:$0xff]
    %8259 = vadd.xlane.f32.xlu0 %v8245
    %v8260 = vpop.xlane.xlu0 %8259
    %8261 = vadd.xlane.f32.xlu0 %v8246
    %v8262 = vpop.xlane.xlu0 %8261
    %8263 = vadd.xlane.f32.xlu0 %v8247
    %v8264 = vpop.xlane.xlu0 %8263
    %8265 = vadd.xlane.f32.xlu0 %v8248
    %v8266 = vpop.xlane.xlu0 %8265
    %v8267 = vmul.f32 %v8260, %v567
    %v8268 = vmul.f32 %v8262, %v567
    %v8269 = vmul.f32 %v8264, %v567
    %v8270 = vmul.f32 %v8266, %v567
    %v8271 = vsub.f32 %v8245, %v8267
    %v8272 = vsub.f32 %v8246, %v8268
    %v8273 = vsub.f32 %v8247, %v8269
    %v8274 = vsub.f32 %v8248, %v8270
    %v8275 = vmul.f32 %v8271, %v8271
    %v8276 = vmul.f32 %v8272, %v8272
    %v8277 = vmul.f32 %v8273, %v8273
    %v8278 = vmul.f32 %v8274, %v8274
    %8279 = vadd.xlane.f32.xlu0 %v8275
    %v8280 = vpop.xlane.xlu0 %8279
    %8281 = vadd.xlane.f32.xlu0 %v8276
    %v8282 = vpop.xlane.xlu0 %8281
    %8283 = vadd.xlane.f32.xlu0 %v8277
    %v8284 = vpop.xlane.xlu0 %8283
    %8285 = vadd.xlane.f32.xlu0 %v8278
    %v8286 = vpop.xlane.xlu0 %8285
    %v8287 = vmul.f32 %v8280, %v567
    %v8288 = vmul.f32 %v8282, %v567
    %v8289 = vmul.f32 %v8284, %v567
    %v8290 = vmul.f32 %v8286, %v567
    %v8291 = vadd.f32 %v8287, 1e-05
    %v8292 = vadd.f32 %v8288, 1e-05
    %v8293 = vadd.f32 %v8289, 1e-05
    %v8294 = vadd.f32 %v8290, 1e-05
    %v8295 = vrsqrt.pop %v8291
    %v8296 = vmul.f32 %v8295, %v8291
    %v8297 = vmul.f32 %v8296, %v8295
    %v8298 = vmul.f32 0.5, %v8297
    %v8299 = vsub.f32 1.5, %v8298
    %v8300 = vmul.f32 %v8295, %v8299
    %vm8301 = vweird.f32 %v8291
    %vm8302 = vweird.f32 %v8295
    %vm8303 = vmor %vm8301, %vm8302
    %v8304 = vsel %vm8303, %v8295, %v8300
    %v8305 = vrsqrt.pop %v8292
    %v8306 = vmul.f32 %v8305, %v8292
    %v8307 = vmul.f32 %v8306, %v8305
    %v8308 = vmul.f32 0.5, %v8307
    %v8309 = vsub.f32 1.5, %v8308
    %v8310 = vmul.f32 %v8305, %v8309
    %vm8311 = vweird.f32 %v8292
    %vm8312 = vweird.f32 %v8305
    %vm8313 = vmor %vm8311, %vm8312
    %v8314 = vsel %vm8313, %v8305, %v8310
    %v8315 = vrsqrt.pop %v8293
    %v8316 = vmul.f32 %v8315, %v8293
    %v8317 = vmul.f32 %v8316, %v8315
    %v8318 = vmul.f32 0.5, %v8317
    %v8319 = vsub.f32 1.5, %v8318
    %v8320 = vmul.f32 %v8315, %v8319
    %vm8321 = vweird.f32 %v8293
    %vm8322 = vweird.f32 %v8315
    %vm8323 = vmor %vm8321, %vm8322
    %v8324 = vsel %vm8323, %v8315, %v8320
    %v8325 = vrsqrt.pop %v8294
    %v8326 = vmul.f32 %v8325, %v8294
    %v8327 = vmul.f32 %v8326, %v8325
    %v8328 = vmul.f32 0.5, %v8327
    %v8329 = vsub.f32 1.5, %v8328
    %v8330 = vmul.f32 %v8325, %v8329
    %vm8331 = vweird.f32 %v8294
    %vm8332 = vweird.f32 %v8325
    %vm8333 = vmor %vm8331, %vm8332
    %v8334 = vsel %vm8333, %v8325, %v8330
    %v8335 = vmul.f32 %v8271, %v8304
    %v8336 = vmul.f32 %v8272, %v8314
    %v8337 = vmul.f32 %v8273, %v8324
    %v8338 = vmul.f32 %v8274, %v8334
    %8340 = vset.pattern.permute.xlu0 0
    %8341 = vperm.xlu0 %8340, %v8250
    %v8342 = vpop.permute.xlu0 %8341
    %8345 = vset.pattern.permute.xlu0 0
    %8346 = vperm.xlu0 %8345, %v8251
    %v8347 = vpop.permute.xlu0 %8346
    %8350 = vset.pattern.permute.xlu0 0
    %8351 = vperm.xlu0 %8350, %v8252
    %v8352 = vpop.permute.xlu0 %8351
    %8355 = vset.pattern.permute.xlu0 0
    %8356 = vperm.xlu0 %8355, %v8253
    %v8357 = vpop.permute.xlu0 %8356
    %v8359 = vmul.f32 %v8335, %v8342
    %v8360 = vmul.f32 %v8336, %v8347
    %v8361 = vmul.f32 %v8337, %v8352
    %v8362 = vmul.f32 %v8338, %v8357
    %8364 = vset.pattern.permute.xlu0 0
    %8365 = vperm.xlu0 %8364, %v8255
    %v8366 = vpop.permute.xlu0 %8365
    %8369 = vset.pattern.permute.xlu0 0
    %8370 = vperm.xlu0 %8369, %v8256
    %v8371 = vpop.permute.xlu0 %8370
    %8374 = vset.pattern.permute.xlu0 0
    %8375 = vperm.xlu0 %8374, %v8257
    %v8376 = vpop.permute.xlu0 %8375
    %8379 = vset.pattern.permute.xlu0 0
    %8380 = vperm.xlu0 %8379, %v8258
    %v8381 = vpop.permute.xlu0 %8380
    %v8383 = vadd.f32 %v8359, %v8366
    %v8384 = vadd.f32 %v8360, %v8371
    %v8385 = vadd.f32 %v8361, %v8376
    %v8386 = vadd.f32 %v8362, %v8381
    %v8387 = vmax.f32 %v8383, 0.0
    %v8388 = vmax.f32 %v8384, 0.0
    %v8389 = vmax.f32 %v8385, 0.0
    %v8390 = vmax.f32 %v8386, 0.0
    %s8391 = scalar_lea.vmem %s13, 112
    %v8392 = vld [vmem:[%s8391] sm:$0xf]
    %v8393 = vld [vmem:[%s8391 + $0x4] sm:$0xf]
    %v8394 = vld [vmem:[%s8391 + $0x8] sm:$0xf]
    %v8395 = vld [vmem:[%s8391 + $0xc] sm:$0xf]
    %v8396 = vpack.c.bf16 %v8388, %v8387
    %v8397 = vpack.c.bf16 %v8390, %v8389
    %s8398 = scalar_lea.vmem %s14, 224
    %v8399 = vld [vmem:[%s8398] sm:$0xff]
    %v8400 = vld [vmem:[%s8398 + $0x8] sm:$0xff]
    %v8401 = vld [vmem:[%s8398 + $0x10] sm:$0xff]
    %v8402 = vld [vmem:[%s8398 + $0x18] sm:$0xff]
    %8404 = vset.pattern.permute.xlu0 0
    %8405 = vperm.xlu0 %8404, %v8399
    %v8406 = vpop.permute.xlu0 %8405
    %8409 = vset.pattern.permute.xlu0 0
    %8410 = vperm.xlu0 %8409, %v8400
    %v8411 = vpop.permute.xlu0 %8410
    %8414 = vset.pattern.permute.xlu0 0
    %8415 = vperm.xlu0 %8414, %v8401
    %v8416 = vpop.permute.xlu0 %8415
    %8419 = vset.pattern.permute.xlu0 0
    %8420 = vperm.xlu0 %8419, %v8402
    %v8421 = vpop.permute.xlu0 %8420
    %v8427 = vunpack.c.l.b16 %v8392
    %v8428 = vunpack.c.l.b16 %v8393
    %v8429 = vunpack.c.l.b16 %v8394
    %v8430 = vunpack.c.l.b16 %v8395
    %v8431 = vpack.c.b16 %v8428, %v8427
    %v8432 = vpack.c.b16 %v8430, %v8429
    %v8434 = vsel %vm519, %v8431, 0
    %v8437 = vsel %vm519, %v8432, 0
    %8439 = vmatpush.bf16.msra.mxu0 0
    %8440 = vmatpush.bf16.msra.mxu0 0
    %8441 = vmatpush.bf16.msra.mxu0 0
    %8442 = vmatpush.bf16.msra.mxu0 0
    %8443 = vmatpush.bf16.msra.mxu0 0
    %8444 = vmatpush.bf16.msra.mxu0 0
    %8445 = vmatpush.bf16.msra.mxu0 %v8397
    %8446 = vmatpush.bf16.msra.mxu0 %v8396
    %8447 = vmatmul.bf16.gmra.mxu0 %v8434
    %v8448 = vpop.f32.mrf.mxu0
    %v8449 = vadd.f32 %v8406, %v8448
    %v8450 = vpop.f32.mrf.mxu0
    %v8451 = vadd.f32 %v8411, %v8450
    %8452 = vmatmul.bf16.gmra.mxu0 %v8437
    %v8453 = vpop.f32.mrf.mxu0
    %v8454 = vadd.f32 %v8416, %v8453
    %v8455 = vpop.f32.mrf.mxu0
    %v8456 = vadd.f32 %v8421, %v8455
    %8457 = vdwg.mxu0
    %v8458 = vadd.f32 %v8449, %v7461
    %v8459 = vadd.f32 %v8451, %v7462
    %v8460 = vadd.f32 %v8454, %v7463
    %v8461 = vadd.f32 %v8456, %v7464
    %v8462 = vmax.f32 %v8458, 0.0
    %v8463 = vmax.f32 %v8459, 0.0
    %v8464 = vmax.f32 %v8460, 0.0
    %v8465 = vmax.f32 %v8461, 0.0
    %v8466 = vld [vmem:[%s16] sm:$0xff]
    %8471 = vrot.lane.b32.xlu0 %v8462, 9
    %v8472 = vpop.permute.xlu0 %8471
    %8473 = vrot.lane.b32.xlu0 %v8463, 9
    %v8474 = vpop.permute.xlu0 %8473
    %8475 = vrot.lane.b32.xlu0 %v8464, 9
    %v8476 = vpop.permute.xlu0 %8475
    %8477 = vrot.lane.b32.xlu0 %v8465, 9
    %v8478 = vpop.permute.xlu0 %8477
    %v8483 = vpack.c.bf16 %v8474, %v8472
    %v8484 = vpack.c.bf16 %v8478, %v8476
    %v8485 = vld [vmem:[%s15] sm:$0xf]
    %v8487 = vsel %vm519, %v8485, 0
    %8489 = vmatpush.bf16.msra.mxu0 0
    %8490 = vmatpush.bf16.msra.mxu0 0
    %8491 = vmatpush.bf16.msra.mxu0 0
    %8492 = vmatpush.bf16.msra.mxu0 0
    %8493 = vmatpush.bf16.msra.mxu0 0
    %8494 = vmatpush.bf16.msra.mxu0 0
    %8495 = vmatpush.bf16.msra.mxu0 %v8484
    %8496 = vmatpush.bf16.msra.mxu0 %v8483
    %8497 = vmatmul.bf16.gmra.mxu0 %v8487
    %v8498 = vpop.f32.mrf.mxu0
    %v8499 = vadd.f32 0.0, %v8498
    %v8500 = vpop.f32.mrf.mxu0
    %8501 = vdwg.mxu0
    %v8502 = vmul.f32 %v8499, %v753
    %8503 = vrot.lane.b32.xlu0 %v8462, 8
    %v8504 = vpop.permute.xlu0 %8503
    %8505 = vrot.lane.b32.xlu0 %v8463, 8
    %v8506 = vpop.permute.xlu0 %8505
    %8507 = vrot.lane.b32.xlu0 %v8464, 8
    %v8508 = vpop.permute.xlu0 %8507
    %8509 = vrot.lane.b32.xlu0 %v8465, 8
    %v8510 = vpop.permute.xlu0 %8509
    %v8515 = vpack.c.bf16 %v8506, %v8504
    %v8516 = vpack.c.bf16 %v8510, %v8508
    %s8517 = scalar_lea.vmem %s15, 4
    %v8518 = vld [vmem:[%s8517] sm:$0xf]
    %v8520 = vsel %vm519, %v8518, 0
    %8522 = vmatpush.bf16.msra.mxu0 0
    %8523 = vmatpush.bf16.msra.mxu0 0
    %8524 = vmatpush.bf16.msra.mxu0 0
    %8525 = vmatpush.bf16.msra.mxu0 0
    %8526 = vmatpush.bf16.msra.mxu0 0
    %8527 = vmatpush.bf16.msra.mxu0 0
    %8528 = vmatpush.bf16.msra.mxu0 %v8516
    %8529 = vmatpush.bf16.msra.mxu0 %v8515
    %8530 = vmatmul.bf16.gmra.mxu0 %v8520
    %v8531 = vpop.f32.mrf.mxu0
    %v8532 = vadd.f32 0.0, %v8531
    %v8533 = vpop.f32.mrf.mxu0
    %8534 = vdwg.mxu0
    %v8535 = vmul.f32 %v8532, %v812
    %v8536 = vadd.f32 %v8502, %v8535
    %8537 = vrot.lane.b32.xlu0 %v8462, 7
    %v8538 = vpop.permute.xlu0 %8537
    %8539 = vrot.lane.b32.xlu0 %v8463, 7
    %v8540 = vpop.permute.xlu0 %8539
    %8541 = vrot.lane.b32.xlu0 %v8464, 7
    %v8542 = vpop.permute.xlu0 %8541
    %8543 = vrot.lane.b32.xlu0 %v8465, 7
    %v8544 = vpop.permute.xlu0 %8543
    %v8549 = vpack.c.bf16 %v8540, %v8538
    %v8550 = vpack.c.bf16 %v8544, %v8542
    %s8551 = scalar_lea.vmem %s15, 8
    %v8552 = vld [vmem:[%s8551] sm:$0xf]
    %v8554 = vsel %vm519, %v8552, 0
    %8556 = vmatpush.bf16.msra.mxu0 0
    %8557 = vmatpush.bf16.msra.mxu0 0
    %8558 = vmatpush.bf16.msra.mxu0 0
    %8559 = vmatpush.bf16.msra.mxu0 0
    %8560 = vmatpush.bf16.msra.mxu0 0
    %8561 = vmatpush.bf16.msra.mxu0 0
    %8562 = vmatpush.bf16.msra.mxu0 %v8550
    %8563 = vmatpush.bf16.msra.mxu0 %v8549
    %8564 = vmatmul.bf16.gmra.mxu0 %v8554
    %v8565 = vpop.f32.mrf.mxu0
    %v8566 = vadd.f32 0.0, %v8565
    %v8567 = vpop.f32.mrf.mxu0
    %8568 = vdwg.mxu0
    %v8569 = vmul.f32 %v8566, %v875
    %v8570 = vadd.f32 %v8536, %v8569
    %8571 = vrot.lane.b32.xlu0 %v8462, 1
    %v8572 = vpop.permute.xlu0 %8571
    %8573 = vrot.lane.b32.xlu0 %v8463, 1
    %v8574 = vpop.permute.xlu0 %8573
    %8575 = vrot.lane.b32.xlu0 %v8464, 1
    %v8576 = vpop.permute.xlu0 %8575
    %8577 = vrot.lane.b32.xlu0 %v8465, 1
    %v8578 = vpop.permute.xlu0 %8577
    %v8583 = vpack.c.bf16 %v8574, %v8572
    %v8584 = vpack.c.bf16 %v8578, %v8576
    %s8585 = scalar_lea.vmem %s15, 12
    %v8586 = vld [vmem:[%s8585] sm:$0xf]
    %v8588 = vsel %vm519, %v8586, 0
    %8590 = vmatpush.bf16.msra.mxu0 0
    %8591 = vmatpush.bf16.msra.mxu0 0
    %8592 = vmatpush.bf16.msra.mxu0 0
    %8593 = vmatpush.bf16.msra.mxu0 0
    %8594 = vmatpush.bf16.msra.mxu0 0
    %8595 = vmatpush.bf16.msra.mxu0 0
    %8596 = vmatpush.bf16.msra.mxu0 %v8584
    %8597 = vmatpush.bf16.msra.mxu0 %v8583
    %8598 = vmatmul.bf16.gmra.mxu0 %v8588
    %v8599 = vpop.f32.mrf.mxu0
    %v8600 = vadd.f32 0.0, %v8599
    %v8601 = vpop.f32.mrf.mxu0
    %8602 = vdwg.mxu0
    %v8603 = vmul.f32 %v8600, %v938
    %v8604 = vadd.f32 %v8570, %v8603
    %v8605 = vpack.c.bf16 %v8463, %v8462
    %v8606 = vpack.c.bf16 %v8465, %v8464
    %s8607 = scalar_lea.vmem %s15, 16
    %v8608 = vld [vmem:[%s8607] sm:$0xf]
    %v8610 = vsel %vm519, %v8608, 0
    %8612 = vmatpush.bf16.msra.mxu0 0
    %8613 = vmatpush.bf16.msra.mxu0 0
    %8614 = vmatpush.bf16.msra.mxu0 0
    %8615 = vmatpush.bf16.msra.mxu0 0
    %8616 = vmatpush.bf16.msra.mxu0 0
    %8617 = vmatpush.bf16.msra.mxu0 0
    %8618 = vmatpush.bf16.msra.mxu0 %v8606
    %8619 = vmatpush.bf16.msra.mxu0 %v8605
    %8620 = vmatmul.bf16.gmra.mxu0 %v8610
    %v8621 = vpop.f32.mrf.mxu0
    %v8622 = vadd.f32 0.0, %v8621
    %v8623 = vpop.f32.mrf.mxu0
    %8624 = vdwg.mxu0
    %v8625 = vmul.f32 %v8622, %v989
    %v8626 = vadd.f32 %v8604, %v8625
    %8627 = vrot.lane.b32.xlu0 %v8462, 127
    %v8628 = vpop.permute.xlu0 %8627
    %8629 = vrot.lane.b32.xlu0 %v8463, 127
    %v8630 = vpop.permute.xlu0 %8629
    %8631 = vrot.lane.b32.xlu0 %v8464, 127
    %v8632 = vpop.permute.xlu0 %8631
    %8633 = vrot.lane.b32.xlu0 %v8465, 127
    %v8634 = vpop.permute.xlu0 %8633
    %v8639 = vpack.c.bf16 %v8630, %v8628
    %v8640 = vpack.c.bf16 %v8634, %v8632
    %s8641 = scalar_lea.vmem %s15, 20
    %v8642 = vld [vmem:[%s8641] sm:$0xf]
    %v8644 = vsel %vm519, %v8642, 0
    %8646 = vmatpush.bf16.msra.mxu0 0
    %8647 = vmatpush.bf16.msra.mxu0 0
    %8648 = vmatpush.bf16.msra.mxu0 0
    %8649 = vmatpush.bf16.msra.mxu0 0
    %8650 = vmatpush.bf16.msra.mxu0 0
    %8651 = vmatpush.bf16.msra.mxu0 0
    %8652 = vmatpush.bf16.msra.mxu0 %v8640
    %8653 = vmatpush.bf16.msra.mxu0 %v8639
    %8654 = vmatmul.bf16.gmra.mxu0 %v8644
    %v8655 = vpop.f32.mrf.mxu0
    %v8656 = vadd.f32 0.0, %v8655
    %v8657 = vpop.f32.mrf.mxu0
    %8658 = vdwg.mxu0
    %v8659 = vmul.f32 %v8656, %v1052
    %v8660 = vadd.f32 %v8626, %v8659
    %8661 = vrot.lane.b32.xlu0 %v8462, 121
    %v8662 = vpop.permute.xlu0 %8661
    %8663 = vrot.lane.b32.xlu0 %v8463, 121
    %v8664 = vpop.permute.xlu0 %8663
    %8665 = vrot.lane.b32.xlu0 %v8464, 121
    %v8666 = vpop.permute.xlu0 %8665
    %8667 = vrot.lane.b32.xlu0 %v8465, 121
    %v8668 = vpop.permute.xlu0 %8667
    %v8673 = vpack.c.bf16 %v8664, %v8662
    %v8674 = vpack.c.bf16 %v8668, %v8666
    %s8675 = scalar_lea.vmem %s15, 24
    %v8676 = vld [vmem:[%s8675] sm:$0xf]
    %v8678 = vsel %vm519, %v8676, 0
    %8680 = vmatpush.bf16.msra.mxu0 0
    %8681 = vmatpush.bf16.msra.mxu0 0
    %8682 = vmatpush.bf16.msra.mxu0 0
    %8683 = vmatpush.bf16.msra.mxu0 0
    %8684 = vmatpush.bf16.msra.mxu0 0
    %8685 = vmatpush.bf16.msra.mxu0 0
    %8686 = vmatpush.bf16.msra.mxu0 %v8674
    %8687 = vmatpush.bf16.msra.mxu0 %v8673
    %8688 = vmatmul.bf16.gmra.mxu0 %v8678
    %v8689 = vpop.f32.mrf.mxu0
    %v8690 = vadd.f32 0.0, %v8689
    %v8691 = vpop.f32.mrf.mxu0
    %8692 = vdwg.mxu0
    %v8693 = vmul.f32 %v8690, %v1115
    %v8694 = vadd.f32 %v8660, %v8693
    %8695 = vrot.lane.b32.xlu0 %v8462, 120
    %v8696 = vpop.permute.xlu0 %8695
    %8697 = vrot.lane.b32.xlu0 %v8463, 120
    %v8698 = vpop.permute.xlu0 %8697
    %8699 = vrot.lane.b32.xlu0 %v8464, 120
    %v8700 = vpop.permute.xlu0 %8699
    %8701 = vrot.lane.b32.xlu0 %v8465, 120
    %v8702 = vpop.permute.xlu0 %8701
    %v8707 = vpack.c.bf16 %v8698, %v8696
    %v8708 = vpack.c.bf16 %v8702, %v8700
    %s8709 = scalar_lea.vmem %s15, 28
    %v8710 = vld [vmem:[%s8709] sm:$0xf]
    %v8712 = vsel %vm519, %v8710, 0
    %8714 = vmatpush.bf16.msra.mxu0 0
    %8715 = vmatpush.bf16.msra.mxu0 0
    %8716 = vmatpush.bf16.msra.mxu0 0
    %8717 = vmatpush.bf16.msra.mxu0 0
    %8718 = vmatpush.bf16.msra.mxu0 0
    %8719 = vmatpush.bf16.msra.mxu0 0
    %8720 = vmatpush.bf16.msra.mxu0 %v8708
    %8721 = vmatpush.bf16.msra.mxu0 %v8707
    %8722 = vmatmul.bf16.gmra.mxu0 %v8712
    %v8723 = vpop.f32.mrf.mxu0
    %v8724 = vadd.f32 0.0, %v8723
    %v8725 = vpop.f32.mrf.mxu0
    %8726 = vdwg.mxu0
    %v8727 = vmul.f32 %v8724, %v1178
    %v8728 = vadd.f32 %v8694, %v8727
    %8729 = vrot.lane.b32.xlu0 %v8462, 119
    %v8730 = vpop.permute.xlu0 %8729
    %8731 = vrot.lane.b32.xlu0 %v8463, 119
    %v8732 = vpop.permute.xlu0 %8731
    %8733 = vrot.lane.b32.xlu0 %v8464, 119
    %v8734 = vpop.permute.xlu0 %8733
    %8735 = vrot.lane.b32.xlu0 %v8465, 119
    %v8736 = vpop.permute.xlu0 %8735
    %v8741 = vpack.c.bf16 %v8732, %v8730
    %v8742 = vpack.c.bf16 %v8736, %v8734
    %s8743 = scalar_lea.vmem %s15, 32
    %v8744 = vld [vmem:[%s8743] sm:$0xf]
    %v8746 = vsel %vm519, %v8744, 0
    %8748 = vmatpush.bf16.msra.mxu0 0
    %8749 = vmatpush.bf16.msra.mxu0 0
    %8750 = vmatpush.bf16.msra.mxu0 0
    %8751 = vmatpush.bf16.msra.mxu0 0
    %8752 = vmatpush.bf16.msra.mxu0 0
    %8753 = vmatpush.bf16.msra.mxu0 0
    %8754 = vmatpush.bf16.msra.mxu0 %v8742
    %8755 = vmatpush.bf16.msra.mxu0 %v8741
    %8756 = vmatmul.bf16.gmra.mxu0 %v8746
    %v8757 = vpop.f32.mrf.mxu0
    %v8758 = vadd.f32 0.0, %v8757
    %v8759 = vpop.f32.mrf.mxu0
    %8760 = vdwg.mxu0
    %v8761 = vmul.f32 %v8758, %v1241
    %v8762 = vadd.f32 %v8728, %v8761
    %8764 = vset.pattern.permute.xlu0 0
    %8765 = vperm.xlu0 %8764, %v8466
    %v8766 = vpop.permute.xlu0 %8765
    %v8768 = vadd.f32 %v8762, %v8766
    %s8769 = sld [smem:[#allocation5]]
    %s8770 = sld [smem:[#allocation5 + $0x1]]
    %v8771 = vtanh.pop %v8768
    %v8772 = vstv %s8769
    %v8773 = vmul.f32 %v8772, %v8771
    %v8774 = vstv %s8770
    %v8775 = vadd.f32 %v8773, %v8774
    %v8776 = vsub.f32 1.0, %v92
    %v8778 = vperm.slane %v8776, 0
    %v8780 = vmul.f32 %v8768, %v8778
    %v8781 = vmul.f32 %v8775, %v8776
    %v8782 = vmul.f32 %v8781, 1.442695
    %v8783 = vpow.pop %v8782
    %v8784 = vmul.f32 %v91, %v8783
    %8786 = vst [vmem:[#allocation1] sm:$0xff] %v8780
    %s8787 = scalar_lea.vmem [#allocation1], 1
    %v8788 = vld [vmem:[%s8787] ss:$9 sm:$0xff]
    %v8790 = vadd.f32 %v8784, %v8788
    %8791 = vst [vmem:[%s18] sm:$0x1] %v8790
    %8792 = vst [vmem:[%s19] sm:$0x1] %v8781
    // Predicated region
    $region82: #{affine_coupling_forward.1} parent=1 // pred_check
      _
    $region83: #{affine_coupling_forward.1} parent=1 // pred_check_branch
      %8794 = sbr.rel (0) target = $region85
    $region84: #{affine_coupling_forward.1} parent=1 // pred_region
      _
    $region85: #{affine_coupling_forward.1} parent=1 // pred_fallthru
      _
    // Predicated region
    $region86: #{affine_coupling_forward.1} parent=1 // pred_check
      _
    $region87: #{affine_coupling_forward.1} parent=1 // pred_check_branch
      %8796 = sbr.rel (0) target = $region89
    $region88: #{affine_coupling_forward.1} parent=1 // pred_region
      _
    $region89: #{affine_coupling_forward.1} parent=1 // pred_fallthru
      _
    // Predicated region
    $region90: #{affine_coupling_forward.1} parent=1 // pred_check
      _
    $region91: #{affine_coupling_forward.1} parent=1 // pred_check_branch
      %8798 = sbr.rel (0) target = $region93
    $region92: #{affine_coupling_forward.1} parent=1 // pred_region
      _
    $region93: #{affine_coupling_forward.1} parent=1 // pred_fallthru
      _
    // Predicated region
    $region94: #{affine_coupling_forward.1} parent=1 // pred_check
      _
    $region95: #{affine_coupling_forward.1} parent=1 // pred_check_branch
      %8800 = sbr.rel (0) target = $region97
    $region96: #{affine_coupling_forward.1} parent=1 // pred_region
      _
    $region97: #{affine_coupling_forward.1} parent=1 // pred_fallthru
      _
    %8801 = vsyncpa [#allocation3], 1
    %8802 = vsyncpa [#allocation4], 1

</llo_original>
